<compile_context>
chip_gen: v7x
topology: tpu7x:2x2x1
jax: 0.10.0
libtpu: 0.0.40
codegen_flags: <defaults>
</compile_context>

<pallas_src>
import functools

import numpy as np
import jax
import jax.numpy as jnp
from jax.experimental import pallas as pl
from jax.experimental.pallas import tpu as pltpu


# ----------------------------- Pallas kernel -------------------------------

def _silu(y, approx):
    # sigmoid via exp + reciprocal: the divide lowers to the EUP slot.
    # approx=True -> single EUP vrcp (production); exact kept for the strict
    # f32 correctness check.
    return y * pl.reciprocal(1.0 + jnp.exp(-y), approx=approx)


def _csp_block_kernel(x_ref, w1_ref, w2_ref, wb_ref, sb_ref, bb_ref,
                      wf1_ref, wf2_ref, sf_ref, bf_ref, o_ref,
                      pad_ref, col_ref, *, approx_silu):
    """Fused CSPBlock forward for one batch element.

    x_ref  : (h*w, Cin)              input block (stride already applied)
    w1_ref : (Cin, hidden)           stem conv1 1x1 weight
    w2_ref : (Cin, hidden)           stem conv2 1x1 weight
    wb_ref : (L, 9*hidden, hidden)   3x3 weights, row = 9-tap*hidden + c_in
    sb_ref : (L, 1, hidden)          folded BN scale per bottleneck layer
    bb_ref : (L, 1, hidden)          folded BN bias  per bottleneck layer
    wf1_ref: (hidden, Cout)          final 1x1 weight rows consumed by y1
    wf2_ref: (hidden, Cout)          final 1x1 weight rows consumed by y2
    sf_ref : (1, Cout)  bf_ref: (1, Cout)   folded final BN
    o_ref  : (h*w, Cout)
    pad_ref: VMEM scratch (h+2, w+2, hidden)   zero-padded y1 buffer (f32)
    col_ref: VMEM scratch (h, w, 9*hidden)     im2col window buffer  (f32)
    """
    h = pad_ref.shape[0] - 2
    w = pad_ref.shape[1] - 2
    hidden = w1_ref.shape[1]
    num_layers = wb_ref.shape[0]
    cdt = wb_ref.dtype                       # MXU compute dtype (f32 or bf16)

    # ---- stem: both 1x1 convs from one VMEM-resident read of x ------------
    xm = x_ref[...]                                           # (h*w, Cin)
    y1 = jnp.dot(xm, w1_ref[...], preferred_element_type=jnp.float32)
    y2 = jnp.dot(xm, w2_ref[...], preferred_element_type=jnp.float32)

    # ---- zero only the halo border of the pad buffer ----------------------
    # Every grid step (not just step 0): under megacore sharding each core has
    # its own scratch and may never run program_id == 0; 4 thin slice stores
    # are negligible vs. a full-buffer clear.
    zrow = jnp.zeros((1, w + 2, hidden), pad_ref.dtype)
    zcol = jnp.zeros((h + 2, 1, hidden), pad_ref.dtype)
    pad_ref[0:1, :, :] = zrow
    pad_ref[h + 1:h + 2, :, :] = zrow
    pad_ref[:, 0:1, :] = zcol
    pad_ref[:, w + 1:w + 2, :] = zcol

    # ---- bottleneck chain: im2col + one K=9*hidden matmul per layer -------
    # y1 stays f32 between layers (accuracy); only the MXU operands are cast.
    for l in range(num_layers):                  # static unroll (small L)
        pad_ref[1:h + 1, 1:w + 1, :] = y1.reshape(h, w, hidden)
        for k in range(9):                       # 9 slab copies, no reshapes
            dy, dx = divmod(k, 3)
            col_ref[:, :, k * hidden:(k + 1) * hidden] = (
                pad_ref[dy:dy + h, dx:dx + w, :])
        col = col_ref[...].reshape(h * w, 9 * hidden).astype(cdt)
        acc = jnp.dot(col, wb_ref[l], preferred_element_type=jnp.float32)
        y1 = _silu(acc * sb_ref[l] + bb_ref[l], approx_silu)

    # ---- final 1x1 over the virtual concat [y1 | y2] + BN + SiLU ----------
    yf = jnp.dot(y1.astype(cdt), wf1_ref[...],
                 preferred_element_type=jnp.float32)
    yf = yf + jnp.dot(y2.astype(cdt), wf2_ref[...],
                      preferred_element_type=jnp.float32)
    yf = _silu(yf * sf_ref[...] + bf_ref[...], approx_silu)
    # NOTE: at toy Cout (=8) this store is lane-masked; production Cout>=128
    # makes it lane-dense with the same code.
    o_ref[...] = yf.astype(o_ref.dtype)


# ------------------------------ wrapper -------------------------------------

def fold_bn(gamma, beta, mean, var, eps=1e-5):
    scale = gamma / jnp.sqrt(var + eps)
    bias = beta - mean * scale
    return scale[None, :], bias[None, :]


def csp_block_forward(x_nchw, params, downsample=False,
                      compute_dtype=None, approx_silu=False):
    """Pallas CSPBlock forward. x_nchw: (N, Cin, H, W) -> (N, Cout, H', W').

    compute_dtype: dtype of the MXU matmul operands (x / conv weights).
      None -> x.dtype.  bf16 gives ~2x MXU throughput and halves x/weight DMA
      bytes; accumulators, BN/SiLU and inter-layer activations stay f32.
    """
    out_dtype = x_nchw.dtype
    cdt = out_dtype if compute_dtype is None else compute_dtype

    x = jnp.transpose(x_nchw, (0, 2, 3, 1))                    # NCHW -> NHWC
    if downsample:
        # TODO(synk): fold the stride-2 pick into the kernel's input DMA
        # (pl.ds(..., stride=2) / index_map) instead of an XLA slice.
        x = x[:, ::2, ::2, :]
    n, h, w, cin = x.shape
    hidden = params["w1"].shape[1]
    cout = params["final"]["w"].shape[1]
    num_layers = len(params["bottlenecks"])

    # Rank-3 input (n, h*w, cin): kernel-side load needs no reshape.
    x = x.reshape(n, h * w, cin).astype(cdt)

    # Stack + reshape bottleneck weights to (L, 9*hidden, hidden): row index
    # k*hidden + c_in matches the im2col column order built in the kernel.
    wb = jnp.stack([lp["w"] for lp in params["bottlenecks"]])  # (L,9,hid,hid)
    wb = wb.reshape(num_layers, 9 * hidden, hidden).astype(cdt)
    sb_list, bb_list = [], []
    for lp in params["bottlenecks"]:
        s, b = fold_bn(lp["gamma"], lp["beta"], lp["mean"], lp["var"])
        sb_list.append(s)
        bb_list.append(b)
    sb = jnp.stack(sb_list)                                    # (L, 1, hidden)
    bb = jnp.stack(bb_list)

    # Split the final 1x1 weight: the channel concat is never materialised.
    wf = params["final"]["w"]                                  # (2*hid, Cout)
    wf1 = wf[:hidden].astype(cdt)
    wf2 = wf[hidden:].astype(cdt)
    sf, bf = fold_bn(params["final"]["gamma"], params["final"]["beta"],
                     params["final"]["mean"], params["final"]["var"])

    w1 = params["w1"].astype(cdt)
    w2 = params["w2"].astype(cdt)

    kernel = functools.partial(_csp_block_kernel, approx_silu=approx_silu)

    out = pl.pallas_call(
        kernel,
        out_shape=jax.ShapeDtypeStruct((n, h * w, cout), out_dtype),
        grid=(n,),
        in_specs=[
            pl.BlockSpec((None, h * w, cin), lambda b: (b, 0, 0)),
            pl.BlockSpec((cin, hidden), lambda b: (0, 0)),
            pl.BlockSpec((cin, hidden), lambda b: (0, 0)),
            pl.BlockSpec((num_layers, 9 * hidden, hidden),
                         lambda b: (0, 0, 0)),
            pl.BlockSpec((num_layers, 1, hidden), lambda b: (0, 0, 0)),
            pl.BlockSpec((num_layers, 1, hidden), lambda b: (0, 0, 0)),
            pl.BlockSpec((hidden, cout), lambda b: (0, 0)),
            pl.BlockSpec((hidden, cout), lambda b: (0, 0)),
            pl.BlockSpec((1, cout), lambda b: (0, 0)),
            pl.BlockSpec((1, cout), lambda b: (0, 0)),
        ],
        out_specs=pl.BlockSpec((None, h * w, cout), lambda b: (b, 0, 0)),
        scratch_shapes=[
            pltpu.VMEM((h + 2, w + 2, hidden), jnp.float32),   # padded y1
            pltpu.VMEM((h, w, 9 * hidden), jnp.float32),       # im2col window
        ],
        compiler_params=pltpu.CompilerParams(
            dimension_semantics=("parallel",),
            vmem_limit_bytes=32 * 1024 * 1024),   # v5e default is only 16 MiB
    )(x, w1, w2, wb, sb, bb, wf1, wf2, sf, bf)

    out = out.reshape(n, h, w, cout)
    return jnp.transpose(out, (0, 3, 1, 2))                    # NHWC -> NCHW


# --------------------------- pure-JAX reference ------------------------------

def _ref_forward(x_nchw, params, downsample=False):
    stride = 2 if downsample else 1
    x = jnp.transpose(x_nchw, (0, 2, 3, 1))
    y1 = jnp.einsum("nhwc,cd->nhwd", x[:, ::stride, ::stride, :], params["w1"])
    y2 = jnp.einsum("nhwc,cd->nhwd", x[:, ::stride, ::stride, :], params["w2"])
    for layer in params["bottlenecks"]:
        cin = layer["w"].shape[1]
        cout = layer["w"].shape[2]
        w_hwio = layer["w"].reshape(3, 3, cin, cout)
        y1 = jax.lax.conv_general_dilated(
            y1, w_hwio, window_strides=(1, 1), padding="SAME",
            dimension_numbers=("NHWC", "HWIO", "NHWC"))
        s, b = fold_bn(layer["gamma"], layer["beta"], layer["mean"],
                       layer["var"])
        y1 = y1 * s[None] + b[None]
        y1 = y1 * jax.nn.sigmoid(y1)
    y = jnp.concatenate([y1, y2], axis=-1)
    out = jnp.einsum("nhwc,cd->nhwd", y, params["final"]["w"])
    s, b = fold_bn(params["final"]["gamma"], params["final"]["beta"],
                   params["final"]["mean"], params["final"]["var"])
    out = out * s[None] + b[None]
    out = out * jax.nn.sigmoid(out)
    return jnp.transpose(out, (0, 3, 1, 2))


# --------------------------------- main --------------------------------------

if __name__ == "__main__":
    N, Cin, H, W = 2, 4, 16, 16
    Cout = 8
    expansion = 0.5
    hidden = int(Cout * expansion)   # 4
    num_layers = 2                   # exercise the fused bottleneck chain
    downsample = False

    key = jax.random.PRNGKey(0)
    keys = jax.random.split(key, 8 + 4 * num_layers)
    ki = iter(range(len(keys)))

    x = jax.random.normal(keys[next(ki)], (N, Cin, H, W), jnp.float32)

    params = {
        "w1": 0.1 * jax.random.normal(keys[next(ki)], (Cin, hidden),
                                      jnp.float32),
        "w2": 0.1 * jax.random.normal(keys[next(ki)], (Cin, hidden),
                                      jnp.float32),
        "bottlenecks": [],
        "final": {},
    }
    for _ in range(num_layers):
        params["bottlenecks"].append({
            "w": 0.1 * jax.random.normal(keys[next(ki)], (9, hidden, hidden),
                                         jnp.float32),
            "gamma": 1.0 + 0.1 * jax.random.normal(keys[next(ki)], (hidden,),
                                                   jnp.float32),
            "beta": 0.1 * jax.random.normal(keys[next(ki)], (hidden,),
                                            jnp.float32),
            "mean": 0.1 * jax.random.normal(keys[next(ki)], (hidden,),
                                            jnp.float32),
            "var": jnp.ones((hidden,), jnp.float32),
        })
    params["final"] = {
        "w": 0.1 * jax.random.normal(keys[next(ki)], (2 * hidden, Cout),
                                     jnp.float32),
        "gamma": 1.0 + 0.1 * jax.random.normal(keys[next(ki)], (Cout,),
                                               jnp.float32),
        "beta": 0.1 * jax.random.normal(keys[next(ki)], (Cout,), jnp.float32),
        "mean": 0.1 * jax.random.normal(keys[next(ki)], (Cout,), jnp.float32),
        "var": jnp.ones((Cout,), jnp.float32),
    }

    ref = jax.block_until_ready(
        _ref_forward(x, params, downsample=downsample))

    # f32 path (exact reciprocal): strict check against the pure-JAX reference.
    out_f32 = jax.block_until_ready(
        csp_block_forward(x, params, downsample=downsample))
    assert out_f32.shape == (N, Cout, H, W), out_f32.shape
    np.testing.assert_allclose(np.asarray(out_f32), np.asarray(ref),
                               rtol=1e-4, atol=1e-4)

    # bf16 MXU path (+ EUP approx reciprocal): production configuration,
    # checked with a mixed-precision tolerance.
    out_bf16 = jax.block_until_ready(
        csp_block_forward(x, params, downsample=downsample,
                          compute_dtype=jnp.bfloat16, approx_silu=True))
    assert out_bf16.shape == (N, Cout, H, W), out_bf16.shape
    np.testing.assert_allclose(np.asarray(out_bf16), np.asarray(ref),
                               rtol=5e-2, atol=5e-2)

    print("KERNEL_OK")
</pallas_src>

<mosaic_0001>
module attributes {stable_mosaic.version = 11 : i64} {
  func.func @_csp_block_kernel(%arg0: i32, %arg1: memref<1x256x4xf32, #tpu.memory_space<vmem>>, %arg2: memref<4x4xf32, #tpu.memory_space<vmem>>, %arg3: memref<4x4xf32, #tpu.memory_space<vmem>>, %arg4: memref<2x36x4xf32, #tpu.memory_space<vmem>>, %arg5: memref<2x1x4xf32, #tpu.memory_space<vmem>>, %arg6: memref<2x1x4xf32, #tpu.memory_space<vmem>>, %arg7: memref<4x8xf32, #tpu.memory_space<vmem>>, %arg8: memref<4x8xf32, #tpu.memory_space<vmem>>, %arg9: memref<1x8xf32, #tpu.memory_space<vmem>>, %arg10: memref<1x8xf32, #tpu.memory_space<vmem>>, %arg11: memref<1x256x8xf32, #tpu.memory_space<vmem>>, %arg12: memref<18x18x4xf32, #tpu.memory_space<vmem>>, %arg13: memref<16x16x36xf32, #tpu.memory_space<vmem>>) attributes {dimension_semantics = [#tpu.dimension_semantics<parallel>], iteration_bounds = array<i64: 2>, scalar_prefetch = 0 : i64, scratch_operands = 2 : i64, tpu.core_type = #tpu.core_type<tc>, window_params = [{transform_indices = @transform_0, window_bounds = array<i64: 1, 256, 4>}, {pipeline_mode = #tpu.pipeline_mode<synchronous>, transform_indices = @transform_1, window_bounds = array<i64: 4, 4>}, {pipeline_mode = #tpu.pipeline_mode<synchronous>, transform_indices = @transform_2, window_bounds = array<i64: 4, 4>}, {pipeline_mode = #tpu.pipeline_mode<synchronous>, transform_indices = @transform_3, window_bounds = array<i64: 2, 36, 4>}, {pipeline_mode = #tpu.pipeline_mode<synchronous>, transform_indices = @transform_4, window_bounds = array<i64: 2, 1, 4>}, {pipeline_mode = #tpu.pipeline_mode<synchronous>, transform_indices = @transform_5, window_bounds = array<i64: 2, 1, 4>}, {pipeline_mode = #tpu.pipeline_mode<synchronous>, transform_indices = @transform_6, window_bounds = array<i64: 4, 8>}, {pipeline_mode = #tpu.pipeline_mode<synchronous>, transform_indices = @transform_7, window_bounds = array<i64: 4, 8>}, {pipeline_mode = #tpu.pipeline_mode<synchronous>, transform_indices = @transform_8, window_bounds = array<i64: 1, 8>}, {pipeline_mode = #tpu.pipeline_mode<synchronous>, transform_indices = @transform_9, window_bounds = array<i64: 1, 8>}, {transform_indices = @transform_10, window_bounds = array<i64: 1, 256, 8>}]} {
    %c0 = arith.constant 0 : index
    %c0_0 = arith.constant 0 : index
    %c0_1 = arith.constant 0 : index
    %0 = vector.load %arg1[%c0, %c0_0, %c0_1] : memref<1x256x4xf32, #tpu.memory_space<vmem>>, vector<1x256x4xf32>
    %1 = vector.shape_cast %0 : vector<1x256x4xf32> to vector<256x4xf32>
    %c0_2 = arith.constant 0 : index
    %c0_3 = arith.constant 0 : index
    %2 = vector.load %arg2[%c0_2, %c0_3] : memref<4x4xf32, #tpu.memory_space<vmem>>, vector<4x4xf32>
    %cst = arith.constant dense<0.000000e+00> : vector<256x4xf32>
    %3 = tpu.matmul %1, %2, %cst {dimension_numbers = #tpu.dot_dimension_numbers<[1], [0], [0], [1], [0, 0, 1, 1], [], []>} : vector<256x4xf32>, vector<4x4xf32>, vector<256x4xf32> -> vector<256x4xf32>
    %c0_4 = arith.constant 0 : index
    %c0_5 = arith.constant 0 : index
    %4 = vector.load %arg3[%c0_4, %c0_5] : memref<4x4xf32, #tpu.memory_space<vmem>>, vector<4x4xf32>
    %cst_6 = arith.constant dense<0.000000e+00> : vector<256x4xf32>
    %5 = tpu.matmul %1, %4, %cst_6 {dimension_numbers = #tpu.dot_dimension_numbers<[1], [0], [0], [1], [0, 0, 1, 1], [], []>} : vector<256x4xf32>, vector<4x4xf32>, vector<256x4xf32> -> vector<256x4xf32>
    %cst_7 = arith.constant 0.000000e+00 : f32
    %6 = vector.broadcast %cst_7 : f32 to vector<1x18x4xf32>
    %cst_8 = arith.constant 0.000000e+00 : f32
    %7 = vector.broadcast %cst_8 : f32 to vector<18x1x4xf32>
    %c0_9 = arith.constant 0 : index
    %c0_10 = arith.constant 0 : index
    %c0_11 = arith.constant 0 : index
    %8 = vector.load %arg12[%c0_9, %c0_10, %c0_11] : memref<18x18x4xf32, #tpu.memory_space<vmem>>, vector<1x18x4xf32>
    tpu.vector_store %arg12[%c0_9, %c0_10, %c0_11], %6 {strides = array<i32>} : memref<18x18x4xf32, #tpu.memory_space<vmem>>, vector<1x18x4xf32>,
    %c17 = arith.constant 17 : index
    %c0_12 = arith.constant 0 : index
    %c0_13 = arith.constant 0 : index
    %9 = vector.load %arg12[%c17, %c0_12, %c0_13] : memref<18x18x4xf32, #tpu.memory_space<vmem>>, vector<1x18x4xf32>
    tpu.vector_store %arg12[%c17, %c0_12, %c0_13], %6 {strides = array<i32>} : memref<18x18x4xf32, #tpu.memory_space<vmem>>, vector<1x18x4xf32>,
    %c0_14 = arith.constant 0 : index
    %c0_15 = arith.constant 0 : index
    %c0_16 = arith.constant 0 : index
    %10 = vector.load %arg12[%c0_14, %c0_15, %c0_16] : memref<18x18x4xf32, #tpu.memory_space<vmem>>, vector<18x1x4xf32>
    tpu.vector_store %arg12[%c0_14, %c0_15, %c0_16], %7 {strides = array<i32>} : memref<18x18x4xf32, #tpu.memory_space<vmem>>, vector<18x1x4xf32>,
    %c0_17 = arith.constant 0 : index
    %c17_18 = arith.constant 17 : index
    %c0_19 = arith.constant 0 : index
    %11 = vector.load %arg12[%c0_17, %c17_18, %c0_19] : memref<18x18x4xf32, #tpu.memory_space<vmem>>, vector<18x1x4xf32>
    tpu.vector_store %arg12[%c0_17, %c17_18, %c0_19], %7 {strides = array<i32>} : memref<18x18x4xf32, #tpu.memory_space<vmem>>, vector<18x1x4xf32>,
    %12 = vector.shape_cast %3 : vector<256x4xf32> to vector<16x16x4xf32>
    %c1 = arith.constant 1 : index
    %c1_20 = arith.constant 1 : index
    %c0_21 = arith.constant 0 : index
    %13 = vector.load %arg12[%c1, %c1_20, %c0_21] : memref<18x18x4xf32, #tpu.memory_space<vmem>>, vector<16x16x4xf32>
    tpu.vector_store %arg12[%c1, %c1_20, %c0_21], %12 {strides = array<i32>} : memref<18x18x4xf32, #tpu.memory_space<vmem>>, vector<16x16x4xf32>,
    %c0_22 = arith.constant 0 : index
    %c0_23 = arith.constant 0 : index
    %c0_24 = arith.constant 0 : index
    %14 = vector.load %arg12[%c0_22, %c0_23, %c0_24] : memref<18x18x4xf32, #tpu.memory_space<vmem>>, vector<16x16x4xf32>
    %c0_25 = arith.constant 0 : index
    %c0_26 = arith.constant 0 : index
    %c0_27 = arith.constant 0 : index
    %15 = vector.load %arg13[%c0_25, %c0_26, %c0_27] : memref<16x16x36xf32, #tpu.memory_space<vmem>>, vector<16x16x4xf32>
    tpu.vector_store %arg13[%c0_25, %c0_26, %c0_27], %14 {strides = array<i32>} : memref<16x16x36xf32, #tpu.memory_space<vmem>>, vector<16x16x4xf32>,
    %c0_28 = arith.constant 0 : index
    %c1_29 = arith.constant 1 : index
    %c0_30 = arith.constant 0 : index
    %16 = vector.load %arg12[%c0_28, %c1_29, %c0_30] : memref<18x18x4xf32, #tpu.memory_space<vmem>>, vector<16x16x4xf32>
    %c0_31 = arith.constant 0 : index
    %c0_32 = arith.constant 0 : index
    %c4 = arith.constant 4 : index
    %17 = vector.load %arg13[%c0_31, %c0_32, %c4] : memref<16x16x36xf32, #tpu.memory_space<vmem>>, vector<16x16x4xf32>
    tpu.vector_store %arg13[%c0_31, %c0_32, %c4], %16 {strides = array<i32>} : memref<16x16x36xf32, #tpu.memory_space<vmem>>, vector<16x16x4xf32>,
    %c0_33 = arith.constant 0 : index
    %c2 = arith.constant 2 : index
    %c0_34 = arith.constant 0 : index
    %18 = vector.load %arg12[%c0_33, %c2, %c0_34] : memref<18x18x4xf32, #tpu.memory_space<vmem>>, vector<16x16x4xf32>
    %c0_35 = arith.constant 0 : index
    %c0_36 = arith.constant 0 : index
    %c8 = arith.constant 8 : index
    %19 = vector.load %arg13[%c0_35, %c0_36, %c8] : memref<16x16x36xf32, #tpu.memory_space<vmem>>, vector<16x16x4xf32>
    tpu.vector_store %arg13[%c0_35, %c0_36, %c8], %18 {strides = array<i32>} : memref<16x16x36xf32, #tpu.memory_space<vmem>>, vector<16x16x4xf32>,
    %c1_37 = arith.constant 1 : index
    %c0_38 = arith.constant 0 : index
    %c0_39 = arith.constant 0 : index
    %20 = vector.load %arg12[%c1_37, %c0_38, %c0_39] : memref<18x18x4xf32, #tpu.memory_space<vmem>>, vector<16x16x4xf32>
    %c0_40 = arith.constant 0 : index
    %c0_41 = arith.constant 0 : index
    %c12 = arith.constant 12 : index
    %21 = vector.load %arg13[%c0_40, %c0_41, %c12] : memref<16x16x36xf32, #tpu.memory_space<vmem>>, vector<16x16x4xf32>
    tpu.vector_store %arg13[%c0_40, %c0_41, %c12], %20 {strides = array<i32>} : memref<16x16x36xf32, #tpu.memory_space<vmem>>, vector<16x16x4xf32>,
    %c1_42 = arith.constant 1 : index
    %c1_43 = arith.constant 1 : index
    %c0_44 = arith.constant 0 : index
    %22 = vector.load %arg12[%c1_42, %c1_43, %c0_44] : memref<18x18x4xf32, #tpu.memory_space<vmem>>, vector<16x16x4xf32>
    %c0_45 = arith.constant 0 : index
    %c0_46 = arith.constant 0 : index
    %c16 = arith.constant 16 : index
    %23 = vector.load %arg13[%c0_45, %c0_46, %c16] : memref<16x16x36xf32, #tpu.memory_space<vmem>>, vector<16x16x4xf32>
    tpu.vector_store %arg13[%c0_45, %c0_46, %c16], %22 {strides = array<i32>} : memref<16x16x36xf32, #tpu.memory_space<vmem>>, vector<16x16x4xf32>,
    %c1_47 = arith.constant 1 : index
    %c2_48 = arith.constant 2 : index
    %c0_49 = arith.constant 0 : index
    %24 = vector.load %arg12[%c1_47, %c2_48, %c0_49] : memref<18x18x4xf32, #tpu.memory_space<vmem>>, vector<16x16x4xf32>
    %c0_50 = arith.constant 0 : index
    %c0_51 = arith.constant 0 : index
    %c20 = arith.constant 20 : index
    %25 = vector.load %arg13[%c0_50, %c0_51, %c20] : memref<16x16x36xf32, #tpu.memory_space<vmem>>, vector<16x16x4xf32>
    tpu.vector_store %arg13[%c0_50, %c0_51, %c20], %24 {strides = array<i32>} : memref<16x16x36xf32, #tpu.memory_space<vmem>>, vector<16x16x4xf32>,
    %c2_52 = arith.constant 2 : index
    %c0_53 = arith.constant 0 : index
    %c0_54 = arith.constant 0 : index
    %26 = vector.load %arg12[%c2_52, %c0_53, %c0_54] : memref<18x18x4xf32, #tpu.memory_space<vmem>>, vector<16x16x4xf32>
    %c0_55 = arith.constant 0 : index
    %c0_56 = arith.constant 0 : index
    %c24 = arith.constant 24 : index
    %27 = vector.load %arg13[%c0_55, %c0_56, %c24] : memref<16x16x36xf32, #tpu.memory_space<vmem>>, vector<16x16x4xf32>
    tpu.vector_store %arg13[%c0_55, %c0_56, %c24], %26 {strides = array<i32>} : memref<16x16x36xf32, #tpu.memory_space<vmem>>, vector<16x16x4xf32>,
    %c2_57 = arith.constant 2 : index
    %c1_58 = arith.constant 1 : index
    %c0_59 = arith.constant 0 : index
    %28 = vector.load %arg12[%c2_57, %c1_58, %c0_59] : memref<18x18x4xf32, #tpu.memory_space<vmem>>, vector<16x16x4xf32>
    %c0_60 = arith.constant 0 : index
    %c0_61 = arith.constant 0 : index
    %c28 = arith.constant 28 : index
    %29 = vector.load %arg13[%c0_60, %c0_61, %c28] : memref<16x16x36xf32, #tpu.memory_space<vmem>>, vector<16x16x4xf32>
    tpu.vector_store %arg13[%c0_60, %c0_61, %c28], %28 {strides = array<i32>} : memref<16x16x36xf32, #tpu.memory_space<vmem>>, vector<16x16x4xf32>,
    %c2_62 = arith.constant 2 : index
    %c2_63 = arith.constant 2 : index
    %c0_64 = arith.constant 0 : index
    %30 = vector.load %arg12[%c2_62, %c2_63, %c0_64] : memref<18x18x4xf32, #tpu.memory_space<vmem>>, vector<16x16x4xf32>
    %c0_65 = arith.constant 0 : index
    %c0_66 = arith.constant 0 : index
    %c32 = arith.constant 32 : index
    %31 = vector.load %arg13[%c0_65, %c0_66, %c32] : memref<16x16x36xf32, #tpu.memory_space<vmem>>, vector<16x16x4xf32>
    tpu.vector_store %arg13[%c0_65, %c0_66, %c32], %30 {strides = array<i32>} : memref<16x16x36xf32, #tpu.memory_space<vmem>>, vector<16x16x4xf32>,
    %c0_67 = arith.constant 0 : index
    %c0_68 = arith.constant 0 : index
    %c0_69 = arith.constant 0 : index
    %32 = vector.load %arg13[%c0_67, %c0_68, %c0_69] : memref<16x16x36xf32, #tpu.memory_space<vmem>>, vector<16x16x36xf32>
    %33 = vector.shape_cast %32 : vector<16x16x36xf32> to vector<256x36xf32>
    %c0_70 = arith.constant 0 : index
    %c0_71 = arith.constant 0 : index
    %c0_72 = arith.constant 0 : index
    %34 = vector.load %arg4[%c0_70, %c0_71, %c0_72] : memref<2x36x4xf32, #tpu.memory_space<vmem>>, vector<1x36x4xf32>
    %35 = vector.shape_cast %34 : vector<1x36x4xf32> to vector<36x4xf32>
    %cst_73 = arith.constant dense<0.000000e+00> : vector<256x4xf32>
    %36 = tpu.matmul %33, %35, %cst_73 {dimension_numbers = #tpu.dot_dimension_numbers<[1], [0], [0], [1], [0, 0, 1, 1], [], []>} : vector<256x36xf32>, vector<36x4xf32>, vector<256x4xf32> -> vector<256x4xf32>
    %c0_74 = arith.constant 0 : index
    %c0_75 = arith.constant 0 : index
    %c0_76 = arith.constant 0 : index
    %37 = vector.load %arg5[%c0_74, %c0_75, %c0_76] : memref<2x1x4xf32, #tpu.memory_space<vmem>>, vector<1x1x4xf32>
    %38 = vector.shape_cast %37 : vector<1x1x4xf32> to vector<1x4xf32>
    %39 = vector.broadcast %38 : vector<1x4xf32> to vector<256x4xf32>
    %40 = arith.mulf %36, %39 : vector<256x4xf32>
    %c0_77 = arith.constant 0 : index
    %c0_78 = arith.constant 0 : index
    %c0_79 = arith.constant 0 : index
    %41 = vector.load %arg6[%c0_77, %c0_78, %c0_79] : memref<2x1x4xf32, #tpu.memory_space<vmem>>, vector<1x1x4xf32>
    %42 = vector.shape_cast %41 : vector<1x1x4xf32> to vector<1x4xf32>
    %43 = vector.broadcast %42 : vector<1x4xf32> to vector<256x4xf32>
    %44 = arith.addf %40, %43 : vector<256x4xf32>
    %cst_80 = arith.constant 0.000000e+00 : f32
    %45 = vector.broadcast %cst_80 : f32 to vector<256x4xf32>
    %46 = arith.subf %45, %44 : vector<256x4xf32>
    %47 = math.exp %46 : vector<256x4xf32>
    %cst_81 = arith.constant 1.000000e+00 : f32
    %48 = vector.broadcast %cst_81 : f32 to vector<256x4xf32>
    %49 = arith.addf %48, %47 : vector<256x4xf32>
    %50 = tpu.reciprocal %49 : vector<256x4xf32> -> vector<256x4xf32>
    %51 = arith.mulf %44, %50 : vector<256x4xf32>
    %52 = vector.shape_cast %51 : vector<256x4xf32> to vector<16x16x4xf32>
    %c1_82 = arith.constant 1 : index
    %c1_83 = arith.constant 1 : index
    %c0_84 = arith.constant 0 : index
    %53 = vector.load %arg12[%c1_82, %c1_83, %c0_84] : memref<18x18x4xf32, #tpu.memory_space<vmem>>, vector<16x16x4xf32>
    tpu.vector_store %arg12[%c1_82, %c1_83, %c0_84], %52 {strides = array<i32>} : memref<18x18x4xf32, #tpu.memory_space<vmem>>, vector<16x16x4xf32>,
    %c0_85 = arith.constant 0 : index
    %c0_86 = arith.constant 0 : index
    %c0_87 = arith.constant 0 : index
    %54 = vector.load %arg12[%c0_85, %c0_86, %c0_87] : memref<18x18x4xf32, #tpu.memory_space<vmem>>, vector<16x16x4xf32>
    %c0_88 = arith.constant 0 : index
    %c0_89 = arith.constant 0 : index
    %c0_90 = arith.constant 0 : index
    %55 = vector.load %arg13[%c0_88, %c0_89, %c0_90] : memref<16x16x36xf32, #tpu.memory_space<vmem>>, vector<16x16x4xf32>
    tpu.vector_store %arg13[%c0_88, %c0_89, %c0_90], %54 {strides = array<i32>} : memref<16x16x36xf32, #tpu.memory_space<vmem>>, vector<16x16x4xf32>,
    %c0_91 = arith.constant 0 : index
    %c1_92 = arith.constant 1 : index
    %c0_93 = arith.constant 0 : index
    %56 = vector.load %arg12[%c0_91, %c1_92, %c0_93] : memref<18x18x4xf32, #tpu.memory_space<vmem>>, vector<16x16x4xf32>
    %c0_94 = arith.constant 0 : index
    %c0_95 = arith.constant 0 : index
    %c4_96 = arith.constant 4 : index
    %57 = vector.load %arg13[%c0_94, %c0_95, %c4_96] : memref<16x16x36xf32, #tpu.memory_space<vmem>>, vector<16x16x4xf32>
    tpu.vector_store %arg13[%c0_94, %c0_95, %c4_96], %56 {strides = array<i32>} : memref<16x16x36xf32, #tpu.memory_space<vmem>>, vector<16x16x4xf32>,
    %c0_97 = arith.constant 0 : index
    %c2_98 = arith.constant 2 : index
    %c0_99 = arith.constant 0 : index
    %58 = vector.load %arg12[%c0_97, %c2_98, %c0_99] : memref<18x18x4xf32, #tpu.memory_space<vmem>>, vector<16x16x4xf32>
    %c0_100 = arith.constant 0 : index
    %c0_101 = arith.constant 0 : index
    %c8_102 = arith.constant 8 : index
    %59 = vector.load %arg13[%c0_100, %c0_101, %c8_102] : memref<16x16x36xf32, #tpu.memory_space<vmem>>, vector<16x16x4xf32>
    tpu.vector_store %arg13[%c0_100, %c0_101, %c8_102], %58 {strides = array<i32>} : memref<16x16x36xf32, #tpu.memory_space<vmem>>, vector<16x16x4xf32>,
    %c1_103 = arith.constant 1 : index
    %c0_104 = arith.constant 0 : index
    %c0_105 = arith.constant 0 : index
    %60 = vector.load %arg12[%c1_103, %c0_104, %c0_105] : memref<18x18x4xf32, #tpu.memory_space<vmem>>, vector<16x16x4xf32>
    %c0_106 = arith.constant 0 : index
    %c0_107 = arith.constant 0 : index
    %c12_108 = arith.constant 12 : index
    %61 = vector.load %arg13[%c0_106, %c0_107, %c12_108] : memref<16x16x36xf32, #tpu.memory_space<vmem>>, vector<16x16x4xf32>
    tpu.vector_store %arg13[%c0_106, %c0_107, %c12_108], %60 {strides = array<i32>} : memref<16x16x36xf32, #tpu.memory_space<vmem>>, vector<16x16x4xf32>,
    %c1_109 = arith.constant 1 : index
    %c1_110 = arith.constant 1 : index
    %c0_111 = arith.constant 0 : index
    %62 = vector.load %arg12[%c1_109, %c1_110, %c0_111] : memref<18x18x4xf32, #tpu.memory_space<vmem>>, vector<16x16x4xf32>
    %c0_112 = arith.constant 0 : index
    %c0_113 = arith.constant 0 : index
    %c16_114 = arith.constant 16 : index
    %63 = vector.load %arg13[%c0_112, %c0_113, %c16_114] : memref<16x16x36xf32, #tpu.memory_space<vmem>>, vector<16x16x4xf32>
    tpu.vector_store %arg13[%c0_112, %c0_113, %c16_114], %62 {strides = array<i32>} : memref<16x16x36xf32, #tpu.memory_space<vmem>>, vector<16x16x4xf32>,
    %c1_115 = arith.constant 1 : index
    %c2_116 = arith.constant 2 : index
    %c0_117 = arith.constant 0 : index
    %64 = vector.load %arg12[%c1_115, %c2_116, %c0_117] : memref<18x18x4xf32, #tpu.memory_space<vmem>>, vector<16x16x4xf32>
    %c0_118 = arith.constant 0 : index
    %c0_119 = arith.constant 0 : index
    %c20_120 = arith.constant 20 : index
    %65 = vector.load %arg13[%c0_118, %c0_119, %c20_120] : memref<16x16x36xf32, #tpu.memory_space<vmem>>, vector<16x16x4xf32>
    tpu.vector_store %arg13[%c0_118, %c0_119, %c20_120], %64 {strides = array<i32>} : memref<16x16x36xf32, #tpu.memory_space<vmem>>, vector<16x16x4xf32>,
    %c2_121 = arith.constant 2 : index
    %c0_122 = arith.constant 0 : index
    %c0_123 = arith.constant 0 : index
    %66 = vector.load %arg12[%c2_121, %c0_122, %c0_123] : memref<18x18x4xf32, #tpu.memory_space<vmem>>, vector<16x16x4xf32>
    %c0_124 = arith.constant 0 : index
    %c0_125 = arith.constant 0 : index
    %c24_126 = arith.constant 24 : index
    %67 = vector.load %arg13[%c0_124, %c0_125, %c24_126] : memref<16x16x36xf32, #tpu.memory_space<vmem>>, vector<16x16x4xf32>
    tpu.vector_store %arg13[%c0_124, %c0_125, %c24_126], %66 {strides = array<i32>} : memref<16x16x36xf32, #tpu.memory_space<vmem>>, vector<16x16x4xf32>,
    %c2_127 = arith.constant 2 : index
    %c1_128 = arith.constant 1 : index
    %c0_129 = arith.constant 0 : index
    %68 = vector.load %arg12[%c2_127, %c1_128, %c0_129] : memref<18x18x4xf32, #tpu.memory_space<vmem>>, vector<16x16x4xf32>
    %c0_130 = arith.constant 0 : index
    %c0_131 = arith.constant 0 : index
    %c28_132 = arith.constant 28 : index
    %69 = vector.load %arg13[%c0_130, %c0_131, %c28_132] : memref<16x16x36xf32, #tpu.memory_space<vmem>>, vector<16x16x4xf32>
    tpu.vector_store %arg13[%c0_130, %c0_131, %c28_132], %68 {strides = array<i32>} : memref<16x16x36xf32, #tpu.memory_space<vmem>>, vector<16x16x4xf32>,
    %c2_133 = arith.constant 2 : index
    %c2_134 = arith.constant 2 : index
    %c0_135 = arith.constant 0 : index
    %70 = vector.load %arg12[%c2_133, %c2_134, %c0_135] : memref<18x18x4xf32, #tpu.memory_space<vmem>>, vector<16x16x4xf32>
    %c0_136 = arith.constant 0 : index
    %c0_137 = arith.constant 0 : index
    %c32_138 = arith.constant 32 : index
    %71 = vector.load %arg13[%c0_136, %c0_137, %c32_138] : memref<16x16x36xf32, #tpu.memory_space<vmem>>, vector<16x16x4xf32>
    tpu.vector_store %arg13[%c0_136, %c0_137, %c32_138], %70 {strides = array<i32>} : memref<16x16x36xf32, #tpu.memory_space<vmem>>, vector<16x16x4xf32>,
    %c0_139 = arith.constant 0 : index
    %c0_140 = arith.constant 0 : index
    %c0_141 = arith.constant 0 : index
    %72 = vector.load %arg13[%c0_139, %c0_140, %c0_141] : memref<16x16x36xf32, #tpu.memory_space<vmem>>, vector<16x16x36xf32>
    %73 = vector.shape_cast %72 : vector<16x16x36xf32> to vector<256x36xf32>
    %c1_142 = arith.constant 1 : index
    %c0_143 = arith.constant 0 : index
    %c0_144 = arith.constant 0 : index
    %74 = vector.load %arg4[%c1_142, %c0_143, %c0_144] : memref<2x36x4xf32, #tpu.memory_space<vmem>>, vector<1x36x4xf32>
    %75 = vector.shape_cast %74 : vector<1x36x4xf32> to vector<36x4xf32>
    %cst_145 = arith.constant dense<0.000000e+00> : vector<256x4xf32>
    %76 = tpu.matmul %73, %75, %cst_145 {dimension_numbers = #tpu.dot_dimension_numbers<[1], [0], [0], [1], [0, 0, 1, 1], [], []>} : vector<256x36xf32>, vector<36x4xf32>, vector<256x4xf32> -> vector<256x4xf32>
    %c1_146 = arith.constant 1 : index
    %c0_147 = arith.constant 0 : index
    %c0_148 = arith.constant 0 : index
    %77 = vector.load %arg5[%c1_146, %c0_147, %c0_148] : memref<2x1x4xf32, #tpu.memory_space<vmem>>, vector<1x1x4xf32>
    %78 = vector.shape_cast %77 : vector<1x1x4xf32> to vector<1x4xf32>
    %79 = vector.broadcast %78 : vector<1x4xf32> to vector<256x4xf32>
    %80 = arith.mulf %76, %79 : vector<256x4xf32>
    %c1_149 = arith.constant 1 : index
    %c0_150 = arith.constant 0 : index
    %c0_151 = arith.constant 0 : index
    %81 = vector.load %arg6[%c1_149, %c0_150, %c0_151] : memref<2x1x4xf32, #tpu.memory_space<vmem>>, vector<1x1x4xf32>
    %82 = vector.shape_cast %81 : vector<1x1x4xf32> to vector<1x4xf32>
    %83 = vector.broadcast %82 : vector<1x4xf32> to vector<256x4xf32>
    %84 = arith.addf %80, %83 : vector<256x4xf32>
    %cst_152 = arith.constant 0.000000e+00 : f32
    %85 = vector.broadcast %cst_152 : f32 to vector<256x4xf32>
    %86 = arith.subf %85, %84 : vector<256x4xf32>
    %87 = math.exp %86 : vector<256x4xf32>
    %cst_153 = arith.constant 1.000000e+00 : f32
    %88 = vector.broadcast %cst_153 : f32 to vector<256x4xf32>
    %89 = arith.addf %88, %87 : vector<256x4xf32>
    %90 = tpu.reciprocal %89 : vector<256x4xf32> -> vector<256x4xf32>
    %91 = arith.mulf %84, %90 : vector<256x4xf32>
    %c0_154 = arith.constant 0 : index
    %c0_155 = arith.constant 0 : index
    %92 = vector.load %arg7[%c0_154, %c0_155] : memref<4x8xf32, #tpu.memory_space<vmem>>, vector<4x8xf32>
    %cst_156 = arith.constant dense<0.000000e+00> : vector<256x8xf32>
    %93 = tpu.matmul %91, %92, %cst_156 {dimension_numbers = #tpu.dot_dimension_numbers<[1], [0], [0], [1], [0, 0, 1, 1], [], []>} : vector<256x4xf32>, vector<4x8xf32>, vector<256x8xf32> -> vector<256x8xf32>
    %c0_157 = arith.constant 0 : index
    %c0_158 = arith.constant 0 : index
    %94 = vector.load %arg8[%c0_157, %c0_158] : memref<4x8xf32, #tpu.memory_space<vmem>>, vector<4x8xf32>
    %cst_159 = arith.constant dense<0.000000e+00> : vector<256x8xf32>
    %95 = tpu.matmul %5, %94, %cst_159 {dimension_numbers = #tpu.dot_dimension_numbers<[1], [0], [0], [1], [0, 0, 1, 1], [], []>} : vector<256x4xf32>, vector<4x8xf32>, vector<256x8xf32> -> vector<256x8xf32>
    %96 = arith.addf %93, %95 : vector<256x8xf32>
    %c0_160 = arith.constant 0 : index
    %c0_161 = arith.constant 0 : index
    %97 = vector.load %arg9[%c0_160, %c0_161] : memref<1x8xf32, #tpu.memory_space<vmem>>, vector<1x8xf32>
    %98 = vector.broadcast %97 : vector<1x8xf32> to vector<256x8xf32>
    %99 = arith.mulf %96, %98 : vector<256x8xf32>
    %c0_162 = arith.constant 0 : index
    %c0_163 = arith.constant 0 : index
    %100 = vector.load %arg10[%c0_162, %c0_163] : memref<1x8xf32, #tpu.memory_space<vmem>>, vector<1x8xf32>
    %101 = vector.broadcast %100 : vector<1x8xf32> to vector<256x8xf32>
    %102 = arith.addf %99, %101 : vector<256x8xf32>
    %cst_164 = arith.constant 0.000000e+00 : f32
    %103 = vector.broadcast %cst_164 : f32 to vector<256x8xf32>
    %104 = arith.subf %103, %102 : vector<256x8xf32>
    %105 = math.exp %104 : vector<256x8xf32>
    %cst_165 = arith.constant 1.000000e+00 : f32
    %106 = vector.broadcast %cst_165 : f32 to vector<256x8xf32>
    %107 = arith.addf %106, %105 : vector<256x8xf32>
    %108 = tpu.reciprocal %107 : vector<256x8xf32> -> vector<256x8xf32>
    %109 = arith.mulf %102, %108 : vector<256x8xf32>
    %c0_166 = arith.constant 0 : index
    %c0_167 = arith.constant 0 : index
    %c0_168 = arith.constant 0 : index
    %110 = vector.load %arg11[%c0_166, %c0_167, %c0_168] : memref<1x256x8xf32, #tpu.memory_space<vmem>>, vector<1x256x8xf32>
    %111 = vector.shape_cast %110 : vector<1x256x8xf32> to vector<256x8xf32>
    %112 = vector.shape_cast %109 : vector<256x8xf32> to vector<1x256x8xf32>
    tpu.vector_store %arg11[%c0_166, %c0_167, %c0_168], %112 {strides = array<i32>} : memref<1x256x8xf32, #tpu.memory_space<vmem>>, vector<1x256x8xf32>,
    return
  }
  func.func @transform_0(%arg0: i32) -> (i32, i32, i32) {
    %c0_i32 = arith.constant 0 : i32
    %c0_i32_0 = arith.constant 0 : i32
    %c0_i32_1 = arith.constant 0 : i32
    return %arg0, %c0_i32, %c0_i32_0 : i32, i32, i32
  }
  func.func @transform_1(%arg0: i32) -> (i32, i32) {
    %c0_i32 = arith.constant 0 : i32
    %c0_i32_0 = arith.constant 0 : i32
    %c0_i32_1 = arith.constant 0 : i32
    return %c0_i32, %c0_i32_0 : i32, i32
  }
  func.func @transform_2(%arg0: i32) -> (i32, i32) {
    %c0_i32 = arith.constant 0 : i32
    %c0_i32_0 = arith.constant 0 : i32
    %c0_i32_1 = arith.constant 0 : i32
    return %c0_i32, %c0_i32_0 : i32, i32
  }
  func.func @transform_3(%arg0: i32) -> (i32, i32, i32) {
    %c0_i32 = arith.constant 0 : i32
    %c0_i32_0 = arith.constant 0 : i32
    %c0_i32_1 = arith.constant 0 : i32
    %c0_i32_2 = arith.constant 0 : i32
    return %c0_i32, %c0_i32_0, %c0_i32_1 : i32, i32, i32
  }
  func.func @transform_4(%arg0: i32) -> (i32, i32, i32) {
    %c0_i32 = arith.constant 0 : i32
    %c0_i32_0 = arith.constant 0 : i32
    %c0_i32_1 = arith.constant 0 : i32
    %c0_i32_2 = arith.constant 0 : i32
    return %c0_i32, %c0_i32_0, %c0_i32_1 : i32, i32, i32
  }
  func.func @transform_5(%arg0: i32) -> (i32, i32, i32) {
    %c0_i32 = arith.constant 0 : i32
    %c0_i32_0 = arith.constant 0 : i32
    %c0_i32_1 = arith.constant 0 : i32
    %c0_i32_2 = arith.constant 0 : i32
    return %c0_i32, %c0_i32_0, %c0_i32_1 : i32, i32, i32
  }
  func.func @transform_6(%arg0: i32) -> (i32, i32) {
    %c0_i32 = arith.constant 0 : i32
    %c0_i32_0 = arith.constant 0 : i32
    %c0_i32_1 = arith.constant 0 : i32
    return %c0_i32, %c0_i32_0 : i32, i32
  }
  func.func @transform_7(%arg0: i32) -> (i32, i32) {
    %c0_i32 = arith.constant 0 : i32
    %c0_i32_0 = arith.constant 0 : i32
    %c0_i32_1 = arith.constant 0 : i32
    return %c0_i32, %c0_i32_0 : i32, i32
  }
  func.func @transform_8(%arg0: i32) -> (i32, i32) {
    %c0_i32 = arith.constant 0 : i32
    %c0_i32_0 = arith.constant 0 : i32
    %c0_i32_1 = arith.constant 0 : i32
    return %c0_i32, %c0_i32_0 : i32, i32
  }
  func.func @transform_9(%arg0: i32) -> (i32, i32) {
    %c0_i32 = arith.constant 0 : i32
    %c0_i32_0 = arith.constant 0 : i32
    %c0_i32_1 = arith.constant 0 : i32
    return %c0_i32, %c0_i32_0 : i32, i32
  }
  func.func @transform_10(%arg0: i32) -> (i32, i32, i32) {
    %c0_i32 = arith.constant 0 : i32
    %c0_i32_0 = arith.constant 0 : i32
    %c0_i32_1 = arith.constant 0 : i32
    return %arg0, %c0_i32, %c0_i32_0 : i32, i32, i32
  }
}

</mosaic_0001>

<llo_original>
// kernel: tpu_custom_call.1
$region0: #{tpu_custom_call.1}
  #allocation0 [shape = 'u32[]', space=smem, size = 0x4, offset = 0x4, fixed_abs, tag = 'smem constant byte address 0x4 - core index']
  #allocation1 [shape = 'u32[144,128]{1,0:T(1,128)}', space=vmem, size = 0x12000, scoped, tag = 'internal scratch']
  #allocation2 [shape = 'f32[18,18,4]{2,1,0:T(8,128)}', space=vmem, size = 0x36000, scoped, tag = 'scratch operand']
  #allocation3 [shape = 'f32[16,16,36]{2,1,0:T(8,128)}', space=vmem, size = 0x20000, scoped, tag = 'scratch operand']
  %s0 = inlined_call_operand.vmem [shape: f32[2,256,4], index: 0, kind: input, shape index: {}]
  %s1 = inlined_call_operand.vmem [shape: f32[4,4], index: 1, kind: input, shape index: {}]
  %s2 = inlined_call_operand.vmem [shape: f32[4,4], index: 2, kind: input, shape index: {}]
  %s3 = inlined_call_operand.vmem [shape: f32[2,36,4], index: 3, kind: input, shape index: {}]
  %s4 = inlined_call_operand.vmem [shape: f32[2,1,4], index: 4, kind: input, shape index: {}]
  %s5 = inlined_call_operand.vmem [shape: f32[2,1,4], index: 5, kind: input, shape index: {}]
  %s6 = inlined_call_operand.vmem [shape: f32[4,8], index: 6, kind: input, shape index: {}]
  %s7 = inlined_call_operand.vmem [shape: f32[4,8], index: 7, kind: input, shape index: {}]
  %s8 = inlined_call_operand.vmem [shape: f32[1,8], index: 8, kind: input, shape index: {}]
  %s9 = inlined_call_operand.vmem [shape: f32[1,8], index: 9, kind: input, shape index: {}]
  %s10 = inlined_call_operand.vmem [shape: f32[2,256,8], index: 10, kind: output, shape index: {}]
  %s11 = sld [smem:[#allocation0]]
  $region73: #{tpu_custom_call.1} parent=0
    _
  %s13 = ssub.s32 1, %s11
  %s14 = scalar_select 0, %s13, %s11
  loop: start=0, step=1, limit=4
  $region2: #{tpu_custom_call.1} parent=0 // loop_pre_header
    _
  $region3: #{tpu_custom_call.1} parent=0 // loop_header
    %s16 = sphi 0, %s20
    %p17 = scmp.ge.s32.totalorder %s16, 4
    %s26 = sphi 0, %s28
    %s29 = sphi 0, %s26
    %s30 = sphi 0, %s29
    %s46 = sphi 0, %s30
    %s50 = sphi 0, %s50
    %s52 = sphi 0, %s50
    %s53 = sphi 0, %s52
    %s67 = sphi 0, %s53
    %s71 = sphi 0, %s71
    %s73 = sphi 0, %s71
    %s74 = sphi 0, %s73
    %s88 = sphi 0, %s74
    %s92 = sphi 0, %s92
    %s94 = sphi 0, %s92
    %s95 = sphi 0, %s94
    %s109 = sphi 0, %s95
    %s113 = sphi 0, %s113
    %s115 = sphi 0, %s113
    %s116 = sphi 0, %s115
    %s130 = sphi 0, %s116
    %s134 = sphi 0, %s134
    %s136 = sphi 0, %s134
    %s137 = sphi 0, %s136
    %s151 = sphi 0, %s137
    %s155 = sphi 0, %s155
    %s157 = sphi 0, %s155
    %s158 = sphi 0, %s157
    %s172 = sphi 0, %s158
    %s176 = sphi 0, %s176
    %s178 = sphi 0, %s176
    %s179 = sphi 0, %s178
    %s193 = sphi 0, %s179
    %s197 = sphi 0, %s197
    %s199 = sphi 0, %s197
    %s200 = sphi 0, %s199
    %s214 = sphi 0, %s200
    %s218 = sphi 0, %s218
    %s220 = sphi 0, %s218
    %s221 = sphi 0, %s220
    %s235 = sphi 0, %s221
    %s241 = sphi 0, %s243
    %s244 = sphi 0, %s241
    %s245 = sphi 0, %s244
    %s261 = sphi 0, %s245
  $region4: #{tpu_custom_call.1} parent=0 // loop_header_branch
    %19 = sbr.rel (%p17) target = $region8
  $region5: #{tpu_custom_call.1} parent=0 // loop_body
    %s21 = ssub.s32 %s16, 1
    %s22 = ssub.s32 %s16, 2
    %s23 = sadd.s32 %s16, 1
    %s24 = ssub.s32 %s16, %s23
    %p25 = scmp.eq.s32.totalorder %s24, 0
    %s27 = sadd.s32 %s26, 1
    %s28 = scalar_select %p25, %s26, %s27
    %p31 = pneg %p25
    %p32 = scmp.eq.s32.totalorder %s16, 1
    %p33 = por %p31, %p32
    %p34 = scmp.ne.s32.totalorder %s26, %s29
    %p35 = scmp.eq.s32.totalorder %s16, 0
    %p36 = por %p34, %p35
    %p37 = scmp.ne.s32.totalorder %s26, %s29
    %p38 = scmp.eq.s32.totalorder %s21, 1
    %p39 = por %p37, %p38
    %p40 = scmp.ne.s32.totalorder %s29, %s30
    %p41 = scmp.eq.s32.totalorder %s21, 0
    %p42 = por %p40, %p41
    %p43 = scmp.ne.s32.totalorder %s29, %s30
    %p44 = scmp.eq.s32.totalorder %s22, 1
    %p45 = por %p43, %p44
    %p47 = scmp.ne.s32.totalorder %s30, %s46
    %p48 = scmp.eq.s32.totalorder %s22, 0
    %p49 = por %p47, %p48
    %s51 = sadd.s32 %s50, 1
    %p54 = scmp.eq.s32.totalorder %s16, 1
    %p55 = scmp.ne.s32.totalorder %s50, %s52
    %p56 = scmp.eq.s32.totalorder %s16, 0
    %p57 = por %p55, %p56
    %p58 = scmp.ne.s32.totalorder %s50, %s52
    %p59 = scmp.eq.s32.totalorder %s21, 1
    %p60 = por %p58, %p59
    %p61 = scmp.ne.s32.totalorder %s52, %s53
    %p62 = scmp.eq.s32.totalorder %s21, 0
    %p63 = por %p61, %p62
    %p64 = scmp.ne.s32.totalorder %s52, %s53
    %p65 = scmp.eq.s32.totalorder %s22, 1
    %p66 = por %p64, %p65
    %p68 = scmp.ne.s32.totalorder %s53, %s67
    %p69 = scmp.eq.s32.totalorder %s22, 0
    %p70 = por %p68, %p69
    %s72 = sadd.s32 %s71, 1
    %p75 = scmp.eq.s32.totalorder %s16, 1
    %p76 = scmp.ne.s32.totalorder %s71, %s73
    %p77 = scmp.eq.s32.totalorder %s16, 0
    %p78 = por %p76, %p77
    %p79 = scmp.ne.s32.totalorder %s71, %s73
    %p80 = scmp.eq.s32.totalorder %s21, 1
    %p81 = por %p79, %p80
    %p82 = scmp.ne.s32.totalorder %s73, %s74
    %p83 = scmp.eq.s32.totalorder %s21, 0
    %p84 = por %p82, %p83
    %p85 = scmp.ne.s32.totalorder %s73, %s74
    %p86 = scmp.eq.s32.totalorder %s22, 1
    %p87 = por %p85, %p86
    %p89 = scmp.ne.s32.totalorder %s74, %s88
    %p90 = scmp.eq.s32.totalorder %s22, 0
    %p91 = por %p89, %p90
    %s93 = sadd.s32 %s92, 1
    %p96 = scmp.eq.s32.totalorder %s16, 1
    %p97 = scmp.ne.s32.totalorder %s92, %s94
    %p98 = scmp.eq.s32.totalorder %s16, 0
    %p99 = por %p97, %p98
    %p100 = scmp.ne.s32.totalorder %s92, %s94
    %p101 = scmp.eq.s32.totalorder %s21, 1
    %p102 = por %p100, %p101
    %p103 = scmp.ne.s32.totalorder %s94, %s95
    %p104 = scmp.eq.s32.totalorder %s21, 0
    %p105 = por %p103, %p104
    %p106 = scmp.ne.s32.totalorder %s94, %s95
    %p107 = scmp.eq.s32.totalorder %s22, 1
    %p108 = por %p106, %p107
    %p110 = scmp.ne.s32.totalorder %s95, %s109
    %p111 = scmp.eq.s32.totalorder %s22, 0
    %p112 = por %p110, %p111
    %s114 = sadd.s32 %s113, 1
    %p117 = scmp.eq.s32.totalorder %s16, 1
    %p118 = scmp.ne.s32.totalorder %s113, %s115
    %p119 = scmp.eq.s32.totalorder %s16, 0
    %p120 = por %p118, %p119
    %p121 = scmp.ne.s32.totalorder %s113, %s115
    %p122 = scmp.eq.s32.totalorder %s21, 1
    %p123 = por %p121, %p122
    %p124 = scmp.ne.s32.totalorder %s115, %s116
    %p125 = scmp.eq.s32.totalorder %s21, 0
    %p126 = por %p124, %p125
    %p127 = scmp.ne.s32.totalorder %s115, %s116
    %p128 = scmp.eq.s32.totalorder %s22, 1
    %p129 = por %p127, %p128
    %p131 = scmp.ne.s32.totalorder %s116, %s130
    %p132 = scmp.eq.s32.totalorder %s22, 0
    %p133 = por %p131, %p132
    %s135 = sadd.s32 %s134, 1
    %p138 = scmp.eq.s32.totalorder %s16, 1
    %p139 = scmp.ne.s32.totalorder %s134, %s136
    %p140 = scmp.eq.s32.totalorder %s16, 0
    %p141 = por %p139, %p140
    %p142 = scmp.ne.s32.totalorder %s134, %s136
    %p143 = scmp.eq.s32.totalorder %s21, 1
    %p144 = por %p142, %p143
    %p145 = scmp.ne.s32.totalorder %s136, %s137
    %p146 = scmp.eq.s32.totalorder %s21, 0
    %p147 = por %p145, %p146
    %p148 = scmp.ne.s32.totalorder %s136, %s137
    %p149 = scmp.eq.s32.totalorder %s22, 1
    %p150 = por %p148, %p149
    %p152 = scmp.ne.s32.totalorder %s137, %s151
    %p153 = scmp.eq.s32.totalorder %s22, 0
    %p154 = por %p152, %p153
    %s156 = sadd.s32 %s155, 1
    %p159 = scmp.eq.s32.totalorder %s16, 1
    %p160 = scmp.ne.s32.totalorder %s155, %s157
    %p161 = scmp.eq.s32.totalorder %s16, 0
    %p162 = por %p160, %p161
    %p163 = scmp.ne.s32.totalorder %s155, %s157
    %p164 = scmp.eq.s32.totalorder %s21, 1
    %p165 = por %p163, %p164
    %p166 = scmp.ne.s32.totalorder %s157, %s158
    %p167 = scmp.eq.s32.totalorder %s21, 0
    %p168 = por %p166, %p167
    %p169 = scmp.ne.s32.totalorder %s157, %s158
    %p170 = scmp.eq.s32.totalorder %s22, 1
    %p171 = por %p169, %p170
    %p173 = scmp.ne.s32.totalorder %s158, %s172
    %p174 = scmp.eq.s32.totalorder %s22, 0
    %p175 = por %p173, %p174
    %s177 = sadd.s32 %s176, 1
    %p180 = scmp.eq.s32.totalorder %s16, 1
    %p181 = scmp.ne.s32.totalorder %s176, %s178
    %p182 = scmp.eq.s32.totalorder %s16, 0
    %p183 = por %p181, %p182
    %p184 = scmp.ne.s32.totalorder %s176, %s178
    %p185 = scmp.eq.s32.totalorder %s21, 1
    %p186 = por %p184, %p185
    %p187 = scmp.ne.s32.totalorder %s178, %s179
    %p188 = scmp.eq.s32.totalorder %s21, 0
    %p189 = por %p187, %p188
    %p190 = scmp.ne.s32.totalorder %s178, %s179
    %p191 = scmp.eq.s32.totalorder %s22, 1
    %p192 = por %p190, %p191
    %p194 = scmp.ne.s32.totalorder %s179, %s193
    %p195 = scmp.eq.s32.totalorder %s22, 0
    %p196 = por %p194, %p195
    %s198 = sadd.s32 %s197, 1
    %p201 = scmp.eq.s32.totalorder %s16, 1
    %p202 = scmp.ne.s32.totalorder %s197, %s199
    %p203 = scmp.eq.s32.totalorder %s16, 0
    %p204 = por %p202, %p203
    %p205 = scmp.ne.s32.totalorder %s197, %s199
    %p206 = scmp.eq.s32.totalorder %s21, 1
    %p207 = por %p205, %p206
    %p208 = scmp.ne.s32.totalorder %s199, %s200
    %p209 = scmp.eq.s32.totalorder %s21, 0
    %p210 = por %p208, %p209
    %p211 = scmp.ne.s32.totalorder %s199, %s200
    %p212 = scmp.eq.s32.totalorder %s22, 1
    %p213 = por %p211, %p212
    %p215 = scmp.ne.s32.totalorder %s200, %s214
    %p216 = scmp.eq.s32.totalorder %s22, 0
    %p217 = por %p215, %p216
    %s219 = sadd.s32 %s218, 1
    %p222 = scmp.eq.s32.totalorder %s16, 1
    %p223 = scmp.ne.s32.totalorder %s218, %s220
    %p224 = scmp.eq.s32.totalorder %s16, 0
    %p225 = por %p223, %p224
    %p226 = scmp.ne.s32.totalorder %s218, %s220
    %p227 = scmp.eq.s32.totalorder %s21, 1
    %p228 = por %p226, %p227
    %p229 = scmp.ne.s32.totalorder %s220, %s221
    %p230 = scmp.eq.s32.totalorder %s21, 0
    %p231 = por %p229, %p230
    %p232 = scmp.ne.s32.totalorder %s220, %s221
    %p233 = scmp.eq.s32.totalorder %s22, 1
    %p234 = por %p232, %p233
    %p236 = scmp.ne.s32.totalorder %s221, %s235
    %p237 = scmp.eq.s32.totalorder %s22, 0
    %p238 = por %p236, %p237
    %s239 = ssub.s32 %s16, %s23
    %p240 = scmp.eq.s32.totalorder %s239, 0
    %s242 = sadd.s32 %s241, 1
    %s243 = scalar_select %p240, %s241, %s242
    %p246 = pneg %p240
    %p247 = scmp.eq.s32.totalorder %s16, 1
    %p248 = por %p246, %p247
    %p249 = scmp.ne.s32.totalorder %s241, %s244
    %p250 = scmp.eq.s32.totalorder %s16, 0
    %p251 = por %p249, %p250
    %p252 = scmp.ne.s32.totalorder %s241, %s244
    %p253 = scmp.eq.s32.totalorder %s21, 1
    %p254 = por %p252, %p253
    %p255 = scmp.ne.s32.totalorder %s244, %s245
    %p256 = scmp.eq.s32.totalorder %s21, 0
    %p257 = por %p255, %p256
    %p258 = scmp.ne.s32.totalorder %s244, %s245
    %p259 = scmp.eq.s32.totalorder %s22, 1
    %p260 = por %p258, %p259
    %p262 = scmp.ne.s32.totalorder %s245, %s261
    %p263 = scmp.eq.s32.totalorder %s22, 0
    %p264 = por %p262, %p263
    %p265 = scmp.le.s32.totalorder 1, %s16
    %p266 = scmp.lt.s32.totalorder %s16, 3
    %p267 = pnand %p265, %p266
    %p268 = pneg %p267
    // Predicated region
    $region9: #{tpu_custom_call.1} parent=5 // pred_check
      _
    $region10: #{tpu_custom_call.1} parent=5 // pred_check_branch
      %270 = sbr.rel (%p267) target = $region12
    $region11: #{tpu_custom_call.1} parent=5 // pred_region
      %s271 = ssub.s32 %s16, 1
      // Predicated region
      $region13: #{tpu_custom_call.1} parent=11 // pred_check
        %p272 = pneg %p63
      $region14: #{tpu_custom_call.1} parent=11 // pred_check_branch
        %274 = sbr.rel (%p272) target = $region16
      $region15: #{tpu_custom_call.1} parent=11 // pred_region
        _
      $region16: #{tpu_custom_call.1} parent=11 // pred_fallthru
        _
      // Predicated region
      $region17: #{tpu_custom_call.1} parent=11 // pred_check
        %p275 = pneg %p84
      $region18: #{tpu_custom_call.1} parent=11 // pred_check_branch
        %277 = sbr.rel (%p275) target = $region20
      $region19: #{tpu_custom_call.1} parent=11 // pred_region
        _
      $region20: #{tpu_custom_call.1} parent=11 // pred_fallthru
        _
      // Predicated region
      $region21: #{tpu_custom_call.1} parent=11 // pred_check
        %p278 = pneg %p105
      $region22: #{tpu_custom_call.1} parent=11 // pred_check_branch
        %280 = sbr.rel (%p278) target = $region24
      $region23: #{tpu_custom_call.1} parent=11 // pred_region
        _
      $region24: #{tpu_custom_call.1} parent=11 // pred_fallthru
        _
      // Predicated region
      $region25: #{tpu_custom_call.1} parent=11 // pred_check
        %p281 = pneg %p126
      $region26: #{tpu_custom_call.1} parent=11 // pred_check_branch
        %283 = sbr.rel (%p281) target = $region28
      $region27: #{tpu_custom_call.1} parent=11 // pred_region
        _
      $region28: #{tpu_custom_call.1} parent=11 // pred_fallthru
        _
      // Predicated region
      $region29: #{tpu_custom_call.1} parent=11 // pred_check
        %p284 = pneg %p147
      $region30: #{tpu_custom_call.1} parent=11 // pred_check_branch
        %286 = sbr.rel (%p284) target = $region32
      $region31: #{tpu_custom_call.1} parent=11 // pred_region
        _
      $region32: #{tpu_custom_call.1} parent=11 // pred_fallthru
        _
      // Predicated region
      $region33: #{tpu_custom_call.1} parent=11 // pred_check
        %p287 = pneg %p168
      $region34: #{tpu_custom_call.1} parent=11 // pred_check_branch
        %289 = sbr.rel (%p287) target = $region36
      $region35: #{tpu_custom_call.1} parent=11 // pred_region
        _
      $region36: #{tpu_custom_call.1} parent=11 // pred_fallthru
        _
      // Predicated region
      $region37: #{tpu_custom_call.1} parent=11 // pred_check
        %p290 = pneg %p189
      $region38: #{tpu_custom_call.1} parent=11 // pred_check_branch
        %292 = sbr.rel (%p290) target = $region40
      $region39: #{tpu_custom_call.1} parent=11 // pred_region
        _
      $region40: #{tpu_custom_call.1} parent=11 // pred_fallthru
        _
      // Predicated region
      $region41: #{tpu_custom_call.1} parent=11 // pred_check
        %p293 = pneg %p210
      $region42: #{tpu_custom_call.1} parent=11 // pred_check_branch
        %295 = sbr.rel (%p293) target = $region44
      $region43: #{tpu_custom_call.1} parent=11 // pred_region
        _
      $region44: #{tpu_custom_call.1} parent=11 // pred_fallthru
        _
      // Predicated region
      $region45: #{tpu_custom_call.1} parent=11 // pred_check
        %p296 = pneg %p231
      $region46: #{tpu_custom_call.1} parent=11 // pred_check_branch
        %298 = sbr.rel (%p296) target = $region48
      $region47: #{tpu_custom_call.1} parent=11 // pred_region
        _
      $region48: #{tpu_custom_call.1} parent=11 // pred_fallthru
        _
    $region12: #{tpu_custom_call.1} parent=5 // pred_fallthru
      _
    %p299 = scmp.lt.s32.totalorder %s16, 2
    // Predicated region
    $region49: #{tpu_custom_call.1} parent=5 // pred_check
      %p300 = pneg %p299
    $region50: #{tpu_custom_call.1} parent=5 // pred_check_branch
      %302 = sbr.rel (%p300) target = $region52
    $region51: #{tpu_custom_call.1} parent=5 // pred_region
      // Predicated region
      $region53: #{tpu_custom_call.1} parent=51 // pred_check
        %p303 = pneg %p36
      $region54: #{tpu_custom_call.1} parent=51 // pred_check_branch
        %305 = sbr.rel (%p303) target = $region56
      $region55: #{tpu_custom_call.1} parent=51 // pred_region
        %p306 = scmp.lt.s32.totalorder %s16, 1
        %s307 = scalar_select %p306, %s16, 1
        %s308 = smul.addr %s307, 32
        %s309 = smul.addr %s308, 8
        %s310 = scalar_lea.vmem %s0, %s309
      $region56: #{tpu_custom_call.1} parent=51 // pred_fallthru
        _
    $region52: #{tpu_custom_call.1} parent=5 // pred_fallthru
      _
    %p311 = scmp.le.s32.totalorder 1, %s16
    %p312 = scmp.lt.s32.totalorder %s16, 3
    %p313 = pnand %p311, %p312
    %p314 = pneg %p313
    // Predicated region
    $region57: #{tpu_custom_call.1} parent=5 // pred_check
      _
    $region58: #{tpu_custom_call.1} parent=5 // pred_check_branch
      %316 = sbr.rel (%p313) target = $region60
    $region59: #{tpu_custom_call.1} parent=5 // pred_region
      %s317 = ssub.s32 %s16, 1
      %p318 = scmp.lt.s32.totalorder %s21, 1
      %s319 = scalar_select %p318, %s21, 1
      %s320 = smul.addr %s319, 32
      %s321 = smul.addr %s320, 8
      %s322 = scalar_lea.vmem %s0, %s321
      %p323 = pneg %p42
      %p324 = pneg %p39
      %p325 = pneg %p63
      %p326 = pneg %p60
      %p327 = pneg %p84
      %p328 = pneg %p81
      %p329 = pneg %p105
      %p330 = pneg %p102
      %p331 = pneg %p126
      %p332 = pneg %p123
      %p333 = pneg %p147
      %p334 = pneg %p144
      %p335 = pneg %p168
      %p336 = pneg %p165
      %p337 = pneg %p189
      %p338 = pneg %p186
      %p339 = pneg %p210
      %p340 = pneg %p207
      %p341 = pneg %p231
      %p342 = pneg %p228
      %p343 = pneg %p257
      %p344 = pneg %p254
      %p345 = scmp.lt.s32.totalorder %s21, 1
      %s346 = scalar_select %p345, %s21, 1
      %s347 = smul.addr %s346, 32
      %s348 = smul.addr %s347, 8
      %s349 = scalar_lea.vmem %s10, %s348
      %p350 = scmp.lt.s32.totalorder %s21, 1
      %s351 = scalar_select %p350, %s21, 1
      %s352 = smul.addr %s351, 32
      %s353 = smul.addr %s352, 8
      %s354 = scalar_lea.vmem %s0, %s353
      %p355 = scmp.lt.s32.totalorder %s21, 1
      %s356 = scalar_select %p355, %s21, 1
      %s357 = smul.addr %s356, 32
      %s358 = smul.addr %s357, 8
      %s359 = scalar_lea.vmem %s10, %s358
      %v360 = vld [vmem:[%s354] sm:$0xff]
      %v361 = vld [vmem:[%s354 + $0x8] sm:$0xff]
      %v362 = vld [vmem:[%s354 + $0x10] sm:$0xff]
      %v363 = vld [vmem:[%s354 + $0x18] sm:$0xff]
      %v364 = vld [vmem:[%s354 + $0x20] sm:$0xff]
      %v365 = vld [vmem:[%s354 + $0x28] sm:$0xff]
      %v366 = vld [vmem:[%s354 + $0x30] sm:$0xff]
      %v367 = vld [vmem:[%s354 + $0x38] sm:$0xff]
      %v368 = vld [vmem:[%s354 + $0x40] sm:$0xff]
      %v369 = vld [vmem:[%s354 + $0x48] sm:$0xff]
      %v370 = vld [vmem:[%s354 + $0x50] sm:$0xff]
      %v371 = vld [vmem:[%s354 + $0x58] sm:$0xff]
      %v372 = vld [vmem:[%s354 + $0x60] sm:$0xff]
      %v373 = vld [vmem:[%s354 + $0x68] sm:$0xff]
      %v374 = vld [vmem:[%s354 + $0x70] sm:$0xff]
      %v375 = vld [vmem:[%s354 + $0x78] sm:$0xff]
      %v376 = vld [vmem:[%s354 + $0x80] sm:$0xff]
      %v377 = vld [vmem:[%s354 + $0x88] sm:$0xff]
      %v378 = vld [vmem:[%s354 + $0x90] sm:$0xff]
      %v379 = vld [vmem:[%s354 + $0x98] sm:$0xff]
      %v380 = vld [vmem:[%s354 + $0xa0] sm:$0xff]
      %v381 = vld [vmem:[%s354 + $0xa8] sm:$0xff]
      %v382 = vld [vmem:[%s354 + $0xb0] sm:$0xff]
      %v383 = vld [vmem:[%s354 + $0xb8] sm:$0xff]
      %v384 = vld [vmem:[%s354 + $0xc0] sm:$0xff]
      %v385 = vld [vmem:[%s354 + $0xc8] sm:$0xff]
      %v386 = vld [vmem:[%s354 + $0xd0] sm:$0xff]
      %v387 = vld [vmem:[%s354 + $0xd8] sm:$0xff]
      %v388 = vld [vmem:[%s354 + $0xe0] sm:$0xff]
      %v389 = vld [vmem:[%s354 + $0xe8] sm:$0xff]
      %v390 = vld [vmem:[%s354 + $0xf0] sm:$0xff]
      %v391 = vld [vmem:[%s354 + $0xf8] sm:$0xff]
      %v392 = vld [vmem:[%s1] sm:$0xf]
      %vm393 = vcmask 31744
      %v395 = vsel %vm393, %v360, 0
      %v398 = vsel %vm393, %v361, 0
      %v401 = vsel %vm393, %v362, 0
      %v404 = vsel %vm393, %v363, 0
      %v407 = vsel %vm393, %v364, 0
      %v410 = vsel %vm393, %v365, 0
      %v413 = vsel %vm393, %v366, 0
      %v416 = vsel %vm393, %v367, 0
      %v419 = vsel %vm393, %v368, 0
      %v422 = vsel %vm393, %v369, 0
      %v425 = vsel %vm393, %v370, 0
      %v428 = vsel %vm393, %v371, 0
      %v431 = vsel %vm393, %v372, 0
      %v434 = vsel %vm393, %v373, 0
      %v437 = vsel %vm393, %v374, 0
      %v440 = vsel %vm393, %v375, 0
      %v443 = vsel %vm393, %v376, 0
      %v446 = vsel %vm393, %v377, 0
      %v449 = vsel %vm393, %v378, 0
      %v452 = vsel %vm393, %v379, 0
      %v455 = vsel %vm393, %v380, 0
      %v458 = vsel %vm393, %v381, 0
      %v461 = vsel %vm393, %v382, 0
      %v464 = vsel %vm393, %v383, 0
      %v467 = vsel %vm393, %v384, 0
      %v470 = vsel %vm393, %v385, 0
      %v473 = vsel %vm393, %v386, 0
      %v476 = vsel %vm393, %v387, 0
      %v479 = vsel %vm393, %v388, 0
      %v482 = vsel %vm393, %v389, 0
      %v485 = vsel %vm393, %v390, 0
      %v488 = vsel %vm393, %v391, 0
      %vm490 = vcmask 1043456
      %v492 = vsel %vm490, %v392, 0
      %494 = vmatprep.subr.mxu0 0.0
      %495 = vmatpush1.msra.mxu0 %v492
      %496 = vmatprep.subr.mxu0 0.0
      %497 = vmatpush1.msra.mxu0 0.0
      %498 = vmatprep.subr.mxu0 0.0
      %499 = vmatpush1.msra.mxu0 0.0
      %500 = vmatprep.subr.mxu0 0.0
      %501 = vmatpush1.msra.mxu0 0.0
      %502 = vmatprep.subr.mxu0 0.0
      %503 = vmatpush1.msra.mxu0 0.0
      %504 = vmatprep.subr.mxu0 0.0
      %505 = vmatpush1.msra.mxu0 0.0
      %506 = vmatprep.subr.mxu0 0.0
      %507 = vmatpush1.msra.mxu0 0.0
      %508 = vmatprep.subr.mxu0 0.0
      %509 = vmatpush1.msra.mxu0 0.0
      %510 = vmatprep.subr.mxu0 0.0
      %511 = vmatpush1.msra.mxu0 0.0
      %512 = vmatprep.subr.mxu0 0.0
      %513 = vmatpush1.msra.mxu0 0.0
      %514 = vmatprep.subr.mxu0 0.0
      %515 = vmatpush1.msra.mxu0 0.0
      %516 = vmatprep.subr.mxu0 0.0
      %517 = vmatpush1.msra.mxu0 0.0
      %518 = vmatprep.subr.mxu0 0.0
      %519 = vmatpush1.msra.mxu0 0.0
      %520 = vmatprep.subr.mxu0 0.0
      %521 = vmatpush1.msra.mxu0 0.0
      %522 = vmatprep.subr.mxu0 0.0
      %523 = vmatpush1.msra.mxu0 0.0
      %524 = vmatprep.subr.mxu0 0.0
      %525 = vmatpush1.msra.mxu0 0.0
      %526 = vmatprep.subr.mxu0 0.0
      %527 = vmatpush1.msra.mxu0 0.0
      %528 = vmatprep.subr.mxu0 0.0
      %529 = vmatpush1.msra.mxu0 0.0
      %530 = vmatprep.subr.mxu0 0.0
      %531 = vmatpush1.msra.mxu0 0.0
      %532 = vmatprep.subr.mxu0 0.0
      %533 = vmatpush1.msra.mxu0 0.0
      %534 = vmatprep.subr.mxu0 0.0
      %535 = vmatpush1.msra.mxu0 0.0
      %536 = vmatprep.subr.mxu0 0.0
      %537 = vmatpush1.msra.mxu0 0.0
      %538 = vmatprep.subr.mxu0 0.0
      %539 = vmatpush1.msra.mxu0 0.0
      %540 = vmatprep.subr.mxu0 0.0
      %541 = vmatpush1.msra.mxu0 0.0
      %542 = vmatprep.subr.mxu0 0.0
      %543 = vmatpush1.msra.mxu0 0.0
      %544 = vmatprep.subr.mxu0 0.0
      %545 = vmatpush1.msra.mxu0 0.0
      %546 = vmatprep.subr.mxu0 0.0
      %547 = vmatpush1.msra.mxu0 0.0
      %548 = vmatprep.subr.mxu0 0.0
      %549 = vmatpush1.msra.mxu0 0.0
      %550 = vmatprep.subr.mxu0 0.0
      %551 = vmatpush1.msra.mxu0 0.0
      %552 = vmatprep.subr.mxu0 0.0
      %553 = vmatpush1.msra.mxu0 0.0
      %554 = vmatprep.subr.mxu0 0.0
      %555 = vmatpush1.msra.mxu0 0.0
      %556 = vmatprep.subr.mxu0 0.0
      %557 = vmatpush1.msra.mxu0 0.0
      %558 = vmatprep.mubr.f32.mxu0 0.0
      %559 = vmatmul.mubr.f32.gmra.mrb[0].mxu0 %v395
      %v560 = vpop.f32.mrb[0].mxu0
      %v561 = vadd.f32 0.0, %v560
      %v562 = vpop.f32.mrb[0].mxu0
      %563 = vmatprep.mubr.f32.mxu0 0.0
      %564 = vmatmul.mubr.f32.gmra.mrb[0].mxu0 %v398
      %v565 = vpop.f32.mrb[0].mxu0
      %v566 = vadd.f32 0.0, %v565
      %v567 = vpop.f32.mrb[0].mxu0
      %568 = vmatprep.mubr.f32.mxu0 0.0
      %569 = vmatmul.mubr.f32.gmra.mrb[0].mxu0 %v401
      %v570 = vpop.f32.mrb[0].mxu0
      %v571 = vadd.f32 0.0, %v570
      %v572 = vpop.f32.mrb[0].mxu0
      %573 = vmatprep.mubr.f32.mxu0 0.0
      %574 = vmatmul.mubr.f32.gmra.mrb[0].mxu0 %v404
      %v575 = vpop.f32.mrb[0].mxu0
      %v576 = vadd.f32 0.0, %v575
      %v577 = vpop.f32.mrb[0].mxu0
      %578 = vmatprep.mubr.f32.mxu0 0.0
      %579 = vmatmul.mubr.f32.gmra.mrb[0].mxu0 %v407
      %v580 = vpop.f32.mrb[0].mxu0
      %v581 = vadd.f32 0.0, %v580
      %v582 = vpop.f32.mrb[0].mxu0
      %583 = vmatprep.mubr.f32.mxu0 0.0
      %584 = vmatmul.mubr.f32.gmra.mrb[0].mxu0 %v410
      %v585 = vpop.f32.mrb[0].mxu0
      %v586 = vadd.f32 0.0, %v585
      %v587 = vpop.f32.mrb[0].mxu0
      %588 = vmatprep.mubr.f32.mxu0 0.0
      %589 = vmatmul.mubr.f32.gmra.mrb[0].mxu0 %v413
      %v590 = vpop.f32.mrb[0].mxu0
      %v591 = vadd.f32 0.0, %v590
      %v592 = vpop.f32.mrb[0].mxu0
      %593 = vmatprep.mubr.f32.mxu0 0.0
      %594 = vmatmul.mubr.f32.gmra.mrb[0].mxu0 %v416
      %v595 = vpop.f32.mrb[0].mxu0
      %v596 = vadd.f32 0.0, %v595
      %v597 = vpop.f32.mrb[0].mxu0
      %598 = vmatprep.mubr.f32.mxu0 0.0
      %599 = vmatmul.mubr.f32.gmra.mrb[0].mxu0 %v419
      %v600 = vpop.f32.mrb[0].mxu0
      %v601 = vadd.f32 0.0, %v600
      %v602 = vpop.f32.mrb[0].mxu0
      %603 = vmatprep.mubr.f32.mxu0 0.0
      %604 = vmatmul.mubr.f32.gmra.mrb[0].mxu0 %v422
      %v605 = vpop.f32.mrb[0].mxu0
      %v606 = vadd.f32 0.0, %v605
      %v607 = vpop.f32.mrb[0].mxu0
      %608 = vmatprep.mubr.f32.mxu0 0.0
      %609 = vmatmul.mubr.f32.gmra.mrb[0].mxu0 %v425
      %v610 = vpop.f32.mrb[0].mxu0
      %v611 = vadd.f32 0.0, %v610
      %v612 = vpop.f32.mrb[0].mxu0
      %613 = vmatprep.mubr.f32.mxu0 0.0
      %614 = vmatmul.mubr.f32.gmra.mrb[0].mxu0 %v428
      %v615 = vpop.f32.mrb[0].mxu0
      %v616 = vadd.f32 0.0, %v615
      %v617 = vpop.f32.mrb[0].mxu0
      %618 = vmatprep.mubr.f32.mxu0 0.0
      %619 = vmatmul.mubr.f32.gmra.mrb[0].mxu0 %v431
      %v620 = vpop.f32.mrb[0].mxu0
      %v621 = vadd.f32 0.0, %v620
      %v622 = vpop.f32.mrb[0].mxu0
      %623 = vmatprep.mubr.f32.mxu0 0.0
      %624 = vmatmul.mubr.f32.gmra.mrb[0].mxu0 %v434
      %v625 = vpop.f32.mrb[0].mxu0
      %v626 = vadd.f32 0.0, %v625
      %v627 = vpop.f32.mrb[0].mxu0
      %628 = vmatprep.mubr.f32.mxu0 0.0
      %629 = vmatmul.mubr.f32.gmra.mrb[0].mxu0 %v437
      %v630 = vpop.f32.mrb[0].mxu0
      %v631 = vadd.f32 0.0, %v630
      %v632 = vpop.f32.mrb[0].mxu0
      %633 = vmatprep.mubr.f32.mxu0 0.0
      %634 = vmatmul.mubr.f32.gmra.mrb[0].mxu0 %v440
      %v635 = vpop.f32.mrb[0].mxu0
      %v636 = vadd.f32 0.0, %v635
      %v637 = vpop.f32.mrb[0].mxu0
      %638 = vmatprep.mubr.f32.mxu0 0.0
      %639 = vmatmul.mubr.f32.gmra.mrb[0].mxu0 %v443
      %v640 = vpop.f32.mrb[0].mxu0
      %v641 = vadd.f32 0.0, %v640
      %v642 = vpop.f32.mrb[0].mxu0
      %643 = vmatprep.mubr.f32.mxu0 0.0
      %644 = vmatmul.mubr.f32.gmra.mrb[0].mxu0 %v446
      %v645 = vpop.f32.mrb[0].mxu0
      %v646 = vadd.f32 0.0, %v645
      %v647 = vpop.f32.mrb[0].mxu0
      %648 = vmatprep.mubr.f32.mxu0 0.0
      %649 = vmatmul.mubr.f32.gmra.mrb[0].mxu0 %v449
      %v650 = vpop.f32.mrb[0].mxu0
      %v651 = vadd.f32 0.0, %v650
      %v652 = vpop.f32.mrb[0].mxu0
      %653 = vmatprep.mubr.f32.mxu0 0.0
      %654 = vmatmul.mubr.f32.gmra.mrb[0].mxu0 %v452
      %v655 = vpop.f32.mrb[0].mxu0
      %v656 = vadd.f32 0.0, %v655
      %v657 = vpop.f32.mrb[0].mxu0
      %658 = vmatprep.mubr.f32.mxu0 0.0
      %659 = vmatmul.mubr.f32.gmra.mrb[0].mxu0 %v455
      %v660 = vpop.f32.mrb[0].mxu0
      %v661 = vadd.f32 0.0, %v660
      %v662 = vpop.f32.mrb[0].mxu0
      %663 = vmatprep.mubr.f32.mxu0 0.0
      %664 = vmatmul.mubr.f32.gmra.mrb[0].mxu0 %v458
      %v665 = vpop.f32.mrb[0].mxu0
      %v666 = vadd.f32 0.0, %v665
      %v667 = vpop.f32.mrb[0].mxu0
      %668 = vmatprep.mubr.f32.mxu0 0.0
      %669 = vmatmul.mubr.f32.gmra.mrb[0].mxu0 %v461
      %v670 = vpop.f32.mrb[0].mxu0
      %v671 = vadd.f32 0.0, %v670
      %v672 = vpop.f32.mrb[0].mxu0
      %673 = vmatprep.mubr.f32.mxu0 0.0
      %674 = vmatmul.mubr.f32.gmra.mrb[0].mxu0 %v464
      %v675 = vpop.f32.mrb[0].mxu0
      %v676 = vadd.f32 0.0, %v675
      %v677 = vpop.f32.mrb[0].mxu0
      %678 = vmatprep.mubr.f32.mxu0 0.0
      %679 = vmatmul.mubr.f32.gmra.mrb[0].mxu0 %v467
      %v680 = vpop.f32.mrb[0].mxu0
      %v681 = vadd.f32 0.0, %v680
      %v682 = vpop.f32.mrb[0].mxu0
      %683 = vmatprep.mubr.f32.mxu0 0.0
      %684 = vmatmul.mubr.f32.gmra.mrb[0].mxu0 %v470
      %v685 = vpop.f32.mrb[0].mxu0
      %v686 = vadd.f32 0.0, %v685
      %v687 = vpop.f32.mrb[0].mxu0
      %688 = vmatprep.mubr.f32.mxu0 0.0
      %689 = vmatmul.mubr.f32.gmra.mrb[0].mxu0 %v473
      %v690 = vpop.f32.mrb[0].mxu0
      %v691 = vadd.f32 0.0, %v690
      %v692 = vpop.f32.mrb[0].mxu0
      %693 = vmatprep.mubr.f32.mxu0 0.0
      %694 = vmatmul.mubr.f32.gmra.mrb[0].mxu0 %v476
      %v695 = vpop.f32.mrb[0].mxu0
      %v696 = vadd.f32 0.0, %v695
      %v697 = vpop.f32.mrb[0].mxu0
      %698 = vmatprep.mubr.f32.mxu0 0.0
      %699 = vmatmul.mubr.f32.gmra.mrb[0].mxu0 %v479
      %v700 = vpop.f32.mrb[0].mxu0
      %v701 = vadd.f32 0.0, %v700
      %v702 = vpop.f32.mrb[0].mxu0
      %703 = vmatprep.mubr.f32.mxu0 0.0
      %704 = vmatmul.mubr.f32.gmra.mrb[0].mxu0 %v482
      %v705 = vpop.f32.mrb[0].mxu0
      %v706 = vadd.f32 0.0, %v705
      %v707 = vpop.f32.mrb[0].mxu0
      %708 = vmatprep.mubr.f32.mxu0 0.0
      %709 = vmatmul.mubr.f32.gmra.mrb[0].mxu0 %v485
      %v710 = vpop.f32.mrb[0].mxu0
      %v711 = vadd.f32 0.0, %v710
      %v712 = vpop.f32.mrb[0].mxu0
      %713 = vmatprep.mubr.f32.mxu0 0.0
      %714 = vmatmul.mubr.f32.gmra.mrb[0].mxu0 %v488
      %v715 = vpop.f32.mrb[0].mxu0
      %v716 = vadd.f32 0.0, %v715
      %v717 = vpop.f32.mrb[0].mxu0
      %718 = vdwg.mxu0
      %v719 = vld [vmem:[%s2] sm:$0xf]
      %v721 = vsel %vm490, %v719, 0
      %723 = vmatprep.subr.mxu0 0.0
      %724 = vmatpush1.msra.mxu0 %v721
      %725 = vmatprep.subr.mxu0 0.0
      %726 = vmatpush1.msra.mxu0 0.0
      %727 = vmatprep.subr.mxu0 0.0
      %728 = vmatpush1.msra.mxu0 0.0
      %729 = vmatprep.subr.mxu0 0.0
      %730 = vmatpush1.msra.mxu0 0.0
      %731 = vmatprep.subr.mxu0 0.0
      %732 = vmatpush1.msra.mxu0 0.0
      %733 = vmatprep.subr.mxu0 0.0
      %734 = vmatpush1.msra.mxu0 0.0
      %735 = vmatprep.subr.mxu0 0.0
      %736 = vmatpush1.msra.mxu0 0.0
      %737 = vmatprep.subr.mxu0 0.0
      %738 = vmatpush1.msra.mxu0 0.0
      %739 = vmatprep.subr.mxu0 0.0
      %740 = vmatpush1.msra.mxu0 0.0
      %741 = vmatprep.subr.mxu0 0.0
      %742 = vmatpush1.msra.mxu0 0.0
      %743 = vmatprep.subr.mxu0 0.0
      %744 = vmatpush1.msra.mxu0 0.0
      %745 = vmatprep.subr.mxu0 0.0
      %746 = vmatpush1.msra.mxu0 0.0
      %747 = vmatprep.subr.mxu0 0.0
      %748 = vmatpush1.msra.mxu0 0.0
      %749 = vmatprep.subr.mxu0 0.0
      %750 = vmatpush1.msra.mxu0 0.0
      %751 = vmatprep.subr.mxu0 0.0
      %752 = vmatpush1.msra.mxu0 0.0
      %753 = vmatprep.subr.mxu0 0.0
      %754 = vmatpush1.msra.mxu0 0.0
      %755 = vmatprep.subr.mxu0 0.0
      %756 = vmatpush1.msra.mxu0 0.0
      %757 = vmatprep.subr.mxu0 0.0
      %758 = vmatpush1.msra.mxu0 0.0
      %759 = vmatprep.subr.mxu0 0.0
      %760 = vmatpush1.msra.mxu0 0.0
      %761 = vmatprep.subr.mxu0 0.0
      %762 = vmatpush1.msra.mxu0 0.0
      %763 = vmatprep.subr.mxu0 0.0
      %764 = vmatpush1.msra.mxu0 0.0
      %765 = vmatprep.subr.mxu0 0.0
      %766 = vmatpush1.msra.mxu0 0.0
      %767 = vmatprep.subr.mxu0 0.0
      %768 = vmatpush1.msra.mxu0 0.0
      %769 = vmatprep.subr.mxu0 0.0
      %770 = vmatpush1.msra.mxu0 0.0
      %771 = vmatprep.subr.mxu0 0.0
      %772 = vmatpush1.msra.mxu0 0.0
      %773 = vmatprep.subr.mxu0 0.0
      %774 = vmatpush1.msra.mxu0 0.0
      %775 = vmatprep.subr.mxu0 0.0
      %776 = vmatpush1.msra.mxu0 0.0
      %777 = vmatprep.subr.mxu0 0.0
      %778 = vmatpush1.msra.mxu0 0.0
      %779 = vmatprep.subr.mxu0 0.0
      %780 = vmatpush1.msra.mxu0 0.0
      %781 = vmatprep.subr.mxu0 0.0
      %782 = vmatpush1.msra.mxu0 0.0
      %783 = vmatprep.subr.mxu0 0.0
      %784 = vmatpush1.msra.mxu0 0.0
      %785 = vmatprep.subr.mxu0 0.0
      %786 = vmatpush1.msra.mxu0 0.0
      %787 = vmatprep.mubr.f32.mxu0 0.0
      %788 = vmatmul.mubr.f32.gmra.mrb[0].mxu0 %v395
      %v789 = vpop.f32.mrb[0].mxu0
      %v790 = vadd.f32 0.0, %v789
      %v791 = vpop.f32.mrb[0].mxu0
      %792 = vmatprep.mubr.f32.mxu0 0.0
      %793 = vmatmul.mubr.f32.gmra.mrb[0].mxu0 %v398
      %v794 = vpop.f32.mrb[0].mxu0
      %v795 = vadd.f32 0.0, %v794
      %v796 = vpop.f32.mrb[0].mxu0
      %797 = vmatprep.mubr.f32.mxu0 0.0
      %798 = vmatmul.mubr.f32.gmra.mrb[0].mxu0 %v401
      %v799 = vpop.f32.mrb[0].mxu0
      %v800 = vadd.f32 0.0, %v799
      %v801 = vpop.f32.mrb[0].mxu0
      %802 = vmatprep.mubr.f32.mxu0 0.0
      %803 = vmatmul.mubr.f32.gmra.mrb[0].mxu0 %v404
      %v804 = vpop.f32.mrb[0].mxu0
      %v805 = vadd.f32 0.0, %v804
      %v806 = vpop.f32.mrb[0].mxu0
      %807 = vmatprep.mubr.f32.mxu0 0.0
      %808 = vmatmul.mubr.f32.gmra.mrb[0].mxu0 %v407
      %v809 = vpop.f32.mrb[0].mxu0
      %v810 = vadd.f32 0.0, %v809
      %v811 = vpop.f32.mrb[0].mxu0
      %812 = vmatprep.mubr.f32.mxu0 0.0
      %813 = vmatmul.mubr.f32.gmra.mrb[0].mxu0 %v410
      %v814 = vpop.f32.mrb[0].mxu0
      %v815 = vadd.f32 0.0, %v814
      %v816 = vpop.f32.mrb[0].mxu0
      %817 = vmatprep.mubr.f32.mxu0 0.0
      %818 = vmatmul.mubr.f32.gmra.mrb[0].mxu0 %v413
      %v819 = vpop.f32.mrb[0].mxu0
      %v820 = vadd.f32 0.0, %v819
      %v821 = vpop.f32.mrb[0].mxu0
      %822 = vmatprep.mubr.f32.mxu0 0.0
      %823 = vmatmul.mubr.f32.gmra.mrb[0].mxu0 %v416
      %v824 = vpop.f32.mrb[0].mxu0
      %v825 = vadd.f32 0.0, %v824
      %v826 = vpop.f32.mrb[0].mxu0
      %827 = vmatprep.mubr.f32.mxu0 0.0
      %828 = vmatmul.mubr.f32.gmra.mrb[0].mxu0 %v419
      %v829 = vpop.f32.mrb[0].mxu0
      %v830 = vadd.f32 0.0, %v829
      %v831 = vpop.f32.mrb[0].mxu0
      %832 = vmatprep.mubr.f32.mxu0 0.0
      %833 = vmatmul.mubr.f32.gmra.mrb[0].mxu0 %v422
      %v834 = vpop.f32.mrb[0].mxu0
      %v835 = vadd.f32 0.0, %v834
      %v836 = vpop.f32.mrb[0].mxu0
      %837 = vmatprep.mubr.f32.mxu0 0.0
      %838 = vmatmul.mubr.f32.gmra.mrb[0].mxu0 %v425
      %v839 = vpop.f32.mrb[0].mxu0
      %v840 = vadd.f32 0.0, %v839
      %v841 = vpop.f32.mrb[0].mxu0
      %842 = vmatprep.mubr.f32.mxu0 0.0
      %843 = vmatmul.mubr.f32.gmra.mrb[0].mxu0 %v428
      %v844 = vpop.f32.mrb[0].mxu0
      %v845 = vadd.f32 0.0, %v844
      %v846 = vpop.f32.mrb[0].mxu0
      %847 = vmatprep.mubr.f32.mxu0 0.0
      %848 = vmatmul.mubr.f32.gmra.mrb[0].mxu0 %v431
      %v849 = vpop.f32.mrb[0].mxu0
      %v850 = vadd.f32 0.0, %v849
      %v851 = vpop.f32.mrb[0].mxu0
      %852 = vmatprep.mubr.f32.mxu0 0.0
      %853 = vmatmul.mubr.f32.gmra.mrb[0].mxu0 %v434
      %v854 = vpop.f32.mrb[0].mxu0
      %v855 = vadd.f32 0.0, %v854
      %v856 = vpop.f32.mrb[0].mxu0
      %857 = vmatprep.mubr.f32.mxu0 0.0
      %858 = vmatmul.mubr.f32.gmra.mrb[0].mxu0 %v437
      %v859 = vpop.f32.mrb[0].mxu0
      %v860 = vadd.f32 0.0, %v859
      %v861 = vpop.f32.mrb[0].mxu0
      %862 = vmatprep.mubr.f32.mxu0 0.0
      %863 = vmatmul.mubr.f32.gmra.mrb[0].mxu0 %v440
      %v864 = vpop.f32.mrb[0].mxu0
      %v865 = vadd.f32 0.0, %v864
      %v866 = vpop.f32.mrb[0].mxu0
      %867 = vmatprep.mubr.f32.mxu0 0.0
      %868 = vmatmul.mubr.f32.gmra.mrb[0].mxu0 %v443
      %v869 = vpop.f32.mrb[0].mxu0
      %v870 = vadd.f32 0.0, %v869
      %v871 = vpop.f32.mrb[0].mxu0
      %872 = vmatprep.mubr.f32.mxu0 0.0
      %873 = vmatmul.mubr.f32.gmra.mrb[0].mxu0 %v446
      %v874 = vpop.f32.mrb[0].mxu0
      %v875 = vadd.f32 0.0, %v874
      %v876 = vpop.f32.mrb[0].mxu0
      %877 = vmatprep.mubr.f32.mxu0 0.0
      %878 = vmatmul.mubr.f32.gmra.mrb[0].mxu0 %v449
      %v879 = vpop.f32.mrb[0].mxu0
      %v880 = vadd.f32 0.0, %v879
      %v881 = vpop.f32.mrb[0].mxu0
      %882 = vmatprep.mubr.f32.mxu0 0.0
      %883 = vmatmul.mubr.f32.gmra.mrb[0].mxu0 %v452
      %v884 = vpop.f32.mrb[0].mxu0
      %v885 = vadd.f32 0.0, %v884
      %v886 = vpop.f32.mrb[0].mxu0
      %887 = vmatprep.mubr.f32.mxu0 0.0
      %888 = vmatmul.mubr.f32.gmra.mrb[0].mxu0 %v455
      %v889 = vpop.f32.mrb[0].mxu0
      %v890 = vadd.f32 0.0, %v889
      %v891 = vpop.f32.mrb[0].mxu0
      %892 = vmatprep.mubr.f32.mxu0 0.0
      %893 = vmatmul.mubr.f32.gmra.mrb[0].mxu0 %v458
      %v894 = vpop.f32.mrb[0].mxu0
      %v895 = vadd.f32 0.0, %v894
      %v896 = vpop.f32.mrb[0].mxu0
      %897 = vmatprep.mubr.f32.mxu0 0.0
      %898 = vmatmul.mubr.f32.gmra.mrb[0].mxu0 %v461
      %v899 = vpop.f32.mrb[0].mxu0
      %v900 = vadd.f32 0.0, %v899
      %v901 = vpop.f32.mrb[0].mxu0
      %902 = vmatprep.mubr.f32.mxu0 0.0
      %903 = vmatmul.mubr.f32.gmra.mrb[0].mxu0 %v464
      %v904 = vpop.f32.mrb[0].mxu0
      %v905 = vadd.f32 0.0, %v904
      %v906 = vpop.f32.mrb[0].mxu0
      %907 = vmatprep.mubr.f32.mxu0 0.0
      %908 = vmatmul.mubr.f32.gmra.mrb[0].mxu0 %v467
      %v909 = vpop.f32.mrb[0].mxu0
      %v910 = vadd.f32 0.0, %v909
      %v911 = vpop.f32.mrb[0].mxu0
      %912 = vmatprep.mubr.f32.mxu0 0.0
      %913 = vmatmul.mubr.f32.gmra.mrb[0].mxu0 %v470
      %v914 = vpop.f32.mrb[0].mxu0
      %v915 = vadd.f32 0.0, %v914
      %v916 = vpop.f32.mrb[0].mxu0
      %917 = vmatprep.mubr.f32.mxu0 0.0
      %918 = vmatmul.mubr.f32.gmra.mrb[0].mxu0 %v473
      %v919 = vpop.f32.mrb[0].mxu0
      %v920 = vadd.f32 0.0, %v919
      %v921 = vpop.f32.mrb[0].mxu0
      %922 = vmatprep.mubr.f32.mxu0 0.0
      %923 = vmatmul.mubr.f32.gmra.mrb[0].mxu0 %v476
      %v924 = vpop.f32.mrb[0].mxu0
      %v925 = vadd.f32 0.0, %v924
      %v926 = vpop.f32.mrb[0].mxu0
      %927 = vmatprep.mubr.f32.mxu0 0.0
      %928 = vmatmul.mubr.f32.gmra.mrb[0].mxu0 %v479
      %v929 = vpop.f32.mrb[0].mxu0
      %v930 = vadd.f32 0.0, %v929
      %v931 = vpop.f32.mrb[0].mxu0
      %932 = vmatprep.mubr.f32.mxu0 0.0
      %933 = vmatmul.mubr.f32.gmra.mrb[0].mxu0 %v482
      %v934 = vpop.f32.mrb[0].mxu0
      %v935 = vadd.f32 0.0, %v934
      %v936 = vpop.f32.mrb[0].mxu0
      %937 = vmatprep.mubr.f32.mxu0 0.0
      %938 = vmatmul.mubr.f32.gmra.mrb[0].mxu0 %v485
      %v939 = vpop.f32.mrb[0].mxu0
      %v940 = vadd.f32 0.0, %v939
      %v941 = vpop.f32.mrb[0].mxu0
      %942 = vmatprep.mubr.f32.mxu0 0.0
      %943 = vmatmul.mubr.f32.gmra.mrb[0].mxu0 %v488
      %v944 = vpop.f32.mrb[0].mxu0
      %v945 = vadd.f32 0.0, %v944
      %v946 = vpop.f32.mrb[0].mxu0
      %947 = vdwg.mxu0
      %948 = vst.msk [vmem:[#allocation2] sm:$0xff] %vm393, 0.0
      %949 = vst.msk [vmem:[#allocation2 + $0x8] sm:$0xff] %vm393, 0.0
      %vm950 = vcmask 25600
      %951 = vst.msk [vmem:[#allocation2 + $0x10] sm:$0x3] %vm950, 0.0
      %s952 = scalar_lea.vmem [#allocation2], 408
      %953 = vst.msk [vmem:[%s952] sm:$0xff] %vm393, 0.0
      %954 = vst.msk [vmem:[%s952 + $0x8] sm:$0xff] %vm393, 0.0
      %955 = vst.msk [vmem:[%s952 + $0x10] sm:$0x3] %vm950, 0.0
      %vm956 = vcmask 24576
      %957 = vst.msk [vmem:[#allocation2] sm:$0x1] %vm956, 0.0
      %958 = vst.msk [vmem:[#allocation2 + $0x18] sm:$0x1] %vm956, 0.0
      %959 = vst.msk [vmem:[#allocation2 + $0x30] sm:$0x1] %vm956, 0.0
      %960 = vst.msk [vmem:[#allocation2 + $0x48] sm:$0x1] %vm956, 0.0
      %961 = vst.msk [vmem:[#allocation2 + $0x60] sm:$0x1] %vm956, 0.0
      %962 = vst.msk [vmem:[#allocation2 + $0x78] sm:$0x1] %vm956, 0.0
      %963 = vst.msk [vmem:[#allocation2 + $0x90] sm:$0x1] %vm956, 0.0
      %964 = vst.msk [vmem:[#allocation2 + $0xa8] sm:$0x1] %vm956, 0.0
      %965 = vst.msk [vmem:[#allocation2 + $0xc0] sm:$0x1] %vm956, 0.0
      %966 = vst.msk [vmem:[#allocation2 + $0xd8] sm:$0x1] %vm956, 0.0
      %967 = vst.msk [vmem:[#allocation2 + $0xf0] sm:$0x1] %vm956, 0.0
      %968 = vst.msk [vmem:[#allocation2 + $0x108] sm:$0x1] %vm956, 0.0
      %969 = vst.msk [vmem:[#allocation2 + $0x120] sm:$0x1] %vm956, 0.0
      %970 = vst.msk [vmem:[#allocation2 + $0x138] sm:$0x1] %vm956, 0.0
      %971 = vst.msk [vmem:[#allocation2 + $0x150] sm:$0x1] %vm956, 0.0
      %972 = vst.msk [vmem:[#allocation2 + $0x168] sm:$0x1] %vm956, 0.0
      %973 = vst.msk [vmem:[#allocation2 + $0x180] sm:$0x1] %vm956, 0.0
      %974 = vst.msk [vmem:[#allocation2 + $0x198] sm:$0x1] %vm956, 0.0
      %975 = vst.msk [vmem:[#allocation2 + $0x11] sm:$0x1] %vm956, 0.0
      %976 = vst.msk [vmem:[#allocation2 + $0x29] sm:$0x1] %vm956, 0.0
      %977 = vst.msk [vmem:[#allocation2 + $0x41] sm:$0x1] %vm956, 0.0
      %978 = vst.msk [vmem:[#allocation2 + $0x59] sm:$0x1] %vm956, 0.0
      %979 = vst.msk [vmem:[#allocation2 + $0x71] sm:$0x1] %vm956, 0.0
      %980 = vst.msk [vmem:[#allocation2 + $0x89] sm:$0x1] %vm956, 0.0
      %981 = vst.msk [vmem:[#allocation2 + $0xa1] sm:$0x1] %vm956, 0.0
      %982 = vst.msk [vmem:[#allocation2 + $0xb9] sm:$0x1] %vm956, 0.0
      %983 = vst.msk [vmem:[#allocation2 + $0xd1] sm:$0x1] %vm956, 0.0
      %984 = vst.msk [vmem:[#allocation2 + $0xe9] sm:$0x1] %vm956, 0.0
      %985 = vst.msk [vmem:[#allocation2 + $0x101] sm:$0x1] %vm956, 0.0
      %986 = vst.msk [vmem:[#allocation2 + $0x119] sm:$0x1] %vm956, 0.0
      %987 = vst.msk [vmem:[#allocation2 + $0x131] sm:$0x1] %vm956, 0.0
      %988 = vst.msk [vmem:[#allocation2 + $0x149] sm:$0x1] %vm956, 0.0
      %989 = vst.msk [vmem:[#allocation2 + $0x161] sm:$0x1] %vm956, 0.0
      %990 = vst.msk [vmem:[#allocation2 + $0x179] sm:$0x1] %vm956, 0.0
      %991 = vst.msk [vmem:[#allocation2 + $0x191] sm:$0x1] %vm956, 0.0
      %992 = vst.msk [vmem:[#allocation2 + $0x1a9] sm:$0x1] %vm956, 0.0
      %s993 = scalar_lea.vmem [#allocation2], 24
      %994 = vst.msk [vmem:[%s993 + $0x1] sm:$0xff] %vm393, %v561
      %995 = vst.msk [vmem:[%s993 + $0x9] sm:$0xff] %vm393, %v566
      %996 = vst.msk [vmem:[%s993 + $0x19] sm:$0xff] %vm393, %v571
      %997 = vst.msk [vmem:[%s993 + $0x21] sm:$0xff] %vm393, %v576
      %998 = vst.msk [vmem:[%s993 + $0x31] sm:$0xff] %vm393, %v581
      %999 = vst.msk [vmem:[%s993 + $0x39] sm:$0xff] %vm393, %v586
      %1000 = vst.msk [vmem:[%s993 + $0x49] sm:$0xff] %vm393, %v591
      %1001 = vst.msk [vmem:[%s993 + $0x51] sm:$0xff] %vm393, %v596
      %1002 = vst.msk [vmem:[%s993 + $0x61] sm:$0xff] %vm393, %v601
      %1003 = vst.msk [vmem:[%s993 + $0x69] sm:$0xff] %vm393, %v606
      %1004 = vst.msk [vmem:[%s993 + $0x79] sm:$0xff] %vm393, %v611
      %1005 = vst.msk [vmem:[%s993 + $0x81] sm:$0xff] %vm393, %v616
      %1006 = vst.msk [vmem:[%s993 + $0x91] sm:$0xff] %vm393, %v621
      %1007 = vst.msk [vmem:[%s993 + $0x99] sm:$0xff] %vm393, %v626
      %1008 = vst.msk [vmem:[%s993 + $0xa9] sm:$0xff] %vm393, %v631
      %1009 = vst.msk [vmem:[%s993 + $0xb1] sm:$0xff] %vm393, %v636
      %1010 = vst.msk [vmem:[%s993 + $0xc1] sm:$0xff] %vm393, %v641
      %1011 = vst.msk [vmem:[%s993 + $0xc9] sm:$0xff] %vm393, %v646
      %1012 = vst.msk [vmem:[%s993 + $0xd9] sm:$0xff] %vm393, %v651
      %1013 = vst.msk [vmem:[%s993 + $0xe1] sm:$0xff] %vm393, %v656
      %1014 = vst.msk [vmem:[%s993 + $0xf1] sm:$0xff] %vm393, %v661
      %1015 = vst.msk [vmem:[%s993 + $0xf9] sm:$0xff] %vm393, %v666
      %1016 = vst.msk [vmem:[%s993 + $0x109] sm:$0xff] %vm393, %v671
      %1017 = vst.msk [vmem:[%s993 + $0x111] sm:$0xff] %vm393, %v676
      %1018 = vst.msk [vmem:[%s993 + $0x121] sm:$0xff] %vm393, %v681
      %1019 = vst.msk [vmem:[%s993 + $0x129] sm:$0xff] %vm393, %v686
      %1020 = vst.msk [vmem:[%s993 + $0x139] sm:$0xff] %vm393, %v691
      %1021 = vst.msk [vmem:[%s993 + $0x141] sm:$0xff] %vm393, %v696
      %1022 = vst.msk [vmem:[%s993 + $0x151] sm:$0xff] %vm393, %v701
      %1023 = vst.msk [vmem:[%s993 + $0x159] sm:$0xff] %vm393, %v706
      %1024 = vst.msk [vmem:[%s993 + $0x169] sm:$0xff] %vm393, %v711
      %1025 = vst.msk [vmem:[%s993 + $0x171] sm:$0xff] %vm393, %v716
      %v1026 = vld [vmem:[#allocation2] sm:$0xff]
      %v1027 = vld [vmem:[#allocation2 + $0x8] sm:$0xff]
      %v1028 = vld [vmem:[#allocation2 + $0x18] sm:$0xff]
      %v1029 = vld [vmem:[#allocation2 + $0x20] sm:$0xff]
      %v1030 = vld [vmem:[#allocation2 + $0x30] sm:$0xff]
      %v1031 = vld [vmem:[#allocation2 + $0x38] sm:$0xff]
      %v1032 = vld [vmem:[#allocation2 + $0x48] sm:$0xff]
      %v1033 = vld [vmem:[#allocation2 + $0x50] sm:$0xff]
      %v1034 = vld [vmem:[#allocation2 + $0x60] sm:$0xff]
      %v1035 = vld [vmem:[#allocation2 + $0x68] sm:$0xff]
      %v1036 = vld [vmem:[#allocation2 + $0x78] sm:$0xff]
      %v1037 = vld [vmem:[#allocation2 + $0x80] sm:$0xff]
      %v1038 = vld [vmem:[#allocation2 + $0x90] sm:$0xff]
      %v1039 = vld [vmem:[#allocation2 + $0x98] sm:$0xff]
      %v1040 = vld [vmem:[#allocation2 + $0xa8] sm:$0xff]
      %v1041 = vld [vmem:[#allocation2 + $0xb0] sm:$0xff]
      %v1042 = vld [vmem:[#allocation2 + $0xc0] sm:$0xff]
      %v1043 = vld [vmem:[#allocation2 + $0xc8] sm:$0xff]
      %v1044 = vld [vmem:[#allocation2 + $0xd8] sm:$0xff]
      %v1045 = vld [vmem:[#allocation2 + $0xe0] sm:$0xff]
      %v1046 = vld [vmem:[#allocation2 + $0xf0] sm:$0xff]
      %v1047 = vld [vmem:[#allocation2 + $0xf8] sm:$0xff]
      %v1048 = vld [vmem:[#allocation2 + $0x108] sm:$0xff]
      %v1049 = vld [vmem:[#allocation2 + $0x110] sm:$0xff]
      %v1050 = vld [vmem:[#allocation2 + $0x120] sm:$0xff]
      %v1051 = vld [vmem:[#allocation2 + $0x128] sm:$0xff]
      %v1052 = vld [vmem:[#allocation2 + $0x138] sm:$0xff]
      %v1053 = vld [vmem:[#allocation2 + $0x140] sm:$0xff]
      %v1054 = vld [vmem:[#allocation2 + $0x150] sm:$0xff]
      %v1055 = vld [vmem:[#allocation2 + $0x158] sm:$0xff]
      %v1056 = vld [vmem:[#allocation2 + $0x168] sm:$0xff]
      %v1057 = vld [vmem:[#allocation2 + $0x170] sm:$0xff]
      %1058 = vst.msk [vmem:[#allocation3] sm:$0xff] %vm393, %v1026
      %1059 = vst.msk [vmem:[#allocation3 + $0x8] sm:$0xff] %vm393, %v1027
      %1060 = vst.msk [vmem:[#allocation3 + $0x10] sm:$0xff] %vm393, %v1028
      %1061 = vst.msk [vmem:[#allocation3 + $0x18] sm:$0xff] %vm393, %v1029
      %1062 = vst.msk [vmem:[#allocation3 + $0x20] sm:$0xff] %vm393, %v1030
      %1063 = vst.msk [vmem:[#allocation3 + $0x28] sm:$0xff] %vm393, %v1031
      %1064 = vst.msk [vmem:[#allocation3 + $0x30] sm:$0xff] %vm393, %v1032
      %1065 = vst.msk [vmem:[#allocation3 + $0x38] sm:$0xff] %vm393, %v1033
      %1066 = vst.msk [vmem:[#allocation3 + $0x40] sm:$0xff] %vm393, %v1034
      %1067 = vst.msk [vmem:[#allocation3 + $0x48] sm:$0xff] %vm393, %v1035
      %1068 = vst.msk [vmem:[#allocation3 + $0x50] sm:$0xff] %vm393, %v1036
      %1069 = vst.msk [vmem:[#allocation3 + $0x58] sm:$0xff] %vm393, %v1037
      %1070 = vst.msk [vmem:[#allocation3 + $0x60] sm:$0xff] %vm393, %v1038
      %1071 = vst.msk [vmem:[#allocation3 + $0x68] sm:$0xff] %vm393, %v1039
      %1072 = vst.msk [vmem:[#allocation3 + $0x70] sm:$0xff] %vm393, %v1040
      %1073 = vst.msk [vmem:[#allocation3 + $0x78] sm:$0xff] %vm393, %v1041
      %1074 = vst.msk [vmem:[#allocation3 + $0x80] sm:$0xff] %vm393, %v1042
      %1075 = vst.msk [vmem:[#allocation3 + $0x88] sm:$0xff] %vm393, %v1043
      %1076 = vst.msk [vmem:[#allocation3 + $0x90] sm:$0xff] %vm393, %v1044
      %1077 = vst.msk [vmem:[#allocation3 + $0x98] sm:$0xff] %vm393, %v1045
      %1078 = vst.msk [vmem:[#allocation3 + $0xa0] sm:$0xff] %vm393, %v1046
      %1079 = vst.msk [vmem:[#allocation3 + $0xa8] sm:$0xff] %vm393, %v1047
      %1080 = vst.msk [vmem:[#allocation3 + $0xb0] sm:$0xff] %vm393, %v1048
      %1081 = vst.msk [vmem:[#allocation3 + $0xb8] sm:$0xff] %vm393, %v1049
      %1082 = vst.msk [vmem:[#allocation3 + $0xc0] sm:$0xff] %vm393, %v1050
      %1083 = vst.msk [vmem:[#allocation3 + $0xc8] sm:$0xff] %vm393, %v1051
      %1084 = vst.msk [vmem:[#allocation3 + $0xd0] sm:$0xff] %vm393, %v1052
      %1085 = vst.msk [vmem:[#allocation3 + $0xd8] sm:$0xff] %vm393, %v1053
      %1086 = vst.msk [vmem:[#allocation3 + $0xe0] sm:$0xff] %vm393, %v1054
      %1087 = vst.msk [vmem:[#allocation3 + $0xe8] sm:$0xff] %vm393, %v1055
      %1088 = vst.msk [vmem:[#allocation3 + $0xf0] sm:$0xff] %vm393, %v1056
      %1089 = vst.msk [vmem:[#allocation3 + $0xf8] sm:$0xff] %vm393, %v1057
      %v1090 = vld [vmem:[#allocation2 + $0x1] sm:$0xff]
      %v1091 = vld [vmem:[#allocation2 + $0x9] sm:$0xff]
      %v1092 = vld [vmem:[#allocation2 + $0x19] sm:$0xff]
      %v1093 = vld [vmem:[#allocation2 + $0x21] sm:$0xff]
      %v1094 = vld [vmem:[#allocation2 + $0x31] sm:$0xff]
      %v1095 = vld [vmem:[#allocation2 + $0x39] sm:$0xff]
      %v1096 = vld [vmem:[#allocation2 + $0x49] sm:$0xff]
      %v1097 = vld [vmem:[#allocation2 + $0x51] sm:$0xff]
      %v1098 = vld [vmem:[#allocation2 + $0x61] sm:$0xff]
      %v1099 = vld [vmem:[#allocation2 + $0x69] sm:$0xff]
      %v1100 = vld [vmem:[#allocation2 + $0x79] sm:$0xff]
      %v1101 = vld [vmem:[#allocation2 + $0x81] sm:$0xff]
      %v1102 = vld [vmem:[#allocation2 + $0x91] sm:$0xff]
      %v1103 = vld [vmem:[#allocation2 + $0x99] sm:$0xff]
      %v1104 = vld [vmem:[#allocation2 + $0xa9] sm:$0xff]
      %v1105 = vld [vmem:[#allocation2 + $0xb1] sm:$0xff]
      %v1106 = vld [vmem:[#allocation2 + $0xc1] sm:$0xff]
      %v1107 = vld [vmem:[#allocation2 + $0xc9] sm:$0xff]
      %v1108 = vld [vmem:[#allocation2 + $0xd9] sm:$0xff]
      %v1109 = vld [vmem:[#allocation2 + $0xe1] sm:$0xff]
      %v1110 = vld [vmem:[#allocation2 + $0xf1] sm:$0xff]
      %v1111 = vld [vmem:[#allocation2 + $0xf9] sm:$0xff]
      %v1112 = vld [vmem:[#allocation2 + $0x109] sm:$0xff]
      %v1113 = vld [vmem:[#allocation2 + $0x111] sm:$0xff]
      %v1114 = vld [vmem:[#allocation2 + $0x121] sm:$0xff]
      %v1115 = vld [vmem:[#allocation2 + $0x129] sm:$0xff]
      %v1116 = vld [vmem:[#allocation2 + $0x139] sm:$0xff]
      %v1117 = vld [vmem:[#allocation2 + $0x141] sm:$0xff]
      %v1118 = vld [vmem:[#allocation2 + $0x151] sm:$0xff]
      %v1119 = vld [vmem:[#allocation2 + $0x159] sm:$0xff]
      %v1120 = vld [vmem:[#allocation2 + $0x169] sm:$0xff]
      %v1121 = vld [vmem:[#allocation2 + $0x171] sm:$0xff]
      %1154 = vrot.lane.b32.xlu0 %v1090, 4
      %v1155 = vpop.permute.xlu0 %1154
      %1156 = vrot.lane.b32.xlu0 %v1091, 4
      %v1157 = vpop.permute.xlu0 %1156
      %1158 = vrot.lane.b32.xlu0 %v1092, 4
      %v1159 = vpop.permute.xlu0 %1158
      %1160 = vrot.lane.b32.xlu0 %v1093, 4
      %v1161 = vpop.permute.xlu0 %1160
      %1162 = vrot.lane.b32.xlu0 %v1094, 4
      %v1163 = vpop.permute.xlu0 %1162
      %1164 = vrot.lane.b32.xlu0 %v1095, 4
      %v1165 = vpop.permute.xlu0 %1164
      %1166 = vrot.lane.b32.xlu0 %v1096, 4
      %v1167 = vpop.permute.xlu0 %1166
      %1168 = vrot.lane.b32.xlu0 %v1097, 4
      %v1169 = vpop.permute.xlu0 %1168
      %1170 = vrot.lane.b32.xlu0 %v1098, 4
      %v1171 = vpop.permute.xlu0 %1170
      %1172 = vrot.lane.b32.xlu0 %v1099, 4
      %v1173 = vpop.permute.xlu0 %1172
      %1174 = vrot.lane.b32.xlu0 %v1100, 4
      %v1175 = vpop.permute.xlu0 %1174
      %1176 = vrot.lane.b32.xlu0 %v1101, 4
      %v1177 = vpop.permute.xlu0 %1176
      %1178 = vrot.lane.b32.xlu0 %v1102, 4
      %v1179 = vpop.permute.xlu0 %1178
      %1180 = vrot.lane.b32.xlu0 %v1103, 4
      %v1181 = vpop.permute.xlu0 %1180
      %1182 = vrot.lane.b32.xlu0 %v1104, 4
      %v1183 = vpop.permute.xlu0 %1182
      %1184 = vrot.lane.b32.xlu0 %v1105, 4
      %v1185 = vpop.permute.xlu0 %1184
      %1186 = vrot.lane.b32.xlu0 %v1106, 4
      %v1187 = vpop.permute.xlu0 %1186
      %1188 = vrot.lane.b32.xlu0 %v1107, 4
      %v1189 = vpop.permute.xlu0 %1188
      %1190 = vrot.lane.b32.xlu0 %v1108, 4
      %v1191 = vpop.permute.xlu0 %1190
      %1192 = vrot.lane.b32.xlu0 %v1109, 4
      %v1193 = vpop.permute.xlu0 %1192
      %1194 = vrot.lane.b32.xlu0 %v1110, 4
      %v1195 = vpop.permute.xlu0 %1194
      %1196 = vrot.lane.b32.xlu0 %v1111, 4
      %v1197 = vpop.permute.xlu0 %1196
      %1198 = vrot.lane.b32.xlu0 %v1112, 4
      %v1199 = vpop.permute.xlu0 %1198
      %1200 = vrot.lane.b32.xlu0 %v1113, 4
      %v1201 = vpop.permute.xlu0 %1200
      %1202 = vrot.lane.b32.xlu0 %v1114, 4
      %v1203 = vpop.permute.xlu0 %1202
      %1204 = vrot.lane.b32.xlu0 %v1115, 4
      %v1205 = vpop.permute.xlu0 %1204
      %1206 = vrot.lane.b32.xlu0 %v1116, 4
      %v1207 = vpop.permute.xlu0 %1206
      %1208 = vrot.lane.b32.xlu0 %v1117, 4
      %v1209 = vpop.permute.xlu0 %1208
      %1210 = vrot.lane.b32.xlu0 %v1118, 4
      %v1211 = vpop.permute.xlu0 %1210
      %1212 = vrot.lane.b32.xlu0 %v1119, 4
      %v1213 = vpop.permute.xlu0 %1212
      %1214 = vrot.lane.b32.xlu0 %v1120, 4
      %v1215 = vpop.permute.xlu0 %1214
      %1216 = vrot.lane.b32.xlu0 %v1121, 4
      %v1217 = vpop.permute.xlu0 %1216
      %vm1250 = vcmask 64544
      %1251 = vst.msk [vmem:[#allocation3] sm:$0xff] %vm1250, %v1155
      %1252 = vst.msk [vmem:[#allocation3 + $0x8] sm:$0xff] %vm1250, %v1157
      %1253 = vst.msk [vmem:[#allocation3 + $0x10] sm:$0xff] %vm1250, %v1159
      %1254 = vst.msk [vmem:[#allocation3 + $0x18] sm:$0xff] %vm1250, %v1161
      %1255 = vst.msk [vmem:[#allocation3 + $0x20] sm:$0xff] %vm1250, %v1163
      %1256 = vst.msk [vmem:[#allocation3 + $0x28] sm:$0xff] %vm1250, %v1165
      %1257 = vst.msk [vmem:[#allocation3 + $0x30] sm:$0xff] %vm1250, %v1167
      %1258 = vst.msk [vmem:[#allocation3 + $0x38] sm:$0xff] %vm1250, %v1169
      %1259 = vst.msk [vmem:[#allocation3 + $0x40] sm:$0xff] %vm1250, %v1171
      %1260 = vst.msk [vmem:[#allocation3 + $0x48] sm:$0xff] %vm1250, %v1173
      %1261 = vst.msk [vmem:[#allocation3 + $0x50] sm:$0xff] %vm1250, %v1175
      %1262 = vst.msk [vmem:[#allocation3 + $0x58] sm:$0xff] %vm1250, %v1177
      %1263 = vst.msk [vmem:[#allocation3 + $0x60] sm:$0xff] %vm1250, %v1179
      %1264 = vst.msk [vmem:[#allocation3 + $0x68] sm:$0xff] %vm1250, %v1181
      %1265 = vst.msk [vmem:[#allocation3 + $0x70] sm:$0xff] %vm1250, %v1183
      %1266 = vst.msk [vmem:[#allocation3 + $0x78] sm:$0xff] %vm1250, %v1185
      %1267 = vst.msk [vmem:[#allocation3 + $0x80] sm:$0xff] %vm1250, %v1187
      %1268 = vst.msk [vmem:[#allocation3 + $0x88] sm:$0xff] %vm1250, %v1189
      %1269 = vst.msk [vmem:[#allocation3 + $0x90] sm:$0xff] %vm1250, %v1191
      %1270 = vst.msk [vmem:[#allocation3 + $0x98] sm:$0xff] %vm1250, %v1193
      %1271 = vst.msk [vmem:[#allocation3 + $0xa0] sm:$0xff] %vm1250, %v1195
      %1272 = vst.msk [vmem:[#allocation3 + $0xa8] sm:$0xff] %vm1250, %v1197
      %1273 = vst.msk [vmem:[#allocation3 + $0xb0] sm:$0xff] %vm1250, %v1199
      %1274 = vst.msk [vmem:[#allocation3 + $0xb8] sm:$0xff] %vm1250, %v1201
      %1275 = vst.msk [vmem:[#allocation3 + $0xc0] sm:$0xff] %vm1250, %v1203
      %1276 = vst.msk [vmem:[#allocation3 + $0xc8] sm:$0xff] %vm1250, %v1205
      %1277 = vst.msk [vmem:[#allocation3 + $0xd0] sm:$0xff] %vm1250, %v1207
      %1278 = vst.msk [vmem:[#allocation3 + $0xd8] sm:$0xff] %vm1250, %v1209
      %1279 = vst.msk [vmem:[#allocation3 + $0xe0] sm:$0xff] %vm1250, %v1211
      %1280 = vst.msk [vmem:[#allocation3 + $0xe8] sm:$0xff] %vm1250, %v1213
      %1281 = vst.msk [vmem:[#allocation3 + $0xf0] sm:$0xff] %vm1250, %v1215
      %1282 = vst.msk [vmem:[#allocation3 + $0xf8] sm:$0xff] %vm1250, %v1217
      %v1283 = vld [vmem:[#allocation2 + $0x2] sm:$0xff]
      %v1284 = vld [vmem:[#allocation2 + $0xa] sm:$0xff]
      %v1285 = vld [vmem:[#allocation2 + $0x1a] sm:$0xff]
      %v1286 = vld [vmem:[#allocation2 + $0x22] sm:$0xff]
      %v1287 = vld [vmem:[#allocation2 + $0x32] sm:$0xff]
      %v1288 = vld [vmem:[#allocation2 + $0x3a] sm:$0xff]
      %v1289 = vld [vmem:[#allocation2 + $0x4a] sm:$0xff]
      %v1290 = vld [vmem:[#allocation2 + $0x52] sm:$0xff]
      %v1291 = vld [vmem:[#allocation2 + $0x62] sm:$0xff]
      %v1292 = vld [vmem:[#allocation2 + $0x6a] sm:$0xff]
      %v1293 = vld [vmem:[#allocation2 + $0x7a] sm:$0xff]
      %v1294 = vld [vmem:[#allocation2 + $0x82] sm:$0xff]
      %v1295 = vld [vmem:[#allocation2 + $0x92] sm:$0xff]
      %v1296 = vld [vmem:[#allocation2 + $0x9a] sm:$0xff]
      %v1297 = vld [vmem:[#allocation2 + $0xaa] sm:$0xff]
      %v1298 = vld [vmem:[#allocation2 + $0xb2] sm:$0xff]
      %v1299 = vld [vmem:[#allocation2 + $0xc2] sm:$0xff]
      %v1300 = vld [vmem:[#allocation2 + $0xca] sm:$0xff]
      %v1301 = vld [vmem:[#allocation2 + $0xda] sm:$0xff]
      %v1302 = vld [vmem:[#allocation2 + $0xe2] sm:$0xff]
      %v1303 = vld [vmem:[#allocation2 + $0xf2] sm:$0xff]
      %v1304 = vld [vmem:[#allocation2 + $0xfa] sm:$0xff]
      %v1305 = vld [vmem:[#allocation2 + $0x10a] sm:$0xff]
      %v1306 = vld [vmem:[#allocation2 + $0x112] sm:$0xff]
      %v1307 = vld [vmem:[#allocation2 + $0x122] sm:$0xff]
      %v1308 = vld [vmem:[#allocation2 + $0x12a] sm:$0xff]
      %v1309 = vld [vmem:[#allocation2 + $0x13a] sm:$0xff]
      %v1310 = vld [vmem:[#allocation2 + $0x142] sm:$0xff]
      %v1311 = vld [vmem:[#allocation2 + $0x152] sm:$0xff]
      %v1312 = vld [vmem:[#allocation2 + $0x15a] sm:$0xff]
      %v1313 = vld [vmem:[#allocation2 + $0x16a] sm:$0xff]
      %v1314 = vld [vmem:[#allocation2 + $0x172] sm:$0xff]
      %1347 = vrot.lane.b32.xlu0 %v1283, 8
      %v1348 = vpop.permute.xlu0 %1347
      %1349 = vrot.lane.b32.xlu0 %v1284, 8
      %v1350 = vpop.permute.xlu0 %1349
      %1351 = vrot.lane.b32.xlu0 %v1285, 8
      %v1352 = vpop.permute.xlu0 %1351
      %1353 = vrot.lane.b32.xlu0 %v1286, 8
      %v1354 = vpop.permute.xlu0 %1353
      %1355 = vrot.lane.b32.xlu0 %v1287, 8
      %v1356 = vpop.permute.xlu0 %1355
      %1357 = vrot.lane.b32.xlu0 %v1288, 8
      %v1358 = vpop.permute.xlu0 %1357
      %1359 = vrot.lane.b32.xlu0 %v1289, 8
      %v1360 = vpop.permute.xlu0 %1359
      %1361 = vrot.lane.b32.xlu0 %v1290, 8
      %v1362 = vpop.permute.xlu0 %1361
      %1363 = vrot.lane.b32.xlu0 %v1291, 8
      %v1364 = vpop.permute.xlu0 %1363
      %1365 = vrot.lane.b32.xlu0 %v1292, 8
      %v1366 = vpop.permute.xlu0 %1365
      %1367 = vrot.lane.b32.xlu0 %v1293, 8
      %v1368 = vpop.permute.xlu0 %1367
      %1369 = vrot.lane.b32.xlu0 %v1294, 8
      %v1370 = vpop.permute.xlu0 %1369
      %1371 = vrot.lane.b32.xlu0 %v1295, 8
      %v1372 = vpop.permute.xlu0 %1371
      %1373 = vrot.lane.b32.xlu0 %v1296, 8
      %v1374 = vpop.permute.xlu0 %1373
      %1375 = vrot.lane.b32.xlu0 %v1297, 8
      %v1376 = vpop.permute.xlu0 %1375
      %1377 = vrot.lane.b32.xlu0 %v1298, 8
      %v1378 = vpop.permute.xlu0 %1377
      %1379 = vrot.lane.b32.xlu0 %v1299, 8
      %v1380 = vpop.permute.xlu0 %1379
      %1381 = vrot.lane.b32.xlu0 %v1300, 8
      %v1382 = vpop.permute.xlu0 %1381
      %1383 = vrot.lane.b32.xlu0 %v1301, 8
      %v1384 = vpop.permute.xlu0 %1383
      %1385 = vrot.lane.b32.xlu0 %v1302, 8
      %v1386 = vpop.permute.xlu0 %1385
      %1387 = vrot.lane.b32.xlu0 %v1303, 8
      %v1388 = vpop.permute.xlu0 %1387
      %1389 = vrot.lane.b32.xlu0 %v1304, 8
      %v1390 = vpop.permute.xlu0 %1389
      %1391 = vrot.lane.b32.xlu0 %v1305, 8
      %v1392 = vpop.permute.xlu0 %1391
      %1393 = vrot.lane.b32.xlu0 %v1306, 8
      %v1394 = vpop.permute.xlu0 %1393
      %1395 = vrot.lane.b32.xlu0 %v1307, 8
      %v1396 = vpop.permute.xlu0 %1395
      %1397 = vrot.lane.b32.xlu0 %v1308, 8
      %v1398 = vpop.permute.xlu0 %1397
      %1399 = vrot.lane.b32.xlu0 %v1309, 8
      %v1400 = vpop.permute.xlu0 %1399
      %1401 = vrot.lane.b32.xlu0 %v1310, 8
      %v1402 = vpop.permute.xlu0 %1401
      %1403 = vrot.lane.b32.xlu0 %v1311, 8
      %v1404 = vpop.permute.xlu0 %1403
      %1405 = vrot.lane.b32.xlu0 %v1312, 8
      %v1406 = vpop.permute.xlu0 %1405
      %1407 = vrot.lane.b32.xlu0 %v1313, 8
      %v1408 = vpop.permute.xlu0 %1407
      %1409 = vrot.lane.b32.xlu0 %v1314, 8
      %v1410 = vpop.permute.xlu0 %1409
      %vm1443 = vcmask 97344
      %1444 = vst.msk [vmem:[#allocation3] sm:$0xff] %vm1443, %v1348
      %1445 = vst.msk [vmem:[#allocation3 + $0x8] sm:$0xff] %vm1443, %v1350
      %1446 = vst.msk [vmem:[#allocation3 + $0x10] sm:$0xff] %vm1443, %v1352
      %1447 = vst.msk [vmem:[#allocation3 + $0x18] sm:$0xff] %vm1443, %v1354
      %1448 = vst.msk [vmem:[#allocation3 + $0x20] sm:$0xff] %vm1443, %v1356
      %1449 = vst.msk [vmem:[#allocation3 + $0x28] sm:$0xff] %vm1443, %v1358
      %1450 = vst.msk [vmem:[#allocation3 + $0x30] sm:$0xff] %vm1443, %v1360
      %1451 = vst.msk [vmem:[#allocation3 + $0x38] sm:$0xff] %vm1443, %v1362
      %1452 = vst.msk [vmem:[#allocation3 + $0x40] sm:$0xff] %vm1443, %v1364
      %1453 = vst.msk [vmem:[#allocation3 + $0x48] sm:$0xff] %vm1443, %v1366
      %1454 = vst.msk [vmem:[#allocation3 + $0x50] sm:$0xff] %vm1443, %v1368
      %1455 = vst.msk [vmem:[#allocation3 + $0x58] sm:$0xff] %vm1443, %v1370
      %1456 = vst.msk [vmem:[#allocation3 + $0x60] sm:$0xff] %vm1443, %v1372
      %1457 = vst.msk [vmem:[#allocation3 + $0x68] sm:$0xff] %vm1443, %v1374
      %1458 = vst.msk [vmem:[#allocation3 + $0x70] sm:$0xff] %vm1443, %v1376
      %1459 = vst.msk [vmem:[#allocation3 + $0x78] sm:$0xff] %vm1443, %v1378
      %1460 = vst.msk [vmem:[#allocation3 + $0x80] sm:$0xff] %vm1443, %v1380
      %1461 = vst.msk [vmem:[#allocation3 + $0x88] sm:$0xff] %vm1443, %v1382
      %1462 = vst.msk [vmem:[#allocation3 + $0x90] sm:$0xff] %vm1443, %v1384
      %1463 = vst.msk [vmem:[#allocation3 + $0x98] sm:$0xff] %vm1443, %v1386
      %1464 = vst.msk [vmem:[#allocation3 + $0xa0] sm:$0xff] %vm1443, %v1388
      %1465 = vst.msk [vmem:[#allocation3 + $0xa8] sm:$0xff] %vm1443, %v1390
      %1466 = vst.msk [vmem:[#allocation3 + $0xb0] sm:$0xff] %vm1443, %v1392
      %1467 = vst.msk [vmem:[#allocation3 + $0xb8] sm:$0xff] %vm1443, %v1394
      %1468 = vst.msk [vmem:[#allocation3 + $0xc0] sm:$0xff] %vm1443, %v1396
      %1469 = vst.msk [vmem:[#allocation3 + $0xc8] sm:$0xff] %vm1443, %v1398
      %1470 = vst.msk [vmem:[#allocation3 + $0xd0] sm:$0xff] %vm1443, %v1400
      %1471 = vst.msk [vmem:[#allocation3 + $0xd8] sm:$0xff] %vm1443, %v1402
      %1472 = vst.msk [vmem:[#allocation3 + $0xe0] sm:$0xff] %vm1443, %v1404
      %1473 = vst.msk [vmem:[#allocation3 + $0xe8] sm:$0xff] %vm1443, %v1406
      %1474 = vst.msk [vmem:[#allocation3 + $0xf0] sm:$0xff] %vm1443, %v1408
      %1475 = vst.msk [vmem:[#allocation3 + $0xf8] sm:$0xff] %vm1443, %v1410
      %v1476 = vld [vmem:[%s993] sm:$0xff]
      %v1477 = vld [vmem:[%s993 + $0x8] sm:$0xff]
      %v1478 = vld [vmem:[%s993 + $0x18] sm:$0xff]
      %v1479 = vld [vmem:[%s993 + $0x20] sm:$0xff]
      %v1480 = vld [vmem:[%s993 + $0x30] sm:$0xff]
      %v1481 = vld [vmem:[%s993 + $0x38] sm:$0xff]
      %v1482 = vld [vmem:[%s993 + $0x48] sm:$0xff]
      %v1483 = vld [vmem:[%s993 + $0x50] sm:$0xff]
      %v1484 = vld [vmem:[%s993 + $0x60] sm:$0xff]
      %v1485 = vld [vmem:[%s993 + $0x68] sm:$0xff]
      %v1486 = vld [vmem:[%s993 + $0x78] sm:$0xff]
      %v1487 = vld [vmem:[%s993 + $0x80] sm:$0xff]
      %v1488 = vld [vmem:[%s993 + $0x90] sm:$0xff]
      %v1489 = vld [vmem:[%s993 + $0x98] sm:$0xff]
      %v1490 = vld [vmem:[%s993 + $0xa8] sm:$0xff]
      %v1491 = vld [vmem:[%s993 + $0xb0] sm:$0xff]
      %v1492 = vld [vmem:[%s993 + $0xc0] sm:$0xff]
      %v1493 = vld [vmem:[%s993 + $0xc8] sm:$0xff]
      %v1494 = vld [vmem:[%s993 + $0xd8] sm:$0xff]
      %v1495 = vld [vmem:[%s993 + $0xe0] sm:$0xff]
      %v1496 = vld [vmem:[%s993 + $0xf0] sm:$0xff]
      %v1497 = vld [vmem:[%s993 + $0xf8] sm:$0xff]
      %v1498 = vld [vmem:[%s993 + $0x108] sm:$0xff]
      %v1499 = vld [vmem:[%s993 + $0x110] sm:$0xff]
      %v1500 = vld [vmem:[%s993 + $0x120] sm:$0xff]
      %v1501 = vld [vmem:[%s993 + $0x128] sm:$0xff]
      %v1502 = vld [vmem:[%s993 + $0x138] sm:$0xff]
      %v1503 = vld [vmem:[%s993 + $0x140] sm:$0xff]
      %v1504 = vld [vmem:[%s993 + $0x150] sm:$0xff]
      %v1505 = vld [vmem:[%s993 + $0x158] sm:$0xff]
      %v1506 = vld [vmem:[%s993 + $0x168] sm:$0xff]
      %v1507 = vld [vmem:[%s993 + $0x170] sm:$0xff]
      %1540 = vrot.lane.b32.xlu0 %v1476, 12
      %v1541 = vpop.permute.xlu0 %1540
      %1542 = vrot.lane.b32.xlu0 %v1477, 12
      %v1543 = vpop.permute.xlu0 %1542
      %1544 = vrot.lane.b32.xlu0 %v1478, 12
      %v1545 = vpop.permute.xlu0 %1544
      %1546 = vrot.lane.b32.xlu0 %v1479, 12
      %v1547 = vpop.permute.xlu0 %1546
      %1548 = vrot.lane.b32.xlu0 %v1480, 12
      %v1549 = vpop.permute.xlu0 %1548
      %1550 = vrot.lane.b32.xlu0 %v1481, 12
      %v1551 = vpop.permute.xlu0 %1550
      %1552 = vrot.lane.b32.xlu0 %v1482, 12
      %v1553 = vpop.permute.xlu0 %1552
      %1554 = vrot.lane.b32.xlu0 %v1483, 12
      %v1555 = vpop.permute.xlu0 %1554
      %1556 = vrot.lane.b32.xlu0 %v1484, 12
      %v1557 = vpop.permute.xlu0 %1556
      %1558 = vrot.lane.b32.xlu0 %v1485, 12
      %v1559 = vpop.permute.xlu0 %1558
      %1560 = vrot.lane.b32.xlu0 %v1486, 12
      %v1561 = vpop.permute.xlu0 %1560
      %1562 = vrot.lane.b32.xlu0 %v1487, 12
      %v1563 = vpop.permute.xlu0 %1562
      %1564 = vrot.lane.b32.xlu0 %v1488, 12
      %v1565 = vpop.permute.xlu0 %1564
      %1566 = vrot.lane.b32.xlu0 %v1489, 12
      %v1567 = vpop.permute.xlu0 %1566
      %1568 = vrot.lane.b32.xlu0 %v1490, 12
      %v1569 = vpop.permute.xlu0 %1568
      %1570 = vrot.lane.b32.xlu0 %v1491, 12
      %v1571 = vpop.permute.xlu0 %1570
      %1572 = vrot.lane.b32.xlu0 %v1492, 12
      %v1573 = vpop.permute.xlu0 %1572
      %1574 = vrot.lane.b32.xlu0 %v1493, 12
      %v1575 = vpop.permute.xlu0 %1574
      %1576 = vrot.lane.b32.xlu0 %v1494, 12
      %v1577 = vpop.permute.xlu0 %1576
      %1578 = vrot.lane.b32.xlu0 %v1495, 12
      %v1579 = vpop.permute.xlu0 %1578
      %1580 = vrot.lane.b32.xlu0 %v1496, 12
      %v1581 = vpop.permute.xlu0 %1580
      %1582 = vrot.lane.b32.xlu0 %v1497, 12
      %v1583 = vpop.permute.xlu0 %1582
      %1584 = vrot.lane.b32.xlu0 %v1498, 12
      %v1585 = vpop.permute.xlu0 %1584
      %1586 = vrot.lane.b32.xlu0 %v1499, 12
      %v1587 = vpop.permute.xlu0 %1586
      %1588 = vrot.lane.b32.xlu0 %v1500, 12
      %v1589 = vpop.permute.xlu0 %1588
      %1590 = vrot.lane.b32.xlu0 %v1501, 12
      %v1591 = vpop.permute.xlu0 %1590
      %1592 = vrot.lane.b32.xlu0 %v1502, 12
      %v1593 = vpop.permute.xlu0 %1592
      %1594 = vrot.lane.b32.xlu0 %v1503, 12
      %v1595 = vpop.permute.xlu0 %1594
      %1596 = vrot.lane.b32.xlu0 %v1504, 12
      %v1597 = vpop.permute.xlu0 %1596
      %1598 = vrot.lane.b32.xlu0 %v1505, 12
      %v1599 = vpop.permute.xlu0 %1598
      %1600 = vrot.lane.b32.xlu0 %v1506, 12
      %v1601 = vpop.permute.xlu0 %1600
      %1602 = vrot.lane.b32.xlu0 %v1507, 12
      %v1603 = vpop.permute.xlu0 %1602
      %vm1636 = vcmask 130144
      %1637 = vst.msk [vmem:[#allocation3] sm:$0xff] %vm1636, %v1541
      %1638 = vst.msk [vmem:[#allocation3 + $0x8] sm:$0xff] %vm1636, %v1543
      %1639 = vst.msk [vmem:[#allocation3 + $0x10] sm:$0xff] %vm1636, %v1545
      %1640 = vst.msk [vmem:[#allocation3 + $0x18] sm:$0xff] %vm1636, %v1547
      %1641 = vst.msk [vmem:[#allocation3 + $0x20] sm:$0xff] %vm1636, %v1549
      %1642 = vst.msk [vmem:[#allocation3 + $0x28] sm:$0xff] %vm1636, %v1551
      %1643 = vst.msk [vmem:[#allocation3 + $0x30] sm:$0xff] %vm1636, %v1553
      %1644 = vst.msk [vmem:[#allocation3 + $0x38] sm:$0xff] %vm1636, %v1555
      %1645 = vst.msk [vmem:[#allocation3 + $0x40] sm:$0xff] %vm1636, %v1557
      %1646 = vst.msk [vmem:[#allocation3 + $0x48] sm:$0xff] %vm1636, %v1559
      %1647 = vst.msk [vmem:[#allocation3 + $0x50] sm:$0xff] %vm1636, %v1561
      %1648 = vst.msk [vmem:[#allocation3 + $0x58] sm:$0xff] %vm1636, %v1563
      %1649 = vst.msk [vmem:[#allocation3 + $0x60] sm:$0xff] %vm1636, %v1565
      %1650 = vst.msk [vmem:[#allocation3 + $0x68] sm:$0xff] %vm1636, %v1567
      %1651 = vst.msk [vmem:[#allocation3 + $0x70] sm:$0xff] %vm1636, %v1569
      %1652 = vst.msk [vmem:[#allocation3 + $0x78] sm:$0xff] %vm1636, %v1571
      %1653 = vst.msk [vmem:[#allocation3 + $0x80] sm:$0xff] %vm1636, %v1573
      %1654 = vst.msk [vmem:[#allocation3 + $0x88] sm:$0xff] %vm1636, %v1575
      %1655 = vst.msk [vmem:[#allocation3 + $0x90] sm:$0xff] %vm1636, %v1577
      %1656 = vst.msk [vmem:[#allocation3 + $0x98] sm:$0xff] %vm1636, %v1579
      %1657 = vst.msk [vmem:[#allocation3 + $0xa0] sm:$0xff] %vm1636, %v1581
      %1658 = vst.msk [vmem:[#allocation3 + $0xa8] sm:$0xff] %vm1636, %v1583
      %1659 = vst.msk [vmem:[#allocation3 + $0xb0] sm:$0xff] %vm1636, %v1585
      %1660 = vst.msk [vmem:[#allocation3 + $0xb8] sm:$0xff] %vm1636, %v1587
      %1661 = vst.msk [vmem:[#allocation3 + $0xc0] sm:$0xff] %vm1636, %v1589
      %1662 = vst.msk [vmem:[#allocation3 + $0xc8] sm:$0xff] %vm1636, %v1591
      %1663 = vst.msk [vmem:[#allocation3 + $0xd0] sm:$0xff] %vm1636, %v1593
      %1664 = vst.msk [vmem:[#allocation3 + $0xd8] sm:$0xff] %vm1636, %v1595
      %1665 = vst.msk [vmem:[#allocation3 + $0xe0] sm:$0xff] %vm1636, %v1597
      %1666 = vst.msk [vmem:[#allocation3 + $0xe8] sm:$0xff] %vm1636, %v1599
      %1667 = vst.msk [vmem:[#allocation3 + $0xf0] sm:$0xff] %vm1636, %v1601
      %1668 = vst.msk [vmem:[#allocation3 + $0xf8] sm:$0xff] %vm1636, %v1603
      %v1669 = vld [vmem:[%s993 + $0x1] sm:$0xff]
      %v1670 = vld [vmem:[%s993 + $0x9] sm:$0xff]
      %v1671 = vld [vmem:[%s993 + $0x19] sm:$0xff]
      %v1672 = vld [vmem:[%s993 + $0x21] sm:$0xff]
      %v1673 = vld [vmem:[%s993 + $0x31] sm:$0xff]
      %v1674 = vld [vmem:[%s993 + $0x39] sm:$0xff]
      %v1675 = vld [vmem:[%s993 + $0x49] sm:$0xff]
      %v1676 = vld [vmem:[%s993 + $0x51] sm:$0xff]
      %v1677 = vld [vmem:[%s993 + $0x61] sm:$0xff]
      %v1678 = vld [vmem:[%s993 + $0x69] sm:$0xff]
      %v1679 = vld [vmem:[%s993 + $0x79] sm:$0xff]
      %v1680 = vld [vmem:[%s993 + $0x81] sm:$0xff]
      %v1681 = vld [vmem:[%s993 + $0x91] sm:$0xff]
      %v1682 = vld [vmem:[%s993 + $0x99] sm:$0xff]
      %v1683 = vld [vmem:[%s993 + $0xa9] sm:$0xff]
      %v1684 = vld [vmem:[%s993 + $0xb1] sm:$0xff]
      %v1685 = vld [vmem:[%s993 + $0xc1] sm:$0xff]
      %v1686 = vld [vmem:[%s993 + $0xc9] sm:$0xff]
      %v1687 = vld [vmem:[%s993 + $0xd9] sm:$0xff]
      %v1688 = vld [vmem:[%s993 + $0xe1] sm:$0xff]
      %v1689 = vld [vmem:[%s993 + $0xf1] sm:$0xff]
      %v1690 = vld [vmem:[%s993 + $0xf9] sm:$0xff]
      %v1691 = vld [vmem:[%s993 + $0x109] sm:$0xff]
      %v1692 = vld [vmem:[%s993 + $0x111] sm:$0xff]
      %v1693 = vld [vmem:[%s993 + $0x121] sm:$0xff]
      %v1694 = vld [vmem:[%s993 + $0x129] sm:$0xff]
      %v1695 = vld [vmem:[%s993 + $0x139] sm:$0xff]
      %v1696 = vld [vmem:[%s993 + $0x141] sm:$0xff]
      %v1697 = vld [vmem:[%s993 + $0x151] sm:$0xff]
      %v1698 = vld [vmem:[%s993 + $0x159] sm:$0xff]
      %v1699 = vld [vmem:[%s993 + $0x169] sm:$0xff]
      %v1700 = vld [vmem:[%s993 + $0x171] sm:$0xff]
      %1733 = vrot.lane.b32.xlu0 %v1669, 16
      %v1734 = vpop.permute.xlu0 %1733
      %1735 = vrot.lane.b32.xlu0 %v1670, 16
      %v1736 = vpop.permute.xlu0 %1735
      %1737 = vrot.lane.b32.xlu0 %v1671, 16
      %v1738 = vpop.permute.xlu0 %1737
      %1739 = vrot.lane.b32.xlu0 %v1672, 16
      %v1740 = vpop.permute.xlu0 %1739
      %1741 = vrot.lane.b32.xlu0 %v1673, 16
      %v1742 = vpop.permute.xlu0 %1741
      %1743 = vrot.lane.b32.xlu0 %v1674, 16
      %v1744 = vpop.permute.xlu0 %1743
      %1745 = vrot.lane.b32.xlu0 %v1675, 16
      %v1746 = vpop.permute.xlu0 %1745
      %1747 = vrot.lane.b32.xlu0 %v1676, 16
      %v1748 = vpop.permute.xlu0 %1747
      %1749 = vrot.lane.b32.xlu0 %v1677, 16
      %v1750 = vpop.permute.xlu0 %1749
      %1751 = vrot.lane.b32.xlu0 %v1678, 16
      %v1752 = vpop.permute.xlu0 %1751
      %1753 = vrot.lane.b32.xlu0 %v1679, 16
      %v1754 = vpop.permute.xlu0 %1753
      %1755 = vrot.lane.b32.xlu0 %v1680, 16
      %v1756 = vpop.permute.xlu0 %1755
      %1757 = vrot.lane.b32.xlu0 %v1681, 16
      %v1758 = vpop.permute.xlu0 %1757
      %1759 = vrot.lane.b32.xlu0 %v1682, 16
      %v1760 = vpop.permute.xlu0 %1759
      %1761 = vrot.lane.b32.xlu0 %v1683, 16
      %v1762 = vpop.permute.xlu0 %1761
      %1763 = vrot.lane.b32.xlu0 %v1684, 16
      %v1764 = vpop.permute.xlu0 %1763
      %1765 = vrot.lane.b32.xlu0 %v1685, 16
      %v1766 = vpop.permute.xlu0 %1765
      %1767 = vrot.lane.b32.xlu0 %v1686, 16
      %v1768 = vpop.permute.xlu0 %1767
      %1769 = vrot.lane.b32.xlu0 %v1687, 16
      %v1770 = vpop.permute.xlu0 %1769
      %1771 = vrot.lane.b32.xlu0 %v1688, 16
      %v1772 = vpop.permute.xlu0 %1771
      %1773 = vrot.lane.b32.xlu0 %v1689, 16
      %v1774 = vpop.permute.xlu0 %1773
      %1775 = vrot.lane.b32.xlu0 %v1690, 16
      %v1776 = vpop.permute.xlu0 %1775
      %1777 = vrot.lane.b32.xlu0 %v1691, 16
      %v1778 = vpop.permute.xlu0 %1777
      %1779 = vrot.lane.b32.xlu0 %v1692, 16
      %v1780 = vpop.permute.xlu0 %1779
      %1781 = vrot.lane.b32.xlu0 %v1693, 16
      %v1782 = vpop.permute.xlu0 %1781
      %1783 = vrot.lane.b32.xlu0 %v1694, 16
      %v1784 = vpop.permute.xlu0 %1783
      %1785 = vrot.lane.b32.xlu0 %v1695, 16
      %v1786 = vpop.permute.xlu0 %1785
      %1787 = vrot.lane.b32.xlu0 %v1696, 16
      %v1788 = vpop.permute.xlu0 %1787
      %1789 = vrot.lane.b32.xlu0 %v1697, 16
      %v1790 = vpop.permute.xlu0 %1789
      %1791 = vrot.lane.b32.xlu0 %v1698, 16
      %v1792 = vpop.permute.xlu0 %1791
      %1793 = vrot.lane.b32.xlu0 %v1699, 16
      %v1794 = vpop.permute.xlu0 %1793
      %1795 = vrot.lane.b32.xlu0 %v1700, 16
      %v1796 = vpop.permute.xlu0 %1795
      %vm1829 = vcmask 162944
      %1830 = vst.msk [vmem:[#allocation3] sm:$0xff] %vm1829, %v1734
      %1831 = vst.msk [vmem:[#allocation3 + $0x8] sm:$0xff] %vm1829, %v1736
      %1832 = vst.msk [vmem:[#allocation3 + $0x10] sm:$0xff] %vm1829, %v1738
      %1833 = vst.msk [vmem:[#allocation3 + $0x18] sm:$0xff] %vm1829, %v1740
      %1834 = vst.msk [vmem:[#allocation3 + $0x20] sm:$0xff] %vm1829, %v1742
      %1835 = vst.msk [vmem:[#allocation3 + $0x28] sm:$0xff] %vm1829, %v1744
      %1836 = vst.msk [vmem:[#allocation3 + $0x30] sm:$0xff] %vm1829, %v1746
      %1837 = vst.msk [vmem:[#allocation3 + $0x38] sm:$0xff] %vm1829, %v1748
      %1838 = vst.msk [vmem:[#allocation3 + $0x40] sm:$0xff] %vm1829, %v1750
      %1839 = vst.msk [vmem:[#allocation3 + $0x48] sm:$0xff] %vm1829, %v1752
      %1840 = vst.msk [vmem:[#allocation3 + $0x50] sm:$0xff] %vm1829, %v1754
      %1841 = vst.msk [vmem:[#allocation3 + $0x58] sm:$0xff] %vm1829, %v1756
      %1842 = vst.msk [vmem:[#allocation3 + $0x60] sm:$0xff] %vm1829, %v1758
      %1843 = vst.msk [vmem:[#allocation3 + $0x68] sm:$0xff] %vm1829, %v1760
      %1844 = vst.msk [vmem:[#allocation3 + $0x70] sm:$0xff] %vm1829, %v1762
      %1845 = vst.msk [vmem:[#allocation3 + $0x78] sm:$0xff] %vm1829, %v1764
      %1846 = vst.msk [vmem:[#allocation3 + $0x80] sm:$0xff] %vm1829, %v1766
      %1847 = vst.msk [vmem:[#allocation3 + $0x88] sm:$0xff] %vm1829, %v1768
      %1848 = vst.msk [vmem:[#allocation3 + $0x90] sm:$0xff] %vm1829, %v1770
      %1849 = vst.msk [vmem:[#allocation3 + $0x98] sm:$0xff] %vm1829, %v1772
      %1850 = vst.msk [vmem:[#allocation3 + $0xa0] sm:$0xff] %vm1829, %v1774
      %1851 = vst.msk [vmem:[#allocation3 + $0xa8] sm:$0xff] %vm1829, %v1776
      %1852 = vst.msk [vmem:[#allocation3 + $0xb0] sm:$0xff] %vm1829, %v1778
      %1853 = vst.msk [vmem:[#allocation3 + $0xb8] sm:$0xff] %vm1829, %v1780
      %1854 = vst.msk [vmem:[#allocation3 + $0xc0] sm:$0xff] %vm1829, %v1782
      %1855 = vst.msk [vmem:[#allocation3 + $0xc8] sm:$0xff] %vm1829, %v1784
      %1856 = vst.msk [vmem:[#allocation3 + $0xd0] sm:$0xff] %vm1829, %v1786
      %1857 = vst.msk [vmem:[#allocation3 + $0xd8] sm:$0xff] %vm1829, %v1788
      %1858 = vst.msk [vmem:[#allocation3 + $0xe0] sm:$0xff] %vm1829, %v1790
      %1859 = vst.msk [vmem:[#allocation3 + $0xe8] sm:$0xff] %vm1829, %v1792
      %1860 = vst.msk [vmem:[#allocation3 + $0xf0] sm:$0xff] %vm1829, %v1794
      %1861 = vst.msk [vmem:[#allocation3 + $0xf8] sm:$0xff] %vm1829, %v1796
      %v1862 = vld [vmem:[%s993 + $0x2] sm:$0xff]
      %v1863 = vld [vmem:[%s993 + $0xa] sm:$0xff]
      %v1864 = vld [vmem:[%s993 + $0x1a] sm:$0xff]
      %v1865 = vld [vmem:[%s993 + $0x22] sm:$0xff]
      %v1866 = vld [vmem:[%s993 + $0x32] sm:$0xff]
      %v1867 = vld [vmem:[%s993 + $0x3a] sm:$0xff]
      %v1868 = vld [vmem:[%s993 + $0x4a] sm:$0xff]
      %v1869 = vld [vmem:[%s993 + $0x52] sm:$0xff]
      %v1870 = vld [vmem:[%s993 + $0x62] sm:$0xff]
      %v1871 = vld [vmem:[%s993 + $0x6a] sm:$0xff]
      %v1872 = vld [vmem:[%s993 + $0x7a] sm:$0xff]
      %v1873 = vld [vmem:[%s993 + $0x82] sm:$0xff]
      %v1874 = vld [vmem:[%s993 + $0x92] sm:$0xff]
      %v1875 = vld [vmem:[%s993 + $0x9a] sm:$0xff]
      %v1876 = vld [vmem:[%s993 + $0xaa] sm:$0xff]
      %v1877 = vld [vmem:[%s993 + $0xb2] sm:$0xff]
      %v1878 = vld [vmem:[%s993 + $0xc2] sm:$0xff]
      %v1879 = vld [vmem:[%s993 + $0xca] sm:$0xff]
      %v1880 = vld [vmem:[%s993 + $0xda] sm:$0xff]
      %v1881 = vld [vmem:[%s993 + $0xe2] sm:$0xff]
      %v1882 = vld [vmem:[%s993 + $0xf2] sm:$0xff]
      %v1883 = vld [vmem:[%s993 + $0xfa] sm:$0xff]
      %v1884 = vld [vmem:[%s993 + $0x10a] sm:$0xff]
      %v1885 = vld [vmem:[%s993 + $0x112] sm:$0xff]
      %v1886 = vld [vmem:[%s993 + $0x122] sm:$0xff]
      %v1887 = vld [vmem:[%s993 + $0x12a] sm:$0xff]
      %v1888 = vld [vmem:[%s993 + $0x13a] sm:$0xff]
      %v1889 = vld [vmem:[%s993 + $0x142] sm:$0xff]
      %v1890 = vld [vmem:[%s993 + $0x152] sm:$0xff]
      %v1891 = vld [vmem:[%s993 + $0x15a] sm:$0xff]
      %v1892 = vld [vmem:[%s993 + $0x16a] sm:$0xff]
      %v1893 = vld [vmem:[%s993 + $0x172] sm:$0xff]
      %1926 = vrot.lane.b32.xlu0 %v1862, 20
      %v1927 = vpop.permute.xlu0 %1926
      %1928 = vrot.lane.b32.xlu0 %v1863, 20
      %v1929 = vpop.permute.xlu0 %1928
      %1930 = vrot.lane.b32.xlu0 %v1864, 20
      %v1931 = vpop.permute.xlu0 %1930
      %1932 = vrot.lane.b32.xlu0 %v1865, 20
      %v1933 = vpop.permute.xlu0 %1932
      %1934 = vrot.lane.b32.xlu0 %v1866, 20
      %v1935 = vpop.permute.xlu0 %1934
      %1936 = vrot.lane.b32.xlu0 %v1867, 20
      %v1937 = vpop.permute.xlu0 %1936
      %1938 = vrot.lane.b32.xlu0 %v1868, 20
      %v1939 = vpop.permute.xlu0 %1938
      %1940 = vrot.lane.b32.xlu0 %v1869, 20
      %v1941 = vpop.permute.xlu0 %1940
      %1942 = vrot.lane.b32.xlu0 %v1870, 20
      %v1943 = vpop.permute.xlu0 %1942
      %1944 = vrot.lane.b32.xlu0 %v1871, 20
      %v1945 = vpop.permute.xlu0 %1944
      %1946 = vrot.lane.b32.xlu0 %v1872, 20
      %v1947 = vpop.permute.xlu0 %1946
      %1948 = vrot.lane.b32.xlu0 %v1873, 20
      %v1949 = vpop.permute.xlu0 %1948
      %1950 = vrot.lane.b32.xlu0 %v1874, 20
      %v1951 = vpop.permute.xlu0 %1950
      %1952 = vrot.lane.b32.xlu0 %v1875, 20
      %v1953 = vpop.permute.xlu0 %1952
      %1954 = vrot.lane.b32.xlu0 %v1876, 20
      %v1955 = vpop.permute.xlu0 %1954
      %1956 = vrot.lane.b32.xlu0 %v1877, 20
      %v1957 = vpop.permute.xlu0 %1956
      %1958 = vrot.lane.b32.xlu0 %v1878, 20
      %v1959 = vpop.permute.xlu0 %1958
      %1960 = vrot.lane.b32.xlu0 %v1879, 20
      %v1961 = vpop.permute.xlu0 %1960
      %1962 = vrot.lane.b32.xlu0 %v1880, 20
      %v1963 = vpop.permute.xlu0 %1962
      %1964 = vrot.lane.b32.xlu0 %v1881, 20
      %v1965 = vpop.permute.xlu0 %1964
      %1966 = vrot.lane.b32.xlu0 %v1882, 20
      %v1967 = vpop.permute.xlu0 %1966
      %1968 = vrot.lane.b32.xlu0 %v1883, 20
      %v1969 = vpop.permute.xlu0 %1968
      %1970 = vrot.lane.b32.xlu0 %v1884, 20
      %v1971 = vpop.permute.xlu0 %1970
      %1972 = vrot.lane.b32.xlu0 %v1885, 20
      %v1973 = vpop.permute.xlu0 %1972
      %1974 = vrot.lane.b32.xlu0 %v1886, 20
      %v1975 = vpop.permute.xlu0 %1974
      %1976 = vrot.lane.b32.xlu0 %v1887, 20
      %v1977 = vpop.permute.xlu0 %1976
      %1978 = vrot.lane.b32.xlu0 %v1888, 20
      %v1979 = vpop.permute.xlu0 %1978
      %1980 = vrot.lane.b32.xlu0 %v1889, 20
      %v1981 = vpop.permute.xlu0 %1980
      %1982 = vrot.lane.b32.xlu0 %v1890, 20
      %v1983 = vpop.permute.xlu0 %1982
      %1984 = vrot.lane.b32.xlu0 %v1891, 20
      %v1985 = vpop.permute.xlu0 %1984
      %1986 = vrot.lane.b32.xlu0 %v1892, 20
      %v1987 = vpop.permute.xlu0 %1986
      %1988 = vrot.lane.b32.xlu0 %v1893, 20
      %v1989 = vpop.permute.xlu0 %1988
      %vm2022 = vcmask 195744
      %2023 = vst.msk [vmem:[#allocation3] sm:$0xff] %vm2022, %v1927
      %2024 = vst.msk [vmem:[#allocation3 + $0x8] sm:$0xff] %vm2022, %v1929
      %2025 = vst.msk [vmem:[#allocation3 + $0x10] sm:$0xff] %vm2022, %v1931
      %2026 = vst.msk [vmem:[#allocation3 + $0x18] sm:$0xff] %vm2022, %v1933
      %2027 = vst.msk [vmem:[#allocation3 + $0x20] sm:$0xff] %vm2022, %v1935
      %2028 = vst.msk [vmem:[#allocation3 + $0x28] sm:$0xff] %vm2022, %v1937
      %2029 = vst.msk [vmem:[#allocation3 + $0x30] sm:$0xff] %vm2022, %v1939
      %2030 = vst.msk [vmem:[#allocation3 + $0x38] sm:$0xff] %vm2022, %v1941
      %2031 = vst.msk [vmem:[#allocation3 + $0x40] sm:$0xff] %vm2022, %v1943
      %2032 = vst.msk [vmem:[#allocation3 + $0x48] sm:$0xff] %vm2022, %v1945
      %2033 = vst.msk [vmem:[#allocation3 + $0x50] sm:$0xff] %vm2022, %v1947
      %2034 = vst.msk [vmem:[#allocation3 + $0x58] sm:$0xff] %vm2022, %v1949
      %2035 = vst.msk [vmem:[#allocation3 + $0x60] sm:$0xff] %vm2022, %v1951
      %2036 = vst.msk [vmem:[#allocation3 + $0x68] sm:$0xff] %vm2022, %v1953
      %2037 = vst.msk [vmem:[#allocation3 + $0x70] sm:$0xff] %vm2022, %v1955
      %2038 = vst.msk [vmem:[#allocation3 + $0x78] sm:$0xff] %vm2022, %v1957
      %2039 = vst.msk [vmem:[#allocation3 + $0x80] sm:$0xff] %vm2022, %v1959
      %2040 = vst.msk [vmem:[#allocation3 + $0x88] sm:$0xff] %vm2022, %v1961
      %2041 = vst.msk [vmem:[#allocation3 + $0x90] sm:$0xff] %vm2022, %v1963
      %2042 = vst.msk [vmem:[#allocation3 + $0x98] sm:$0xff] %vm2022, %v1965
      %2043 = vst.msk [vmem:[#allocation3 + $0xa0] sm:$0xff] %vm2022, %v1967
      %2044 = vst.msk [vmem:[#allocation3 + $0xa8] sm:$0xff] %vm2022, %v1969
      %2045 = vst.msk [vmem:[#allocation3 + $0xb0] sm:$0xff] %vm2022, %v1971
      %2046 = vst.msk [vmem:[#allocation3 + $0xb8] sm:$0xff] %vm2022, %v1973
      %2047 = vst.msk [vmem:[#allocation3 + $0xc0] sm:$0xff] %vm2022, %v1975
      %2048 = vst.msk [vmem:[#allocation3 + $0xc8] sm:$0xff] %vm2022, %v1977
      %2049 = vst.msk [vmem:[#allocation3 + $0xd0] sm:$0xff] %vm2022, %v1979
      %2050 = vst.msk [vmem:[#allocation3 + $0xd8] sm:$0xff] %vm2022, %v1981
      %2051 = vst.msk [vmem:[#allocation3 + $0xe0] sm:$0xff] %vm2022, %v1983
      %2052 = vst.msk [vmem:[#allocation3 + $0xe8] sm:$0xff] %vm2022, %v1985
      %2053 = vst.msk [vmem:[#allocation3 + $0xf0] sm:$0xff] %vm2022, %v1987
      %2054 = vst.msk [vmem:[#allocation3 + $0xf8] sm:$0xff] %vm2022, %v1989
      %s2055 = scalar_lea.vmem [#allocation2], 48
      %v2056 = vld [vmem:[%s2055] sm:$0xff]
      %v2057 = vld [vmem:[%s2055 + $0x8] sm:$0xff]
      %v2058 = vld [vmem:[%s2055 + $0x18] sm:$0xff]
      %v2059 = vld [vmem:[%s2055 + $0x20] sm:$0xff]
      %v2060 = vld [vmem:[%s2055 + $0x30] sm:$0xff]
      %v2061 = vld [vmem:[%s2055 + $0x38] sm:$0xff]
      %v2062 = vld [vmem:[%s2055 + $0x48] sm:$0xff]
      %v2063 = vld [vmem:[%s2055 + $0x50] sm:$0xff]
      %v2064 = vld [vmem:[%s2055 + $0x60] sm:$0xff]
      %v2065 = vld [vmem:[%s2055 + $0x68] sm:$0xff]
      %v2066 = vld [vmem:[%s2055 + $0x78] sm:$0xff]
      %v2067 = vld [vmem:[%s2055 + $0x80] sm:$0xff]
      %v2068 = vld [vmem:[%s2055 + $0x90] sm:$0xff]
      %v2069 = vld [vmem:[%s2055 + $0x98] sm:$0xff]
      %v2070 = vld [vmem:[%s2055 + $0xa8] sm:$0xff]
      %v2071 = vld [vmem:[%s2055 + $0xb0] sm:$0xff]
      %v2072 = vld [vmem:[%s2055 + $0xc0] sm:$0xff]
      %v2073 = vld [vmem:[%s2055 + $0xc8] sm:$0xff]
      %v2074 = vld [vmem:[%s2055 + $0xd8] sm:$0xff]
      %v2075 = vld [vmem:[%s2055 + $0xe0] sm:$0xff]
      %v2076 = vld [vmem:[%s2055 + $0xf0] sm:$0xff]
      %v2077 = vld [vmem:[%s2055 + $0xf8] sm:$0xff]
      %v2078 = vld [vmem:[%s2055 + $0x108] sm:$0xff]
      %v2079 = vld [vmem:[%s2055 + $0x110] sm:$0xff]
      %v2080 = vld [vmem:[%s2055 + $0x120] sm:$0xff]
      %v2081 = vld [vmem:[%s2055 + $0x128] sm:$0xff]
      %v2082 = vld [vmem:[%s2055 + $0x138] sm:$0xff]
      %v2083 = vld [vmem:[%s2055 + $0x140] sm:$0xff]
      %v2084 = vld [vmem:[%s2055 + $0x150] sm:$0xff]
      %v2085 = vld [vmem:[%s2055 + $0x158] sm:$0xff]
      %v2086 = vld [vmem:[%s2055 + $0x168] sm:$0xff]
      %v2087 = vld [vmem:[%s2055 + $0x170] sm:$0xff]
      %2120 = vrot.lane.b32.xlu0 %v2056, 24
      %v2121 = vpop.permute.xlu0 %2120
      %2122 = vrot.lane.b32.xlu0 %v2057, 24
      %v2123 = vpop.permute.xlu0 %2122
      %2124 = vrot.lane.b32.xlu0 %v2058, 24
      %v2125 = vpop.permute.xlu0 %2124
      %2126 = vrot.lane.b32.xlu0 %v2059, 24
      %v2127 = vpop.permute.xlu0 %2126
      %2128 = vrot.lane.b32.xlu0 %v2060, 24
      %v2129 = vpop.permute.xlu0 %2128
      %2130 = vrot.lane.b32.xlu0 %v2061, 24
      %v2131 = vpop.permute.xlu0 %2130
      %2132 = vrot.lane.b32.xlu0 %v2062, 24
      %v2133 = vpop.permute.xlu0 %2132
      %2134 = vrot.lane.b32.xlu0 %v2063, 24
      %v2135 = vpop.permute.xlu0 %2134
      %2136 = vrot.lane.b32.xlu0 %v2064, 24
      %v2137 = vpop.permute.xlu0 %2136
      %2138 = vrot.lane.b32.xlu0 %v2065, 24
      %v2139 = vpop.permute.xlu0 %2138
      %2140 = vrot.lane.b32.xlu0 %v2066, 24
      %v2141 = vpop.permute.xlu0 %2140
      %2142 = vrot.lane.b32.xlu0 %v2067, 24
      %v2143 = vpop.permute.xlu0 %2142
      %2144 = vrot.lane.b32.xlu0 %v2068, 24
      %v2145 = vpop.permute.xlu0 %2144
      %2146 = vrot.lane.b32.xlu0 %v2069, 24
      %v2147 = vpop.permute.xlu0 %2146
      %2148 = vrot.lane.b32.xlu0 %v2070, 24
      %v2149 = vpop.permute.xlu0 %2148
      %2150 = vrot.lane.b32.xlu0 %v2071, 24
      %v2151 = vpop.permute.xlu0 %2150
      %2152 = vrot.lane.b32.xlu0 %v2072, 24
      %v2153 = vpop.permute.xlu0 %2152
      %2154 = vrot.lane.b32.xlu0 %v2073, 24
      %v2155 = vpop.permute.xlu0 %2154
      %2156 = vrot.lane.b32.xlu0 %v2074, 24
      %v2157 = vpop.permute.xlu0 %2156
      %2158 = vrot.lane.b32.xlu0 %v2075, 24
      %v2159 = vpop.permute.xlu0 %2158
      %2160 = vrot.lane.b32.xlu0 %v2076, 24
      %v2161 = vpop.permute.xlu0 %2160
      %2162 = vrot.lane.b32.xlu0 %v2077, 24
      %v2163 = vpop.permute.xlu0 %2162
      %2164 = vrot.lane.b32.xlu0 %v2078, 24
      %v2165 = vpop.permute.xlu0 %2164
      %2166 = vrot.lane.b32.xlu0 %v2079, 24
      %v2167 = vpop.permute.xlu0 %2166
      %2168 = vrot.lane.b32.xlu0 %v2080, 24
      %v2169 = vpop.permute.xlu0 %2168
      %2170 = vrot.lane.b32.xlu0 %v2081, 24
      %v2171 = vpop.permute.xlu0 %2170
      %2172 = vrot.lane.b32.xlu0 %v2082, 24
      %v2173 = vpop.permute.xlu0 %2172
      %2174 = vrot.lane.b32.xlu0 %v2083, 24
      %v2175 = vpop.permute.xlu0 %2174
      %2176 = vrot.lane.b32.xlu0 %v2084, 24
      %v2177 = vpop.permute.xlu0 %2176
      %2178 = vrot.lane.b32.xlu0 %v2085, 24
      %v2179 = vpop.permute.xlu0 %2178
      %2180 = vrot.lane.b32.xlu0 %v2086, 24
      %v2181 = vpop.permute.xlu0 %2180
      %2182 = vrot.lane.b32.xlu0 %v2087, 24
      %v2183 = vpop.permute.xlu0 %2182
      %vm2216 = vcmask 228544
      %2217 = vst.msk [vmem:[#allocation3] sm:$0xff] %vm2216, %v2121
      %2218 = vst.msk [vmem:[#allocation3 + $0x8] sm:$0xff] %vm2216, %v2123
      %2219 = vst.msk [vmem:[#allocation3 + $0x10] sm:$0xff] %vm2216, %v2125
      %2220 = vst.msk [vmem:[#allocation3 + $0x18] sm:$0xff] %vm2216, %v2127
      %2221 = vst.msk [vmem:[#allocation3 + $0x20] sm:$0xff] %vm2216, %v2129
      %2222 = vst.msk [vmem:[#allocation3 + $0x28] sm:$0xff] %vm2216, %v2131
      %2223 = vst.msk [vmem:[#allocation3 + $0x30] sm:$0xff] %vm2216, %v2133
      %2224 = vst.msk [vmem:[#allocation3 + $0x38] sm:$0xff] %vm2216, %v2135
      %2225 = vst.msk [vmem:[#allocation3 + $0x40] sm:$0xff] %vm2216, %v2137
      %2226 = vst.msk [vmem:[#allocation3 + $0x48] sm:$0xff] %vm2216, %v2139
      %2227 = vst.msk [vmem:[#allocation3 + $0x50] sm:$0xff] %vm2216, %v2141
      %2228 = vst.msk [vmem:[#allocation3 + $0x58] sm:$0xff] %vm2216, %v2143
      %2229 = vst.msk [vmem:[#allocation3 + $0x60] sm:$0xff] %vm2216, %v2145
      %2230 = vst.msk [vmem:[#allocation3 + $0x68] sm:$0xff] %vm2216, %v2147
      %2231 = vst.msk [vmem:[#allocation3 + $0x70] sm:$0xff] %vm2216, %v2149
      %2232 = vst.msk [vmem:[#allocation3 + $0x78] sm:$0xff] %vm2216, %v2151
      %2233 = vst.msk [vmem:[#allocation3 + $0x80] sm:$0xff] %vm2216, %v2153
      %2234 = vst.msk [vmem:[#allocation3 + $0x88] sm:$0xff] %vm2216, %v2155
      %2235 = vst.msk [vmem:[#allocation3 + $0x90] sm:$0xff] %vm2216, %v2157
      %2236 = vst.msk [vmem:[#allocation3 + $0x98] sm:$0xff] %vm2216, %v2159
      %2237 = vst.msk [vmem:[#allocation3 + $0xa0] sm:$0xff] %vm2216, %v2161
      %2238 = vst.msk [vmem:[#allocation3 + $0xa8] sm:$0xff] %vm2216, %v2163
      %2239 = vst.msk [vmem:[#allocation3 + $0xb0] sm:$0xff] %vm2216, %v2165
      %2240 = vst.msk [vmem:[#allocation3 + $0xb8] sm:$0xff] %vm2216, %v2167
      %2241 = vst.msk [vmem:[#allocation3 + $0xc0] sm:$0xff] %vm2216, %v2169
      %2242 = vst.msk [vmem:[#allocation3 + $0xc8] sm:$0xff] %vm2216, %v2171
      %2243 = vst.msk [vmem:[#allocation3 + $0xd0] sm:$0xff] %vm2216, %v2173
      %2244 = vst.msk [vmem:[#allocation3 + $0xd8] sm:$0xff] %vm2216, %v2175
      %2245 = vst.msk [vmem:[#allocation3 + $0xe0] sm:$0xff] %vm2216, %v2177
      %2246 = vst.msk [vmem:[#allocation3 + $0xe8] sm:$0xff] %vm2216, %v2179
      %2247 = vst.msk [vmem:[#allocation3 + $0xf0] sm:$0xff] %vm2216, %v2181
      %2248 = vst.msk [vmem:[#allocation3 + $0xf8] sm:$0xff] %vm2216, %v2183
      %v2249 = vld [vmem:[%s2055 + $0x1] sm:$0xff]
      %v2250 = vld [vmem:[%s2055 + $0x9] sm:$0xff]
      %v2251 = vld [vmem:[%s2055 + $0x19] sm:$0xff]
      %v2252 = vld [vmem:[%s2055 + $0x21] sm:$0xff]
      %v2253 = vld [vmem:[%s2055 + $0x31] sm:$0xff]
      %v2254 = vld [vmem:[%s2055 + $0x39] sm:$0xff]
      %v2255 = vld [vmem:[%s2055 + $0x49] sm:$0xff]
      %v2256 = vld [vmem:[%s2055 + $0x51] sm:$0xff]
      %v2257 = vld [vmem:[%s2055 + $0x61] sm:$0xff]
      %v2258 = vld [vmem:[%s2055 + $0x69] sm:$0xff]
      %v2259 = vld [vmem:[%s2055 + $0x79] sm:$0xff]
      %v2260 = vld [vmem:[%s2055 + $0x81] sm:$0xff]
      %v2261 = vld [vmem:[%s2055 + $0x91] sm:$0xff]
      %v2262 = vld [vmem:[%s2055 + $0x99] sm:$0xff]
      %v2263 = vld [vmem:[%s2055 + $0xa9] sm:$0xff]
      %v2264 = vld [vmem:[%s2055 + $0xb1] sm:$0xff]
      %v2265 = vld [vmem:[%s2055 + $0xc1] sm:$0xff]
      %v2266 = vld [vmem:[%s2055 + $0xc9] sm:$0xff]
      %v2267 = vld [vmem:[%s2055 + $0xd9] sm:$0xff]
      %v2268 = vld [vmem:[%s2055 + $0xe1] sm:$0xff]
      %v2269 = vld [vmem:[%s2055 + $0xf1] sm:$0xff]
      %v2270 = vld [vmem:[%s2055 + $0xf9] sm:$0xff]
      %v2271 = vld [vmem:[%s2055 + $0x109] sm:$0xff]
      %v2272 = vld [vmem:[%s2055 + $0x111] sm:$0xff]
      %v2273 = vld [vmem:[%s2055 + $0x121] sm:$0xff]
      %v2274 = vld [vmem:[%s2055 + $0x129] sm:$0xff]
      %v2275 = vld [vmem:[%s2055 + $0x139] sm:$0xff]
      %v2276 = vld [vmem:[%s2055 + $0x141] sm:$0xff]
      %v2277 = vld [vmem:[%s2055 + $0x151] sm:$0xff]
      %v2278 = vld [vmem:[%s2055 + $0x159] sm:$0xff]
      %v2279 = vld [vmem:[%s2055 + $0x169] sm:$0xff]
      %v2280 = vld [vmem:[%s2055 + $0x171] sm:$0xff]
      %2313 = vrot.lane.b32.xlu0 %v2249, 28
      %v2314 = vpop.permute.xlu0 %2313
      %2315 = vrot.lane.b32.xlu0 %v2250, 28
      %v2316 = vpop.permute.xlu0 %2315
      %2317 = vrot.lane.b32.xlu0 %v2251, 28
      %v2318 = vpop.permute.xlu0 %2317
      %2319 = vrot.lane.b32.xlu0 %v2252, 28
      %v2320 = vpop.permute.xlu0 %2319
      %2321 = vrot.lane.b32.xlu0 %v2253, 28
      %v2322 = vpop.permute.xlu0 %2321
      %2323 = vrot.lane.b32.xlu0 %v2254, 28
      %v2324 = vpop.permute.xlu0 %2323
      %2325 = vrot.lane.b32.xlu0 %v2255, 28
      %v2326 = vpop.permute.xlu0 %2325
      %2327 = vrot.lane.b32.xlu0 %v2256, 28
      %v2328 = vpop.permute.xlu0 %2327
      %2329 = vrot.lane.b32.xlu0 %v2257, 28
      %v2330 = vpop.permute.xlu0 %2329
      %2331 = vrot.lane.b32.xlu0 %v2258, 28
      %v2332 = vpop.permute.xlu0 %2331
      %2333 = vrot.lane.b32.xlu0 %v2259, 28
      %v2334 = vpop.permute.xlu0 %2333
      %2335 = vrot.lane.b32.xlu0 %v2260, 28
      %v2336 = vpop.permute.xlu0 %2335
      %2337 = vrot.lane.b32.xlu0 %v2261, 28
      %v2338 = vpop.permute.xlu0 %2337
      %2339 = vrot.lane.b32.xlu0 %v2262, 28
      %v2340 = vpop.permute.xlu0 %2339
      %2341 = vrot.lane.b32.xlu0 %v2263, 28
      %v2342 = vpop.permute.xlu0 %2341
      %2343 = vrot.lane.b32.xlu0 %v2264, 28
      %v2344 = vpop.permute.xlu0 %2343
      %2345 = vrot.lane.b32.xlu0 %v2265, 28
      %v2346 = vpop.permute.xlu0 %2345
      %2347 = vrot.lane.b32.xlu0 %v2266, 28
      %v2348 = vpop.permute.xlu0 %2347
      %2349 = vrot.lane.b32.xlu0 %v2267, 28
      %v2350 = vpop.permute.xlu0 %2349
      %2351 = vrot.lane.b32.xlu0 %v2268, 28
      %v2352 = vpop.permute.xlu0 %2351
      %2353 = vrot.lane.b32.xlu0 %v2269, 28
      %v2354 = vpop.permute.xlu0 %2353
      %2355 = vrot.lane.b32.xlu0 %v2270, 28
      %v2356 = vpop.permute.xlu0 %2355
      %2357 = vrot.lane.b32.xlu0 %v2271, 28
      %v2358 = vpop.permute.xlu0 %2357
      %2359 = vrot.lane.b32.xlu0 %v2272, 28
      %v2360 = vpop.permute.xlu0 %2359
      %2361 = vrot.lane.b32.xlu0 %v2273, 28
      %v2362 = vpop.permute.xlu0 %2361
      %2363 = vrot.lane.b32.xlu0 %v2274, 28
      %v2364 = vpop.permute.xlu0 %2363
      %2365 = vrot.lane.b32.xlu0 %v2275, 28
      %v2366 = vpop.permute.xlu0 %2365
      %2367 = vrot.lane.b32.xlu0 %v2276, 28
      %v2368 = vpop.permute.xlu0 %2367
      %2369 = vrot.lane.b32.xlu0 %v2277, 28
      %v2370 = vpop.permute.xlu0 %2369
      %2371 = vrot.lane.b32.xlu0 %v2278, 28
      %v2372 = vpop.permute.xlu0 %2371
      %2373 = vrot.lane.b32.xlu0 %v2279, 28
      %v2374 = vpop.permute.xlu0 %2373
      %2375 = vrot.lane.b32.xlu0 %v2280, 28
      %v2376 = vpop.permute.xlu0 %2375
      %vm2409 = vcmask 261344
      %2410 = vst.msk [vmem:[#allocation3] sm:$0xff] %vm2409, %v2314
      %2411 = vst.msk [vmem:[#allocation3 + $0x8] sm:$0xff] %vm2409, %v2316
      %2412 = vst.msk [vmem:[#allocation3 + $0x10] sm:$0xff] %vm2409, %v2318
      %2413 = vst.msk [vmem:[#allocation3 + $0x18] sm:$0xff] %vm2409, %v2320
      %2414 = vst.msk [vmem:[#allocation3 + $0x20] sm:$0xff] %vm2409, %v2322
      %2415 = vst.msk [vmem:[#allocation3 + $0x28] sm:$0xff] %vm2409, %v2324
      %2416 = vst.msk [vmem:[#allocation3 + $0x30] sm:$0xff] %vm2409, %v2326
      %2417 = vst.msk [vmem:[#allocation3 + $0x38] sm:$0xff] %vm2409, %v2328
      %2418 = vst.msk [vmem:[#allocation3 + $0x40] sm:$0xff] %vm2409, %v2330
      %2419 = vst.msk [vmem:[#allocation3 + $0x48] sm:$0xff] %vm2409, %v2332
      %2420 = vst.msk [vmem:[#allocation3 + $0x50] sm:$0xff] %vm2409, %v2334
      %2421 = vst.msk [vmem:[#allocation3 + $0x58] sm:$0xff] %vm2409, %v2336
      %2422 = vst.msk [vmem:[#allocation3 + $0x60] sm:$0xff] %vm2409, %v2338
      %2423 = vst.msk [vmem:[#allocation3 + $0x68] sm:$0xff] %vm2409, %v2340
      %2424 = vst.msk [vmem:[#allocation3 + $0x70] sm:$0xff] %vm2409, %v2342
      %2425 = vst.msk [vmem:[#allocation3 + $0x78] sm:$0xff] %vm2409, %v2344
      %2426 = vst.msk [vmem:[#allocation3 + $0x80] sm:$0xff] %vm2409, %v2346
      %2427 = vst.msk [vmem:[#allocation3 + $0x88] sm:$0xff] %vm2409, %v2348
      %2428 = vst.msk [vmem:[#allocation3 + $0x90] sm:$0xff] %vm2409, %v2350
      %2429 = vst.msk [vmem:[#allocation3 + $0x98] sm:$0xff] %vm2409, %v2352
      %2430 = vst.msk [vmem:[#allocation3 + $0xa0] sm:$0xff] %vm2409, %v2354
      %2431 = vst.msk [vmem:[#allocation3 + $0xa8] sm:$0xff] %vm2409, %v2356
      %2432 = vst.msk [vmem:[#allocation3 + $0xb0] sm:$0xff] %vm2409, %v2358
      %2433 = vst.msk [vmem:[#allocation3 + $0xb8] sm:$0xff] %vm2409, %v2360
      %2434 = vst.msk [vmem:[#allocation3 + $0xc0] sm:$0xff] %vm2409, %v2362
      %2435 = vst.msk [vmem:[#allocation3 + $0xc8] sm:$0xff] %vm2409, %v2364
      %2436 = vst.msk [vmem:[#allocation3 + $0xd0] sm:$0xff] %vm2409, %v2366
      %2437 = vst.msk [vmem:[#allocation3 + $0xd8] sm:$0xff] %vm2409, %v2368
      %2438 = vst.msk [vmem:[#allocation3 + $0xe0] sm:$0xff] %vm2409, %v2370
      %2439 = vst.msk [vmem:[#allocation3 + $0xe8] sm:$0xff] %vm2409, %v2372
      %2440 = vst.msk [vmem:[#allocation3 + $0xf0] sm:$0xff] %vm2409, %v2374
      %2441 = vst.msk [vmem:[#allocation3 + $0xf8] sm:$0xff] %vm2409, %v2376
      %v2442 = vld [vmem:[%s2055 + $0x2] sm:$0xff]
      %v2443 = vld [vmem:[%s2055 + $0xa] sm:$0xff]
      %v2444 = vld [vmem:[%s2055 + $0x1a] sm:$0xff]
      %v2445 = vld [vmem:[%s2055 + $0x22] sm:$0xff]
      %v2446 = vld [vmem:[%s2055 + $0x32] sm:$0xff]
      %v2447 = vld [vmem:[%s2055 + $0x3a] sm:$0xff]
      %v2448 = vld [vmem:[%s2055 + $0x4a] sm:$0xff]
      %v2449 = vld [vmem:[%s2055 + $0x52] sm:$0xff]
      %v2450 = vld [vmem:[%s2055 + $0x62] sm:$0xff]
      %v2451 = vld [vmem:[%s2055 + $0x6a] sm:$0xff]
      %v2452 = vld [vmem:[%s2055 + $0x7a] sm:$0xff]
      %v2453 = vld [vmem:[%s2055 + $0x82] sm:$0xff]
      %v2454 = vld [vmem:[%s2055 + $0x92] sm:$0xff]
      %v2455 = vld [vmem:[%s2055 + $0x9a] sm:$0xff]
      %v2456 = vld [vmem:[%s2055 + $0xaa] sm:$0xff]
      %v2457 = vld [vmem:[%s2055 + $0xb2] sm:$0xff]
      %v2458 = vld [vmem:[%s2055 + $0xc2] sm:$0xff]
      %v2459 = vld [vmem:[%s2055 + $0xca] sm:$0xff]
      %v2460 = vld [vmem:[%s2055 + $0xda] sm:$0xff]
      %v2461 = vld [vmem:[%s2055 + $0xe2] sm:$0xff]
      %v2462 = vld [vmem:[%s2055 + $0xf2] sm:$0xff]
      %v2463 = vld [vmem:[%s2055 + $0xfa] sm:$0xff]
      %v2464 = vld [vmem:[%s2055 + $0x10a] sm:$0xff]
      %v2465 = vld [vmem:[%s2055 + $0x112] sm:$0xff]
      %v2466 = vld [vmem:[%s2055 + $0x122] sm:$0xff]
      %v2467 = vld [vmem:[%s2055 + $0x12a] sm:$0xff]
      %v2468 = vld [vmem:[%s2055 + $0x13a] sm:$0xff]
      %v2469 = vld [vmem:[%s2055 + $0x142] sm:$0xff]
      %v2470 = vld [vmem:[%s2055 + $0x152] sm:$0xff]
      %v2471 = vld [vmem:[%s2055 + $0x15a] sm:$0xff]
      %v2472 = vld [vmem:[%s2055 + $0x16a] sm:$0xff]
      %v2473 = vld [vmem:[%s2055 + $0x172] sm:$0xff]
      %2506 = vrot.lane.b32.xlu0 %v2442, 32
      %v2507 = vpop.permute.xlu0 %2506
      %2508 = vrot.lane.b32.xlu0 %v2443, 32
      %v2509 = vpop.permute.xlu0 %2508
      %2510 = vrot.lane.b32.xlu0 %v2444, 32
      %v2511 = vpop.permute.xlu0 %2510
      %2512 = vrot.lane.b32.xlu0 %v2445, 32
      %v2513 = vpop.permute.xlu0 %2512
      %2514 = vrot.lane.b32.xlu0 %v2446, 32
      %v2515 = vpop.permute.xlu0 %2514
      %2516 = vrot.lane.b32.xlu0 %v2447, 32
      %v2517 = vpop.permute.xlu0 %2516
      %2518 = vrot.lane.b32.xlu0 %v2448, 32
      %v2519 = vpop.permute.xlu0 %2518
      %2520 = vrot.lane.b32.xlu0 %v2449, 32
      %v2521 = vpop.permute.xlu0 %2520
      %2522 = vrot.lane.b32.xlu0 %v2450, 32
      %v2523 = vpop.permute.xlu0 %2522
      %2524 = vrot.lane.b32.xlu0 %v2451, 32
      %v2525 = vpop.permute.xlu0 %2524
      %2526 = vrot.lane.b32.xlu0 %v2452, 32
      %v2527 = vpop.permute.xlu0 %2526
      %2528 = vrot.lane.b32.xlu0 %v2453, 32
      %v2529 = vpop.permute.xlu0 %2528
      %2530 = vrot.lane.b32.xlu0 %v2454, 32
      %v2531 = vpop.permute.xlu0 %2530
      %2532 = vrot.lane.b32.xlu0 %v2455, 32
      %v2533 = vpop.permute.xlu0 %2532
      %2534 = vrot.lane.b32.xlu0 %v2456, 32
      %v2535 = vpop.permute.xlu0 %2534
      %2536 = vrot.lane.b32.xlu0 %v2457, 32
      %v2537 = vpop.permute.xlu0 %2536
      %2538 = vrot.lane.b32.xlu0 %v2458, 32
      %v2539 = vpop.permute.xlu0 %2538
      %2540 = vrot.lane.b32.xlu0 %v2459, 32
      %v2541 = vpop.permute.xlu0 %2540
      %2542 = vrot.lane.b32.xlu0 %v2460, 32
      %v2543 = vpop.permute.xlu0 %2542
      %2544 = vrot.lane.b32.xlu0 %v2461, 32
      %v2545 = vpop.permute.xlu0 %2544
      %2546 = vrot.lane.b32.xlu0 %v2462, 32
      %v2547 = vpop.permute.xlu0 %2546
      %2548 = vrot.lane.b32.xlu0 %v2463, 32
      %v2549 = vpop.permute.xlu0 %2548
      %2550 = vrot.lane.b32.xlu0 %v2464, 32
      %v2551 = vpop.permute.xlu0 %2550
      %2552 = vrot.lane.b32.xlu0 %v2465, 32
      %v2553 = vpop.permute.xlu0 %2552
      %2554 = vrot.lane.b32.xlu0 %v2466, 32
      %v2555 = vpop.permute.xlu0 %2554
      %2556 = vrot.lane.b32.xlu0 %v2467, 32
      %v2557 = vpop.permute.xlu0 %2556
      %2558 = vrot.lane.b32.xlu0 %v2468, 32
      %v2559 = vpop.permute.xlu0 %2558
      %2560 = vrot.lane.b32.xlu0 %v2469, 32
      %v2561 = vpop.permute.xlu0 %2560
      %2562 = vrot.lane.b32.xlu0 %v2470, 32
      %v2563 = vpop.permute.xlu0 %2562
      %2564 = vrot.lane.b32.xlu0 %v2471, 32
      %v2565 = vpop.permute.xlu0 %2564
      %2566 = vrot.lane.b32.xlu0 %v2472, 32
      %v2567 = vpop.permute.xlu0 %2566
      %2568 = vrot.lane.b32.xlu0 %v2473, 32
      %v2569 = vpop.permute.xlu0 %2568
      %vm2602 = vcmask 294144
      %2603 = vst.msk [vmem:[#allocation3] sm:$0xff] %vm2602, %v2507
      %2604 = vst.msk [vmem:[#allocation3 + $0x8] sm:$0xff] %vm2602, %v2509
      %2605 = vst.msk [vmem:[#allocation3 + $0x10] sm:$0xff] %vm2602, %v2511
      %2606 = vst.msk [vmem:[#allocation3 + $0x18] sm:$0xff] %vm2602, %v2513
      %2607 = vst.msk [vmem:[#allocation3 + $0x20] sm:$0xff] %vm2602, %v2515
      %2608 = vst.msk [vmem:[#allocation3 + $0x28] sm:$0xff] %vm2602, %v2517
      %2609 = vst.msk [vmem:[#allocation3 + $0x30] sm:$0xff] %vm2602, %v2519
      %2610 = vst.msk [vmem:[#allocation3 + $0x38] sm:$0xff] %vm2602, %v2521
      %2611 = vst.msk [vmem:[#allocation3 + $0x40] sm:$0xff] %vm2602, %v2523
      %2612 = vst.msk [vmem:[#allocation3 + $0x48] sm:$0xff] %vm2602, %v2525
      %2613 = vst.msk [vmem:[#allocation3 + $0x50] sm:$0xff] %vm2602, %v2527
      %2614 = vst.msk [vmem:[#allocation3 + $0x58] sm:$0xff] %vm2602, %v2529
      %2615 = vst.msk [vmem:[#allocation3 + $0x60] sm:$0xff] %vm2602, %v2531
      %2616 = vst.msk [vmem:[#allocation3 + $0x68] sm:$0xff] %vm2602, %v2533
      %2617 = vst.msk [vmem:[#allocation3 + $0x70] sm:$0xff] %vm2602, %v2535
      %2618 = vst.msk [vmem:[#allocation3 + $0x78] sm:$0xff] %vm2602, %v2537
      %2619 = vst.msk [vmem:[#allocation3 + $0x80] sm:$0xff] %vm2602, %v2539
      %2620 = vst.msk [vmem:[#allocation3 + $0x88] sm:$0xff] %vm2602, %v2541
      %2621 = vst.msk [vmem:[#allocation3 + $0x90] sm:$0xff] %vm2602, %v2543
      %2622 = vst.msk [vmem:[#allocation3 + $0x98] sm:$0xff] %vm2602, %v2545
      %2623 = vst.msk [vmem:[#allocation3 + $0xa0] sm:$0xff] %vm2602, %v2547
      %2624 = vst.msk [vmem:[#allocation3 + $0xa8] sm:$0xff] %vm2602, %v2549
      %2625 = vst.msk [vmem:[#allocation3 + $0xb0] sm:$0xff] %vm2602, %v2551
      %2626 = vst.msk [vmem:[#allocation3 + $0xb8] sm:$0xff] %vm2602, %v2553
      %2627 = vst.msk [vmem:[#allocation3 + $0xc0] sm:$0xff] %vm2602, %v2555
      %2628 = vst.msk [vmem:[#allocation3 + $0xc8] sm:$0xff] %vm2602, %v2557
      %2629 = vst.msk [vmem:[#allocation3 + $0xd0] sm:$0xff] %vm2602, %v2559
      %2630 = vst.msk [vmem:[#allocation3 + $0xd8] sm:$0xff] %vm2602, %v2561
      %2631 = vst.msk [vmem:[#allocation3 + $0xe0] sm:$0xff] %vm2602, %v2563
      %2632 = vst.msk [vmem:[#allocation3 + $0xe8] sm:$0xff] %vm2602, %v2565
      %2633 = vst.msk [vmem:[#allocation3 + $0xf0] sm:$0xff] %vm2602, %v2567
      %2634 = vst.msk [vmem:[#allocation3 + $0xf8] sm:$0xff] %vm2602, %v2569
      %v2635 = vld [vmem:[#allocation3] sm:$0xff]
      %v2636 = vld [vmem:[#allocation3 + $0x8] sm:$0xff]
      %v2637 = vld [vmem:[#allocation3 + $0x10] sm:$0xff]
      %v2638 = vld [vmem:[#allocation3 + $0x18] sm:$0xff]
      %v2639 = vld [vmem:[#allocation3 + $0x20] sm:$0xff]
      %v2640 = vld [vmem:[#allocation3 + $0x28] sm:$0xff]
      %v2641 = vld [vmem:[#allocation3 + $0x30] sm:$0xff]
      %v2642 = vld [vmem:[#allocation3 + $0x38] sm:$0xff]
      %v2643 = vld [vmem:[#allocation3 + $0x40] sm:$0xff]
      %v2644 = vld [vmem:[#allocation3 + $0x48] sm:$0xff]
      %v2645 = vld [vmem:[#allocation3 + $0x50] sm:$0xff]
      %v2646 = vld [vmem:[#allocation3 + $0x58] sm:$0xff]
      %v2647 = vld [vmem:[#allocation3 + $0x60] sm:$0xff]
      %v2648 = vld [vmem:[#allocation3 + $0x68] sm:$0xff]
      %v2649 = vld [vmem:[#allocation3 + $0x70] sm:$0xff]
      %v2650 = vld [vmem:[#allocation3 + $0x78] sm:$0xff]
      %v2651 = vld [vmem:[#allocation3 + $0x80] sm:$0xff]
      %v2652 = vld [vmem:[#allocation3 + $0x88] sm:$0xff]
      %v2653 = vld [vmem:[#allocation3 + $0x90] sm:$0xff]
      %v2654 = vld [vmem:[#allocation3 + $0x98] sm:$0xff]
      %v2655 = vld [vmem:[#allocation3 + $0xa0] sm:$0xff]
      %v2656 = vld [vmem:[#allocation3 + $0xa8] sm:$0xff]
      %v2657 = vld [vmem:[#allocation3 + $0xb0] sm:$0xff]
      %v2658 = vld [vmem:[#allocation3 + $0xb8] sm:$0xff]
      %v2659 = vld [vmem:[#allocation3 + $0xc0] sm:$0xff]
      %v2660 = vld [vmem:[#allocation3 + $0xc8] sm:$0xff]
      %v2661 = vld [vmem:[#allocation3 + $0xd0] sm:$0xff]
      %v2662 = vld [vmem:[#allocation3 + $0xd8] sm:$0xff]
      %v2663 = vld [vmem:[#allocation3 + $0xe0] sm:$0xff]
      %v2664 = vld [vmem:[#allocation3 + $0xe8] sm:$0xff]
      %v2665 = vld [vmem:[#allocation3 + $0xf0] sm:$0xff]
      %v2666 = vld [vmem:[#allocation3 + $0xf8] sm:$0xff]
      %v2667 = vld [vmem:[%s3] sm:$0xff]
      %v2668 = vld [vmem:[%s3 + $0x8] sm:$0xff]
      %v2669 = vld [vmem:[%s3 + $0x10] sm:$0xff]
      %v2670 = vld [vmem:[%s3 + $0x18] sm:$0xff]
      %v2671 = vld [vmem:[%s3 + $0x20] sm:$0xf]
      %vm2672 = vcmask 293888
      %v2674 = vsel %vm2672, %v2635, 0
      %v2677 = vsel %vm2672, %v2636, 0
      %v2680 = vsel %vm2672, %v2637, 0
      %v2683 = vsel %vm2672, %v2638, 0
      %v2686 = vsel %vm2672, %v2639, 0
      %v2689 = vsel %vm2672, %v2640, 0
      %v2692 = vsel %vm2672, %v2641, 0
      %v2695 = vsel %vm2672, %v2642, 0
      %v2698 = vsel %vm2672, %v2643, 0
      %v2701 = vsel %vm2672, %v2644, 0
      %v2704 = vsel %vm2672, %v2645, 0
      %v2707 = vsel %vm2672, %v2646, 0
      %v2710 = vsel %vm2672, %v2647, 0
      %v2713 = vsel %vm2672, %v2648, 0
      %v2716 = vsel %vm2672, %v2649, 0
      %v2719 = vsel %vm2672, %v2650, 0
      %v2722 = vsel %vm2672, %v2651, 0
      %v2725 = vsel %vm2672, %v2652, 0
      %v2728 = vsel %vm2672, %v2653, 0
      %v2731 = vsel %vm2672, %v2654, 0
      %v2734 = vsel %vm2672, %v2655, 0
      %v2737 = vsel %vm2672, %v2656, 0
      %v2740 = vsel %vm2672, %v2657, 0
      %v2743 = vsel %vm2672, %v2658, 0
      %v2746 = vsel %vm2672, %v2659, 0
      %v2749 = vsel %vm2672, %v2660, 0
      %v2752 = vsel %vm2672, %v2661, 0
      %v2755 = vsel %vm2672, %v2662, 0
      %v2758 = vsel %vm2672, %v2663, 0
      %v2761 = vsel %vm2672, %v2664, 0
      %v2764 = vsel %vm2672, %v2665, 0
      %v2767 = vsel %vm2672, %v2666, 0
      %v2770 = vsel %vm490, %v2671, 0
      %2772 = vmatprep.subr.mxu0 0.0
      %2773 = vmatpush1.msra.mxu0 %v2667
      %2774 = vmatprep.subr.mxu0 0.0
      %2775 = vmatpush1.msra.mxu0 %v2668
      %2776 = vmatprep.subr.mxu0 0.0
      %2777 = vmatpush1.msra.mxu0 %v2669
      %2778 = vmatprep.subr.mxu0 0.0
      %2779 = vmatpush1.msra.mxu0 %v2670
      %2780 = vmatprep.subr.mxu0 0.0
      %2781 = vmatpush1.msra.mxu0 %v2770
      %2782 = vmatprep.subr.mxu0 0.0
      %2783 = vmatpush1.msra.mxu0 0.0
      %2784 = vmatprep.subr.mxu0 0.0
      %2785 = vmatpush1.msra.mxu0 0.0
      %2786 = vmatprep.subr.mxu0 0.0
      %2787 = vmatpush1.msra.mxu0 0.0
      %2788 = vmatprep.subr.mxu0 0.0
      %2789 = vmatpush1.msra.mxu0 0.0
      %2790 = vmatprep.subr.mxu0 0.0
      %2791 = vmatpush1.msra.mxu0 0.0
      %2792 = vmatprep.subr.mxu0 0.0
      %2793 = vmatpush1.msra.mxu0 0.0
      %2794 = vmatprep.subr.mxu0 0.0
      %2795 = vmatpush1.msra.mxu0 0.0
      %2796 = vmatprep.subr.mxu0 0.0
      %2797 = vmatpush1.msra.mxu0 0.0
      %2798 = vmatprep.subr.mxu0 0.0
      %2799 = vmatpush1.msra.mxu0 0.0
      %2800 = vmatprep.subr.mxu0 0.0
      %2801 = vmatpush1.msra.mxu0 0.0
      %2802 = vmatprep.subr.mxu0 0.0
      %2803 = vmatpush1.msra.mxu0 0.0
      %2804 = vmatprep.subr.mxu0 0.0
      %2805 = vmatpush1.msra.mxu0 0.0
      %2806 = vmatprep.subr.mxu0 0.0
      %2807 = vmatpush1.msra.mxu0 0.0
      %2808 = vmatprep.subr.mxu0 0.0
      %2809 = vmatpush1.msra.mxu0 0.0
      %2810 = vmatprep.subr.mxu0 0.0
      %2811 = vmatpush1.msra.mxu0 0.0
      %2812 = vmatprep.subr.mxu0 0.0
      %2813 = vmatpush1.msra.mxu0 0.0
      %2814 = vmatprep.subr.mxu0 0.0
      %2815 = vmatpush1.msra.mxu0 0.0
      %2816 = vmatprep.subr.mxu0 0.0
      %2817 = vmatpush1.msra.mxu0 0.0
      %2818 = vmatprep.subr.mxu0 0.0
      %2819 = vmatpush1.msra.mxu0 0.0
      %2820 = vmatprep.subr.mxu0 0.0
      %2821 = vmatpush1.msra.mxu0 0.0
      %2822 = vmatprep.subr.mxu0 0.0
      %2823 = vmatpush1.msra.mxu0 0.0
      %2824 = vmatprep.subr.mxu0 0.0
      %2825 = vmatpush1.msra.mxu0 0.0
      %2826 = vmatprep.subr.mxu0 0.0
      %2827 = vmatpush1.msra.mxu0 0.0
      %2828 = vmatprep.subr.mxu0 0.0
      %2829 = vmatpush1.msra.mxu0 0.0
      %2830 = vmatprep.subr.mxu0 0.0
      %2831 = vmatpush1.msra.mxu0 0.0
      %2832 = vmatprep.subr.mxu0 0.0
      %2833 = vmatpush1.msra.mxu0 0.0
      %2834 = vmatprep.subr.mxu0 0.0
      %2835 = vmatpush1.msra.mxu0 0.0
      %2836 = vmatprep.mubr.f32.mxu0 0.0
      %2837 = vmatmul.mubr.f32.gmra.mrb[0].mxu0 %v2674
      %v2838 = vpop.f32.mrb[0].mxu0
      %v2839 = vadd.f32 0.0, %v2838
      %v2840 = vpop.f32.mrb[0].mxu0
      %2841 = vmatprep.mubr.f32.mxu0 0.0
      %2842 = vmatmul.mubr.f32.gmra.mrb[0].mxu0 %v2677
      %v2843 = vpop.f32.mrb[0].mxu0
      %v2844 = vadd.f32 0.0, %v2843
      %v2845 = vpop.f32.mrb[0].mxu0
      %2846 = vmatprep.mubr.f32.mxu0 0.0
      %2847 = vmatmul.mubr.f32.gmra.mrb[0].mxu0 %v2680
      %v2848 = vpop.f32.mrb[0].mxu0
      %v2849 = vadd.f32 0.0, %v2848
      %v2850 = vpop.f32.mrb[0].mxu0
      %2851 = vmatprep.mubr.f32.mxu0 0.0
      %2852 = vmatmul.mubr.f32.gmra.mrb[0].mxu0 %v2683
      %v2853 = vpop.f32.mrb[0].mxu0
      %v2854 = vadd.f32 0.0, %v2853
      %v2855 = vpop.f32.mrb[0].mxu0
      %2856 = vmatprep.mubr.f32.mxu0 0.0
      %2857 = vmatmul.mubr.f32.gmra.mrb[0].mxu0 %v2686
      %v2858 = vpop.f32.mrb[0].mxu0
      %v2859 = vadd.f32 0.0, %v2858
      %v2860 = vpop.f32.mrb[0].mxu0
      %2861 = vmatprep.mubr.f32.mxu0 0.0
      %2862 = vmatmul.mubr.f32.gmra.mrb[0].mxu0 %v2689
      %v2863 = vpop.f32.mrb[0].mxu0
      %v2864 = vadd.f32 0.0, %v2863
      %v2865 = vpop.f32.mrb[0].mxu0
      %2866 = vmatprep.mubr.f32.mxu0 0.0
      %2867 = vmatmul.mubr.f32.gmra.mrb[0].mxu0 %v2692
      %v2868 = vpop.f32.mrb[0].mxu0
      %v2869 = vadd.f32 0.0, %v2868
      %v2870 = vpop.f32.mrb[0].mxu0
      %2871 = vmatprep.mubr.f32.mxu0 0.0
      %2872 = vmatmul.mubr.f32.gmra.mrb[0].mxu0 %v2695
      %v2873 = vpop.f32.mrb[0].mxu0
      %v2874 = vadd.f32 0.0, %v2873
      %v2875 = vpop.f32.mrb[0].mxu0
      %2876 = vmatprep.mubr.f32.mxu0 0.0
      %2877 = vmatmul.mubr.f32.gmra.mrb[0].mxu0 %v2698
      %v2878 = vpop.f32.mrb[0].mxu0
      %v2879 = vadd.f32 0.0, %v2878
      %v2880 = vpop.f32.mrb[0].mxu0
      %2881 = vmatprep.mubr.f32.mxu0 0.0
      %2882 = vmatmul.mubr.f32.gmra.mrb[0].mxu0 %v2701
      %v2883 = vpop.f32.mrb[0].mxu0
      %v2884 = vadd.f32 0.0, %v2883
      %v2885 = vpop.f32.mrb[0].mxu0
      %2886 = vmatprep.mubr.f32.mxu0 0.0
      %2887 = vmatmul.mubr.f32.gmra.mrb[0].mxu0 %v2704
      %v2888 = vpop.f32.mrb[0].mxu0
      %v2889 = vadd.f32 0.0, %v2888
      %v2890 = vpop.f32.mrb[0].mxu0
      %2891 = vmatprep.mubr.f32.mxu0 0.0
      %2892 = vmatmul.mubr.f32.gmra.mrb[0].mxu0 %v2707
      %v2893 = vpop.f32.mrb[0].mxu0
      %v2894 = vadd.f32 0.0, %v2893
      %v2895 = vpop.f32.mrb[0].mxu0
      %2896 = vmatprep.mubr.f32.mxu0 0.0
      %2897 = vmatmul.mubr.f32.gmra.mrb[0].mxu0 %v2710
      %v2898 = vpop.f32.mrb[0].mxu0
      %v2899 = vadd.f32 0.0, %v2898
      %v2900 = vpop.f32.mrb[0].mxu0
      %2901 = vmatprep.mubr.f32.mxu0 0.0
      %2902 = vmatmul.mubr.f32.gmra.mrb[0].mxu0 %v2713
      %v2903 = vpop.f32.mrb[0].mxu0
      %v2904 = vadd.f32 0.0, %v2903
      %v2905 = vpop.f32.mrb[0].mxu0
      %2906 = vmatprep.mubr.f32.mxu0 0.0
      %2907 = vmatmul.mubr.f32.gmra.mrb[0].mxu0 %v2716
      %v2908 = vpop.f32.mrb[0].mxu0
      %v2909 = vadd.f32 0.0, %v2908
      %v2910 = vpop.f32.mrb[0].mxu0
      %2911 = vmatprep.mubr.f32.mxu0 0.0
      %2912 = vmatmul.mubr.f32.gmra.mrb[0].mxu0 %v2719
      %v2913 = vpop.f32.mrb[0].mxu0
      %v2914 = vadd.f32 0.0, %v2913
      %v2915 = vpop.f32.mrb[0].mxu0
      %2916 = vmatprep.mubr.f32.mxu0 0.0
      %2917 = vmatmul.mubr.f32.gmra.mrb[0].mxu0 %v2722
      %v2918 = vpop.f32.mrb[0].mxu0
      %v2919 = vadd.f32 0.0, %v2918
      %v2920 = vpop.f32.mrb[0].mxu0
      %2921 = vmatprep.mubr.f32.mxu0 0.0
      %2922 = vmatmul.mubr.f32.gmra.mrb[0].mxu0 %v2725
      %v2923 = vpop.f32.mrb[0].mxu0
      %v2924 = vadd.f32 0.0, %v2923
      %v2925 = vpop.f32.mrb[0].mxu0
      %2926 = vmatprep.mubr.f32.mxu0 0.0
      %2927 = vmatmul.mubr.f32.gmra.mrb[0].mxu0 %v2728
      %v2928 = vpop.f32.mrb[0].mxu0
      %v2929 = vadd.f32 0.0, %v2928
      %v2930 = vpop.f32.mrb[0].mxu0
      %2931 = vmatprep.mubr.f32.mxu0 0.0
      %2932 = vmatmul.mubr.f32.gmra.mrb[0].mxu0 %v2731
      %v2933 = vpop.f32.mrb[0].mxu0
      %v2934 = vadd.f32 0.0, %v2933
      %v2935 = vpop.f32.mrb[0].mxu0
      %2936 = vmatprep.mubr.f32.mxu0 0.0
      %2937 = vmatmul.mubr.f32.gmra.mrb[0].mxu0 %v2734
      %v2938 = vpop.f32.mrb[0].mxu0
      %v2939 = vadd.f32 0.0, %v2938
      %v2940 = vpop.f32.mrb[0].mxu0
      %2941 = vmatprep.mubr.f32.mxu0 0.0
      %2942 = vmatmul.mubr.f32.gmra.mrb[0].mxu0 %v2737
      %v2943 = vpop.f32.mrb[0].mxu0
      %v2944 = vadd.f32 0.0, %v2943
      %v2945 = vpop.f32.mrb[0].mxu0
      %2946 = vmatprep.mubr.f32.mxu0 0.0
      %2947 = vmatmul.mubr.f32.gmra.mrb[0].mxu0 %v2740
      %v2948 = vpop.f32.mrb[0].mxu0
      %v2949 = vadd.f32 0.0, %v2948
      %v2950 = vpop.f32.mrb[0].mxu0
      %2951 = vmatprep.mubr.f32.mxu0 0.0
      %2952 = vmatmul.mubr.f32.gmra.mrb[0].mxu0 %v2743
      %v2953 = vpop.f32.mrb[0].mxu0
      %v2954 = vadd.f32 0.0, %v2953
      %v2955 = vpop.f32.mrb[0].mxu0
      %2956 = vmatprep.mubr.f32.mxu0 0.0
      %2957 = vmatmul.mubr.f32.gmra.mrb[0].mxu0 %v2746
      %v2958 = vpop.f32.mrb[0].mxu0
      %v2959 = vadd.f32 0.0, %v2958
      %v2960 = vpop.f32.mrb[0].mxu0
      %2961 = vmatprep.mubr.f32.mxu0 0.0
      %2962 = vmatmul.mubr.f32.gmra.mrb[0].mxu0 %v2749
      %v2963 = vpop.f32.mrb[0].mxu0
      %v2964 = vadd.f32 0.0, %v2963
      %v2965 = vpop.f32.mrb[0].mxu0
      %2966 = vmatprep.mubr.f32.mxu0 0.0
      %2967 = vmatmul.mubr.f32.gmra.mrb[0].mxu0 %v2752
      %v2968 = vpop.f32.mrb[0].mxu0
      %v2969 = vadd.f32 0.0, %v2968
      %v2970 = vpop.f32.mrb[0].mxu0
      %2971 = vmatprep.mubr.f32.mxu0 0.0
      %2972 = vmatmul.mubr.f32.gmra.mrb[0].mxu0 %v2755
      %v2973 = vpop.f32.mrb[0].mxu0
      %v2974 = vadd.f32 0.0, %v2973
      %v2975 = vpop.f32.mrb[0].mxu0
      %2976 = vmatprep.mubr.f32.mxu0 0.0
      %2977 = vmatmul.mubr.f32.gmra.mrb[0].mxu0 %v2758
      %v2978 = vpop.f32.mrb[0].mxu0
      %v2979 = vadd.f32 0.0, %v2978
      %v2980 = vpop.f32.mrb[0].mxu0
      %2981 = vmatprep.mubr.f32.mxu0 0.0
      %2982 = vmatmul.mubr.f32.gmra.mrb[0].mxu0 %v2761
      %v2983 = vpop.f32.mrb[0].mxu0
      %v2984 = vadd.f32 0.0, %v2983
      %v2985 = vpop.f32.mrb[0].mxu0
      %2986 = vmatprep.mubr.f32.mxu0 0.0
      %2987 = vmatmul.mubr.f32.gmra.mrb[0].mxu0 %v2764
      %v2988 = vpop.f32.mrb[0].mxu0
      %v2989 = vadd.f32 0.0, %v2988
      %v2990 = vpop.f32.mrb[0].mxu0
      %2991 = vmatprep.mubr.f32.mxu0 0.0
      %2992 = vmatmul.mubr.f32.gmra.mrb[0].mxu0 %v2767
      %v2993 = vpop.f32.mrb[0].mxu0
      %v2994 = vadd.f32 0.0, %v2993
      %v2995 = vpop.f32.mrb[0].mxu0
      %2996 = vdwg.mxu0
      %v2997 = vld [vmem:[%s4] sm:$0x1]
      %v2999 = vlaneseq
      %v3000 = vshrl.u32 %v2999, 7
      %v3001 = vsub.s32 0, %v3000
      %v3002 = vrot.slane %v2997, %v3001
      %v3004 = vmul.f32 %v2839, %v3002
      %v3005 = vmul.f32 %v2844, %v3002
      %v3006 = vmul.f32 %v2849, %v3002
      %v3007 = vmul.f32 %v2854, %v3002
      %v3008 = vmul.f32 %v2859, %v3002
      %v3009 = vmul.f32 %v2864, %v3002
      %v3010 = vmul.f32 %v2869, %v3002
      %v3011 = vmul.f32 %v2874, %v3002
      %v3012 = vmul.f32 %v2879, %v3002
      %v3013 = vmul.f32 %v2884, %v3002
      %v3014 = vmul.f32 %v2889, %v3002
      %v3015 = vmul.f32 %v2894, %v3002
      %v3016 = vmul.f32 %v2899, %v3002
      %v3017 = vmul.f32 %v2904, %v3002
      %v3018 = vmul.f32 %v2909, %v3002
      %v3019 = vmul.f32 %v2914, %v3002
      %v3020 = vmul.f32 %v2919, %v3002
      %v3021 = vmul.f32 %v2924, %v3002
      %v3022 = vmul.f32 %v2929, %v3002
      %v3023 = vmul.f32 %v2934, %v3002
      %v3024 = vmul.f32 %v2939, %v3002
      %v3025 = vmul.f32 %v2944, %v3002
      %v3026 = vmul.f32 %v2949, %v3002
      %v3027 = vmul.f32 %v2954, %v3002
      %v3028 = vmul.f32 %v2959, %v3002
      %v3029 = vmul.f32 %v2964, %v3002
      %v3030 = vmul.f32 %v2969, %v3002
      %v3031 = vmul.f32 %v2974, %v3002
      %v3032 = vmul.f32 %v2979, %v3002
      %v3033 = vmul.f32 %v2984, %v3002
      %v3034 = vmul.f32 %v2989, %v3002
      %v3035 = vmul.f32 %v2994, %v3002
      %v3036 = vld [vmem:[%s5] sm:$0x1]
      %v3038 = vlaneseq
      %v3039 = vshrl.u32 %v3038, 7
      %v3040 = vsub.s32 0, %v3039
      %v3041 = vrot.slane %v3036, %v3040
      %v3043 = vadd.f32 %v3004, %v3041
      %v3044 = vadd.f32 %v3005, %v3041
      %v3045 = vadd.f32 %v3006, %v3041
      %v3046 = vadd.f32 %v3007, %v3041
      %v3047 = vadd.f32 %v3008, %v3041
      %v3048 = vadd.f32 %v3009, %v3041
      %v3049 = vadd.f32 %v3010, %v3041
      %v3050 = vadd.f32 %v3011, %v3041
      %v3051 = vadd.f32 %v3012, %v3041
      %v3052 = vadd.f32 %v3013, %v3041
      %v3053 = vadd.f32 %v3014, %v3041
      %v3054 = vadd.f32 %v3015, %v3041
      %v3055 = vadd.f32 %v3016, %v3041
      %v3056 = vadd.f32 %v3017, %v3041
      %v3057 = vadd.f32 %v3018, %v3041
      %v3058 = vadd.f32 %v3019, %v3041
      %v3059 = vadd.f32 %v3020, %v3041
      %v3060 = vadd.f32 %v3021, %v3041
      %v3061 = vadd.f32 %v3022, %v3041
      %v3062 = vadd.f32 %v3023, %v3041
      %v3063 = vadd.f32 %v3024, %v3041
      %v3064 = vadd.f32 %v3025, %v3041
      %v3065 = vadd.f32 %v3026, %v3041
      %v3066 = vadd.f32 %v3027, %v3041
      %v3067 = vadd.f32 %v3028, %v3041
      %v3068 = vadd.f32 %v3029, %v3041
      %v3069 = vadd.f32 %v3030, %v3041
      %v3070 = vadd.f32 %v3031, %v3041
      %v3071 = vadd.f32 %v3032, %v3041
      %v3072 = vadd.f32 %v3033, %v3041
      %v3073 = vadd.f32 %v3034, %v3041
      %v3074 = vadd.f32 %v3035, %v3041
      %v3075 = vsub.f32 0.0, %v3043
      %v3076 = vsub.f32 0.0, %v3044
      %v3077 = vsub.f32 0.0, %v3045
      %v3078 = vsub.f32 0.0, %v3046
      %v3079 = vsub.f32 0.0, %v3047
      %v3080 = vsub.f32 0.0, %v3048
      %v3081 = vsub.f32 0.0, %v3049
      %v3082 = vsub.f32 0.0, %v3050
      %v3083 = vsub.f32 0.0, %v3051
      %v3084 = vsub.f32 0.0, %v3052
      %v3085 = vsub.f32 0.0, %v3053
      %v3086 = vsub.f32 0.0, %v3054
      %v3087 = vsub.f32 0.0, %v3055
      %v3088 = vsub.f32 0.0, %v3056
      %v3089 = vsub.f32 0.0, %v3057
      %v3090 = vsub.f32 0.0, %v3058
      %v3091 = vsub.f32 0.0, %v3059
      %v3092 = vsub.f32 0.0, %v3060
      %v3093 = vsub.f32 0.0, %v3061
      %v3094 = vsub.f32 0.0, %v3062
      %v3095 = vsub.f32 0.0, %v3063
      %v3096 = vsub.f32 0.0, %v3064
      %v3097 = vsub.f32 0.0, %v3065
      %v3098 = vsub.f32 0.0, %v3066
      %v3099 = vsub.f32 0.0, %v3067
      %v3100 = vsub.f32 0.0, %v3068
      %v3101 = vsub.f32 0.0, %v3069
      %v3102 = vsub.f32 0.0, %v3070
      %v3103 = vsub.f32 0.0, %v3071
      %v3104 = vsub.f32 0.0, %v3072
      %v3105 = vsub.f32 0.0, %v3073
      %v3106 = vsub.f32 0.0, %v3074
      %v3107 = vmul.f32 %v3075, 1.442695
      %v3108 = vpow.pop %v3107
      %v3109 = vmul.f32 %v3076, 1.442695
      %v3110 = vpow.pop %v3109
      %v3111 = vmul.f32 %v3077, 1.442695
      %v3112 = vpow.pop %v3111
      %v3113 = vmul.f32 %v3078, 1.442695
      %v3114 = vpow.pop %v3113
      %v3115 = vmul.f32 %v3079, 1.442695
      %v3116 = vpow.pop %v3115
      %v3117 = vmul.f32 %v3080, 1.442695
      %v3118 = vpow.pop %v3117
      %v3119 = vmul.f32 %v3081, 1.442695
      %v3120 = vpow.pop %v3119
      %v3121 = vmul.f32 %v3082, 1.442695
      %v3122 = vpow.pop %v3121
      %v3123 = vmul.f32 %v3083, 1.442695
      %v3124 = vpow.pop %v3123
      %v3125 = vmul.f32 %v3084, 1.442695
      %v3126 = vpow.pop %v3125
      %v3127 = vmul.f32 %v3085, 1.442695
      %v3128 = vpow.pop %v3127
      %v3129 = vmul.f32 %v3086, 1.442695
      %v3130 = vpow.pop %v3129
      %v3131 = vmul.f32 %v3087, 1.442695
      %v3132 = vpow.pop %v3131
      %v3133 = vmul.f32 %v3088, 1.442695
      %v3134 = vpow.pop %v3133
      %v3135 = vmul.f32 %v3089, 1.442695
      %v3136 = vpow.pop %v3135
      %v3137 = vmul.f32 %v3090, 1.442695
      %v3138 = vpow.pop %v3137
      %v3139 = vmul.f32 %v3091, 1.442695
      %v3140 = vpow.pop %v3139
      %v3141 = vmul.f32 %v3092, 1.442695
      %v3142 = vpow.pop %v3141
      %v3143 = vmul.f32 %v3093, 1.442695
      %v3144 = vpow.pop %v3143
      %v3145 = vmul.f32 %v3094, 1.442695
      %v3146 = vpow.pop %v3145
      %v3147 = vmul.f32 %v3095, 1.442695
      %v3148 = vpow.pop %v3147
      %v3149 = vmul.f32 %v3096, 1.442695
      %v3150 = vpow.pop %v3149
      %v3151 = vmul.f32 %v3097, 1.442695
      %v3152 = vpow.pop %v3151
      %v3153 = vmul.f32 %v3098, 1.442695
      %v3154 = vpow.pop %v3153
      %v3155 = vmul.f32 %v3099, 1.442695
      %v3156 = vpow.pop %v3155
      %v3157 = vmul.f32 %v3100, 1.442695
      %v3158 = vpow.pop %v3157
      %v3159 = vmul.f32 %v3101, 1.442695
      %v3160 = vpow.pop %v3159
      %v3161 = vmul.f32 %v3102, 1.442695
      %v3162 = vpow.pop %v3161
      %v3163 = vmul.f32 %v3103, 1.442695
      %v3164 = vpow.pop %v3163
      %v3165 = vmul.f32 %v3104, 1.442695
      %v3166 = vpow.pop %v3165
      %v3167 = vmul.f32 %v3105, 1.442695
      %v3168 = vpow.pop %v3167
      %v3169 = vmul.f32 %v3106, 1.442695
      %v3170 = vpow.pop %v3169
      %v3171 = vadd.f32 %v3108, 1.0
      %v3172 = vadd.f32 %v3110, 1.0
      %v3173 = vadd.f32 %v3112, 1.0
      %v3174 = vadd.f32 %v3114, 1.0
      %v3175 = vadd.f32 %v3116, 1.0
      %v3176 = vadd.f32 %v3118, 1.0
      %v3177 = vadd.f32 %v3120, 1.0
      %v3178 = vadd.f32 %v3122, 1.0
      %v3179 = vadd.f32 %v3124, 1.0
      %v3180 = vadd.f32 %v3126, 1.0
      %v3181 = vadd.f32 %v3128, 1.0
      %v3182 = vadd.f32 %v3130, 1.0
      %v3183 = vadd.f32 %v3132, 1.0
      %v3184 = vadd.f32 %v3134, 1.0
      %v3185 = vadd.f32 %v3136, 1.0
      %v3186 = vadd.f32 %v3138, 1.0
      %v3187 = vadd.f32 %v3140, 1.0
      %v3188 = vadd.f32 %v3142, 1.0
      %v3189 = vadd.f32 %v3144, 1.0
      %v3190 = vadd.f32 %v3146, 1.0
      %v3191 = vadd.f32 %v3148, 1.0
      %v3192 = vadd.f32 %v3150, 1.0
      %v3193 = vadd.f32 %v3152, 1.0
      %v3194 = vadd.f32 %v3154, 1.0
      %v3195 = vadd.f32 %v3156, 1.0
      %v3196 = vadd.f32 %v3158, 1.0
      %v3197 = vadd.f32 %v3160, 1.0
      %v3198 = vadd.f32 %v3162, 1.0
      %v3199 = vadd.f32 %v3164, 1.0
      %v3200 = vadd.f32 %v3166, 1.0
      %v3201 = vadd.f32 %v3168, 1.0
      %v3202 = vadd.f32 %v3170, 1.0
      %v3203 = vrcp.pop %v3171
      %v3204 = vrcp.pop %v3172
      %v3205 = vrcp.pop %v3173
      %v3206 = vrcp.pop %v3174
      %v3207 = vrcp.pop %v3175
      %v3208 = vrcp.pop %v3176
      %v3209 = vrcp.pop %v3177
      %v3210 = vrcp.pop %v3178
      %v3211 = vrcp.pop %v3179
      %v3212 = vrcp.pop %v3180
      %v3213 = vrcp.pop %v3181
      %v3214 = vrcp.pop %v3182
      %v3215 = vrcp.pop %v3183
      %v3216 = vrcp.pop %v3184
      %v3217 = vrcp.pop %v3185
      %v3218 = vrcp.pop %v3186
      %v3219 = vrcp.pop %v3187
      %v3220 = vrcp.pop %v3188
      %v3221 = vrcp.pop %v3189
      %v3222 = vrcp.pop %v3190
      %v3223 = vrcp.pop %v3191
      %v3224 = vrcp.pop %v3192
      %v3225 = vrcp.pop %v3193
      %v3226 = vrcp.pop %v3194
      %v3227 = vrcp.pop %v3195
      %v3228 = vrcp.pop %v3196
      %v3229 = vrcp.pop %v3197
      %v3230 = vrcp.pop %v3198
      %v3231 = vrcp.pop %v3199
      %v3232 = vrcp.pop %v3200
      %v3233 = vrcp.pop %v3201
      %v3234 = vrcp.pop %v3202
      %v3235 = vmul.f32 %v3043, %v3203
      %v3236 = vmul.f32 %v3044, %v3204
      %v3237 = vmul.f32 %v3045, %v3205
      %v3238 = vmul.f32 %v3046, %v3206
      %v3239 = vmul.f32 %v3047, %v3207
      %v3240 = vmul.f32 %v3048, %v3208
      %v3241 = vmul.f32 %v3049, %v3209
      %v3242 = vmul.f32 %v3050, %v3210
      %v3243 = vmul.f32 %v3051, %v3211
      %v3244 = vmul.f32 %v3052, %v3212
      %v3245 = vmul.f32 %v3053, %v3213
      %v3246 = vmul.f32 %v3054, %v3214
      %v3247 = vmul.f32 %v3055, %v3215
      %v3248 = vmul.f32 %v3056, %v3216
      %v3249 = vmul.f32 %v3057, %v3217
      %v3250 = vmul.f32 %v3058, %v3218
      %v3251 = vmul.f32 %v3059, %v3219
      %v3252 = vmul.f32 %v3060, %v3220
      %v3253 = vmul.f32 %v3061, %v3221
      %v3254 = vmul.f32 %v3062, %v3222
      %v3255 = vmul.f32 %v3063, %v3223
      %v3256 = vmul.f32 %v3064, %v3224
      %v3257 = vmul.f32 %v3065, %v3225
      %v3258 = vmul.f32 %v3066, %v3226
      %v3259 = vmul.f32 %v3067, %v3227
      %v3260 = vmul.f32 %v3068, %v3228
      %v3261 = vmul.f32 %v3069, %v3229
      %v3262 = vmul.f32 %v3070, %v3230
      %v3263 = vmul.f32 %v3071, %v3231
      %v3264 = vmul.f32 %v3072, %v3232
      %v3265 = vmul.f32 %v3073, %v3233
      %v3266 = vmul.f32 %v3074, %v3234
      %3267 = vst.msk [vmem:[%s993 + $0x1] sm:$0xff] %vm393, %v3235
      %3268 = vst.msk [vmem:[%s993 + $0x9] sm:$0xff] %vm393, %v3236
      %3269 = vst.msk [vmem:[%s993 + $0x19] sm:$0xff] %vm393, %v3237
      %3270 = vst.msk [vmem:[%s993 + $0x21] sm:$0xff] %vm393, %v3238
      %3271 = vst.msk [vmem:[%s993 + $0x31] sm:$0xff] %vm393, %v3239
      %3272 = vst.msk [vmem:[%s993 + $0x39] sm:$0xff] %vm393, %v3240
      %3273 = vst.msk [vmem:[%s993 + $0x49] sm:$0xff] %vm393, %v3241
      %3274 = vst.msk [vmem:[%s993 + $0x51] sm:$0xff] %vm393, %v3242
      %3275 = vst.msk [vmem:[%s993 + $0x61] sm:$0xff] %vm393, %v3243
      %3276 = vst.msk [vmem:[%s993 + $0x69] sm:$0xff] %vm393, %v3244
      %3277 = vst.msk [vmem:[%s993 + $0x79] sm:$0xff] %vm393, %v3245
      %3278 = vst.msk [vmem:[%s993 + $0x81] sm:$0xff] %vm393, %v3246
      %3279 = vst.msk [vmem:[%s993 + $0x91] sm:$0xff] %vm393, %v3247
      %3280 = vst.msk [vmem:[%s993 + $0x99] sm:$0xff] %vm393, %v3248
      %3281 = vst.msk [vmem:[%s993 + $0xa9] sm:$0xff] %vm393, %v3249
      %3282 = vst.msk [vmem:[%s993 + $0xb1] sm:$0xff] %vm393, %v3250
      %3283 = vst.msk [vmem:[%s993 + $0xc1] sm:$0xff] %vm393, %v3251
      %3284 = vst.msk [vmem:[%s993 + $0xc9] sm:$0xff] %vm393, %v3252
      %3285 = vst.msk [vmem:[%s993 + $0xd9] sm:$0xff] %vm393, %v3253
      %3286 = vst.msk [vmem:[%s993 + $0xe1] sm:$0xff] %vm393, %v3254
      %3287 = vst.msk [vmem:[%s993 + $0xf1] sm:$0xff] %vm393, %v3255
      %3288 = vst.msk [vmem:[%s993 + $0xf9] sm:$0xff] %vm393, %v3256
      %3289 = vst.msk [vmem:[%s993 + $0x109] sm:$0xff] %vm393, %v3257
      %3290 = vst.msk [vmem:[%s993 + $0x111] sm:$0xff] %vm393, %v3258
      %3291 = vst.msk [vmem:[%s993 + $0x121] sm:$0xff] %vm393, %v3259
      %3292 = vst.msk [vmem:[%s993 + $0x129] sm:$0xff] %vm393, %v3260
      %3293 = vst.msk [vmem:[%s993 + $0x139] sm:$0xff] %vm393, %v3261
      %3294 = vst.msk [vmem:[%s993 + $0x141] sm:$0xff] %vm393, %v3262
      %3295 = vst.msk [vmem:[%s993 + $0x151] sm:$0xff] %vm393, %v3263
      %3296 = vst.msk [vmem:[%s993 + $0x159] sm:$0xff] %vm393, %v3264
      %3297 = vst.msk [vmem:[%s993 + $0x169] sm:$0xff] %vm393, %v3265
      %3298 = vst.msk [vmem:[%s993 + $0x171] sm:$0xff] %vm393, %v3266
      %v3299 = vld [vmem:[#allocation2] sm:$0xff]
      %v3300 = vld [vmem:[#allocation2 + $0x8] sm:$0xff]
      %v3301 = vld [vmem:[#allocation2 + $0x18] sm:$0xff]
      %v3302 = vld [vmem:[#allocation2 + $0x20] sm:$0xff]
      %v3303 = vld [vmem:[#allocation2 + $0x30] sm:$0xff]
      %v3304 = vld [vmem:[#allocation2 + $0x38] sm:$0xff]
      %v3305 = vld [vmem:[#allocation2 + $0x48] sm:$0xff]
      %v3306 = vld [vmem:[#allocation2 + $0x50] sm:$0xff]
      %v3307 = vld [vmem:[#allocation2 + $0x60] sm:$0xff]
      %v3308 = vld [vmem:[#allocation2 + $0x68] sm:$0xff]
      %v3309 = vld [vmem:[#allocation2 + $0x78] sm:$0xff]
      %v3310 = vld [vmem:[#allocation2 + $0x80] sm:$0xff]
      %v3311 = vld [vmem:[#allocation2 + $0x90] sm:$0xff]
      %v3312 = vld [vmem:[#allocation2 + $0x98] sm:$0xff]
      %v3313 = vld [vmem:[#allocation2 + $0xa8] sm:$0xff]
      %v3314 = vld [vmem:[#allocation2 + $0xb0] sm:$0xff]
      %v3315 = vld [vmem:[#allocation2 + $0xc0] sm:$0xff]
      %v3316 = vld [vmem:[#allocation2 + $0xc8] sm:$0xff]
      %v3317 = vld [vmem:[#allocation2 + $0xd8] sm:$0xff]
      %v3318 = vld [vmem:[#allocation2 + $0xe0] sm:$0xff]
      %v3319 = vld [vmem:[#allocation2 + $0xf0] sm:$0xff]
      %v3320 = vld [vmem:[#allocation2 + $0xf8] sm:$0xff]
      %v3321 = vld [vmem:[#allocation2 + $0x108] sm:$0xff]
      %v3322 = vld [vmem:[#allocation2 + $0x110] sm:$0xff]
      %v3323 = vld [vmem:[#allocation2 + $0x120] sm:$0xff]
      %v3324 = vld [vmem:[#allocation2 + $0x128] sm:$0xff]
      %v3325 = vld [vmem:[#allocation2 + $0x138] sm:$0xff]
      %v3326 = vld [vmem:[#allocation2 + $0x140] sm:$0xff]
      %v3327 = vld [vmem:[#allocation2 + $0x150] sm:$0xff]
      %v3328 = vld [vmem:[#allocation2 + $0x158] sm:$0xff]
      %v3329 = vld [vmem:[#allocation2 + $0x168] sm:$0xff]
      %v3330 = vld [vmem:[#allocation2 + $0x170] sm:$0xff]
      %3331 = vst.msk [vmem:[#allocation3] sm:$0xff] %vm393, %v3299
      %3332 = vst.msk [vmem:[#allocation3 + $0x8] sm:$0xff] %vm393, %v3300
      %3333 = vst.msk [vmem:[#allocation3 + $0x10] sm:$0xff] %vm393, %v3301
      %3334 = vst.msk [vmem:[#allocation3 + $0x18] sm:$0xff] %vm393, %v3302
      %3335 = vst.msk [vmem:[#allocation3 + $0x20] sm:$0xff] %vm393, %v3303
      %3336 = vst.msk [vmem:[#allocation3 + $0x28] sm:$0xff] %vm393, %v3304
      %3337 = vst.msk [vmem:[#allocation3 + $0x30] sm:$0xff] %vm393, %v3305
      %3338 = vst.msk [vmem:[#allocation3 + $0x38] sm:$0xff] %vm393, %v3306
      %3339 = vst.msk [vmem:[#allocation3 + $0x40] sm:$0xff] %vm393, %v3307
      %3340 = vst.msk [vmem:[#allocation3 + $0x48] sm:$0xff] %vm393, %v3308
      %3341 = vst.msk [vmem:[#allocation3 + $0x50] sm:$0xff] %vm393, %v3309
      %3342 = vst.msk [vmem:[#allocation3 + $0x58] sm:$0xff] %vm393, %v3310
      %3343 = vst.msk [vmem:[#allocation3 + $0x60] sm:$0xff] %vm393, %v3311
      %3344 = vst.msk [vmem:[#allocation3 + $0x68] sm:$0xff] %vm393, %v3312
      %3345 = vst.msk [vmem:[#allocation3 + $0x70] sm:$0xff] %vm393, %v3313
      %3346 = vst.msk [vmem:[#allocation3 + $0x78] sm:$0xff] %vm393, %v3314
      %3347 = vst.msk [vmem:[#allocation3 + $0x80] sm:$0xff] %vm393, %v3315
      %3348 = vst.msk [vmem:[#allocation3 + $0x88] sm:$0xff] %vm393, %v3316
      %3349 = vst.msk [vmem:[#allocation3 + $0x90] sm:$0xff] %vm393, %v3317
      %3350 = vst.msk [vmem:[#allocation3 + $0x98] sm:$0xff] %vm393, %v3318
      %3351 = vst.msk [vmem:[#allocation3 + $0xa0] sm:$0xff] %vm393, %v3319
      %3352 = vst.msk [vmem:[#allocation3 + $0xa8] sm:$0xff] %vm393, %v3320
      %3353 = vst.msk [vmem:[#allocation3 + $0xb0] sm:$0xff] %vm393, %v3321
      %3354 = vst.msk [vmem:[#allocation3 + $0xb8] sm:$0xff] %vm393, %v3322
      %3355 = vst.msk [vmem:[#allocation3 + $0xc0] sm:$0xff] %vm393, %v3323
      %3356 = vst.msk [vmem:[#allocation3 + $0xc8] sm:$0xff] %vm393, %v3324
      %3357 = vst.msk [vmem:[#allocation3 + $0xd0] sm:$0xff] %vm393, %v3325
      %3358 = vst.msk [vmem:[#allocation3 + $0xd8] sm:$0xff] %vm393, %v3326
      %3359 = vst.msk [vmem:[#allocation3 + $0xe0] sm:$0xff] %vm393, %v3327
      %3360 = vst.msk [vmem:[#allocation3 + $0xe8] sm:$0xff] %vm393, %v3328
      %3361 = vst.msk [vmem:[#allocation3 + $0xf0] sm:$0xff] %vm393, %v3329
      %3362 = vst.msk [vmem:[#allocation3 + $0xf8] sm:$0xff] %vm393, %v3330
      %v3363 = vld [vmem:[#allocation2 + $0x1] sm:$0xff]
      %v3364 = vld [vmem:[#allocation2 + $0x9] sm:$0xff]
      %v3365 = vld [vmem:[#allocation2 + $0x19] sm:$0xff]
      %v3366 = vld [vmem:[#allocation2 + $0x21] sm:$0xff]
      %v3367 = vld [vmem:[#allocation2 + $0x31] sm:$0xff]
      %v3368 = vld [vmem:[#allocation2 + $0x39] sm:$0xff]
      %v3369 = vld [vmem:[#allocation2 + $0x49] sm:$0xff]
      %v3370 = vld [vmem:[#allocation2 + $0x51] sm:$0xff]
      %v3371 = vld [vmem:[#allocation2 + $0x61] sm:$0xff]
      %v3372 = vld [vmem:[#allocation2 + $0x69] sm:$0xff]
      %v3373 = vld [vmem:[#allocation2 + $0x79] sm:$0xff]
      %v3374 = vld [vmem:[#allocation2 + $0x81] sm:$0xff]
      %v3375 = vld [vmem:[#allocation2 + $0x91] sm:$0xff]
      %v3376 = vld [vmem:[#allocation2 + $0x99] sm:$0xff]
      %v3377 = vld [vmem:[#allocation2 + $0xa9] sm:$0xff]
      %v3378 = vld [vmem:[#allocation2 + $0xb1] sm:$0xff]
      %v3379 = vld [vmem:[#allocation2 + $0xc1] sm:$0xff]
      %v3380 = vld [vmem:[#allocation2 + $0xc9] sm:$0xff]
      %v3381 = vld [vmem:[#allocation2 + $0xd9] sm:$0xff]
      %v3382 = vld [vmem:[#allocation2 + $0xe1] sm:$0xff]
      %v3383 = vld [vmem:[#allocation2 + $0xf1] sm:$0xff]
      %v3384 = vld [vmem:[#allocation2 + $0xf9] sm:$0xff]
      %v3385 = vld [vmem:[#allocation2 + $0x109] sm:$0xff]
      %v3386 = vld [vmem:[#allocation2 + $0x111] sm:$0xff]
      %v3387 = vld [vmem:[#allocation2 + $0x121] sm:$0xff]
      %v3388 = vld [vmem:[#allocation2 + $0x129] sm:$0xff]
      %v3389 = vld [vmem:[#allocation2 + $0x139] sm:$0xff]
      %v3390 = vld [vmem:[#allocation2 + $0x141] sm:$0xff]
      %v3391 = vld [vmem:[#allocation2 + $0x151] sm:$0xff]
      %v3392 = vld [vmem:[#allocation2 + $0x159] sm:$0xff]
      %v3393 = vld [vmem:[#allocation2 + $0x169] sm:$0xff]
      %v3394 = vld [vmem:[#allocation2 + $0x171] sm:$0xff]
      %3427 = vrot.lane.b32.xlu0 %v3363, 4
      %v3428 = vpop.permute.xlu0 %3427
      %3429 = vrot.lane.b32.xlu0 %v3364, 4
      %v3430 = vpop.permute.xlu0 %3429
      %3431 = vrot.lane.b32.xlu0 %v3365, 4
      %v3432 = vpop.permute.xlu0 %3431
      %3433 = vrot.lane.b32.xlu0 %v3366, 4
      %v3434 = vpop.permute.xlu0 %3433
      %3435 = vrot.lane.b32.xlu0 %v3367, 4
      %v3436 = vpop.permute.xlu0 %3435
      %3437 = vrot.lane.b32.xlu0 %v3368, 4
      %v3438 = vpop.permute.xlu0 %3437
      %3439 = vrot.lane.b32.xlu0 %v3369, 4
      %v3440 = vpop.permute.xlu0 %3439
      %3441 = vrot.lane.b32.xlu0 %v3370, 4
      %v3442 = vpop.permute.xlu0 %3441
      %3443 = vrot.lane.b32.xlu0 %v3371, 4
      %v3444 = vpop.permute.xlu0 %3443
      %3445 = vrot.lane.b32.xlu0 %v3372, 4
      %v3446 = vpop.permute.xlu0 %3445
      %3447 = vrot.lane.b32.xlu0 %v3373, 4
      %v3448 = vpop.permute.xlu0 %3447
      %3449 = vrot.lane.b32.xlu0 %v3374, 4
      %v3450 = vpop.permute.xlu0 %3449
      %3451 = vrot.lane.b32.xlu0 %v3375, 4
      %v3452 = vpop.permute.xlu0 %3451
      %3453 = vrot.lane.b32.xlu0 %v3376, 4
      %v3454 = vpop.permute.xlu0 %3453
      %3455 = vrot.lane.b32.xlu0 %v3377, 4
      %v3456 = vpop.permute.xlu0 %3455
      %3457 = vrot.lane.b32.xlu0 %v3378, 4
      %v3458 = vpop.permute.xlu0 %3457
      %3459 = vrot.lane.b32.xlu0 %v3379, 4
      %v3460 = vpop.permute.xlu0 %3459
      %3461 = vrot.lane.b32.xlu0 %v3380, 4
      %v3462 = vpop.permute.xlu0 %3461
      %3463 = vrot.lane.b32.xlu0 %v3381, 4
      %v3464 = vpop.permute.xlu0 %3463
      %3465 = vrot.lane.b32.xlu0 %v3382, 4
      %v3466 = vpop.permute.xlu0 %3465
      %3467 = vrot.lane.b32.xlu0 %v3383, 4
      %v3468 = vpop.permute.xlu0 %3467
      %3469 = vrot.lane.b32.xlu0 %v3384, 4
      %v3470 = vpop.permute.xlu0 %3469
      %3471 = vrot.lane.b32.xlu0 %v3385, 4
      %v3472 = vpop.permute.xlu0 %3471
      %3473 = vrot.lane.b32.xlu0 %v3386, 4
      %v3474 = vpop.permute.xlu0 %3473
      %3475 = vrot.lane.b32.xlu0 %v3387, 4
      %v3476 = vpop.permute.xlu0 %3475
      %3477 = vrot.lane.b32.xlu0 %v3388, 4
      %v3478 = vpop.permute.xlu0 %3477
      %3479 = vrot.lane.b32.xlu0 %v3389, 4
      %v3480 = vpop.permute.xlu0 %3479
      %3481 = vrot.lane.b32.xlu0 %v3390, 4
      %v3482 = vpop.permute.xlu0 %3481
      %3483 = vrot.lane.b32.xlu0 %v3391, 4
      %v3484 = vpop.permute.xlu0 %3483
      %3485 = vrot.lane.b32.xlu0 %v3392, 4
      %v3486 = vpop.permute.xlu0 %3485
      %3487 = vrot.lane.b32.xlu0 %v3393, 4
      %v3488 = vpop.permute.xlu0 %3487
      %3489 = vrot.lane.b32.xlu0 %v3394, 4
      %v3490 = vpop.permute.xlu0 %3489
      %3523 = vst.msk [vmem:[#allocation3] sm:$0xff] %vm1250, %v3428
      %3524 = vst.msk [vmem:[#allocation3 + $0x8] sm:$0xff] %vm1250, %v3430
      %3525 = vst.msk [vmem:[#allocation3 + $0x10] sm:$0xff] %vm1250, %v3432
      %3526 = vst.msk [vmem:[#allocation3 + $0x18] sm:$0xff] %vm1250, %v3434
      %3527 = vst.msk [vmem:[#allocation3 + $0x20] sm:$0xff] %vm1250, %v3436
      %3528 = vst.msk [vmem:[#allocation3 + $0x28] sm:$0xff] %vm1250, %v3438
      %3529 = vst.msk [vmem:[#allocation3 + $0x30] sm:$0xff] %vm1250, %v3440
      %3530 = vst.msk [vmem:[#allocation3 + $0x38] sm:$0xff] %vm1250, %v3442
      %3531 = vst.msk [vmem:[#allocation3 + $0x40] sm:$0xff] %vm1250, %v3444
      %3532 = vst.msk [vmem:[#allocation3 + $0x48] sm:$0xff] %vm1250, %v3446
      %3533 = vst.msk [vmem:[#allocation3 + $0x50] sm:$0xff] %vm1250, %v3448
      %3534 = vst.msk [vmem:[#allocation3 + $0x58] sm:$0xff] %vm1250, %v3450
      %3535 = vst.msk [vmem:[#allocation3 + $0x60] sm:$0xff] %vm1250, %v3452
      %3536 = vst.msk [vmem:[#allocation3 + $0x68] sm:$0xff] %vm1250, %v3454
      %3537 = vst.msk [vmem:[#allocation3 + $0x70] sm:$0xff] %vm1250, %v3456
      %3538 = vst.msk [vmem:[#allocation3 + $0x78] sm:$0xff] %vm1250, %v3458
      %3539 = vst.msk [vmem:[#allocation3 + $0x80] sm:$0xff] %vm1250, %v3460
      %3540 = vst.msk [vmem:[#allocation3 + $0x88] sm:$0xff] %vm1250, %v3462
      %3541 = vst.msk [vmem:[#allocation3 + $0x90] sm:$0xff] %vm1250, %v3464
      %3542 = vst.msk [vmem:[#allocation3 + $0x98] sm:$0xff] %vm1250, %v3466
      %3543 = vst.msk [vmem:[#allocation3 + $0xa0] sm:$0xff] %vm1250, %v3468
      %3544 = vst.msk [vmem:[#allocation3 + $0xa8] sm:$0xff] %vm1250, %v3470
      %3545 = vst.msk [vmem:[#allocation3 + $0xb0] sm:$0xff] %vm1250, %v3472
      %3546 = vst.msk [vmem:[#allocation3 + $0xb8] sm:$0xff] %vm1250, %v3474
      %3547 = vst.msk [vmem:[#allocation3 + $0xc0] sm:$0xff] %vm1250, %v3476
      %3548 = vst.msk [vmem:[#allocation3 + $0xc8] sm:$0xff] %vm1250, %v3478
      %3549 = vst.msk [vmem:[#allocation3 + $0xd0] sm:$0xff] %vm1250, %v3480
      %3550 = vst.msk [vmem:[#allocation3 + $0xd8] sm:$0xff] %vm1250, %v3482
      %3551 = vst.msk [vmem:[#allocation3 + $0xe0] sm:$0xff] %vm1250, %v3484
      %3552 = vst.msk [vmem:[#allocation3 + $0xe8] sm:$0xff] %vm1250, %v3486
      %3553 = vst.msk [vmem:[#allocation3 + $0xf0] sm:$0xff] %vm1250, %v3488
      %3554 = vst.msk [vmem:[#allocation3 + $0xf8] sm:$0xff] %vm1250, %v3490
      %v3555 = vld [vmem:[#allocation2 + $0x2] sm:$0xff]
      %v3556 = vld [vmem:[#allocation2 + $0xa] sm:$0xff]
      %v3557 = vld [vmem:[#allocation2 + $0x1a] sm:$0xff]
      %v3558 = vld [vmem:[#allocation2 + $0x22] sm:$0xff]
      %v3559 = vld [vmem:[#allocation2 + $0x32] sm:$0xff]
      %v3560 = vld [vmem:[#allocation2 + $0x3a] sm:$0xff]
      %v3561 = vld [vmem:[#allocation2 + $0x4a] sm:$0xff]
      %v3562 = vld [vmem:[#allocation2 + $0x52] sm:$0xff]
      %v3563 = vld [vmem:[#allocation2 + $0x62] sm:$0xff]
      %v3564 = vld [vmem:[#allocation2 + $0x6a] sm:$0xff]
      %v3565 = vld [vmem:[#allocation2 + $0x7a] sm:$0xff]
      %v3566 = vld [vmem:[#allocation2 + $0x82] sm:$0xff]
      %v3567 = vld [vmem:[#allocation2 + $0x92] sm:$0xff]
      %v3568 = vld [vmem:[#allocation2 + $0x9a] sm:$0xff]
      %v3569 = vld [vmem:[#allocation2 + $0xaa] sm:$0xff]
      %v3570 = vld [vmem:[#allocation2 + $0xb2] sm:$0xff]
      %v3571 = vld [vmem:[#allocation2 + $0xc2] sm:$0xff]
      %v3572 = vld [vmem:[#allocation2 + $0xca] sm:$0xff]
      %v3573 = vld [vmem:[#allocation2 + $0xda] sm:$0xff]
      %v3574 = vld [vmem:[#allocation2 + $0xe2] sm:$0xff]
      %v3575 = vld [vmem:[#allocation2 + $0xf2] sm:$0xff]
      %v3576 = vld [vmem:[#allocation2 + $0xfa] sm:$0xff]
      %v3577 = vld [vmem:[#allocation2 + $0x10a] sm:$0xff]
      %v3578 = vld [vmem:[#allocation2 + $0x112] sm:$0xff]
      %v3579 = vld [vmem:[#allocation2 + $0x122] sm:$0xff]
      %v3580 = vld [vmem:[#allocation2 + $0x12a] sm:$0xff]
      %v3581 = vld [vmem:[#allocation2 + $0x13a] sm:$0xff]
      %v3582 = vld [vmem:[#allocation2 + $0x142] sm:$0xff]
      %v3583 = vld [vmem:[#allocation2 + $0x152] sm:$0xff]
      %v3584 = vld [vmem:[#allocation2 + $0x15a] sm:$0xff]
      %v3585 = vld [vmem:[#allocation2 + $0x16a] sm:$0xff]
      %v3586 = vld [vmem:[#allocation2 + $0x172] sm:$0xff]
      %3619 = vrot.lane.b32.xlu0 %v3555, 8
      %v3620 = vpop.permute.xlu0 %3619
      %3621 = vrot.lane.b32.xlu0 %v3556, 8
      %v3622 = vpop.permute.xlu0 %3621
      %3623 = vrot.lane.b32.xlu0 %v3557, 8
      %v3624 = vpop.permute.xlu0 %3623
      %3625 = vrot.lane.b32.xlu0 %v3558, 8
      %v3626 = vpop.permute.xlu0 %3625
      %3627 = vrot.lane.b32.xlu0 %v3559, 8
      %v3628 = vpop.permute.xlu0 %3627
      %3629 = vrot.lane.b32.xlu0 %v3560, 8
      %v3630 = vpop.permute.xlu0 %3629
      %3631 = vrot.lane.b32.xlu0 %v3561, 8
      %v3632 = vpop.permute.xlu0 %3631
      %3633 = vrot.lane.b32.xlu0 %v3562, 8
      %v3634 = vpop.permute.xlu0 %3633
      %3635 = vrot.lane.b32.xlu0 %v3563, 8
      %v3636 = vpop.permute.xlu0 %3635
      %3637 = vrot.lane.b32.xlu0 %v3564, 8
      %v3638 = vpop.permute.xlu0 %3637
      %3639 = vrot.lane.b32.xlu0 %v3565, 8
      %v3640 = vpop.permute.xlu0 %3639
      %3641 = vrot.lane.b32.xlu0 %v3566, 8
      %v3642 = vpop.permute.xlu0 %3641
      %3643 = vrot.lane.b32.xlu0 %v3567, 8
      %v3644 = vpop.permute.xlu0 %3643
      %3645 = vrot.lane.b32.xlu0 %v3568, 8
      %v3646 = vpop.permute.xlu0 %3645
      %3647 = vrot.lane.b32.xlu0 %v3569, 8
      %v3648 = vpop.permute.xlu0 %3647
      %3649 = vrot.lane.b32.xlu0 %v3570, 8
      %v3650 = vpop.permute.xlu0 %3649
      %3651 = vrot.lane.b32.xlu0 %v3571, 8
      %v3652 = vpop.permute.xlu0 %3651
      %3653 = vrot.lane.b32.xlu0 %v3572, 8
      %v3654 = vpop.permute.xlu0 %3653
      %3655 = vrot.lane.b32.xlu0 %v3573, 8
      %v3656 = vpop.permute.xlu0 %3655
      %3657 = vrot.lane.b32.xlu0 %v3574, 8
      %v3658 = vpop.permute.xlu0 %3657
      %3659 = vrot.lane.b32.xlu0 %v3575, 8
      %v3660 = vpop.permute.xlu0 %3659
      %3661 = vrot.lane.b32.xlu0 %v3576, 8
      %v3662 = vpop.permute.xlu0 %3661
      %3663 = vrot.lane.b32.xlu0 %v3577, 8
      %v3664 = vpop.permute.xlu0 %3663
      %3665 = vrot.lane.b32.xlu0 %v3578, 8
      %v3666 = vpop.permute.xlu0 %3665
      %3667 = vrot.lane.b32.xlu0 %v3579, 8
      %v3668 = vpop.permute.xlu0 %3667
      %3669 = vrot.lane.b32.xlu0 %v3580, 8
      %v3670 = vpop.permute.xlu0 %3669
      %3671 = vrot.lane.b32.xlu0 %v3581, 8
      %v3672 = vpop.permute.xlu0 %3671
      %3673 = vrot.lane.b32.xlu0 %v3582, 8
      %v3674 = vpop.permute.xlu0 %3673
      %3675 = vrot.lane.b32.xlu0 %v3583, 8
      %v3676 = vpop.permute.xlu0 %3675
      %3677 = vrot.lane.b32.xlu0 %v3584, 8
      %v3678 = vpop.permute.xlu0 %3677
      %3679 = vrot.lane.b32.xlu0 %v3585, 8
      %v3680 = vpop.permute.xlu0 %3679
      %3681 = vrot.lane.b32.xlu0 %v3586, 8
      %v3682 = vpop.permute.xlu0 %3681
      %3715 = vst.msk [vmem:[#allocation3] sm:$0xff] %vm1443, %v3620
      %3716 = vst.msk [vmem:[#allocation3 + $0x8] sm:$0xff] %vm1443, %v3622
      %3717 = vst.msk [vmem:[#allocation3 + $0x10] sm:$0xff] %vm1443, %v3624
      %3718 = vst.msk [vmem:[#allocation3 + $0x18] sm:$0xff] %vm1443, %v3626
      %3719 = vst.msk [vmem:[#allocation3 + $0x20] sm:$0xff] %vm1443, %v3628
      %3720 = vst.msk [vmem:[#allocation3 + $0x28] sm:$0xff] %vm1443, %v3630
      %3721 = vst.msk [vmem:[#allocation3 + $0x30] sm:$0xff] %vm1443, %v3632
      %3722 = vst.msk [vmem:[#allocation3 + $0x38] sm:$0xff] %vm1443, %v3634
      %3723 = vst.msk [vmem:[#allocation3 + $0x40] sm:$0xff] %vm1443, %v3636
      %3724 = vst.msk [vmem:[#allocation3 + $0x48] sm:$0xff] %vm1443, %v3638
      %3725 = vst.msk [vmem:[#allocation3 + $0x50] sm:$0xff] %vm1443, %v3640
      %3726 = vst.msk [vmem:[#allocation3 + $0x58] sm:$0xff] %vm1443, %v3642
      %3727 = vst.msk [vmem:[#allocation3 + $0x60] sm:$0xff] %vm1443, %v3644
      %3728 = vst.msk [vmem:[#allocation3 + $0x68] sm:$0xff] %vm1443, %v3646
      %3729 = vst.msk [vmem:[#allocation3 + $0x70] sm:$0xff] %vm1443, %v3648
      %3730 = vst.msk [vmem:[#allocation3 + $0x78] sm:$0xff] %vm1443, %v3650
      %3731 = vst.msk [vmem:[#allocation3 + $0x80] sm:$0xff] %vm1443, %v3652
      %3732 = vst.msk [vmem:[#allocation3 + $0x88] sm:$0xff] %vm1443, %v3654
      %3733 = vst.msk [vmem:[#allocation3 + $0x90] sm:$0xff] %vm1443, %v3656
      %3734 = vst.msk [vmem:[#allocation3 + $0x98] sm:$0xff] %vm1443, %v3658
      %3735 = vst.msk [vmem:[#allocation3 + $0xa0] sm:$0xff] %vm1443, %v3660
      %3736 = vst.msk [vmem:[#allocation3 + $0xa8] sm:$0xff] %vm1443, %v3662
      %3737 = vst.msk [vmem:[#allocation3 + $0xb0] sm:$0xff] %vm1443, %v3664
      %3738 = vst.msk [vmem:[#allocation3 + $0xb8] sm:$0xff] %vm1443, %v3666
      %3739 = vst.msk [vmem:[#allocation3 + $0xc0] sm:$0xff] %vm1443, %v3668
      %3740 = vst.msk [vmem:[#allocation3 + $0xc8] sm:$0xff] %vm1443, %v3670
      %3741 = vst.msk [vmem:[#allocation3 + $0xd0] sm:$0xff] %vm1443, %v3672
      %3742 = vst.msk [vmem:[#allocation3 + $0xd8] sm:$0xff] %vm1443, %v3674
      %3743 = vst.msk [vmem:[#allocation3 + $0xe0] sm:$0xff] %vm1443, %v3676
      %3744 = vst.msk [vmem:[#allocation3 + $0xe8] sm:$0xff] %vm1443, %v3678
      %3745 = vst.msk [vmem:[#allocation3 + $0xf0] sm:$0xff] %vm1443, %v3680
      %3746 = vst.msk [vmem:[#allocation3 + $0xf8] sm:$0xff] %vm1443, %v3682
      %v3747 = vld [vmem:[%s993] sm:$0xff]
      %v3748 = vld [vmem:[%s993 + $0x8] sm:$0xff]
      %v3749 = vld [vmem:[%s993 + $0x18] sm:$0xff]
      %v3750 = vld [vmem:[%s993 + $0x20] sm:$0xff]
      %v3751 = vld [vmem:[%s993 + $0x30] sm:$0xff]
      %v3752 = vld [vmem:[%s993 + $0x38] sm:$0xff]
      %v3753 = vld [vmem:[%s993 + $0x48] sm:$0xff]
      %v3754 = vld [vmem:[%s993 + $0x50] sm:$0xff]
      %v3755 = vld [vmem:[%s993 + $0x60] sm:$0xff]
      %v3756 = vld [vmem:[%s993 + $0x68] sm:$0xff]
      %v3757 = vld [vmem:[%s993 + $0x78] sm:$0xff]
      %v3758 = vld [vmem:[%s993 + $0x80] sm:$0xff]
      %v3759 = vld [vmem:[%s993 + $0x90] sm:$0xff]
      %v3760 = vld [vmem:[%s993 + $0x98] sm:$0xff]
      %v3761 = vld [vmem:[%s993 + $0xa8] sm:$0xff]
      %v3762 = vld [vmem:[%s993 + $0xb0] sm:$0xff]
      %v3763 = vld [vmem:[%s993 + $0xc0] sm:$0xff]
      %v3764 = vld [vmem:[%s993 + $0xc8] sm:$0xff]
      %v3765 = vld [vmem:[%s993 + $0xd8] sm:$0xff]
      %v3766 = vld [vmem:[%s993 + $0xe0] sm:$0xff]
      %v3767 = vld [vmem:[%s993 + $0xf0] sm:$0xff]
      %v3768 = vld [vmem:[%s993 + $0xf8] sm:$0xff]
      %v3769 = vld [vmem:[%s993 + $0x108] sm:$0xff]
      %v3770 = vld [vmem:[%s993 + $0x110] sm:$0xff]
      %v3771 = vld [vmem:[%s993 + $0x120] sm:$0xff]
      %v3772 = vld [vmem:[%s993 + $0x128] sm:$0xff]
      %v3773 = vld [vmem:[%s993 + $0x138] sm:$0xff]
      %v3774 = vld [vmem:[%s993 + $0x140] sm:$0xff]
      %v3775 = vld [vmem:[%s993 + $0x150] sm:$0xff]
      %v3776 = vld [vmem:[%s993 + $0x158] sm:$0xff]
      %v3777 = vld [vmem:[%s993 + $0x168] sm:$0xff]
      %v3778 = vld [vmem:[%s993 + $0x170] sm:$0xff]
      %3811 = vrot.lane.b32.xlu0 %v3747, 12
      %v3812 = vpop.permute.xlu0 %3811
      %3813 = vrot.lane.b32.xlu0 %v3748, 12
      %v3814 = vpop.permute.xlu0 %3813
      %3815 = vrot.lane.b32.xlu0 %v3749, 12
      %v3816 = vpop.permute.xlu0 %3815
      %3817 = vrot.lane.b32.xlu0 %v3750, 12
      %v3818 = vpop.permute.xlu0 %3817
      %3819 = vrot.lane.b32.xlu0 %v3751, 12
      %v3820 = vpop.permute.xlu0 %3819
      %3821 = vrot.lane.b32.xlu0 %v3752, 12
      %v3822 = vpop.permute.xlu0 %3821
      %3823 = vrot.lane.b32.xlu0 %v3753, 12
      %v3824 = vpop.permute.xlu0 %3823
      %3825 = vrot.lane.b32.xlu0 %v3754, 12
      %v3826 = vpop.permute.xlu0 %3825
      %3827 = vrot.lane.b32.xlu0 %v3755, 12
      %v3828 = vpop.permute.xlu0 %3827
      %3829 = vrot.lane.b32.xlu0 %v3756, 12
      %v3830 = vpop.permute.xlu0 %3829
      %3831 = vrot.lane.b32.xlu0 %v3757, 12
      %v3832 = vpop.permute.xlu0 %3831
      %3833 = vrot.lane.b32.xlu0 %v3758, 12
      %v3834 = vpop.permute.xlu0 %3833
      %3835 = vrot.lane.b32.xlu0 %v3759, 12
      %v3836 = vpop.permute.xlu0 %3835
      %3837 = vrot.lane.b32.xlu0 %v3760, 12
      %v3838 = vpop.permute.xlu0 %3837
      %3839 = vrot.lane.b32.xlu0 %v3761, 12
      %v3840 = vpop.permute.xlu0 %3839
      %3841 = vrot.lane.b32.xlu0 %v3762, 12
      %v3842 = vpop.permute.xlu0 %3841
      %3843 = vrot.lane.b32.xlu0 %v3763, 12
      %v3844 = vpop.permute.xlu0 %3843
      %3845 = vrot.lane.b32.xlu0 %v3764, 12
      %v3846 = vpop.permute.xlu0 %3845
      %3847 = vrot.lane.b32.xlu0 %v3765, 12
      %v3848 = vpop.permute.xlu0 %3847
      %3849 = vrot.lane.b32.xlu0 %v3766, 12
      %v3850 = vpop.permute.xlu0 %3849
      %3851 = vrot.lane.b32.xlu0 %v3767, 12
      %v3852 = vpop.permute.xlu0 %3851
      %3853 = vrot.lane.b32.xlu0 %v3768, 12
      %v3854 = vpop.permute.xlu0 %3853
      %3855 = vrot.lane.b32.xlu0 %v3769, 12
      %v3856 = vpop.permute.xlu0 %3855
      %3857 = vrot.lane.b32.xlu0 %v3770, 12
      %v3858 = vpop.permute.xlu0 %3857
      %3859 = vrot.lane.b32.xlu0 %v3771, 12
      %v3860 = vpop.permute.xlu0 %3859
      %3861 = vrot.lane.b32.xlu0 %v3772, 12
      %v3862 = vpop.permute.xlu0 %3861
      %3863 = vrot.lane.b32.xlu0 %v3773, 12
      %v3864 = vpop.permute.xlu0 %3863
      %3865 = vrot.lane.b32.xlu0 %v3774, 12
      %v3866 = vpop.permute.xlu0 %3865
      %3867 = vrot.lane.b32.xlu0 %v3775, 12
      %v3868 = vpop.permute.xlu0 %3867
      %3869 = vrot.lane.b32.xlu0 %v3776, 12
      %v3870 = vpop.permute.xlu0 %3869
      %3871 = vrot.lane.b32.xlu0 %v3777, 12
      %v3872 = vpop.permute.xlu0 %3871
      %3873 = vrot.lane.b32.xlu0 %v3778, 12
      %v3874 = vpop.permute.xlu0 %3873
      %3907 = vst.msk [vmem:[#allocation3] sm:$0xff] %vm1636, %v3812
      %3908 = vst.msk [vmem:[#allocation3 + $0x8] sm:$0xff] %vm1636, %v3814
      %3909 = vst.msk [vmem:[#allocation3 + $0x10] sm:$0xff] %vm1636, %v3816
      %3910 = vst.msk [vmem:[#allocation3 + $0x18] sm:$0xff] %vm1636, %v3818
      %3911 = vst.msk [vmem:[#allocation3 + $0x20] sm:$0xff] %vm1636, %v3820
      %3912 = vst.msk [vmem:[#allocation3 + $0x28] sm:$0xff] %vm1636, %v3822
      %3913 = vst.msk [vmem:[#allocation3 + $0x30] sm:$0xff] %vm1636, %v3824
      %3914 = vst.msk [vmem:[#allocation3 + $0x38] sm:$0xff] %vm1636, %v3826
      %3915 = vst.msk [vmem:[#allocation3 + $0x40] sm:$0xff] %vm1636, %v3828
      %3916 = vst.msk [vmem:[#allocation3 + $0x48] sm:$0xff] %vm1636, %v3830
      %3917 = vst.msk [vmem:[#allocation3 + $0x50] sm:$0xff] %vm1636, %v3832
      %3918 = vst.msk [vmem:[#allocation3 + $0x58] sm:$0xff] %vm1636, %v3834
      %3919 = vst.msk [vmem:[#allocation3 + $0x60] sm:$0xff] %vm1636, %v3836
      %3920 = vst.msk [vmem:[#allocation3 + $0x68] sm:$0xff] %vm1636, %v3838
      %3921 = vst.msk [vmem:[#allocation3 + $0x70] sm:$0xff] %vm1636, %v3840
      %3922 = vst.msk [vmem:[#allocation3 + $0x78] sm:$0xff] %vm1636, %v3842
      %3923 = vst.msk [vmem:[#allocation3 + $0x80] sm:$0xff] %vm1636, %v3844
      %3924 = vst.msk [vmem:[#allocation3 + $0x88] sm:$0xff] %vm1636, %v3846
      %3925 = vst.msk [vmem:[#allocation3 + $0x90] sm:$0xff] %vm1636, %v3848
      %3926 = vst.msk [vmem:[#allocation3 + $0x98] sm:$0xff] %vm1636, %v3850
      %3927 = vst.msk [vmem:[#allocation3 + $0xa0] sm:$0xff] %vm1636, %v3852
      %3928 = vst.msk [vmem:[#allocation3 + $0xa8] sm:$0xff] %vm1636, %v3854
      %3929 = vst.msk [vmem:[#allocation3 + $0xb0] sm:$0xff] %vm1636, %v3856
      %3930 = vst.msk [vmem:[#allocation3 + $0xb8] sm:$0xff] %vm1636, %v3858
      %3931 = vst.msk [vmem:[#allocation3 + $0xc0] sm:$0xff] %vm1636, %v3860
      %3932 = vst.msk [vmem:[#allocation3 + $0xc8] sm:$0xff] %vm1636, %v3862
      %3933 = vst.msk [vmem:[#allocation3 + $0xd0] sm:$0xff] %vm1636, %v3864
      %3934 = vst.msk [vmem:[#allocation3 + $0xd8] sm:$0xff] %vm1636, %v3866
      %3935 = vst.msk [vmem:[#allocation3 + $0xe0] sm:$0xff] %vm1636, %v3868
      %3936 = vst.msk [vmem:[#allocation3 + $0xe8] sm:$0xff] %vm1636, %v3870
      %3937 = vst.msk [vmem:[#allocation3 + $0xf0] sm:$0xff] %vm1636, %v3872
      %3938 = vst.msk [vmem:[#allocation3 + $0xf8] sm:$0xff] %vm1636, %v3874
      %v3939 = vld [vmem:[%s993 + $0x1] sm:$0xff]
      %v3940 = vld [vmem:[%s993 + $0x9] sm:$0xff]
      %v3941 = vld [vmem:[%s993 + $0x19] sm:$0xff]
      %v3942 = vld [vmem:[%s993 + $0x21] sm:$0xff]
      %v3943 = vld [vmem:[%s993 + $0x31] sm:$0xff]
      %v3944 = vld [vmem:[%s993 + $0x39] sm:$0xff]
      %v3945 = vld [vmem:[%s993 + $0x49] sm:$0xff]
      %v3946 = vld [vmem:[%s993 + $0x51] sm:$0xff]
      %v3947 = vld [vmem:[%s993 + $0x61] sm:$0xff]
      %v3948 = vld [vmem:[%s993 + $0x69] sm:$0xff]
      %v3949 = vld [vmem:[%s993 + $0x79] sm:$0xff]
      %v3950 = vld [vmem:[%s993 + $0x81] sm:$0xff]
      %v3951 = vld [vmem:[%s993 + $0x91] sm:$0xff]
      %v3952 = vld [vmem:[%s993 + $0x99] sm:$0xff]
      %v3953 = vld [vmem:[%s993 + $0xa9] sm:$0xff]
      %v3954 = vld [vmem:[%s993 + $0xb1] sm:$0xff]
      %v3955 = vld [vmem:[%s993 + $0xc1] sm:$0xff]
      %v3956 = vld [vmem:[%s993 + $0xc9] sm:$0xff]
      %v3957 = vld [vmem:[%s993 + $0xd9] sm:$0xff]
      %v3958 = vld [vmem:[%s993 + $0xe1] sm:$0xff]
      %v3959 = vld [vmem:[%s993 + $0xf1] sm:$0xff]
      %v3960 = vld [vmem:[%s993 + $0xf9] sm:$0xff]
      %v3961 = vld [vmem:[%s993 + $0x109] sm:$0xff]
      %v3962 = vld [vmem:[%s993 + $0x111] sm:$0xff]
      %v3963 = vld [vmem:[%s993 + $0x121] sm:$0xff]
      %v3964 = vld [vmem:[%s993 + $0x129] sm:$0xff]
      %v3965 = vld [vmem:[%s993 + $0x139] sm:$0xff]
      %v3966 = vld [vmem:[%s993 + $0x141] sm:$0xff]
      %v3967 = vld [vmem:[%s993 + $0x151] sm:$0xff]
      %v3968 = vld [vmem:[%s993 + $0x159] sm:$0xff]
      %v3969 = vld [vmem:[%s993 + $0x169] sm:$0xff]
      %v3970 = vld [vmem:[%s993 + $0x171] sm:$0xff]
      %4003 = vrot.lane.b32.xlu0 %v3939, 16
      %v4004 = vpop.permute.xlu0 %4003
      %4005 = vrot.lane.b32.xlu0 %v3940, 16
      %v4006 = vpop.permute.xlu0 %4005
      %4007 = vrot.lane.b32.xlu0 %v3941, 16
      %v4008 = vpop.permute.xlu0 %4007
      %4009 = vrot.lane.b32.xlu0 %v3942, 16
      %v4010 = vpop.permute.xlu0 %4009
      %4011 = vrot.lane.b32.xlu0 %v3943, 16
      %v4012 = vpop.permute.xlu0 %4011
      %4013 = vrot.lane.b32.xlu0 %v3944, 16
      %v4014 = vpop.permute.xlu0 %4013
      %4015 = vrot.lane.b32.xlu0 %v3945, 16
      %v4016 = vpop.permute.xlu0 %4015
      %4017 = vrot.lane.b32.xlu0 %v3946, 16
      %v4018 = vpop.permute.xlu0 %4017
      %4019 = vrot.lane.b32.xlu0 %v3947, 16
      %v4020 = vpop.permute.xlu0 %4019
      %4021 = vrot.lane.b32.xlu0 %v3948, 16
      %v4022 = vpop.permute.xlu0 %4021
      %4023 = vrot.lane.b32.xlu0 %v3949, 16
      %v4024 = vpop.permute.xlu0 %4023
      %4025 = vrot.lane.b32.xlu0 %v3950, 16
      %v4026 = vpop.permute.xlu0 %4025
      %4027 = vrot.lane.b32.xlu0 %v3951, 16
      %v4028 = vpop.permute.xlu0 %4027
      %4029 = vrot.lane.b32.xlu0 %v3952, 16
      %v4030 = vpop.permute.xlu0 %4029
      %4031 = vrot.lane.b32.xlu0 %v3953, 16
      %v4032 = vpop.permute.xlu0 %4031
      %4033 = vrot.lane.b32.xlu0 %v3954, 16
      %v4034 = vpop.permute.xlu0 %4033
      %4035 = vrot.lane.b32.xlu0 %v3955, 16
      %v4036 = vpop.permute.xlu0 %4035
      %4037 = vrot.lane.b32.xlu0 %v3956, 16
      %v4038 = vpop.permute.xlu0 %4037
      %4039 = vrot.lane.b32.xlu0 %v3957, 16
      %v4040 = vpop.permute.xlu0 %4039
      %4041 = vrot.lane.b32.xlu0 %v3958, 16
      %v4042 = vpop.permute.xlu0 %4041
      %4043 = vrot.lane.b32.xlu0 %v3959, 16
      %v4044 = vpop.permute.xlu0 %4043
      %4045 = vrot.lane.b32.xlu0 %v3960, 16
      %v4046 = vpop.permute.xlu0 %4045
      %4047 = vrot.lane.b32.xlu0 %v3961, 16
      %v4048 = vpop.permute.xlu0 %4047
      %4049 = vrot.lane.b32.xlu0 %v3962, 16
      %v4050 = vpop.permute.xlu0 %4049
      %4051 = vrot.lane.b32.xlu0 %v3963, 16
      %v4052 = vpop.permute.xlu0 %4051
      %4053 = vrot.lane.b32.xlu0 %v3964, 16
      %v4054 = vpop.permute.xlu0 %4053
      %4055 = vrot.lane.b32.xlu0 %v3965, 16
      %v4056 = vpop.permute.xlu0 %4055
      %4057 = vrot.lane.b32.xlu0 %v3966, 16
      %v4058 = vpop.permute.xlu0 %4057
      %4059 = vrot.lane.b32.xlu0 %v3967, 16
      %v4060 = vpop.permute.xlu0 %4059
      %4061 = vrot.lane.b32.xlu0 %v3968, 16
      %v4062 = vpop.permute.xlu0 %4061
      %4063 = vrot.lane.b32.xlu0 %v3969, 16
      %v4064 = vpop.permute.xlu0 %4063
      %4065 = vrot.lane.b32.xlu0 %v3970, 16
      %v4066 = vpop.permute.xlu0 %4065
      %4099 = vst.msk [vmem:[#allocation3] sm:$0xff] %vm1829, %v4004
      %4100 = vst.msk [vmem:[#allocation3 + $0x8] sm:$0xff] %vm1829, %v4006
      %4101 = vst.msk [vmem:[#allocation3 + $0x10] sm:$0xff] %vm1829, %v4008
      %4102 = vst.msk [vmem:[#allocation3 + $0x18] sm:$0xff] %vm1829, %v4010
      %4103 = vst.msk [vmem:[#allocation3 + $0x20] sm:$0xff] %vm1829, %v4012
      %4104 = vst.msk [vmem:[#allocation3 + $0x28] sm:$0xff] %vm1829, %v4014
      %4105 = vst.msk [vmem:[#allocation3 + $0x30] sm:$0xff] %vm1829, %v4016
      %4106 = vst.msk [vmem:[#allocation3 + $0x38] sm:$0xff] %vm1829, %v4018
      %4107 = vst.msk [vmem:[#allocation3 + $0x40] sm:$0xff] %vm1829, %v4020
      %4108 = vst.msk [vmem:[#allocation3 + $0x48] sm:$0xff] %vm1829, %v4022
      %4109 = vst.msk [vmem:[#allocation3 + $0x50] sm:$0xff] %vm1829, %v4024
      %4110 = vst.msk [vmem:[#allocation3 + $0x58] sm:$0xff] %vm1829, %v4026
      %4111 = vst.msk [vmem:[#allocation3 + $0x60] sm:$0xff] %vm1829, %v4028
      %4112 = vst.msk [vmem:[#allocation3 + $0x68] sm:$0xff] %vm1829, %v4030
      %4113 = vst.msk [vmem:[#allocation3 + $0x70] sm:$0xff] %vm1829, %v4032
      %4114 = vst.msk [vmem:[#allocation3 + $0x78] sm:$0xff] %vm1829, %v4034
      %4115 = vst.msk [vmem:[#allocation3 + $0x80] sm:$0xff] %vm1829, %v4036
      %4116 = vst.msk [vmem:[#allocation3 + $0x88] sm:$0xff] %vm1829, %v4038
      %4117 = vst.msk [vmem:[#allocation3 + $0x90] sm:$0xff] %vm1829, %v4040
      %4118 = vst.msk [vmem:[#allocation3 + $0x98] sm:$0xff] %vm1829, %v4042
      %4119 = vst.msk [vmem:[#allocation3 + $0xa0] sm:$0xff] %vm1829, %v4044
      %4120 = vst.msk [vmem:[#allocation3 + $0xa8] sm:$0xff] %vm1829, %v4046
      %4121 = vst.msk [vmem:[#allocation3 + $0xb0] sm:$0xff] %vm1829, %v4048
      %4122 = vst.msk [vmem:[#allocation3 + $0xb8] sm:$0xff] %vm1829, %v4050
      %4123 = vst.msk [vmem:[#allocation3 + $0xc0] sm:$0xff] %vm1829, %v4052
      %4124 = vst.msk [vmem:[#allocation3 + $0xc8] sm:$0xff] %vm1829, %v4054
      %4125 = vst.msk [vmem:[#allocation3 + $0xd0] sm:$0xff] %vm1829, %v4056
      %4126 = vst.msk [vmem:[#allocation3 + $0xd8] sm:$0xff] %vm1829, %v4058
      %4127 = vst.msk [vmem:[#allocation3 + $0xe0] sm:$0xff] %vm1829, %v4060
      %4128 = vst.msk [vmem:[#allocation3 + $0xe8] sm:$0xff] %vm1829, %v4062
      %4129 = vst.msk [vmem:[#allocation3 + $0xf0] sm:$0xff] %vm1829, %v4064
      %4130 = vst.msk [vmem:[#allocation3 + $0xf8] sm:$0xff] %vm1829, %v4066
      %v4131 = vld [vmem:[%s993 + $0x2] sm:$0xff]
      %v4132 = vld [vmem:[%s993 + $0xa] sm:$0xff]
      %v4133 = vld [vmem:[%s993 + $0x1a] sm:$0xff]
      %v4134 = vld [vmem:[%s993 + $0x22] sm:$0xff]
      %v4135 = vld [vmem:[%s993 + $0x32] sm:$0xff]
      %v4136 = vld [vmem:[%s993 + $0x3a] sm:$0xff]
      %v4137 = vld [vmem:[%s993 + $0x4a] sm:$0xff]
      %v4138 = vld [vmem:[%s993 + $0x52] sm:$0xff]
      %v4139 = vld [vmem:[%s993 + $0x62] sm:$0xff]
      %v4140 = vld [vmem:[%s993 + $0x6a] sm:$0xff]
      %v4141 = vld [vmem:[%s993 + $0x7a] sm:$0xff]
      %v4142 = vld [vmem:[%s993 + $0x82] sm:$0xff]
      %v4143 = vld [vmem:[%s993 + $0x92] sm:$0xff]
      %v4144 = vld [vmem:[%s993 + $0x9a] sm:$0xff]
      %v4145 = vld [vmem:[%s993 + $0xaa] sm:$0xff]
      %v4146 = vld [vmem:[%s993 + $0xb2] sm:$0xff]
      %v4147 = vld [vmem:[%s993 + $0xc2] sm:$0xff]
      %v4148 = vld [vmem:[%s993 + $0xca] sm:$0xff]
      %v4149 = vld [vmem:[%s993 + $0xda] sm:$0xff]
      %v4150 = vld [vmem:[%s993 + $0xe2] sm:$0xff]
      %v4151 = vld [vmem:[%s993 + $0xf2] sm:$0xff]
      %v4152 = vld [vmem:[%s993 + $0xfa] sm:$0xff]
      %v4153 = vld [vmem:[%s993 + $0x10a] sm:$0xff]
      %v4154 = vld [vmem:[%s993 + $0x112] sm:$0xff]
      %v4155 = vld [vmem:[%s993 + $0x122] sm:$0xff]
      %v4156 = vld [vmem:[%s993 + $0x12a] sm:$0xff]
      %v4157 = vld [vmem:[%s993 + $0x13a] sm:$0xff]
      %v4158 = vld [vmem:[%s993 + $0x142] sm:$0xff]
      %v4159 = vld [vmem:[%s993 + $0x152] sm:$0xff]
      %v4160 = vld [vmem:[%s993 + $0x15a] sm:$0xff]
      %v4161 = vld [vmem:[%s993 + $0x16a] sm:$0xff]
      %v4162 = vld [vmem:[%s993 + $0x172] sm:$0xff]
      %4195 = vrot.lane.b32.xlu0 %v4131, 20
      %v4196 = vpop.permute.xlu0 %4195
      %4197 = vrot.lane.b32.xlu0 %v4132, 20
      %v4198 = vpop.permute.xlu0 %4197
      %4199 = vrot.lane.b32.xlu0 %v4133, 20
      %v4200 = vpop.permute.xlu0 %4199
      %4201 = vrot.lane.b32.xlu0 %v4134, 20
      %v4202 = vpop.permute.xlu0 %4201
      %4203 = vrot.lane.b32.xlu0 %v4135, 20
      %v4204 = vpop.permute.xlu0 %4203
      %4205 = vrot.lane.b32.xlu0 %v4136, 20
      %v4206 = vpop.permute.xlu0 %4205
      %4207 = vrot.lane.b32.xlu0 %v4137, 20
      %v4208 = vpop.permute.xlu0 %4207
      %4209 = vrot.lane.b32.xlu0 %v4138, 20
      %v4210 = vpop.permute.xlu0 %4209
      %4211 = vrot.lane.b32.xlu0 %v4139, 20
      %v4212 = vpop.permute.xlu0 %4211
      %4213 = vrot.lane.b32.xlu0 %v4140, 20
      %v4214 = vpop.permute.xlu0 %4213
      %4215 = vrot.lane.b32.xlu0 %v4141, 20
      %v4216 = vpop.permute.xlu0 %4215
      %4217 = vrot.lane.b32.xlu0 %v4142, 20
      %v4218 = vpop.permute.xlu0 %4217
      %4219 = vrot.lane.b32.xlu0 %v4143, 20
      %v4220 = vpop.permute.xlu0 %4219
      %4221 = vrot.lane.b32.xlu0 %v4144, 20
      %v4222 = vpop.permute.xlu0 %4221
      %4223 = vrot.lane.b32.xlu0 %v4145, 20
      %v4224 = vpop.permute.xlu0 %4223
      %4225 = vrot.lane.b32.xlu0 %v4146, 20
      %v4226 = vpop.permute.xlu0 %4225
      %4227 = vrot.lane.b32.xlu0 %v4147, 20
      %v4228 = vpop.permute.xlu0 %4227
      %4229 = vrot.lane.b32.xlu0 %v4148, 20
      %v4230 = vpop.permute.xlu0 %4229
      %4231 = vrot.lane.b32.xlu0 %v4149, 20
      %v4232 = vpop.permute.xlu0 %4231
      %4233 = vrot.lane.b32.xlu0 %v4150, 20
      %v4234 = vpop.permute.xlu0 %4233
      %4235 = vrot.lane.b32.xlu0 %v4151, 20
      %v4236 = vpop.permute.xlu0 %4235
      %4237 = vrot.lane.b32.xlu0 %v4152, 20
      %v4238 = vpop.permute.xlu0 %4237
      %4239 = vrot.lane.b32.xlu0 %v4153, 20
      %v4240 = vpop.permute.xlu0 %4239
      %4241 = vrot.lane.b32.xlu0 %v4154, 20
      %v4242 = vpop.permute.xlu0 %4241
      %4243 = vrot.lane.b32.xlu0 %v4155, 20
      %v4244 = vpop.permute.xlu0 %4243
      %4245 = vrot.lane.b32.xlu0 %v4156, 20
      %v4246 = vpop.permute.xlu0 %4245
      %4247 = vrot.lane.b32.xlu0 %v4157, 20
      %v4248 = vpop.permute.xlu0 %4247
      %4249 = vrot.lane.b32.xlu0 %v4158, 20
      %v4250 = vpop.permute.xlu0 %4249
      %4251 = vrot.lane.b32.xlu0 %v4159, 20
      %v4252 = vpop.permute.xlu0 %4251
      %4253 = vrot.lane.b32.xlu0 %v4160, 20
      %v4254 = vpop.permute.xlu0 %4253
      %4255 = vrot.lane.b32.xlu0 %v4161, 20
      %v4256 = vpop.permute.xlu0 %4255
      %4257 = vrot.lane.b32.xlu0 %v4162, 20
      %v4258 = vpop.permute.xlu0 %4257
      %4291 = vst.msk [vmem:[#allocation3] sm:$0xff] %vm2022, %v4196
      %4292 = vst.msk [vmem:[#allocation3 + $0x8] sm:$0xff] %vm2022, %v4198
      %4293 = vst.msk [vmem:[#allocation3 + $0x10] sm:$0xff] %vm2022, %v4200
      %4294 = vst.msk [vmem:[#allocation3 + $0x18] sm:$0xff] %vm2022, %v4202
      %4295 = vst.msk [vmem:[#allocation3 + $0x20] sm:$0xff] %vm2022, %v4204
      %4296 = vst.msk [vmem:[#allocation3 + $0x28] sm:$0xff] %vm2022, %v4206
      %4297 = vst.msk [vmem:[#allocation3 + $0x30] sm:$0xff] %vm2022, %v4208
      %4298 = vst.msk [vmem:[#allocation3 + $0x38] sm:$0xff] %vm2022, %v4210
      %4299 = vst.msk [vmem:[#allocation3 + $0x40] sm:$0xff] %vm2022, %v4212
      %4300 = vst.msk [vmem:[#allocation3 + $0x48] sm:$0xff] %vm2022, %v4214
      %4301 = vst.msk [vmem:[#allocation3 + $0x50] sm:$0xff] %vm2022, %v4216
      %4302 = vst.msk [vmem:[#allocation3 + $0x58] sm:$0xff] %vm2022, %v4218
      %4303 = vst.msk [vmem:[#allocation3 + $0x60] sm:$0xff] %vm2022, %v4220
      %4304 = vst.msk [vmem:[#allocation3 + $0x68] sm:$0xff] %vm2022, %v4222
      %4305 = vst.msk [vmem:[#allocation3 + $0x70] sm:$0xff] %vm2022, %v4224
      %4306 = vst.msk [vmem:[#allocation3 + $0x78] sm:$0xff] %vm2022, %v4226
      %4307 = vst.msk [vmem:[#allocation3 + $0x80] sm:$0xff] %vm2022, %v4228
      %4308 = vst.msk [vmem:[#allocation3 + $0x88] sm:$0xff] %vm2022, %v4230
      %4309 = vst.msk [vmem:[#allocation3 + $0x90] sm:$0xff] %vm2022, %v4232
      %4310 = vst.msk [vmem:[#allocation3 + $0x98] sm:$0xff] %vm2022, %v4234
      %4311 = vst.msk [vmem:[#allocation3 + $0xa0] sm:$0xff] %vm2022, %v4236
      %4312 = vst.msk [vmem:[#allocation3 + $0xa8] sm:$0xff] %vm2022, %v4238
      %4313 = vst.msk [vmem:[#allocation3 + $0xb0] sm:$0xff] %vm2022, %v4240
      %4314 = vst.msk [vmem:[#allocation3 + $0xb8] sm:$0xff] %vm2022, %v4242
      %4315 = vst.msk [vmem:[#allocation3 + $0xc0] sm:$0xff] %vm2022, %v4244
      %4316 = vst.msk [vmem:[#allocation3 + $0xc8] sm:$0xff] %vm2022, %v4246
      %4317 = vst.msk [vmem:[#allocation3 + $0xd0] sm:$0xff] %vm2022, %v4248
      %4318 = vst.msk [vmem:[#allocation3 + $0xd8] sm:$0xff] %vm2022, %v4250
      %4319 = vst.msk [vmem:[#allocation3 + $0xe0] sm:$0xff] %vm2022, %v4252
      %4320 = vst.msk [vmem:[#allocation3 + $0xe8] sm:$0xff] %vm2022, %v4254
      %4321 = vst.msk [vmem:[#allocation3 + $0xf0] sm:$0xff] %vm2022, %v4256
      %4322 = vst.msk [vmem:[#allocation3 + $0xf8] sm:$0xff] %vm2022, %v4258
      %v4323 = vld [vmem:[%s2055] sm:$0xff]
      %v4324 = vld [vmem:[%s2055 + $0x8] sm:$0xff]
      %v4325 = vld [vmem:[%s2055 + $0x18] sm:$0xff]
      %v4326 = vld [vmem:[%s2055 + $0x20] sm:$0xff]
      %v4327 = vld [vmem:[%s2055 + $0x30] sm:$0xff]
      %v4328 = vld [vmem:[%s2055 + $0x38] sm:$0xff]
      %v4329 = vld [vmem:[%s2055 + $0x48] sm:$0xff]
      %v4330 = vld [vmem:[%s2055 + $0x50] sm:$0xff]
      %v4331 = vld [vmem:[%s2055 + $0x60] sm:$0xff]
      %v4332 = vld [vmem:[%s2055 + $0x68] sm:$0xff]
      %v4333 = vld [vmem:[%s2055 + $0x78] sm:$0xff]
      %v4334 = vld [vmem:[%s2055 + $0x80] sm:$0xff]
      %v4335 = vld [vmem:[%s2055 + $0x90] sm:$0xff]
      %v4336 = vld [vmem:[%s2055 + $0x98] sm:$0xff]
      %v4337 = vld [vmem:[%s2055 + $0xa8] sm:$0xff]
      %v4338 = vld [vmem:[%s2055 + $0xb0] sm:$0xff]
      %v4339 = vld [vmem:[%s2055 + $0xc0] sm:$0xff]
      %v4340 = vld [vmem:[%s2055 + $0xc8] sm:$0xff]
      %v4341 = vld [vmem:[%s2055 + $0xd8] sm:$0xff]
      %v4342 = vld [vmem:[%s2055 + $0xe0] sm:$0xff]
      %v4343 = vld [vmem:[%s2055 + $0xf0] sm:$0xff]
      %v4344 = vld [vmem:[%s2055 + $0xf8] sm:$0xff]
      %v4345 = vld [vmem:[%s2055 + $0x108] sm:$0xff]
      %v4346 = vld [vmem:[%s2055 + $0x110] sm:$0xff]
      %v4347 = vld [vmem:[%s2055 + $0x120] sm:$0xff]
      %v4348 = vld [vmem:[%s2055 + $0x128] sm:$0xff]
      %v4349 = vld [vmem:[%s2055 + $0x138] sm:$0xff]
      %v4350 = vld [vmem:[%s2055 + $0x140] sm:$0xff]
      %v4351 = vld [vmem:[%s2055 + $0x150] sm:$0xff]
      %v4352 = vld [vmem:[%s2055 + $0x158] sm:$0xff]
      %v4353 = vld [vmem:[%s2055 + $0x168] sm:$0xff]
      %v4354 = vld [vmem:[%s2055 + $0x170] sm:$0xff]
      %4387 = vrot.lane.b32.xlu0 %v4323, 24
      %v4388 = vpop.permute.xlu0 %4387
      %4389 = vrot.lane.b32.xlu0 %v4324, 24
      %v4390 = vpop.permute.xlu0 %4389
      %4391 = vrot.lane.b32.xlu0 %v4325, 24
      %v4392 = vpop.permute.xlu0 %4391
      %4393 = vrot.lane.b32.xlu0 %v4326, 24
      %v4394 = vpop.permute.xlu0 %4393
      %4395 = vrot.lane.b32.xlu0 %v4327, 24
      %v4396 = vpop.permute.xlu0 %4395
      %4397 = vrot.lane.b32.xlu0 %v4328, 24
      %v4398 = vpop.permute.xlu0 %4397
      %4399 = vrot.lane.b32.xlu0 %v4329, 24
      %v4400 = vpop.permute.xlu0 %4399
      %4401 = vrot.lane.b32.xlu0 %v4330, 24
      %v4402 = vpop.permute.xlu0 %4401
      %4403 = vrot.lane.b32.xlu0 %v4331, 24
      %v4404 = vpop.permute.xlu0 %4403
      %4405 = vrot.lane.b32.xlu0 %v4332, 24
      %v4406 = vpop.permute.xlu0 %4405
      %4407 = vrot.lane.b32.xlu0 %v4333, 24
      %v4408 = vpop.permute.xlu0 %4407
      %4409 = vrot.lane.b32.xlu0 %v4334, 24
      %v4410 = vpop.permute.xlu0 %4409
      %4411 = vrot.lane.b32.xlu0 %v4335, 24
      %v4412 = vpop.permute.xlu0 %4411
      %4413 = vrot.lane.b32.xlu0 %v4336, 24
      %v4414 = vpop.permute.xlu0 %4413
      %4415 = vrot.lane.b32.xlu0 %v4337, 24
      %v4416 = vpop.permute.xlu0 %4415
      %4417 = vrot.lane.b32.xlu0 %v4338, 24
      %v4418 = vpop.permute.xlu0 %4417
      %4419 = vrot.lane.b32.xlu0 %v4339, 24
      %v4420 = vpop.permute.xlu0 %4419
      %4421 = vrot.lane.b32.xlu0 %v4340, 24
      %v4422 = vpop.permute.xlu0 %4421
      %4423 = vrot.lane.b32.xlu0 %v4341, 24
      %v4424 = vpop.permute.xlu0 %4423
      %4425 = vrot.lane.b32.xlu0 %v4342, 24
      %v4426 = vpop.permute.xlu0 %4425
      %4427 = vrot.lane.b32.xlu0 %v4343, 24
      %v4428 = vpop.permute.xlu0 %4427
      %4429 = vrot.lane.b32.xlu0 %v4344, 24
      %v4430 = vpop.permute.xlu0 %4429
      %4431 = vrot.lane.b32.xlu0 %v4345, 24
      %v4432 = vpop.permute.xlu0 %4431
      %4433 = vrot.lane.b32.xlu0 %v4346, 24
      %v4434 = vpop.permute.xlu0 %4433
      %4435 = vrot.lane.b32.xlu0 %v4347, 24
      %v4436 = vpop.permute.xlu0 %4435
      %4437 = vrot.lane.b32.xlu0 %v4348, 24
      %v4438 = vpop.permute.xlu0 %4437
      %4439 = vrot.lane.b32.xlu0 %v4349, 24
      %v4440 = vpop.permute.xlu0 %4439
      %4441 = vrot.lane.b32.xlu0 %v4350, 24
      %v4442 = vpop.permute.xlu0 %4441
      %4443 = vrot.lane.b32.xlu0 %v4351, 24
      %v4444 = vpop.permute.xlu0 %4443
      %4445 = vrot.lane.b32.xlu0 %v4352, 24
      %v4446 = vpop.permute.xlu0 %4445
      %4447 = vrot.lane.b32.xlu0 %v4353, 24
      %v4448 = vpop.permute.xlu0 %4447
      %4449 = vrot.lane.b32.xlu0 %v4354, 24
      %v4450 = vpop.permute.xlu0 %4449
      %4483 = vst.msk [vmem:[#allocation3] sm:$0xff] %vm2216, %v4388
      %4484 = vst.msk [vmem:[#allocation3 + $0x8] sm:$0xff] %vm2216, %v4390
      %4485 = vst.msk [vmem:[#allocation3 + $0x10] sm:$0xff] %vm2216, %v4392
      %4486 = vst.msk [vmem:[#allocation3 + $0x18] sm:$0xff] %vm2216, %v4394
      %4487 = vst.msk [vmem:[#allocation3 + $0x20] sm:$0xff] %vm2216, %v4396
      %4488 = vst.msk [vmem:[#allocation3 + $0x28] sm:$0xff] %vm2216, %v4398
      %4489 = vst.msk [vmem:[#allocation3 + $0x30] sm:$0xff] %vm2216, %v4400
      %4490 = vst.msk [vmem:[#allocation3 + $0x38] sm:$0xff] %vm2216, %v4402
      %4491 = vst.msk [vmem:[#allocation3 + $0x40] sm:$0xff] %vm2216, %v4404
      %4492 = vst.msk [vmem:[#allocation3 + $0x48] sm:$0xff] %vm2216, %v4406
      %4493 = vst.msk [vmem:[#allocation3 + $0x50] sm:$0xff] %vm2216, %v4408
      %4494 = vst.msk [vmem:[#allocation3 + $0x58] sm:$0xff] %vm2216, %v4410
      %4495 = vst.msk [vmem:[#allocation3 + $0x60] sm:$0xff] %vm2216, %v4412
      %4496 = vst.msk [vmem:[#allocation3 + $0x68] sm:$0xff] %vm2216, %v4414
      %4497 = vst.msk [vmem:[#allocation3 + $0x70] sm:$0xff] %vm2216, %v4416
      %4498 = vst.msk [vmem:[#allocation3 + $0x78] sm:$0xff] %vm2216, %v4418
      %4499 = vst.msk [vmem:[#allocation3 + $0x80] sm:$0xff] %vm2216, %v4420
      %4500 = vst.msk [vmem:[#allocation3 + $0x88] sm:$0xff] %vm2216, %v4422
      %4501 = vst.msk [vmem:[#allocation3 + $0x90] sm:$0xff] %vm2216, %v4424
      %4502 = vst.msk [vmem:[#allocation3 + $0x98] sm:$0xff] %vm2216, %v4426
      %4503 = vst.msk [vmem:[#allocation3 + $0xa0] sm:$0xff] %vm2216, %v4428
      %4504 = vst.msk [vmem:[#allocation3 + $0xa8] sm:$0xff] %vm2216, %v4430
      %4505 = vst.msk [vmem:[#allocation3 + $0xb0] sm:$0xff] %vm2216, %v4432
      %4506 = vst.msk [vmem:[#allocation3 + $0xb8] sm:$0xff] %vm2216, %v4434
      %4507 = vst.msk [vmem:[#allocation3 + $0xc0] sm:$0xff] %vm2216, %v4436
      %4508 = vst.msk [vmem:[#allocation3 + $0xc8] sm:$0xff] %vm2216, %v4438
      %4509 = vst.msk [vmem:[#allocation3 + $0xd0] sm:$0xff] %vm2216, %v4440
      %4510 = vst.msk [vmem:[#allocation3 + $0xd8] sm:$0xff] %vm2216, %v4442
      %4511 = vst.msk [vmem:[#allocation3 + $0xe0] sm:$0xff] %vm2216, %v4444
      %4512 = vst.msk [vmem:[#allocation3 + $0xe8] sm:$0xff] %vm2216, %v4446
      %4513 = vst.msk [vmem:[#allocation3 + $0xf0] sm:$0xff] %vm2216, %v4448
      %4514 = vst.msk [vmem:[#allocation3 + $0xf8] sm:$0xff] %vm2216, %v4450
      %v4515 = vld [vmem:[%s2055 + $0x1] sm:$0xff]
      %v4516 = vld [vmem:[%s2055 + $0x9] sm:$0xff]
      %v4517 = vld [vmem:[%s2055 + $0x19] sm:$0xff]
      %v4518 = vld [vmem:[%s2055 + $0x21] sm:$0xff]
      %v4519 = vld [vmem:[%s2055 + $0x31] sm:$0xff]
      %v4520 = vld [vmem:[%s2055 + $0x39] sm:$0xff]
      %v4521 = vld [vmem:[%s2055 + $0x49] sm:$0xff]
      %v4522 = vld [vmem:[%s2055 + $0x51] sm:$0xff]
      %v4523 = vld [vmem:[%s2055 + $0x61] sm:$0xff]
      %v4524 = vld [vmem:[%s2055 + $0x69] sm:$0xff]
      %v4525 = vld [vmem:[%s2055 + $0x79] sm:$0xff]
      %v4526 = vld [vmem:[%s2055 + $0x81] sm:$0xff]
      %v4527 = vld [vmem:[%s2055 + $0x91] sm:$0xff]
      %v4528 = vld [vmem:[%s2055 + $0x99] sm:$0xff]
      %v4529 = vld [vmem:[%s2055 + $0xa9] sm:$0xff]
      %v4530 = vld [vmem:[%s2055 + $0xb1] sm:$0xff]
      %v4531 = vld [vmem:[%s2055 + $0xc1] sm:$0xff]
      %v4532 = vld [vmem:[%s2055 + $0xc9] sm:$0xff]
      %v4533 = vld [vmem:[%s2055 + $0xd9] sm:$0xff]
      %v4534 = vld [vmem:[%s2055 + $0xe1] sm:$0xff]
      %v4535 = vld [vmem:[%s2055 + $0xf1] sm:$0xff]
      %v4536 = vld [vmem:[%s2055 + $0xf9] sm:$0xff]
      %v4537 = vld [vmem:[%s2055 + $0x109] sm:$0xff]
      %v4538 = vld [vmem:[%s2055 + $0x111] sm:$0xff]
      %v4539 = vld [vmem:[%s2055 + $0x121] sm:$0xff]
      %v4540 = vld [vmem:[%s2055 + $0x129] sm:$0xff]
      %v4541 = vld [vmem:[%s2055 + $0x139] sm:$0xff]
      %v4542 = vld [vmem:[%s2055 + $0x141] sm:$0xff]
      %v4543 = vld [vmem:[%s2055 + $0x151] sm:$0xff]
      %v4544 = vld [vmem:[%s2055 + $0x159] sm:$0xff]
      %v4545 = vld [vmem:[%s2055 + $0x169] sm:$0xff]
      %v4546 = vld [vmem:[%s2055 + $0x171] sm:$0xff]
      %4579 = vrot.lane.b32.xlu0 %v4515, 28
      %v4580 = vpop.permute.xlu0 %4579
      %4581 = vrot.lane.b32.xlu0 %v4516, 28
      %v4582 = vpop.permute.xlu0 %4581
      %4583 = vrot.lane.b32.xlu0 %v4517, 28
      %v4584 = vpop.permute.xlu0 %4583
      %4585 = vrot.lane.b32.xlu0 %v4518, 28
      %v4586 = vpop.permute.xlu0 %4585
      %4587 = vrot.lane.b32.xlu0 %v4519, 28
      %v4588 = vpop.permute.xlu0 %4587
      %4589 = vrot.lane.b32.xlu0 %v4520, 28
      %v4590 = vpop.permute.xlu0 %4589
      %4591 = vrot.lane.b32.xlu0 %v4521, 28
      %v4592 = vpop.permute.xlu0 %4591
      %4593 = vrot.lane.b32.xlu0 %v4522, 28
      %v4594 = vpop.permute.xlu0 %4593
      %4595 = vrot.lane.b32.xlu0 %v4523, 28
      %v4596 = vpop.permute.xlu0 %4595
      %4597 = vrot.lane.b32.xlu0 %v4524, 28
      %v4598 = vpop.permute.xlu0 %4597
      %4599 = vrot.lane.b32.xlu0 %v4525, 28
      %v4600 = vpop.permute.xlu0 %4599
      %4601 = vrot.lane.b32.xlu0 %v4526, 28
      %v4602 = vpop.permute.xlu0 %4601
      %4603 = vrot.lane.b32.xlu0 %v4527, 28
      %v4604 = vpop.permute.xlu0 %4603
      %4605 = vrot.lane.b32.xlu0 %v4528, 28
      %v4606 = vpop.permute.xlu0 %4605
      %4607 = vrot.lane.b32.xlu0 %v4529, 28
      %v4608 = vpop.permute.xlu0 %4607
      %4609 = vrot.lane.b32.xlu0 %v4530, 28
      %v4610 = vpop.permute.xlu0 %4609
      %4611 = vrot.lane.b32.xlu0 %v4531, 28
      %v4612 = vpop.permute.xlu0 %4611
      %4613 = vrot.lane.b32.xlu0 %v4532, 28
      %v4614 = vpop.permute.xlu0 %4613
      %4615 = vrot.lane.b32.xlu0 %v4533, 28
      %v4616 = vpop.permute.xlu0 %4615
      %4617 = vrot.lane.b32.xlu0 %v4534, 28
      %v4618 = vpop.permute.xlu0 %4617
      %4619 = vrot.lane.b32.xlu0 %v4535, 28
      %v4620 = vpop.permute.xlu0 %4619
      %4621 = vrot.lane.b32.xlu0 %v4536, 28
      %v4622 = vpop.permute.xlu0 %4621
      %4623 = vrot.lane.b32.xlu0 %v4537, 28
      %v4624 = vpop.permute.xlu0 %4623
      %4625 = vrot.lane.b32.xlu0 %v4538, 28
      %v4626 = vpop.permute.xlu0 %4625
      %4627 = vrot.lane.b32.xlu0 %v4539, 28
      %v4628 = vpop.permute.xlu0 %4627
      %4629 = vrot.lane.b32.xlu0 %v4540, 28
      %v4630 = vpop.permute.xlu0 %4629
      %4631 = vrot.lane.b32.xlu0 %v4541, 28
      %v4632 = vpop.permute.xlu0 %4631
      %4633 = vrot.lane.b32.xlu0 %v4542, 28
      %v4634 = vpop.permute.xlu0 %4633
      %4635 = vrot.lane.b32.xlu0 %v4543, 28
      %v4636 = vpop.permute.xlu0 %4635
      %4637 = vrot.lane.b32.xlu0 %v4544, 28
      %v4638 = vpop.permute.xlu0 %4637
      %4639 = vrot.lane.b32.xlu0 %v4545, 28
      %v4640 = vpop.permute.xlu0 %4639
      %4641 = vrot.lane.b32.xlu0 %v4546, 28
      %v4642 = vpop.permute.xlu0 %4641
      %4675 = vst.msk [vmem:[#allocation3] sm:$0xff] %vm2409, %v4580
      %4676 = vst.msk [vmem:[#allocation3 + $0x8] sm:$0xff] %vm2409, %v4582
      %4677 = vst.msk [vmem:[#allocation3 + $0x10] sm:$0xff] %vm2409, %v4584
      %4678 = vst.msk [vmem:[#allocation3 + $0x18] sm:$0xff] %vm2409, %v4586
      %4679 = vst.msk [vmem:[#allocation3 + $0x20] sm:$0xff] %vm2409, %v4588
      %4680 = vst.msk [vmem:[#allocation3 + $0x28] sm:$0xff] %vm2409, %v4590
      %4681 = vst.msk [vmem:[#allocation3 + $0x30] sm:$0xff] %vm2409, %v4592
      %4682 = vst.msk [vmem:[#allocation3 + $0x38] sm:$0xff] %vm2409, %v4594
      %4683 = vst.msk [vmem:[#allocation3 + $0x40] sm:$0xff] %vm2409, %v4596
      %4684 = vst.msk [vmem:[#allocation3 + $0x48] sm:$0xff] %vm2409, %v4598
      %4685 = vst.msk [vmem:[#allocation3 + $0x50] sm:$0xff] %vm2409, %v4600
      %4686 = vst.msk [vmem:[#allocation3 + $0x58] sm:$0xff] %vm2409, %v4602
      %4687 = vst.msk [vmem:[#allocation3 + $0x60] sm:$0xff] %vm2409, %v4604
      %4688 = vst.msk [vmem:[#allocation3 + $0x68] sm:$0xff] %vm2409, %v4606
      %4689 = vst.msk [vmem:[#allocation3 + $0x70] sm:$0xff] %vm2409, %v4608
      %4690 = vst.msk [vmem:[#allocation3 + $0x78] sm:$0xff] %vm2409, %v4610
      %4691 = vst.msk [vmem:[#allocation3 + $0x80] sm:$0xff] %vm2409, %v4612
      %4692 = vst.msk [vmem:[#allocation3 + $0x88] sm:$0xff] %vm2409, %v4614
      %4693 = vst.msk [vmem:[#allocation3 + $0x90] sm:$0xff] %vm2409, %v4616
      %4694 = vst.msk [vmem:[#allocation3 + $0x98] sm:$0xff] %vm2409, %v4618
      %4695 = vst.msk [vmem:[#allocation3 + $0xa0] sm:$0xff] %vm2409, %v4620
      %4696 = vst.msk [vmem:[#allocation3 + $0xa8] sm:$0xff] %vm2409, %v4622
      %4697 = vst.msk [vmem:[#allocation3 + $0xb0] sm:$0xff] %vm2409, %v4624
      %4698 = vst.msk [vmem:[#allocation3 + $0xb8] sm:$0xff] %vm2409, %v4626
      %4699 = vst.msk [vmem:[#allocation3 + $0xc0] sm:$0xff] %vm2409, %v4628
      %4700 = vst.msk [vmem:[#allocation3 + $0xc8] sm:$0xff] %vm2409, %v4630
      %4701 = vst.msk [vmem:[#allocation3 + $0xd0] sm:$0xff] %vm2409, %v4632
      %4702 = vst.msk [vmem:[#allocation3 + $0xd8] sm:$0xff] %vm2409, %v4634
      %4703 = vst.msk [vmem:[#allocation3 + $0xe0] sm:$0xff] %vm2409, %v4636
      %4704 = vst.msk [vmem:[#allocation3 + $0xe8] sm:$0xff] %vm2409, %v4638
      %4705 = vst.msk [vmem:[#allocation3 + $0xf0] sm:$0xff] %vm2409, %v4640
      %4706 = vst.msk [vmem:[#allocation3 + $0xf8] sm:$0xff] %vm2409, %v4642
      %v4707 = vld [vmem:[%s2055 + $0x2] sm:$0xff]
      %v4708 = vld [vmem:[%s2055 + $0xa] sm:$0xff]
      %v4709 = vld [vmem:[%s2055 + $0x1a] sm:$0xff]
      %v4710 = vld [vmem:[%s2055 + $0x22] sm:$0xff]
      %v4711 = vld [vmem:[%s2055 + $0x32] sm:$0xff]
      %v4712 = vld [vmem:[%s2055 + $0x3a] sm:$0xff]
      %v4713 = vld [vmem:[%s2055 + $0x4a] sm:$0xff]
      %v4714 = vld [vmem:[%s2055 + $0x52] sm:$0xff]
      %v4715 = vld [vmem:[%s2055 + $0x62] sm:$0xff]
      %v4716 = vld [vmem:[%s2055 + $0x6a] sm:$0xff]
      %v4717 = vld [vmem:[%s2055 + $0x7a] sm:$0xff]
      %v4718 = vld [vmem:[%s2055 + $0x82] sm:$0xff]
      %v4719 = vld [vmem:[%s2055 + $0x92] sm:$0xff]
      %v4720 = vld [vmem:[%s2055 + $0x9a] sm:$0xff]
      %v4721 = vld [vmem:[%s2055 + $0xaa] sm:$0xff]
      %v4722 = vld [vmem:[%s2055 + $0xb2] sm:$0xff]
      %v4723 = vld [vmem:[%s2055 + $0xc2] sm:$0xff]
      %v4724 = vld [vmem:[%s2055 + $0xca] sm:$0xff]
      %v4725 = vld [vmem:[%s2055 + $0xda] sm:$0xff]
      %v4726 = vld [vmem:[%s2055 + $0xe2] sm:$0xff]
      %v4727 = vld [vmem:[%s2055 + $0xf2] sm:$0xff]
      %v4728 = vld [vmem:[%s2055 + $0xfa] sm:$0xff]
      %v4729 = vld [vmem:[%s2055 + $0x10a] sm:$0xff]
      %v4730 = vld [vmem:[%s2055 + $0x112] sm:$0xff]
      %v4731 = vld [vmem:[%s2055 + $0x122] sm:$0xff]
      %v4732 = vld [vmem:[%s2055 + $0x12a] sm:$0xff]
      %v4733 = vld [vmem:[%s2055 + $0x13a] sm:$0xff]
      %v4734 = vld [vmem:[%s2055 + $0x142] sm:$0xff]
      %v4735 = vld [vmem:[%s2055 + $0x152] sm:$0xff]
      %v4736 = vld [vmem:[%s2055 + $0x15a] sm:$0xff]
      %v4737 = vld [vmem:[%s2055 + $0x16a] sm:$0xff]
      %v4738 = vld [vmem:[%s2055 + $0x172] sm:$0xff]
      %4771 = vrot.lane.b32.xlu0 %v4707, 32
      %v4772 = vpop.permute.xlu0 %4771
      %4773 = vrot.lane.b32.xlu0 %v4708, 32
      %v4774 = vpop.permute.xlu0 %4773
      %4775 = vrot.lane.b32.xlu0 %v4709, 32
      %v4776 = vpop.permute.xlu0 %4775
      %4777 = vrot.lane.b32.xlu0 %v4710, 32
      %v4778 = vpop.permute.xlu0 %4777
      %4779 = vrot.lane.b32.xlu0 %v4711, 32
      %v4780 = vpop.permute.xlu0 %4779
      %4781 = vrot.lane.b32.xlu0 %v4712, 32
      %v4782 = vpop.permute.xlu0 %4781
      %4783 = vrot.lane.b32.xlu0 %v4713, 32
      %v4784 = vpop.permute.xlu0 %4783
      %4785 = vrot.lane.b32.xlu0 %v4714, 32
      %v4786 = vpop.permute.xlu0 %4785
      %4787 = vrot.lane.b32.xlu0 %v4715, 32
      %v4788 = vpop.permute.xlu0 %4787
      %4789 = vrot.lane.b32.xlu0 %v4716, 32
      %v4790 = vpop.permute.xlu0 %4789
      %4791 = vrot.lane.b32.xlu0 %v4717, 32
      %v4792 = vpop.permute.xlu0 %4791
      %4793 = vrot.lane.b32.xlu0 %v4718, 32
      %v4794 = vpop.permute.xlu0 %4793
      %4795 = vrot.lane.b32.xlu0 %v4719, 32
      %v4796 = vpop.permute.xlu0 %4795
      %4797 = vrot.lane.b32.xlu0 %v4720, 32
      %v4798 = vpop.permute.xlu0 %4797
      %4799 = vrot.lane.b32.xlu0 %v4721, 32
      %v4800 = vpop.permute.xlu0 %4799
      %4801 = vrot.lane.b32.xlu0 %v4722, 32
      %v4802 = vpop.permute.xlu0 %4801
      %4803 = vrot.lane.b32.xlu0 %v4723, 32
      %v4804 = vpop.permute.xlu0 %4803
      %4805 = vrot.lane.b32.xlu0 %v4724, 32
      %v4806 = vpop.permute.xlu0 %4805
      %4807 = vrot.lane.b32.xlu0 %v4725, 32
      %v4808 = vpop.permute.xlu0 %4807
      %4809 = vrot.lane.b32.xlu0 %v4726, 32
      %v4810 = vpop.permute.xlu0 %4809
      %4811 = vrot.lane.b32.xlu0 %v4727, 32
      %v4812 = vpop.permute.xlu0 %4811
      %4813 = vrot.lane.b32.xlu0 %v4728, 32
      %v4814 = vpop.permute.xlu0 %4813
      %4815 = vrot.lane.b32.xlu0 %v4729, 32
      %v4816 = vpop.permute.xlu0 %4815
      %4817 = vrot.lane.b32.xlu0 %v4730, 32
      %v4818 = vpop.permute.xlu0 %4817
      %4819 = vrot.lane.b32.xlu0 %v4731, 32
      %v4820 = vpop.permute.xlu0 %4819
      %4821 = vrot.lane.b32.xlu0 %v4732, 32
      %v4822 = vpop.permute.xlu0 %4821
      %4823 = vrot.lane.b32.xlu0 %v4733, 32
      %v4824 = vpop.permute.xlu0 %4823
      %4825 = vrot.lane.b32.xlu0 %v4734, 32
      %v4826 = vpop.permute.xlu0 %4825
      %4827 = vrot.lane.b32.xlu0 %v4735, 32
      %v4828 = vpop.permute.xlu0 %4827
      %4829 = vrot.lane.b32.xlu0 %v4736, 32
      %v4830 = vpop.permute.xlu0 %4829
      %4831 = vrot.lane.b32.xlu0 %v4737, 32
      %v4832 = vpop.permute.xlu0 %4831
      %4833 = vrot.lane.b32.xlu0 %v4738, 32
      %v4834 = vpop.permute.xlu0 %4833
      %4867 = vst.msk [vmem:[#allocation3] sm:$0xff] %vm2602, %v4772
      %4868 = vst.msk [vmem:[#allocation3 + $0x8] sm:$0xff] %vm2602, %v4774
      %4869 = vst.msk [vmem:[#allocation3 + $0x10] sm:$0xff] %vm2602, %v4776
      %4870 = vst.msk [vmem:[#allocation3 + $0x18] sm:$0xff] %vm2602, %v4778
      %4871 = vst.msk [vmem:[#allocation3 + $0x20] sm:$0xff] %vm2602, %v4780
      %4872 = vst.msk [vmem:[#allocation3 + $0x28] sm:$0xff] %vm2602, %v4782
      %4873 = vst.msk [vmem:[#allocation3 + $0x30] sm:$0xff] %vm2602, %v4784
      %4874 = vst.msk [vmem:[#allocation3 + $0x38] sm:$0xff] %vm2602, %v4786
      %4875 = vst.msk [vmem:[#allocation3 + $0x40] sm:$0xff] %vm2602, %v4788
      %4876 = vst.msk [vmem:[#allocation3 + $0x48] sm:$0xff] %vm2602, %v4790
      %4877 = vst.msk [vmem:[#allocation3 + $0x50] sm:$0xff] %vm2602, %v4792
      %4878 = vst.msk [vmem:[#allocation3 + $0x58] sm:$0xff] %vm2602, %v4794
      %4879 = vst.msk [vmem:[#allocation3 + $0x60] sm:$0xff] %vm2602, %v4796
      %4880 = vst.msk [vmem:[#allocation3 + $0x68] sm:$0xff] %vm2602, %v4798
      %4881 = vst.msk [vmem:[#allocation3 + $0x70] sm:$0xff] %vm2602, %v4800
      %4882 = vst.msk [vmem:[#allocation3 + $0x78] sm:$0xff] %vm2602, %v4802
      %4883 = vst.msk [vmem:[#allocation3 + $0x80] sm:$0xff] %vm2602, %v4804
      %4884 = vst.msk [vmem:[#allocation3 + $0x88] sm:$0xff] %vm2602, %v4806
      %4885 = vst.msk [vmem:[#allocation3 + $0x90] sm:$0xff] %vm2602, %v4808
      %4886 = vst.msk [vmem:[#allocation3 + $0x98] sm:$0xff] %vm2602, %v4810
      %4887 = vst.msk [vmem:[#allocation3 + $0xa0] sm:$0xff] %vm2602, %v4812
      %4888 = vst.msk [vmem:[#allocation3 + $0xa8] sm:$0xff] %vm2602, %v4814
      %4889 = vst.msk [vmem:[#allocation3 + $0xb0] sm:$0xff] %vm2602, %v4816
      %4890 = vst.msk [vmem:[#allocation3 + $0xb8] sm:$0xff] %vm2602, %v4818
      %4891 = vst.msk [vmem:[#allocation3 + $0xc0] sm:$0xff] %vm2602, %v4820
      %4892 = vst.msk [vmem:[#allocation3 + $0xc8] sm:$0xff] %vm2602, %v4822
      %4893 = vst.msk [vmem:[#allocation3 + $0xd0] sm:$0xff] %vm2602, %v4824
      %4894 = vst.msk [vmem:[#allocation3 + $0xd8] sm:$0xff] %vm2602, %v4826
      %4895 = vst.msk [vmem:[#allocation3 + $0xe0] sm:$0xff] %vm2602, %v4828
      %4896 = vst.msk [vmem:[#allocation3 + $0xe8] sm:$0xff] %vm2602, %v4830
      %4897 = vst.msk [vmem:[#allocation3 + $0xf0] sm:$0xff] %vm2602, %v4832
      %4898 = vst.msk [vmem:[#allocation3 + $0xf8] sm:$0xff] %vm2602, %v4834
      %v4899 = vld [vmem:[#allocation3] sm:$0xff]
      %v4900 = vld [vmem:[#allocation3 + $0x8] sm:$0xff]
      %v4901 = vld [vmem:[#allocation3 + $0x10] sm:$0xff]
      %v4902 = vld [vmem:[#allocation3 + $0x18] sm:$0xff]
      %v4903 = vld [vmem:[#allocation3 + $0x20] sm:$0xff]
      %v4904 = vld [vmem:[#allocation3 + $0x28] sm:$0xff]
      %v4905 = vld [vmem:[#allocation3 + $0x30] sm:$0xff]
      %v4906 = vld [vmem:[#allocation3 + $0x38] sm:$0xff]
      %v4907 = vld [vmem:[#allocation3 + $0x40] sm:$0xff]
      %v4908 = vld [vmem:[#allocation3 + $0x48] sm:$0xff]
      %v4909 = vld [vmem:[#allocation3 + $0x50] sm:$0xff]
      %v4910 = vld [vmem:[#allocation3 + $0x58] sm:$0xff]
      %v4911 = vld [vmem:[#allocation3 + $0x60] sm:$0xff]
      %v4912 = vld [vmem:[#allocation3 + $0x68] sm:$0xff]
      %v4913 = vld [vmem:[#allocation3 + $0x70] sm:$0xff]
      %v4914 = vld [vmem:[#allocation3 + $0x78] sm:$0xff]
      %v4915 = vld [vmem:[#allocation3 + $0x80] sm:$0xff]
      %v4916 = vld [vmem:[#allocation3 + $0x88] sm:$0xff]
      %v4917 = vld [vmem:[#allocation3 + $0x90] sm:$0xff]
      %v4918 = vld [vmem:[#allocation3 + $0x98] sm:$0xff]
      %v4919 = vld [vmem:[#allocation3 + $0xa0] sm:$0xff]
      %v4920 = vld [vmem:[#allocation3 + $0xa8] sm:$0xff]
      %v4921 = vld [vmem:[#allocation3 + $0xb0] sm:$0xff]
      %v4922 = vld [vmem:[#allocation3 + $0xb8] sm:$0xff]
      %v4923 = vld [vmem:[#allocation3 + $0xc0] sm:$0xff]
      %v4924 = vld [vmem:[#allocation3 + $0xc8] sm:$0xff]
      %v4925 = vld [vmem:[#allocation3 + $0xd0] sm:$0xff]
      %v4926 = vld [vmem:[#allocation3 + $0xd8] sm:$0xff]
      %v4927 = vld [vmem:[#allocation3 + $0xe0] sm:$0xff]
      %v4928 = vld [vmem:[#allocation3 + $0xe8] sm:$0xff]
      %v4929 = vld [vmem:[#allocation3 + $0xf0] sm:$0xff]
      %v4930 = vld [vmem:[#allocation3 + $0xf8] sm:$0xff]
      %s4931 = scalar_lea.vmem %s3, 40
      %v4932 = vld [vmem:[%s4931] sm:$0xff]
      %v4933 = vld [vmem:[%s4931 + $0x8] sm:$0xff]
      %v4934 = vld [vmem:[%s4931 + $0x10] sm:$0xff]
      %v4935 = vld [vmem:[%s4931 + $0x18] sm:$0xff]
      %v4936 = vld [vmem:[%s4931 + $0x20] sm:$0xf]
      %v4938 = vsel %vm2672, %v4899, 0
      %v4941 = vsel %vm2672, %v4900, 0
      %v4944 = vsel %vm2672, %v4901, 0
      %v4947 = vsel %vm2672, %v4902, 0
      %v4950 = vsel %vm2672, %v4903, 0
      %v4953 = vsel %vm2672, %v4904, 0
      %v4956 = vsel %vm2672, %v4905, 0
      %v4959 = vsel %vm2672, %v4906, 0
      %v4962 = vsel %vm2672, %v4907, 0
      %v4965 = vsel %vm2672, %v4908, 0
      %v4968 = vsel %vm2672, %v4909, 0
      %v4971 = vsel %vm2672, %v4910, 0
      %v4974 = vsel %vm2672, %v4911, 0
      %v4977 = vsel %vm2672, %v4912, 0
      %v4980 = vsel %vm2672, %v4913, 0
      %v4983 = vsel %vm2672, %v4914, 0
      %v4986 = vsel %vm2672, %v4915, 0
      %v4989 = vsel %vm2672, %v4916, 0
      %v4992 = vsel %vm2672, %v4917, 0
      %v4995 = vsel %vm2672, %v4918, 0
      %v4998 = vsel %vm2672, %v4919, 0
      %v5001 = vsel %vm2672, %v4920, 0
      %v5004 = vsel %vm2672, %v4921, 0
      %v5007 = vsel %vm2672, %v4922, 0
      %v5010 = vsel %vm2672, %v4923, 0
      %v5013 = vsel %vm2672, %v4924, 0
      %v5016 = vsel %vm2672, %v4925, 0
      %v5019 = vsel %vm2672, %v4926, 0
      %v5022 = vsel %vm2672, %v4927, 0
      %v5025 = vsel %vm2672, %v4928, 0
      %v5028 = vsel %vm2672, %v4929, 0
      %v5031 = vsel %vm2672, %v4930, 0
      %v5034 = vsel %vm490, %v4936, 0
      %5036 = vmatprep.subr.mxu0 0.0
      %5037 = vmatpush1.msra.mxu0 %v4932
      %5038 = vmatprep.subr.mxu0 0.0
      %5039 = vmatpush1.msra.mxu0 %v4933
      %5040 = vmatprep.subr.mxu0 0.0
      %5041 = vmatpush1.msra.mxu0 %v4934
      %5042 = vmatprep.subr.mxu0 0.0
      %5043 = vmatpush1.msra.mxu0 %v4935
      %5044 = vmatprep.subr.mxu0 0.0
      %5045 = vmatpush1.msra.mxu0 %v5034
      %5046 = vmatprep.subr.mxu0 0.0
      %5047 = vmatpush1.msra.mxu0 0.0
      %5048 = vmatprep.subr.mxu0 0.0
      %5049 = vmatpush1.msra.mxu0 0.0
      %5050 = vmatprep.subr.mxu0 0.0
      %5051 = vmatpush1.msra.mxu0 0.0
      %5052 = vmatprep.subr.mxu0 0.0
      %5053 = vmatpush1.msra.mxu0 0.0
      %5054 = vmatprep.subr.mxu0 0.0
      %5055 = vmatpush1.msra.mxu0 0.0
      %5056 = vmatprep.subr.mxu0 0.0
      %5057 = vmatpush1.msra.mxu0 0.0
      %5058 = vmatprep.subr.mxu0 0.0
      %5059 = vmatpush1.msra.mxu0 0.0
      %5060 = vmatprep.subr.mxu0 0.0
      %5061 = vmatpush1.msra.mxu0 0.0
      %5062 = vmatprep.subr.mxu0 0.0
      %5063 = vmatpush1.msra.mxu0 0.0
      %5064 = vmatprep.subr.mxu0 0.0
      %5065 = vmatpush1.msra.mxu0 0.0
      %5066 = vmatprep.subr.mxu0 0.0
      %5067 = vmatpush1.msra.mxu0 0.0
      %5068 = vmatprep.subr.mxu0 0.0
      %5069 = vmatpush1.msra.mxu0 0.0
      %5070 = vmatprep.subr.mxu0 0.0
      %5071 = vmatpush1.msra.mxu0 0.0
      %5072 = vmatprep.subr.mxu0 0.0
      %5073 = vmatpush1.msra.mxu0 0.0
      %5074 = vmatprep.subr.mxu0 0.0
      %5075 = vmatpush1.msra.mxu0 0.0
      %5076 = vmatprep.subr.mxu0 0.0
      %5077 = vmatpush1.msra.mxu0 0.0
      %5078 = vmatprep.subr.mxu0 0.0
      %5079 = vmatpush1.msra.mxu0 0.0
      %5080 = vmatprep.subr.mxu0 0.0
      %5081 = vmatpush1.msra.mxu0 0.0
      %5082 = vmatprep.subr.mxu0 0.0
      %5083 = vmatpush1.msra.mxu0 0.0
      %5084 = vmatprep.subr.mxu0 0.0
      %5085 = vmatpush1.msra.mxu0 0.0
      %5086 = vmatprep.subr.mxu0 0.0
      %5087 = vmatpush1.msra.mxu0 0.0
      %5088 = vmatprep.subr.mxu0 0.0
      %5089 = vmatpush1.msra.mxu0 0.0
      %5090 = vmatprep.subr.mxu0 0.0
      %5091 = vmatpush1.msra.mxu0 0.0
      %5092 = vmatprep.subr.mxu0 0.0
      %5093 = vmatpush1.msra.mxu0 0.0
      %5094 = vmatprep.subr.mxu0 0.0
      %5095 = vmatpush1.msra.mxu0 0.0
      %5096 = vmatprep.subr.mxu0 0.0
      %5097 = vmatpush1.msra.mxu0 0.0
      %5098 = vmatprep.subr.mxu0 0.0
      %5099 = vmatpush1.msra.mxu0 0.0
      %5100 = vmatprep.mubr.f32.mxu0 0.0
      %5101 = vmatmul.mubr.f32.gmra.mrb[0].mxu0 %v4938
      %v5102 = vpop.f32.mrb[0].mxu0
      %v5103 = vadd.f32 0.0, %v5102
      %v5104 = vpop.f32.mrb[0].mxu0
      %5105 = vmatprep.mubr.f32.mxu0 0.0
      %5106 = vmatmul.mubr.f32.gmra.mrb[0].mxu0 %v4941
      %v5107 = vpop.f32.mrb[0].mxu0
      %v5108 = vadd.f32 0.0, %v5107
      %v5109 = vpop.f32.mrb[0].mxu0
      %5110 = vmatprep.mubr.f32.mxu0 0.0
      %5111 = vmatmul.mubr.f32.gmra.mrb[0].mxu0 %v4944
      %v5112 = vpop.f32.mrb[0].mxu0
      %v5113 = vadd.f32 0.0, %v5112
      %v5114 = vpop.f32.mrb[0].mxu0
      %5115 = vmatprep.mubr.f32.mxu0 0.0
      %5116 = vmatmul.mubr.f32.gmra.mrb[0].mxu0 %v4947
      %v5117 = vpop.f32.mrb[0].mxu0
      %v5118 = vadd.f32 0.0, %v5117
      %v5119 = vpop.f32.mrb[0].mxu0
      %5120 = vmatprep.mubr.f32.mxu0 0.0
      %5121 = vmatmul.mubr.f32.gmra.mrb[0].mxu0 %v4950
      %v5122 = vpop.f32.mrb[0].mxu0
      %v5123 = vadd.f32 0.0, %v5122
      %v5124 = vpop.f32.mrb[0].mxu0
      %5125 = vmatprep.mubr.f32.mxu0 0.0
      %5126 = vmatmul.mubr.f32.gmra.mrb[0].mxu0 %v4953
      %v5127 = vpop.f32.mrb[0].mxu0
      %v5128 = vadd.f32 0.0, %v5127
      %v5129 = vpop.f32.mrb[0].mxu0
      %5130 = vmatprep.mubr.f32.mxu0 0.0
      %5131 = vmatmul.mubr.f32.gmra.mrb[0].mxu0 %v4956
      %v5132 = vpop.f32.mrb[0].mxu0
      %v5133 = vadd.f32 0.0, %v5132
      %v5134 = vpop.f32.mrb[0].mxu0
      %5135 = vmatprep.mubr.f32.mxu0 0.0
      %5136 = vmatmul.mubr.f32.gmra.mrb[0].mxu0 %v4959
      %v5137 = vpop.f32.mrb[0].mxu0
      %v5138 = vadd.f32 0.0, %v5137
      %v5139 = vpop.f32.mrb[0].mxu0
      %5140 = vmatprep.mubr.f32.mxu0 0.0
      %5141 = vmatmul.mubr.f32.gmra.mrb[0].mxu0 %v4962
      %v5142 = vpop.f32.mrb[0].mxu0
      %v5143 = vadd.f32 0.0, %v5142
      %v5144 = vpop.f32.mrb[0].mxu0
      %5145 = vmatprep.mubr.f32.mxu0 0.0
      %5146 = vmatmul.mubr.f32.gmra.mrb[0].mxu0 %v4965
      %v5147 = vpop.f32.mrb[0].mxu0
      %v5148 = vadd.f32 0.0, %v5147
      %v5149 = vpop.f32.mrb[0].mxu0
      %5150 = vmatprep.mubr.f32.mxu0 0.0
      %5151 = vmatmul.mubr.f32.gmra.mrb[0].mxu0 %v4968
      %v5152 = vpop.f32.mrb[0].mxu0
      %v5153 = vadd.f32 0.0, %v5152
      %v5154 = vpop.f32.mrb[0].mxu0
      %5155 = vmatprep.mubr.f32.mxu0 0.0
      %5156 = vmatmul.mubr.f32.gmra.mrb[0].mxu0 %v4971
      %v5157 = vpop.f32.mrb[0].mxu0
      %v5158 = vadd.f32 0.0, %v5157
      %v5159 = vpop.f32.mrb[0].mxu0
      %5160 = vmatprep.mubr.f32.mxu0 0.0
      %5161 = vmatmul.mubr.f32.gmra.mrb[0].mxu0 %v4974
      %v5162 = vpop.f32.mrb[0].mxu0
      %v5163 = vadd.f32 0.0, %v5162
      %v5164 = vpop.f32.mrb[0].mxu0
      %5165 = vmatprep.mubr.f32.mxu0 0.0
      %5166 = vmatmul.mubr.f32.gmra.mrb[0].mxu0 %v4977
      %v5167 = vpop.f32.mrb[0].mxu0
      %v5168 = vadd.f32 0.0, %v5167
      %v5169 = vpop.f32.mrb[0].mxu0
      %5170 = vmatprep.mubr.f32.mxu0 0.0
      %5171 = vmatmul.mubr.f32.gmra.mrb[0].mxu0 %v4980
      %v5172 = vpop.f32.mrb[0].mxu0
      %v5173 = vadd.f32 0.0, %v5172
      %v5174 = vpop.f32.mrb[0].mxu0
      %5175 = vmatprep.mubr.f32.mxu0 0.0
      %5176 = vmatmul.mubr.f32.gmra.mrb[0].mxu0 %v4983
      %v5177 = vpop.f32.mrb[0].mxu0
      %v5178 = vadd.f32 0.0, %v5177
      %v5179 = vpop.f32.mrb[0].mxu0
      %5180 = vmatprep.mubr.f32.mxu0 0.0
      %5181 = vmatmul.mubr.f32.gmra.mrb[0].mxu0 %v4986
      %v5182 = vpop.f32.mrb[0].mxu0
      %v5183 = vadd.f32 0.0, %v5182
      %v5184 = vpop.f32.mrb[0].mxu0
      %5185 = vmatprep.mubr.f32.mxu0 0.0
      %5186 = vmatmul.mubr.f32.gmra.mrb[0].mxu0 %v4989
      %v5187 = vpop.f32.mrb[0].mxu0
      %v5188 = vadd.f32 0.0, %v5187
      %v5189 = vpop.f32.mrb[0].mxu0
      %5190 = vmatprep.mubr.f32.mxu0 0.0
      %5191 = vmatmul.mubr.f32.gmra.mrb[0].mxu0 %v4992
      %v5192 = vpop.f32.mrb[0].mxu0
      %v5193 = vadd.f32 0.0, %v5192
      %v5194 = vpop.f32.mrb[0].mxu0
      %5195 = vmatprep.mubr.f32.mxu0 0.0
      %5196 = vmatmul.mubr.f32.gmra.mrb[0].mxu0 %v4995
      %v5197 = vpop.f32.mrb[0].mxu0
      %v5198 = vadd.f32 0.0, %v5197
      %v5199 = vpop.f32.mrb[0].mxu0
      %5200 = vmatprep.mubr.f32.mxu0 0.0
      %5201 = vmatmul.mubr.f32.gmra.mrb[0].mxu0 %v4998
      %v5202 = vpop.f32.mrb[0].mxu0
      %v5203 = vadd.f32 0.0, %v5202
      %v5204 = vpop.f32.mrb[0].mxu0
      %5205 = vmatprep.mubr.f32.mxu0 0.0
      %5206 = vmatmul.mubr.f32.gmra.mrb[0].mxu0 %v5001
      %v5207 = vpop.f32.mrb[0].mxu0
      %v5208 = vadd.f32 0.0, %v5207
      %v5209 = vpop.f32.mrb[0].mxu0
      %5210 = vmatprep.mubr.f32.mxu0 0.0
      %5211 = vmatmul.mubr.f32.gmra.mrb[0].mxu0 %v5004
      %v5212 = vpop.f32.mrb[0].mxu0
      %v5213 = vadd.f32 0.0, %v5212
      %v5214 = vpop.f32.mrb[0].mxu0
      %5215 = vmatprep.mubr.f32.mxu0 0.0
      %5216 = vmatmul.mubr.f32.gmra.mrb[0].mxu0 %v5007
      %v5217 = vpop.f32.mrb[0].mxu0
      %v5218 = vadd.f32 0.0, %v5217
      %v5219 = vpop.f32.mrb[0].mxu0
      %5220 = vmatprep.mubr.f32.mxu0 0.0
      %5221 = vmatmul.mubr.f32.gmra.mrb[0].mxu0 %v5010
      %v5222 = vpop.f32.mrb[0].mxu0
      %v5223 = vadd.f32 0.0, %v5222
      %v5224 = vpop.f32.mrb[0].mxu0
      %5225 = vmatprep.mubr.f32.mxu0 0.0
      %5226 = vmatmul.mubr.f32.gmra.mrb[0].mxu0 %v5013
      %v5227 = vpop.f32.mrb[0].mxu0
      %v5228 = vadd.f32 0.0, %v5227
      %v5229 = vpop.f32.mrb[0].mxu0
      %5230 = vmatprep.mubr.f32.mxu0 0.0
      %5231 = vmatmul.mubr.f32.gmra.mrb[0].mxu0 %v5016
      %v5232 = vpop.f32.mrb[0].mxu0
      %v5233 = vadd.f32 0.0, %v5232
      %v5234 = vpop.f32.mrb[0].mxu0
      %5235 = vmatprep.mubr.f32.mxu0 0.0
      %5236 = vmatmul.mubr.f32.gmra.mrb[0].mxu0 %v5019
      %v5237 = vpop.f32.mrb[0].mxu0
      %v5238 = vadd.f32 0.0, %v5237
      %v5239 = vpop.f32.mrb[0].mxu0
      %5240 = vmatprep.mubr.f32.mxu0 0.0
      %5241 = vmatmul.mubr.f32.gmra.mrb[0].mxu0 %v5022
      %v5242 = vpop.f32.mrb[0].mxu0
      %v5243 = vadd.f32 0.0, %v5242
      %v5244 = vpop.f32.mrb[0].mxu0
      %5245 = vmatprep.mubr.f32.mxu0 0.0
      %5246 = vmatmul.mubr.f32.gmra.mrb[0].mxu0 %v5025
      %v5247 = vpop.f32.mrb[0].mxu0
      %v5248 = vadd.f32 0.0, %v5247
      %v5249 = vpop.f32.mrb[0].mxu0
      %5250 = vmatprep.mubr.f32.mxu0 0.0
      %5251 = vmatmul.mubr.f32.gmra.mrb[0].mxu0 %v5028
      %v5252 = vpop.f32.mrb[0].mxu0
      %v5253 = vadd.f32 0.0, %v5252
      %v5254 = vpop.f32.mrb[0].mxu0
      %5255 = vmatprep.mubr.f32.mxu0 0.0
      %5256 = vmatmul.mubr.f32.gmra.mrb[0].mxu0 %v5031
      %v5257 = vpop.f32.mrb[0].mxu0
      %v5258 = vadd.f32 0.0, %v5257
      %v5259 = vpop.f32.mrb[0].mxu0
      %5260 = vdwg.mxu0
      %s5261 = scalar_lea.vmem %s4, 1
      %v5262 = vld [vmem:[%s5261] sm:$0x1]
      %v5264 = vlaneseq
      %v5265 = vshrl.u32 %v5264, 7
      %v5266 = vsub.s32 0, %v5265
      %v5267 = vrot.slane %v5262, %v5266
      %v5269 = vmul.f32 %v5103, %v5267
      %v5270 = vmul.f32 %v5108, %v5267
      %v5271 = vmul.f32 %v5113, %v5267
      %v5272 = vmul.f32 %v5118, %v5267
      %v5273 = vmul.f32 %v5123, %v5267
      %v5274 = vmul.f32 %v5128, %v5267
      %v5275 = vmul.f32 %v5133, %v5267
      %v5276 = vmul.f32 %v5138, %v5267
      %v5277 = vmul.f32 %v5143, %v5267
      %v5278 = vmul.f32 %v5148, %v5267
      %v5279 = vmul.f32 %v5153, %v5267
      %v5280 = vmul.f32 %v5158, %v5267
      %v5281 = vmul.f32 %v5163, %v5267
      %v5282 = vmul.f32 %v5168, %v5267
      %v5283 = vmul.f32 %v5173, %v5267
      %v5284 = vmul.f32 %v5178, %v5267
      %v5285 = vmul.f32 %v5183, %v5267
      %v5286 = vmul.f32 %v5188, %v5267
      %v5287 = vmul.f32 %v5193, %v5267
      %v5288 = vmul.f32 %v5198, %v5267
      %v5289 = vmul.f32 %v5203, %v5267
      %v5290 = vmul.f32 %v5208, %v5267
      %v5291 = vmul.f32 %v5213, %v5267
      %v5292 = vmul.f32 %v5218, %v5267
      %v5293 = vmul.f32 %v5223, %v5267
      %v5294 = vmul.f32 %v5228, %v5267
      %v5295 = vmul.f32 %v5233, %v5267
      %v5296 = vmul.f32 %v5238, %v5267
      %v5297 = vmul.f32 %v5243, %v5267
      %v5298 = vmul.f32 %v5248, %v5267
      %v5299 = vmul.f32 %v5253, %v5267
      %v5300 = vmul.f32 %v5258, %v5267
      %s5301 = scalar_lea.vmem %s5, 1
      %v5302 = vld [vmem:[%s5301] sm:$0x1]
      %v5304 = vlaneseq
      %v5305 = vshrl.u32 %v5304, 7
      %v5306 = vsub.s32 0, %v5305
      %v5307 = vrot.slane %v5302, %v5306
      %v5309 = vadd.f32 %v5269, %v5307
      %v5310 = vadd.f32 %v5270, %v5307
      %v5311 = vadd.f32 %v5271, %v5307
      %v5312 = vadd.f32 %v5272, %v5307
      %v5313 = vadd.f32 %v5273, %v5307
      %v5314 = vadd.f32 %v5274, %v5307
      %v5315 = vadd.f32 %v5275, %v5307
      %v5316 = vadd.f32 %v5276, %v5307
      %v5317 = vadd.f32 %v5277, %v5307
      %v5318 = vadd.f32 %v5278, %v5307
      %v5319 = vadd.f32 %v5279, %v5307
      %v5320 = vadd.f32 %v5280, %v5307
      %v5321 = vadd.f32 %v5281, %v5307
      %v5322 = vadd.f32 %v5282, %v5307
      %v5323 = vadd.f32 %v5283, %v5307
      %v5324 = vadd.f32 %v5284, %v5307
      %v5325 = vadd.f32 %v5285, %v5307
      %v5326 = vadd.f32 %v5286, %v5307
      %v5327 = vadd.f32 %v5287, %v5307
      %v5328 = vadd.f32 %v5288, %v5307
      %v5329 = vadd.f32 %v5289, %v5307
      %v5330 = vadd.f32 %v5290, %v5307
      %v5331 = vadd.f32 %v5291, %v5307
      %v5332 = vadd.f32 %v5292, %v5307
      %v5333 = vadd.f32 %v5293, %v5307
      %v5334 = vadd.f32 %v5294, %v5307
      %v5335 = vadd.f32 %v5295, %v5307
      %v5336 = vadd.f32 %v5296, %v5307
      %v5337 = vadd.f32 %v5297, %v5307
      %v5338 = vadd.f32 %v5298, %v5307
      %v5339 = vadd.f32 %v5299, %v5307
      %v5340 = vadd.f32 %v5300, %v5307
      %v5341 = vsub.f32 0.0, %v5309
      %v5342 = vsub.f32 0.0, %v5310
      %v5343 = vsub.f32 0.0, %v5311
      %v5344 = vsub.f32 0.0, %v5312
      %v5345 = vsub.f32 0.0, %v5313
      %v5346 = vsub.f32 0.0, %v5314
      %v5347 = vsub.f32 0.0, %v5315
      %v5348 = vsub.f32 0.0, %v5316
      %v5349 = vsub.f32 0.0, %v5317
      %v5350 = vsub.f32 0.0, %v5318
      %v5351 = vsub.f32 0.0, %v5319
      %v5352 = vsub.f32 0.0, %v5320
      %v5353 = vsub.f32 0.0, %v5321
      %v5354 = vsub.f32 0.0, %v5322
      %v5355 = vsub.f32 0.0, %v5323
      %v5356 = vsub.f32 0.0, %v5324
      %v5357 = vsub.f32 0.0, %v5325
      %v5358 = vsub.f32 0.0, %v5326
      %v5359 = vsub.f32 0.0, %v5327
      %v5360 = vsub.f32 0.0, %v5328
      %v5361 = vsub.f32 0.0, %v5329
      %v5362 = vsub.f32 0.0, %v5330
      %v5363 = vsub.f32 0.0, %v5331
      %v5364 = vsub.f32 0.0, %v5332
      %v5365 = vsub.f32 0.0, %v5333
      %v5366 = vsub.f32 0.0, %v5334
      %v5367 = vsub.f32 0.0, %v5335
      %v5368 = vsub.f32 0.0, %v5336
      %v5369 = vsub.f32 0.0, %v5337
      %v5370 = vsub.f32 0.0, %v5338
      %v5371 = vsub.f32 0.0, %v5339
      %v5372 = vsub.f32 0.0, %v5340
      %v5373 = vmul.f32 %v5341, 1.442695
      %v5374 = vpow.pop %v5373
      %v5375 = vmul.f32 %v5342, 1.442695
      %v5376 = vpow.pop %v5375
      %v5377 = vmul.f32 %v5343, 1.442695
      %v5378 = vpow.pop %v5377
      %v5379 = vmul.f32 %v5344, 1.442695
      %v5380 = vpow.pop %v5379
      %v5381 = vmul.f32 %v5345, 1.442695
      %v5382 = vpow.pop %v5381
      %v5383 = vmul.f32 %v5346, 1.442695
      %v5384 = vpow.pop %v5383
      %v5385 = vmul.f32 %v5347, 1.442695
      %v5386 = vpow.pop %v5385
      %v5387 = vmul.f32 %v5348, 1.442695
      %v5388 = vpow.pop %v5387
      %v5389 = vmul.f32 %v5349, 1.442695
      %v5390 = vpow.pop %v5389
      %v5391 = vmul.f32 %v5350, 1.442695
      %v5392 = vpow.pop %v5391
      %v5393 = vmul.f32 %v5351, 1.442695
      %v5394 = vpow.pop %v5393
      %v5395 = vmul.f32 %v5352, 1.442695
      %v5396 = vpow.pop %v5395
      %v5397 = vmul.f32 %v5353, 1.442695
      %v5398 = vpow.pop %v5397
      %v5399 = vmul.f32 %v5354, 1.442695
      %v5400 = vpow.pop %v5399
      %v5401 = vmul.f32 %v5355, 1.442695
      %v5402 = vpow.pop %v5401
      %v5403 = vmul.f32 %v5356, 1.442695
      %v5404 = vpow.pop %v5403
      %v5405 = vmul.f32 %v5357, 1.442695
      %v5406 = vpow.pop %v5405
      %v5407 = vmul.f32 %v5358, 1.442695
      %v5408 = vpow.pop %v5407
      %v5409 = vmul.f32 %v5359, 1.442695
      %v5410 = vpow.pop %v5409
      %v5411 = vmul.f32 %v5360, 1.442695
      %v5412 = vpow.pop %v5411
      %v5413 = vmul.f32 %v5361, 1.442695
      %v5414 = vpow.pop %v5413
      %v5415 = vmul.f32 %v5362, 1.442695
      %v5416 = vpow.pop %v5415
      %v5417 = vmul.f32 %v5363, 1.442695
      %v5418 = vpow.pop %v5417
      %v5419 = vmul.f32 %v5364, 1.442695
      %v5420 = vpow.pop %v5419
      %v5421 = vmul.f32 %v5365, 1.442695
      %v5422 = vpow.pop %v5421
      %v5423 = vmul.f32 %v5366, 1.442695
      %v5424 = vpow.pop %v5423
      %v5425 = vmul.f32 %v5367, 1.442695
      %v5426 = vpow.pop %v5425
      %v5427 = vmul.f32 %v5368, 1.442695
      %v5428 = vpow.pop %v5427
      %v5429 = vmul.f32 %v5369, 1.442695
      %v5430 = vpow.pop %v5429
      %v5431 = vmul.f32 %v5370, 1.442695
      %v5432 = vpow.pop %v5431
      %v5433 = vmul.f32 %v5371, 1.442695
      %v5434 = vpow.pop %v5433
      %v5435 = vmul.f32 %v5372, 1.442695
      %v5436 = vpow.pop %v5435
      %v5437 = vadd.f32 %v5374, 1.0
      %v5438 = vadd.f32 %v5376, 1.0
      %v5439 = vadd.f32 %v5378, 1.0
      %v5440 = vadd.f32 %v5380, 1.0
      %v5441 = vadd.f32 %v5382, 1.0
      %v5442 = vadd.f32 %v5384, 1.0
      %v5443 = vadd.f32 %v5386, 1.0
      %v5444 = vadd.f32 %v5388, 1.0
      %v5445 = vadd.f32 %v5390, 1.0
      %v5446 = vadd.f32 %v5392, 1.0
      %v5447 = vadd.f32 %v5394, 1.0
      %v5448 = vadd.f32 %v5396, 1.0
      %v5449 = vadd.f32 %v5398, 1.0
      %v5450 = vadd.f32 %v5400, 1.0
      %v5451 = vadd.f32 %v5402, 1.0
      %v5452 = vadd.f32 %v5404, 1.0
      %v5453 = vadd.f32 %v5406, 1.0
      %v5454 = vadd.f32 %v5408, 1.0
      %v5455 = vadd.f32 %v5410, 1.0
      %v5456 = vadd.f32 %v5412, 1.0
      %v5457 = vadd.f32 %v5414, 1.0
      %v5458 = vadd.f32 %v5416, 1.0
      %v5459 = vadd.f32 %v5418, 1.0
      %v5460 = vadd.f32 %v5420, 1.0
      %v5461 = vadd.f32 %v5422, 1.0
      %v5462 = vadd.f32 %v5424, 1.0
      %v5463 = vadd.f32 %v5426, 1.0
      %v5464 = vadd.f32 %v5428, 1.0
      %v5465 = vadd.f32 %v5430, 1.0
      %v5466 = vadd.f32 %v5432, 1.0
      %v5467 = vadd.f32 %v5434, 1.0
      %v5468 = vadd.f32 %v5436, 1.0
      %v5469 = vrcp.pop %v5437
      %v5470 = vrcp.pop %v5438
      %v5471 = vrcp.pop %v5439
      %v5472 = vrcp.pop %v5440
      %v5473 = vrcp.pop %v5441
      %v5474 = vrcp.pop %v5442
      %v5475 = vrcp.pop %v5443
      %v5476 = vrcp.pop %v5444
      %v5477 = vrcp.pop %v5445
      %v5478 = vrcp.pop %v5446
      %v5479 = vrcp.pop %v5447
      %v5480 = vrcp.pop %v5448
      %v5481 = vrcp.pop %v5449
      %v5482 = vrcp.pop %v5450
      %v5483 = vrcp.pop %v5451
      %v5484 = vrcp.pop %v5452
      %v5485 = vrcp.pop %v5453
      %v5486 = vrcp.pop %v5454
      %v5487 = vrcp.pop %v5455
      %v5488 = vrcp.pop %v5456
      %v5489 = vrcp.pop %v5457
      %v5490 = vrcp.pop %v5458
      %v5491 = vrcp.pop %v5459
      %v5492 = vrcp.pop %v5460
      %v5493 = vrcp.pop %v5461
      %v5494 = vrcp.pop %v5462
      %v5495 = vrcp.pop %v5463
      %v5496 = vrcp.pop %v5464
      %v5497 = vrcp.pop %v5465
      %v5498 = vrcp.pop %v5466
      %v5499 = vrcp.pop %v5467
      %v5500 = vrcp.pop %v5468
      %v5501 = vmul.f32 %v5309, %v5469
      %v5502 = vmul.f32 %v5310, %v5470
      %v5503 = vmul.f32 %v5311, %v5471
      %v5504 = vmul.f32 %v5312, %v5472
      %v5505 = vmul.f32 %v5313, %v5473
      %v5506 = vmul.f32 %v5314, %v5474
      %v5507 = vmul.f32 %v5315, %v5475
      %v5508 = vmul.f32 %v5316, %v5476
      %v5509 = vmul.f32 %v5317, %v5477
      %v5510 = vmul.f32 %v5318, %v5478
      %v5511 = vmul.f32 %v5319, %v5479
      %v5512 = vmul.f32 %v5320, %v5480
      %v5513 = vmul.f32 %v5321, %v5481
      %v5514 = vmul.f32 %v5322, %v5482
      %v5515 = vmul.f32 %v5323, %v5483
      %v5516 = vmul.f32 %v5324, %v5484
      %v5517 = vmul.f32 %v5325, %v5485
      %v5518 = vmul.f32 %v5326, %v5486
      %v5519 = vmul.f32 %v5327, %v5487
      %v5520 = vmul.f32 %v5328, %v5488
      %v5521 = vmul.f32 %v5329, %v5489
      %v5522 = vmul.f32 %v5330, %v5490
      %v5523 = vmul.f32 %v5331, %v5491
      %v5524 = vmul.f32 %v5332, %v5492
      %v5525 = vmul.f32 %v5333, %v5493
      %v5526 = vmul.f32 %v5334, %v5494
      %v5527 = vmul.f32 %v5335, %v5495
      %v5528 = vmul.f32 %v5336, %v5496
      %v5529 = vmul.f32 %v5337, %v5497
      %v5530 = vmul.f32 %v5338, %v5498
      %v5531 = vmul.f32 %v5339, %v5499
      %v5532 = vmul.f32 %v5340, %v5500
      %v5533 = vld [vmem:[%s6] sm:$0xf]
      %v5534 = vld [vmem:[%s7] sm:$0xf]
      %v5536 = vsel %vm393, %v790, 0
      %v5539 = vsel %vm393, %v795, 0
      %v5542 = vsel %vm393, %v800, 0
      %v5545 = vsel %vm393, %v805, 0
      %v5548 = vsel %vm393, %v810, 0
      %v5551 = vsel %vm393, %v815, 0
      %v5554 = vsel %vm393, %v820, 0
      %v5557 = vsel %vm393, %v825, 0
      %v5560 = vsel %vm393, %v830, 0
      %v5563 = vsel %vm393, %v835, 0
      %v5566 = vsel %vm393, %v840, 0
      %v5569 = vsel %vm393, %v845, 0
      %v5572 = vsel %vm393, %v850, 0
      %v5575 = vsel %vm393, %v855, 0
      %v5578 = vsel %vm393, %v860, 0
      %v5581 = vsel %vm393, %v865, 0
      %v5584 = vsel %vm393, %v870, 0
      %v5587 = vsel %vm393, %v875, 0
      %v5590 = vsel %vm393, %v880, 0
      %v5593 = vsel %vm393, %v885, 0
      %v5596 = vsel %vm393, %v890, 0
      %v5599 = vsel %vm393, %v895, 0
      %v5602 = vsel %vm393, %v900, 0
      %v5605 = vsel %vm393, %v905, 0
      %v5608 = vsel %vm393, %v910, 0
      %v5611 = vsel %vm393, %v915, 0
      %v5614 = vsel %vm393, %v920, 0
      %v5617 = vsel %vm393, %v925, 0
      %v5620 = vsel %vm393, %v930, 0
      %v5623 = vsel %vm393, %v935, 0
      %v5626 = vsel %vm393, %v940, 0
      %v5629 = vsel %vm393, %v945, 0
      %v5632 = vsel %vm490, %v5534, 0
      %5634 = vmatprep.subr.mxu0 0.0
      %5635 = vmatpush1.msra.mxu0 %v5632
      %5636 = vmatprep.subr.mxu0 0.0
      %5637 = vmatpush1.msra.mxu0 0.0
      %5638 = vmatprep.subr.mxu0 0.0
      %5639 = vmatpush1.msra.mxu0 0.0
      %5640 = vmatprep.subr.mxu0 0.0
      %5641 = vmatpush1.msra.mxu0 0.0
      %5642 = vmatprep.subr.mxu0 0.0
      %5643 = vmatpush1.msra.mxu0 0.0
      %5644 = vmatprep.subr.mxu0 0.0
      %5645 = vmatpush1.msra.mxu0 0.0
      %5646 = vmatprep.subr.mxu0 0.0
      %5647 = vmatpush1.msra.mxu0 0.0
      %5648 = vmatprep.subr.mxu0 0.0
      %5649 = vmatpush1.msra.mxu0 0.0
      %5650 = vmatprep.subr.mxu0 0.0
      %5651 = vmatpush1.msra.mxu0 0.0
      %5652 = vmatprep.subr.mxu0 0.0
      %5653 = vmatpush1.msra.mxu0 0.0
      %5654 = vmatprep.subr.mxu0 0.0
      %5655 = vmatpush1.msra.mxu0 0.0
      %5656 = vmatprep.subr.mxu0 0.0
      %5657 = vmatpush1.msra.mxu0 0.0
      %5658 = vmatprep.subr.mxu0 0.0
      %5659 = vmatpush1.msra.mxu0 0.0
      %5660 = vmatprep.subr.mxu0 0.0
      %5661 = vmatpush1.msra.mxu0 0.0
      %5662 = vmatprep.subr.mxu0 0.0
      %5663 = vmatpush1.msra.mxu0 0.0
      %5664 = vmatprep.subr.mxu0 0.0
      %5665 = vmatpush1.msra.mxu0 0.0
      %5666 = vmatprep.subr.mxu0 0.0
      %5667 = vmatpush1.msra.mxu0 0.0
      %5668 = vmatprep.subr.mxu0 0.0
      %5669 = vmatpush1.msra.mxu0 0.0
      %5670 = vmatprep.subr.mxu0 0.0
      %5671 = vmatpush1.msra.mxu0 0.0
      %5672 = vmatprep.subr.mxu0 0.0
      %5673 = vmatpush1.msra.mxu0 0.0
      %5674 = vmatprep.subr.mxu0 0.0
      %5675 = vmatpush1.msra.mxu0 0.0
      %5676 = vmatprep.subr.mxu0 0.0
      %5677 = vmatpush1.msra.mxu0 0.0
      %5678 = vmatprep.subr.mxu0 0.0
      %5679 = vmatpush1.msra.mxu0 0.0
      %5680 = vmatprep.subr.mxu0 0.0
      %5681 = vmatpush1.msra.mxu0 0.0
      %5682 = vmatprep.subr.mxu0 0.0
      %5683 = vmatpush1.msra.mxu0 0.0
      %5684 = vmatprep.subr.mxu0 0.0
      %5685 = vmatpush1.msra.mxu0 0.0
      %5686 = vmatprep.subr.mxu0 0.0
      %5687 = vmatpush1.msra.mxu0 0.0
      %5688 = vmatprep.subr.mxu0 0.0
      %5689 = vmatpush1.msra.mxu0 0.0
      %5690 = vmatprep.subr.mxu0 0.0
      %5691 = vmatpush1.msra.mxu0 0.0
      %5692 = vmatprep.subr.mxu0 0.0
      %5693 = vmatpush1.msra.mxu0 0.0
      %5694 = vmatprep.subr.mxu0 0.0
      %5695 = vmatpush1.msra.mxu0 0.0
      %5696 = vmatprep.subr.mxu0 0.0
      %5697 = vmatpush1.msra.mxu0 0.0
      %5698 = vmatprep.mubr.f32.mxu0 0.0
      %5699 = vmatmul.mubr.f32.gmra.mrb[0].mxu0 %v5536
      %v5700 = vpop.f32.mrb[0].mxu0
      %v5701 = vadd.f32 0.0, %v5700
      %v5702 = vpop.f32.mrb[0].mxu0
      %5703 = vmatprep.mubr.f32.mxu0 0.0
      %5704 = vmatmul.mubr.f32.gmra.mrb[0].mxu0 %v5539
      %v5705 = vpop.f32.mrb[0].mxu0
      %v5706 = vadd.f32 0.0, %v5705
      %v5707 = vpop.f32.mrb[0].mxu0
      %5708 = vmatprep.mubr.f32.mxu0 0.0
      %5709 = vmatmul.mubr.f32.gmra.mrb[0].mxu0 %v5542
      %v5710 = vpop.f32.mrb[0].mxu0
      %v5711 = vadd.f32 0.0, %v5710
      %v5712 = vpop.f32.mrb[0].mxu0
      %5713 = vmatprep.mubr.f32.mxu0 0.0
      %5714 = vmatmul.mubr.f32.gmra.mrb[0].mxu0 %v5545
      %v5715 = vpop.f32.mrb[0].mxu0
      %v5716 = vadd.f32 0.0, %v5715
      %v5717 = vpop.f32.mrb[0].mxu0
      %5718 = vmatprep.mubr.f32.mxu0 0.0
      %5719 = vmatmul.mubr.f32.gmra.mrb[0].mxu0 %v5548
      %v5720 = vpop.f32.mrb[0].mxu0
      %v5721 = vadd.f32 0.0, %v5720
      %v5722 = vpop.f32.mrb[0].mxu0
      %5723 = vmatprep.mubr.f32.mxu0 0.0
      %5724 = vmatmul.mubr.f32.gmra.mrb[0].mxu0 %v5551
      %v5725 = vpop.f32.mrb[0].mxu0
      %v5726 = vadd.f32 0.0, %v5725
      %v5727 = vpop.f32.mrb[0].mxu0
      %5728 = vmatprep.mubr.f32.mxu0 0.0
      %5729 = vmatmul.mubr.f32.gmra.mrb[0].mxu0 %v5554
      %v5730 = vpop.f32.mrb[0].mxu0
      %v5731 = vadd.f32 0.0, %v5730
      %v5732 = vpop.f32.mrb[0].mxu0
      %5733 = vmatprep.mubr.f32.mxu0 0.0
      %5734 = vmatmul.mubr.f32.gmra.mrb[0].mxu0 %v5557
      %v5735 = vpop.f32.mrb[0].mxu0
      %v5736 = vadd.f32 0.0, %v5735
      %v5737 = vpop.f32.mrb[0].mxu0
      %5738 = vmatprep.mubr.f32.mxu0 0.0
      %5739 = vmatmul.mubr.f32.gmra.mrb[0].mxu0 %v5560
      %v5740 = vpop.f32.mrb[0].mxu0
      %v5741 = vadd.f32 0.0, %v5740
      %v5742 = vpop.f32.mrb[0].mxu0
      %5743 = vmatprep.mubr.f32.mxu0 0.0
      %5744 = vmatmul.mubr.f32.gmra.mrb[0].mxu0 %v5563
      %v5745 = vpop.f32.mrb[0].mxu0
      %v5746 = vadd.f32 0.0, %v5745
      %v5747 = vpop.f32.mrb[0].mxu0
      %5748 = vmatprep.mubr.f32.mxu0 0.0
      %5749 = vmatmul.mubr.f32.gmra.mrb[0].mxu0 %v5566
      %v5750 = vpop.f32.mrb[0].mxu0
      %v5751 = vadd.f32 0.0, %v5750
      %v5752 = vpop.f32.mrb[0].mxu0
      %5753 = vmatprep.mubr.f32.mxu0 0.0
      %5754 = vmatmul.mubr.f32.gmra.mrb[0].mxu0 %v5569
      %v5755 = vpop.f32.mrb[0].mxu0
      %v5756 = vadd.f32 0.0, %v5755
      %v5757 = vpop.f32.mrb[0].mxu0
      %5758 = vmatprep.mubr.f32.mxu0 0.0
      %5759 = vmatmul.mubr.f32.gmra.mrb[0].mxu0 %v5572
      %v5760 = vpop.f32.mrb[0].mxu0
      %v5761 = vadd.f32 0.0, %v5760
      %v5762 = vpop.f32.mrb[0].mxu0
      %5763 = vmatprep.mubr.f32.mxu0 0.0
      %5764 = vmatmul.mubr.f32.gmra.mrb[0].mxu0 %v5575
      %v5765 = vpop.f32.mrb[0].mxu0
      %v5766 = vadd.f32 0.0, %v5765
      %v5767 = vpop.f32.mrb[0].mxu0
      %5768 = vmatprep.mubr.f32.mxu0 0.0
      %5769 = vmatmul.mubr.f32.gmra.mrb[0].mxu0 %v5578
      %v5770 = vpop.f32.mrb[0].mxu0
      %v5771 = vadd.f32 0.0, %v5770
      %v5772 = vpop.f32.mrb[0].mxu0
      %5773 = vmatprep.mubr.f32.mxu0 0.0
      %5774 = vmatmul.mubr.f32.gmra.mrb[0].mxu0 %v5581
      %v5775 = vpop.f32.mrb[0].mxu0
      %v5776 = vadd.f32 0.0, %v5775
      %v5777 = vpop.f32.mrb[0].mxu0
      %5778 = vmatprep.mubr.f32.mxu0 0.0
      %5779 = vmatmul.mubr.f32.gmra.mrb[0].mxu0 %v5584
      %v5780 = vpop.f32.mrb[0].mxu0
      %v5781 = vadd.f32 0.0, %v5780
      %v5782 = vpop.f32.mrb[0].mxu0
      %5783 = vmatprep.mubr.f32.mxu0 0.0
      %5784 = vmatmul.mubr.f32.gmra.mrb[0].mxu0 %v5587
      %v5785 = vpop.f32.mrb[0].mxu0
      %v5786 = vadd.f32 0.0, %v5785
      %v5787 = vpop.f32.mrb[0].mxu0
      %5788 = vmatprep.mubr.f32.mxu0 0.0
      %5789 = vmatmul.mubr.f32.gmra.mrb[0].mxu0 %v5590
      %v5790 = vpop.f32.mrb[0].mxu0
      %v5791 = vadd.f32 0.0, %v5790
      %v5792 = vpop.f32.mrb[0].mxu0
      %5793 = vmatprep.mubr.f32.mxu0 0.0
      %5794 = vmatmul.mubr.f32.gmra.mrb[0].mxu0 %v5593
      %v5795 = vpop.f32.mrb[0].mxu0
      %v5796 = vadd.f32 0.0, %v5795
      %v5797 = vpop.f32.mrb[0].mxu0
      %5798 = vmatprep.mubr.f32.mxu0 0.0
      %5799 = vmatmul.mubr.f32.gmra.mrb[0].mxu0 %v5596
      %v5800 = vpop.f32.mrb[0].mxu0
      %v5801 = vadd.f32 0.0, %v5800
      %v5802 = vpop.f32.mrb[0].mxu0
      %5803 = vmatprep.mubr.f32.mxu0 0.0
      %5804 = vmatmul.mubr.f32.gmra.mrb[0].mxu0 %v5599
      %v5805 = vpop.f32.mrb[0].mxu0
      %v5806 = vadd.f32 0.0, %v5805
      %v5807 = vpop.f32.mrb[0].mxu0
      %5808 = vmatprep.mubr.f32.mxu0 0.0
      %5809 = vmatmul.mubr.f32.gmra.mrb[0].mxu0 %v5602
      %v5810 = vpop.f32.mrb[0].mxu0
      %v5811 = vadd.f32 0.0, %v5810
      %v5812 = vpop.f32.mrb[0].mxu0
      %5813 = vmatprep.mubr.f32.mxu0 0.0
      %5814 = vmatmul.mubr.f32.gmra.mrb[0].mxu0 %v5605
      %v5815 = vpop.f32.mrb[0].mxu0
      %v5816 = vadd.f32 0.0, %v5815
      %v5817 = vpop.f32.mrb[0].mxu0
      %5818 = vmatprep.mubr.f32.mxu0 0.0
      %5819 = vmatmul.mubr.f32.gmra.mrb[0].mxu0 %v5608
      %v5820 = vpop.f32.mrb[0].mxu0
      %v5821 = vadd.f32 0.0, %v5820
      %v5822 = vpop.f32.mrb[0].mxu0
      %5823 = vmatprep.mubr.f32.mxu0 0.0
      %5824 = vmatmul.mubr.f32.gmra.mrb[0].mxu0 %v5611
      %v5825 = vpop.f32.mrb[0].mxu0
      %v5826 = vadd.f32 0.0, %v5825
      %v5827 = vpop.f32.mrb[0].mxu0
      %5828 = vmatprep.mubr.f32.mxu0 0.0
      %5829 = vmatmul.mubr.f32.gmra.mrb[0].mxu0 %v5614
      %v5830 = vpop.f32.mrb[0].mxu0
      %v5831 = vadd.f32 0.0, %v5830
      %v5832 = vpop.f32.mrb[0].mxu0
      %5833 = vmatprep.mubr.f32.mxu0 0.0
      %5834 = vmatmul.mubr.f32.gmra.mrb[0].mxu0 %v5617
      %v5835 = vpop.f32.mrb[0].mxu0
      %v5836 = vadd.f32 0.0, %v5835
      %v5837 = vpop.f32.mrb[0].mxu0
      %5838 = vmatprep.mubr.f32.mxu0 0.0
      %5839 = vmatmul.mubr.f32.gmra.mrb[0].mxu0 %v5620
      %v5840 = vpop.f32.mrb[0].mxu0
      %v5841 = vadd.f32 0.0, %v5840
      %v5842 = vpop.f32.mrb[0].mxu0
      %5843 = vmatprep.mubr.f32.mxu0 0.0
      %5844 = vmatmul.mubr.f32.gmra.mrb[0].mxu0 %v5623
      %v5845 = vpop.f32.mrb[0].mxu0
      %v5846 = vadd.f32 0.0, %v5845
      %v5847 = vpop.f32.mrb[0].mxu0
      %5848 = vmatprep.mubr.f32.mxu0 0.0
      %5849 = vmatmul.mubr.f32.gmra.mrb[0].mxu0 %v5626
      %v5850 = vpop.f32.mrb[0].mxu0
      %v5851 = vadd.f32 0.0, %v5850
      %v5852 = vpop.f32.mrb[0].mxu0
      %5853 = vmatprep.mubr.f32.mxu0 0.0
      %5854 = vmatmul.mubr.f32.gmra.mrb[0].mxu0 %v5629
      %v5855 = vpop.f32.mrb[0].mxu0
      %v5856 = vadd.f32 0.0, %v5855
      %v5857 = vpop.f32.mrb[0].mxu0
      %5858 = vdwg.mxu0
      %v5860 = vsel %vm393, %v5501, 0
      %v5863 = vsel %vm393, %v5502, 0
      %v5866 = vsel %vm393, %v5503, 0
      %v5869 = vsel %vm393, %v5504, 0
      %v5872 = vsel %vm393, %v5505, 0
      %v5875 = vsel %vm393, %v5506, 0
      %v5878 = vsel %vm393, %v5507, 0
      %v5881 = vsel %vm393, %v5508, 0
      %v5884 = vsel %vm393, %v5509, 0
      %v5887 = vsel %vm393, %v5510, 0
      %v5890 = vsel %vm393, %v5511, 0
      %v5893 = vsel %vm393, %v5512, 0
      %v5896 = vsel %vm393, %v5513, 0
      %v5899 = vsel %vm393, %v5514, 0
      %v5902 = vsel %vm393, %v5515, 0
      %v5905 = vsel %vm393, %v5516, 0
      %v5908 = vsel %vm393, %v5517, 0
      %v5911 = vsel %vm393, %v5518, 0
      %v5914 = vsel %vm393, %v5519, 0
      %v5917 = vsel %vm393, %v5520, 0
      %v5920 = vsel %vm393, %v5521, 0
      %v5923 = vsel %vm393, %v5522, 0
      %v5926 = vsel %vm393, %v5523, 0
      %v5929 = vsel %vm393, %v5524, 0
      %v5932 = vsel %vm393, %v5525, 0
      %v5935 = vsel %vm393, %v5526, 0
      %v5938 = vsel %vm393, %v5527, 0
      %v5941 = vsel %vm393, %v5528, 0
      %v5944 = vsel %vm393, %v5529, 0
      %v5947 = vsel %vm393, %v5530, 0
      %v5950 = vsel %vm393, %v5531, 0
      %v5953 = vsel %vm393, %v5532, 0
      %v5956 = vsel %vm490, %v5533, 0
      %5958 = vmatprep.subr.mxu0 0.0
      %5959 = vmatpush1.msra.mxu0 %v5956
      %5960 = vmatprep.subr.mxu0 0.0
      %5961 = vmatpush1.msra.mxu0 0.0
      %5962 = vmatprep.subr.mxu0 0.0
      %5963 = vmatpush1.msra.mxu0 0.0
      %5964 = vmatprep.subr.mxu0 0.0
      %5965 = vmatpush1.msra.mxu0 0.0
      %5966 = vmatprep.subr.mxu0 0.0
      %5967 = vmatpush1.msra.mxu0 0.0
      %5968 = vmatprep.subr.mxu0 0.0
      %5969 = vmatpush1.msra.mxu0 0.0
      %5970 = vmatprep.subr.mxu0 0.0
      %5971 = vmatpush1.msra.mxu0 0.0
      %5972 = vmatprep.subr.mxu0 0.0
      %5973 = vmatpush1.msra.mxu0 0.0
      %5974 = vmatprep.subr.mxu0 0.0
      %5975 = vmatpush1.msra.mxu0 0.0
      %5976 = vmatprep.subr.mxu0 0.0
      %5977 = vmatpush1.msra.mxu0 0.0
      %5978 = vmatprep.subr.mxu0 0.0
      %5979 = vmatpush1.msra.mxu0 0.0
      %5980 = vmatprep.subr.mxu0 0.0
      %5981 = vmatpush1.msra.mxu0 0.0
      %5982 = vmatprep.subr.mxu0 0.0
      %5983 = vmatpush1.msra.mxu0 0.0
      %5984 = vmatprep.subr.mxu0 0.0
      %5985 = vmatpush1.msra.mxu0 0.0
      %5986 = vmatprep.subr.mxu0 0.0
      %5987 = vmatpush1.msra.mxu0 0.0
      %5988 = vmatprep.subr.mxu0 0.0
      %5989 = vmatpush1.msra.mxu0 0.0
      %5990 = vmatprep.subr.mxu0 0.0
      %5991 = vmatpush1.msra.mxu0 0.0
      %5992 = vmatprep.subr.mxu0 0.0
      %5993 = vmatpush1.msra.mxu0 0.0
      %5994 = vmatprep.subr.mxu0 0.0
      %5995 = vmatpush1.msra.mxu0 0.0
      %5996 = vmatprep.subr.mxu0 0.0
      %5997 = vmatpush1.msra.mxu0 0.0
      %5998 = vmatprep.subr.mxu0 0.0
      %5999 = vmatpush1.msra.mxu0 0.0
      %6000 = vmatprep.subr.mxu0 0.0
      %6001 = vmatpush1.msra.mxu0 0.0
      %6002 = vmatprep.subr.mxu0 0.0
      %6003 = vmatpush1.msra.mxu0 0.0
      %6004 = vmatprep.subr.mxu0 0.0
      %6005 = vmatpush1.msra.mxu0 0.0
      %6006 = vmatprep.subr.mxu0 0.0
      %6007 = vmatpush1.msra.mxu0 0.0
      %6008 = vmatprep.subr.mxu0 0.0
      %6009 = vmatpush1.msra.mxu0 0.0
      %6010 = vmatprep.subr.mxu0 0.0
      %6011 = vmatpush1.msra.mxu0 0.0
      %6012 = vmatprep.subr.mxu0 0.0
      %6013 = vmatpush1.msra.mxu0 0.0
      %6014 = vmatprep.subr.mxu0 0.0
      %6015 = vmatpush1.msra.mxu0 0.0
      %6016 = vmatprep.subr.mxu0 0.0
      %6017 = vmatpush1.msra.mxu0 0.0
      %6018 = vmatprep.subr.mxu0 0.0
      %6019 = vmatpush1.msra.mxu0 0.0
      %6020 = vmatprep.subr.mxu0 0.0
      %6021 = vmatpush1.msra.mxu0 0.0
      %6022 = vmatprep.mubr.f32.mxu0 0.0
      %6023 = vmatmul.mubr.f32.gmra.mrb[0].mxu0 %v5860
      %v6024 = vpop.f32.mrb[0].mxu0
      %v6025 = vadd.f32 %v5701, %v6024
      %v6026 = vpop.f32.mrb[0].mxu0
      %6027 = vmatprep.mubr.f32.mxu0 0.0
      %6028 = vmatmul.mubr.f32.gmra.mrb[0].mxu0 %v5863
      %v6029 = vpop.f32.mrb[0].mxu0
      %v6030 = vadd.f32 %v5706, %v6029
      %v6031 = vpop.f32.mrb[0].mxu0
      %6032 = vmatprep.mubr.f32.mxu0 0.0
      %6033 = vmatmul.mubr.f32.gmra.mrb[0].mxu0 %v5866
      %v6034 = vpop.f32.mrb[0].mxu0
      %v6035 = vadd.f32 %v5711, %v6034
      %v6036 = vpop.f32.mrb[0].mxu0
      %6037 = vmatprep.mubr.f32.mxu0 0.0
      %6038 = vmatmul.mubr.f32.gmra.mrb[0].mxu0 %v5869
      %v6039 = vpop.f32.mrb[0].mxu0
      %v6040 = vadd.f32 %v5716, %v6039
      %v6041 = vpop.f32.mrb[0].mxu0
      %6042 = vmatprep.mubr.f32.mxu0 0.0
      %6043 = vmatmul.mubr.f32.gmra.mrb[0].mxu0 %v5872
      %v6044 = vpop.f32.mrb[0].mxu0
      %v6045 = vadd.f32 %v5721, %v6044
      %v6046 = vpop.f32.mrb[0].mxu0
      %6047 = vmatprep.mubr.f32.mxu0 0.0
      %6048 = vmatmul.mubr.f32.gmra.mrb[0].mxu0 %v5875
      %v6049 = vpop.f32.mrb[0].mxu0
      %v6050 = vadd.f32 %v5726, %v6049
      %v6051 = vpop.f32.mrb[0].mxu0
      %6052 = vmatprep.mubr.f32.mxu0 0.0
      %6053 = vmatmul.mubr.f32.gmra.mrb[0].mxu0 %v5878
      %v6054 = vpop.f32.mrb[0].mxu0
      %v6055 = vadd.f32 %v5731, %v6054
      %v6056 = vpop.f32.mrb[0].mxu0
      %6057 = vmatprep.mubr.f32.mxu0 0.0
      %6058 = vmatmul.mubr.f32.gmra.mrb[0].mxu0 %v5881
      %v6059 = vpop.f32.mrb[0].mxu0
      %v6060 = vadd.f32 %v5736, %v6059
      %v6061 = vpop.f32.mrb[0].mxu0
      %6062 = vmatprep.mubr.f32.mxu0 0.0
      %6063 = vmatmul.mubr.f32.gmra.mrb[0].mxu0 %v5884
      %v6064 = vpop.f32.mrb[0].mxu0
      %v6065 = vadd.f32 %v5741, %v6064
      %v6066 = vpop.f32.mrb[0].mxu0
      %6067 = vmatprep.mubr.f32.mxu0 0.0
      %6068 = vmatmul.mubr.f32.gmra.mrb[0].mxu0 %v5887
      %v6069 = vpop.f32.mrb[0].mxu0
      %v6070 = vadd.f32 %v5746, %v6069
      %v6071 = vpop.f32.mrb[0].mxu0
      %6072 = vmatprep.mubr.f32.mxu0 0.0
      %6073 = vmatmul.mubr.f32.gmra.mrb[0].mxu0 %v5890
      %v6074 = vpop.f32.mrb[0].mxu0
      %v6075 = vadd.f32 %v5751, %v6074
      %v6076 = vpop.f32.mrb[0].mxu0
      %6077 = vmatprep.mubr.f32.mxu0 0.0
      %6078 = vmatmul.mubr.f32.gmra.mrb[0].mxu0 %v5893
      %v6079 = vpop.f32.mrb[0].mxu0
      %v6080 = vadd.f32 %v5756, %v6079
      %v6081 = vpop.f32.mrb[0].mxu0
      %6082 = vmatprep.mubr.f32.mxu0 0.0
      %6083 = vmatmul.mubr.f32.gmra.mrb[0].mxu0 %v5896
      %v6084 = vpop.f32.mrb[0].mxu0
      %v6085 = vadd.f32 %v5761, %v6084
      %v6086 = vpop.f32.mrb[0].mxu0
      %6087 = vmatprep.mubr.f32.mxu0 0.0
      %6088 = vmatmul.mubr.f32.gmra.mrb[0].mxu0 %v5899
      %v6089 = vpop.f32.mrb[0].mxu0
      %v6090 = vadd.f32 %v5766, %v6089
      %v6091 = vpop.f32.mrb[0].mxu0
      %6092 = vmatprep.mubr.f32.mxu0 0.0
      %6093 = vmatmul.mubr.f32.gmra.mrb[0].mxu0 %v5902
      %v6094 = vpop.f32.mrb[0].mxu0
      %v6095 = vadd.f32 %v5771, %v6094
      %v6096 = vpop.f32.mrb[0].mxu0
      %6097 = vmatprep.mubr.f32.mxu0 0.0
      %6098 = vmatmul.mubr.f32.gmra.mrb[0].mxu0 %v5905
      %v6099 = vpop.f32.mrb[0].mxu0
      %v6100 = vadd.f32 %v5776, %v6099
      %v6101 = vpop.f32.mrb[0].mxu0
      %6102 = vmatprep.mubr.f32.mxu0 0.0
      %6103 = vmatmul.mubr.f32.gmra.mrb[0].mxu0 %v5908
      %v6104 = vpop.f32.mrb[0].mxu0
      %v6105 = vadd.f32 %v5781, %v6104
      %v6106 = vpop.f32.mrb[0].mxu0
      %6107 = vmatprep.mubr.f32.mxu0 0.0
      %6108 = vmatmul.mubr.f32.gmra.mrb[0].mxu0 %v5911
      %v6109 = vpop.f32.mrb[0].mxu0
      %v6110 = vadd.f32 %v5786, %v6109
      %v6111 = vpop.f32.mrb[0].mxu0
      %6112 = vmatprep.mubr.f32.mxu0 0.0
      %6113 = vmatmul.mubr.f32.gmra.mrb[0].mxu0 %v5914
      %v6114 = vpop.f32.mrb[0].mxu0
      %v6115 = vadd.f32 %v5791, %v6114
      %v6116 = vpop.f32.mrb[0].mxu0
      %6117 = vmatprep.mubr.f32.mxu0 0.0
      %6118 = vmatmul.mubr.f32.gmra.mrb[0].mxu0 %v5917
      %v6119 = vpop.f32.mrb[0].mxu0
      %v6120 = vadd.f32 %v5796, %v6119
      %v6121 = vpop.f32.mrb[0].mxu0
      %6122 = vmatprep.mubr.f32.mxu0 0.0
      %6123 = vmatmul.mubr.f32.gmra.mrb[0].mxu0 %v5920
      %v6124 = vpop.f32.mrb[0].mxu0
      %v6125 = vadd.f32 %v5801, %v6124
      %v6126 = vpop.f32.mrb[0].mxu0
      %6127 = vmatprep.mubr.f32.mxu0 0.0
      %6128 = vmatmul.mubr.f32.gmra.mrb[0].mxu0 %v5923
      %v6129 = vpop.f32.mrb[0].mxu0
      %v6130 = vadd.f32 %v5806, %v6129
      %v6131 = vpop.f32.mrb[0].mxu0
      %6132 = vmatprep.mubr.f32.mxu0 0.0
      %6133 = vmatmul.mubr.f32.gmra.mrb[0].mxu0 %v5926
      %v6134 = vpop.f32.mrb[0].mxu0
      %v6135 = vadd.f32 %v5811, %v6134
      %v6136 = vpop.f32.mrb[0].mxu0
      %6137 = vmatprep.mubr.f32.mxu0 0.0
      %6138 = vmatmul.mubr.f32.gmra.mrb[0].mxu0 %v5929
      %v6139 = vpop.f32.mrb[0].mxu0
      %v6140 = vadd.f32 %v5816, %v6139
      %v6141 = vpop.f32.mrb[0].mxu0
      %6142 = vmatprep.mubr.f32.mxu0 0.0
      %6143 = vmatmul.mubr.f32.gmra.mrb[0].mxu0 %v5932
      %v6144 = vpop.f32.mrb[0].mxu0
      %v6145 = vadd.f32 %v5821, %v6144
      %v6146 = vpop.f32.mrb[0].mxu0
      %6147 = vmatprep.mubr.f32.mxu0 0.0
      %6148 = vmatmul.mubr.f32.gmra.mrb[0].mxu0 %v5935
      %v6149 = vpop.f32.mrb[0].mxu0
      %v6150 = vadd.f32 %v5826, %v6149
      %v6151 = vpop.f32.mrb[0].mxu0
      %6152 = vmatprep.mubr.f32.mxu0 0.0
      %6153 = vmatmul.mubr.f32.gmra.mrb[0].mxu0 %v5938
      %v6154 = vpop.f32.mrb[0].mxu0
      %v6155 = vadd.f32 %v5831, %v6154
      %v6156 = vpop.f32.mrb[0].mxu0
      %6157 = vmatprep.mubr.f32.mxu0 0.0
      %6158 = vmatmul.mubr.f32.gmra.mrb[0].mxu0 %v5941
      %v6159 = vpop.f32.mrb[0].mxu0
      %v6160 = vadd.f32 %v5836, %v6159
      %v6161 = vpop.f32.mrb[0].mxu0
      %6162 = vmatprep.mubr.f32.mxu0 0.0
      %6163 = vmatmul.mubr.f32.gmra.mrb[0].mxu0 %v5944
      %v6164 = vpop.f32.mrb[0].mxu0
      %v6165 = vadd.f32 %v5841, %v6164
      %v6166 = vpop.f32.mrb[0].mxu0
      %6167 = vmatprep.mubr.f32.mxu0 0.0
      %6168 = vmatmul.mubr.f32.gmra.mrb[0].mxu0 %v5947
      %v6169 = vpop.f32.mrb[0].mxu0
      %v6170 = vadd.f32 %v5846, %v6169
      %v6171 = vpop.f32.mrb[0].mxu0
      %6172 = vmatprep.mubr.f32.mxu0 0.0
      %6173 = vmatmul.mubr.f32.gmra.mrb[0].mxu0 %v5950
      %v6174 = vpop.f32.mrb[0].mxu0
      %v6175 = vadd.f32 %v5851, %v6174
      %v6176 = vpop.f32.mrb[0].mxu0
      %6177 = vmatprep.mubr.f32.mxu0 0.0
      %6178 = vmatmul.mubr.f32.gmra.mrb[0].mxu0 %v5953
      %v6179 = vpop.f32.mrb[0].mxu0
      %v6180 = vadd.f32 %v5856, %v6179
      %v6181 = vpop.f32.mrb[0].mxu0
      %6182 = vdwg.mxu0
      %v6183 = vld [vmem:[%s8] sm:$0x1]
      %v6185 = vlaneseq
      %v6186 = vshrl.u32 %v6185, 7
      %v6187 = vsub.s32 0, %v6186
      %v6188 = vrot.slane %v6183, %v6187
      %v6190 = vmul.f32 %v6025, %v6188
      %v6191 = vmul.f32 %v6030, %v6188
      %v6192 = vmul.f32 %v6035, %v6188
      %v6193 = vmul.f32 %v6040, %v6188
      %v6194 = vmul.f32 %v6045, %v6188
      %v6195 = vmul.f32 %v6050, %v6188
      %v6196 = vmul.f32 %v6055, %v6188
      %v6197 = vmul.f32 %v6060, %v6188
      %v6198 = vmul.f32 %v6065, %v6188
      %v6199 = vmul.f32 %v6070, %v6188
      %v6200 = vmul.f32 %v6075, %v6188
      %v6201 = vmul.f32 %v6080, %v6188
      %v6202 = vmul.f32 %v6085, %v6188
      %v6203 = vmul.f32 %v6090, %v6188
      %v6204 = vmul.f32 %v6095, %v6188
      %v6205 = vmul.f32 %v6100, %v6188
      %v6206 = vmul.f32 %v6105, %v6188
      %v6207 = vmul.f32 %v6110, %v6188
      %v6208 = vmul.f32 %v6115, %v6188
      %v6209 = vmul.f32 %v6120, %v6188
      %v6210 = vmul.f32 %v6125, %v6188
      %v6211 = vmul.f32 %v6130, %v6188
      %v6212 = vmul.f32 %v6135, %v6188
      %v6213 = vmul.f32 %v6140, %v6188
      %v6214 = vmul.f32 %v6145, %v6188
      %v6215 = vmul.f32 %v6150, %v6188
      %v6216 = vmul.f32 %v6155, %v6188
      %v6217 = vmul.f32 %v6160, %v6188
      %v6218 = vmul.f32 %v6165, %v6188
      %v6219 = vmul.f32 %v6170, %v6188
      %v6220 = vmul.f32 %v6175, %v6188
      %v6221 = vmul.f32 %v6180, %v6188
      %v6222 = vld [vmem:[%s9] sm:$0x1]
      %v6224 = vlaneseq
      %v6225 = vshrl.u32 %v6224, 7
      %v6226 = vsub.s32 0, %v6225
      %v6227 = vrot.slane %v6222, %v6226
      %v6229 = vadd.f32 %v6190, %v6227
      %v6230 = vadd.f32 %v6191, %v6227
      %v6231 = vadd.f32 %v6192, %v6227
      %v6232 = vadd.f32 %v6193, %v6227
      %v6233 = vadd.f32 %v6194, %v6227
      %v6234 = vadd.f32 %v6195, %v6227
      %v6235 = vadd.f32 %v6196, %v6227
      %v6236 = vadd.f32 %v6197, %v6227
      %v6237 = vadd.f32 %v6198, %v6227
      %v6238 = vadd.f32 %v6199, %v6227
      %v6239 = vadd.f32 %v6200, %v6227
      %v6240 = vadd.f32 %v6201, %v6227
      %v6241 = vadd.f32 %v6202, %v6227
      %v6242 = vadd.f32 %v6203, %v6227
      %v6243 = vadd.f32 %v6204, %v6227
      %v6244 = vadd.f32 %v6205, %v6227
      %v6245 = vadd.f32 %v6206, %v6227
      %v6246 = vadd.f32 %v6207, %v6227
      %v6247 = vadd.f32 %v6208, %v6227
      %v6248 = vadd.f32 %v6209, %v6227
      %v6249 = vadd.f32 %v6210, %v6227
      %v6250 = vadd.f32 %v6211, %v6227
      %v6251 = vadd.f32 %v6212, %v6227
      %v6252 = vadd.f32 %v6213, %v6227
      %v6253 = vadd.f32 %v6214, %v6227
      %v6254 = vadd.f32 %v6215, %v6227
      %v6255 = vadd.f32 %v6216, %v6227
      %v6256 = vadd.f32 %v6217, %v6227
      %v6257 = vadd.f32 %v6218, %v6227
      %v6258 = vadd.f32 %v6219, %v6227
      %v6259 = vadd.f32 %v6220, %v6227
      %v6260 = vadd.f32 %v6221, %v6227
      %v6261 = vsub.f32 0.0, %v6229
      %v6262 = vsub.f32 0.0, %v6230
      %v6263 = vsub.f32 0.0, %v6231
      %v6264 = vsub.f32 0.0, %v6232
      %v6265 = vsub.f32 0.0, %v6233
      %v6266 = vsub.f32 0.0, %v6234
      %v6267 = vsub.f32 0.0, %v6235
      %v6268 = vsub.f32 0.0, %v6236
      %v6269 = vsub.f32 0.0, %v6237
      %v6270 = vsub.f32 0.0, %v6238
      %v6271 = vsub.f32 0.0, %v6239
      %v6272 = vsub.f32 0.0, %v6240
      %v6273 = vsub.f32 0.0, %v6241
      %v6274 = vsub.f32 0.0, %v6242
      %v6275 = vsub.f32 0.0, %v6243
      %v6276 = vsub.f32 0.0, %v6244
      %v6277 = vsub.f32 0.0, %v6245
      %v6278 = vsub.f32 0.0, %v6246
      %v6279 = vsub.f32 0.0, %v6247
      %v6280 = vsub.f32 0.0, %v6248
      %v6281 = vsub.f32 0.0, %v6249
      %v6282 = vsub.f32 0.0, %v6250
      %v6283 = vsub.f32 0.0, %v6251
      %v6284 = vsub.f32 0.0, %v6252
      %v6285 = vsub.f32 0.0, %v6253
      %v6286 = vsub.f32 0.0, %v6254
      %v6287 = vsub.f32 0.0, %v6255
      %v6288 = vsub.f32 0.0, %v6256
      %v6289 = vsub.f32 0.0, %v6257
      %v6290 = vsub.f32 0.0, %v6258
      %v6291 = vsub.f32 0.0, %v6259
      %v6292 = vsub.f32 0.0, %v6260
      %v6293 = vmul.f32 %v6261, 1.442695
      %v6294 = vpow.pop %v6293
      %v6295 = vmul.f32 %v6262, 1.442695
      %v6296 = vpow.pop %v6295
      %v6297 = vmul.f32 %v6263, 1.442695
      %v6298 = vpow.pop %v6297
      %v6299 = vmul.f32 %v6264, 1.442695
      %v6300 = vpow.pop %v6299
      %v6301 = vmul.f32 %v6265, 1.442695
      %v6302 = vpow.pop %v6301
      %v6303 = vmul.f32 %v6266, 1.442695
      %v6304 = vpow.pop %v6303
      %v6305 = vmul.f32 %v6267, 1.442695
      %v6306 = vpow.pop %v6305
      %v6307 = vmul.f32 %v6268, 1.442695
      %v6308 = vpow.pop %v6307
      %v6309 = vmul.f32 %v6269, 1.442695
      %v6310 = vpow.pop %v6309
      %v6311 = vmul.f32 %v6270, 1.442695
      %v6312 = vpow.pop %v6311
      %v6313 = vmul.f32 %v6271, 1.442695
      %v6314 = vpow.pop %v6313
      %v6315 = vmul.f32 %v6272, 1.442695
      %v6316 = vpow.pop %v6315
      %v6317 = vmul.f32 %v6273, 1.442695
      %v6318 = vpow.pop %v6317
      %v6319 = vmul.f32 %v6274, 1.442695
      %v6320 = vpow.pop %v6319
      %v6321 = vmul.f32 %v6275, 1.442695
      %v6322 = vpow.pop %v6321
      %v6323 = vmul.f32 %v6276, 1.442695
      %v6324 = vpow.pop %v6323
      %v6325 = vmul.f32 %v6277, 1.442695
      %v6326 = vpow.pop %v6325
      %v6327 = vmul.f32 %v6278, 1.442695
      %v6328 = vpow.pop %v6327
      %v6329 = vmul.f32 %v6279, 1.442695
      %v6330 = vpow.pop %v6329
      %v6331 = vmul.f32 %v6280, 1.442695
      %v6332 = vpow.pop %v6331
      %v6333 = vmul.f32 %v6281, 1.442695
      %v6334 = vpow.pop %v6333
      %v6335 = vmul.f32 %v6282, 1.442695
      %v6336 = vpow.pop %v6335
      %v6337 = vmul.f32 %v6283, 1.442695
      %v6338 = vpow.pop %v6337
      %v6339 = vmul.f32 %v6284, 1.442695
      %v6340 = vpow.pop %v6339
      %v6341 = vmul.f32 %v6285, 1.442695
      %v6342 = vpow.pop %v6341
      %v6343 = vmul.f32 %v6286, 1.442695
      %v6344 = vpow.pop %v6343
      %v6345 = vmul.f32 %v6287, 1.442695
      %v6346 = vpow.pop %v6345
      %v6347 = vmul.f32 %v6288, 1.442695
      %v6348 = vpow.pop %v6347
      %v6349 = vmul.f32 %v6289, 1.442695
      %v6350 = vpow.pop %v6349
      %v6351 = vmul.f32 %v6290, 1.442695
      %v6352 = vpow.pop %v6351
      %v6353 = vmul.f32 %v6291, 1.442695
      %v6354 = vpow.pop %v6353
      %v6355 = vmul.f32 %v6292, 1.442695
      %v6356 = vpow.pop %v6355
      %v6357 = vadd.f32 %v6294, 1.0
      %v6358 = vadd.f32 %v6296, 1.0
      %v6359 = vadd.f32 %v6298, 1.0
      %v6360 = vadd.f32 %v6300, 1.0
      %v6361 = vadd.f32 %v6302, 1.0
      %v6362 = vadd.f32 %v6304, 1.0
      %v6363 = vadd.f32 %v6306, 1.0
      %v6364 = vadd.f32 %v6308, 1.0
      %v6365 = vadd.f32 %v6310, 1.0
      %v6366 = vadd.f32 %v6312, 1.0
      %v6367 = vadd.f32 %v6314, 1.0
      %v6368 = vadd.f32 %v6316, 1.0
      %v6369 = vadd.f32 %v6318, 1.0
      %v6370 = vadd.f32 %v6320, 1.0
      %v6371 = vadd.f32 %v6322, 1.0
      %v6372 = vadd.f32 %v6324, 1.0
      %v6373 = vadd.f32 %v6326, 1.0
      %v6374 = vadd.f32 %v6328, 1.0
      %v6375 = vadd.f32 %v6330, 1.0
      %v6376 = vadd.f32 %v6332, 1.0
      %v6377 = vadd.f32 %v6334, 1.0
      %v6378 = vadd.f32 %v6336, 1.0
      %v6379 = vadd.f32 %v6338, 1.0
      %v6380 = vadd.f32 %v6340, 1.0
      %v6381 = vadd.f32 %v6342, 1.0
      %v6382 = vadd.f32 %v6344, 1.0
      %v6383 = vadd.f32 %v6346, 1.0
      %v6384 = vadd.f32 %v6348, 1.0
      %v6385 = vadd.f32 %v6350, 1.0
      %v6386 = vadd.f32 %v6352, 1.0
      %v6387 = vadd.f32 %v6354, 1.0
      %v6388 = vadd.f32 %v6356, 1.0
      %v6389 = vrcp.pop %v6357
      %v6390 = vrcp.pop %v6358
      %v6391 = vrcp.pop %v6359
      %v6392 = vrcp.pop %v6360
      %v6393 = vrcp.pop %v6361
      %v6394 = vrcp.pop %v6362
      %v6395 = vrcp.pop %v6363
      %v6396 = vrcp.pop %v6364
      %v6397 = vrcp.pop %v6365
      %v6398 = vrcp.pop %v6366
      %v6399 = vrcp.pop %v6367
      %v6400 = vrcp.pop %v6368
      %v6401 = vrcp.pop %v6369
      %v6402 = vrcp.pop %v6370
      %v6403 = vrcp.pop %v6371
      %v6404 = vrcp.pop %v6372
      %v6405 = vrcp.pop %v6373
      %v6406 = vrcp.pop %v6374
      %v6407 = vrcp.pop %v6375
      %v6408 = vrcp.pop %v6376
      %v6409 = vrcp.pop %v6377
      %v6410 = vrcp.pop %v6378
      %v6411 = vrcp.pop %v6379
      %v6412 = vrcp.pop %v6380
      %v6413 = vrcp.pop %v6381
      %v6414 = vrcp.pop %v6382
      %v6415 = vrcp.pop %v6383
      %v6416 = vrcp.pop %v6384
      %v6417 = vrcp.pop %v6385
      %v6418 = vrcp.pop %v6386
      %v6419 = vrcp.pop %v6387
      %v6420 = vrcp.pop %v6388
      %v6421 = vmul.f32 %v6229, %v6389
      %v6422 = vmul.f32 %v6230, %v6390
      %v6423 = vmul.f32 %v6231, %v6391
      %v6424 = vmul.f32 %v6232, %v6392
      %v6425 = vmul.f32 %v6233, %v6393
      %v6426 = vmul.f32 %v6234, %v6394
      %v6427 = vmul.f32 %v6235, %v6395
      %v6428 = vmul.f32 %v6236, %v6396
      %v6429 = vmul.f32 %v6237, %v6397
      %v6430 = vmul.f32 %v6238, %v6398
      %v6431 = vmul.f32 %v6239, %v6399
      %v6432 = vmul.f32 %v6240, %v6400
      %v6433 = vmul.f32 %v6241, %v6401
      %v6434 = vmul.f32 %v6242, %v6402
      %v6435 = vmul.f32 %v6243, %v6403
      %v6436 = vmul.f32 %v6244, %v6404
      %v6437 = vmul.f32 %v6245, %v6405
      %v6438 = vmul.f32 %v6246, %v6406
      %v6439 = vmul.f32 %v6247, %v6407
      %v6440 = vmul.f32 %v6248, %v6408
      %v6441 = vmul.f32 %v6249, %v6409
      %v6442 = vmul.f32 %v6250, %v6410
      %v6443 = vmul.f32 %v6251, %v6411
      %v6444 = vmul.f32 %v6252, %v6412
      %v6445 = vmul.f32 %v6253, %v6413
      %v6446 = vmul.f32 %v6254, %v6414
      %v6447 = vmul.f32 %v6255, %v6415
      %v6448 = vmul.f32 %v6256, %v6416
      %v6449 = vmul.f32 %v6257, %v6417
      %v6450 = vmul.f32 %v6258, %v6418
      %v6451 = vmul.f32 %v6259, %v6419
      %v6452 = vmul.f32 %v6260, %v6420
      %vm6453 = vcmask 64512
      %6454 = vst.msk [vmem:[%s359] sm:$0xff] %vm6453, %v6421
      %6455 = vst.msk [vmem:[%s359 + $0x8] sm:$0xff] %vm6453, %v6422
      %6456 = vst.msk [vmem:[%s359 + $0x10] sm:$0xff] %vm6453, %v6423
      %6457 = vst.msk [vmem:[%s359 + $0x18] sm:$0xff] %vm6453, %v6424
      %6458 = vst.msk [vmem:[%s359 + $0x20] sm:$0xff] %vm6453, %v6425
      %6459 = vst.msk [vmem:[%s359 + $0x28] sm:$0xff] %vm6453, %v6426
      %6460 = vst.msk [vmem:[%s359 + $0x30] sm:$0xff] %vm6453, %v6427
      %6461 = vst.msk [vmem:[%s359 + $0x38] sm:$0xff] %vm6453, %v6428
      %6462 = vst.msk [vmem:[%s359 + $0x40] sm:$0xff] %vm6453, %v6429
      %6463 = vst.msk [vmem:[%s359 + $0x48] sm:$0xff] %vm6453, %v6430
      %6464 = vst.msk [vmem:[%s359 + $0x50] sm:$0xff] %vm6453, %v6431
      %6465 = vst.msk [vmem:[%s359 + $0x58] sm:$0xff] %vm6453, %v6432
      %6466 = vst.msk [vmem:[%s359 + $0x60] sm:$0xff] %vm6453, %v6433
      %6467 = vst.msk [vmem:[%s359 + $0x68] sm:$0xff] %vm6453, %v6434
      %6468 = vst.msk [vmem:[%s359 + $0x70] sm:$0xff] %vm6453, %v6435
      %6469 = vst.msk [vmem:[%s359 + $0x78] sm:$0xff] %vm6453, %v6436
      %6470 = vst.msk [vmem:[%s359 + $0x80] sm:$0xff] %vm6453, %v6437
      %6471 = vst.msk [vmem:[%s359 + $0x88] sm:$0xff] %vm6453, %v6438
      %6472 = vst.msk [vmem:[%s359 + $0x90] sm:$0xff] %vm6453, %v6439
      %6473 = vst.msk [vmem:[%s359 + $0x98] sm:$0xff] %vm6453, %v6440
      %6474 = vst.msk [vmem:[%s359 + $0xa0] sm:$0xff] %vm6453, %v6441
      %6475 = vst.msk [vmem:[%s359 + $0xa8] sm:$0xff] %vm6453, %v6442
      %6476 = vst.msk [vmem:[%s359 + $0xb0] sm:$0xff] %vm6453, %v6443
      %6477 = vst.msk [vmem:[%s359 + $0xb8] sm:$0xff] %vm6453, %v6444
      %6478 = vst.msk [vmem:[%s359 + $0xc0] sm:$0xff] %vm6453, %v6445
      %6479 = vst.msk [vmem:[%s359 + $0xc8] sm:$0xff] %vm6453, %v6446
      %6480 = vst.msk [vmem:[%s359 + $0xd0] sm:$0xff] %vm6453, %v6447
      %6481 = vst.msk [vmem:[%s359 + $0xd8] sm:$0xff] %vm6453, %v6448
      %6482 = vst.msk [vmem:[%s359 + $0xe0] sm:$0xff] %vm6453, %v6449
      %6483 = vst.msk [vmem:[%s359 + $0xe8] sm:$0xff] %vm6453, %v6450
      %6484 = vst.msk [vmem:[%s359 + $0xf0] sm:$0xff] %vm6453, %v6451
      %6485 = vst.msk [vmem:[%s359 + $0xf8] sm:$0xff] %vm6453, %v6452
      %p6486 = scmp.lt.s32.totalorder %s21, 1
      %s6487 = scalar_select %p6486, %s21, 1
      %s6488 = smul.addr %s6487, 32
      %s6489 = smul.addr %s6488, 8
      %s6490 = scalar_lea.vmem %s10, %s6489
      // Predicated region
      $region61: #{tpu_custom_call.1} parent=59 // pred_check
        %p6491 = pneg %p254
      $region62: #{tpu_custom_call.1} parent=59 // pred_check_branch
        %6493 = sbr.rel (%p6491) target = $region64
      $region63: #{tpu_custom_call.1} parent=59 // pred_region
        _
      $region64: #{tpu_custom_call.1} parent=59 // pred_fallthru
        _
    $region60: #{tpu_custom_call.1} parent=5 // pred_fallthru
      _
    %p6494 = scmp.le.s32.totalorder 2, %s16
    // Predicated region
    $region65: #{tpu_custom_call.1} parent=5 // pred_check
      %p6495 = pneg %p6494
    $region66: #{tpu_custom_call.1} parent=5 // pred_check_branch
      %6497 = sbr.rel (%p6495) target = $region68
    $region67: #{tpu_custom_call.1} parent=5 // pred_region
      %s6498 = ssub.s32 %s16, 2
      // Predicated region
      $region69: #{tpu_custom_call.1} parent=67 // pred_check
        %p6499 = pneg %p260
      $region70: #{tpu_custom_call.1} parent=67 // pred_check_branch
        %6501 = sbr.rel (%p6499) target = $region72
      $region71: #{tpu_custom_call.1} parent=67 // pred_region
        %p6502 = scmp.lt.s32.totalorder %s22, 1
        %s6503 = scalar_select %p6502, %s22, 1
        %s6504 = smul.addr %s6503, 32
        %s6505 = smul.addr %s6504, 8
        %s6506 = scalar_lea.vmem %s10, %s6505
      $region72: #{tpu_custom_call.1} parent=67 // pred_fallthru
        _
    $region68: #{tpu_custom_call.1} parent=5 // pred_fallthru
      _
  $region6: #{tpu_custom_call.1} parent=0 // loop_footer
    %s20 = sadd.s32 1, %s16
  $region7: #{tpu_custom_call.1} parent=0 // loop_footer_branch
    %15 = sbr.rel target = $region3
  $region8: #{tpu_custom_call.1} parent=0 // loop_exit
    _

</llo_original>
